<compile_context>
chip_gen: v6e
topology: v6e:2x2x1
jax: 0.10.0
libtpu: 0.0.40
codegen_flags: <defaults>
</compile_context>

<pallas_src>
import functools

import jax
import jax.numpy as jnp
from jax.experimental import pallas as pl
from jax.experimental.pallas import tpu as pltpu


# ----------------------------------------------------------------------------
# GRU cell (PyTorch convention, gate order [r, z, n])
# ----------------------------------------------------------------------------
def _gru_cell(xt, h, wih_ref, whh_ref, bih_ref, bhh_ref):
    """One GRU step.  xt: (B, I), h: (B, H).  Weight refs are (3, I|H, H)."""
    gi_r = jnp.dot(xt, wih_ref[0], preferred_element_type=jnp.float32) + bih_ref[0]
    gi_z = jnp.dot(xt, wih_ref[1], preferred_element_type=jnp.float32) + bih_ref[1]
    gi_n = jnp.dot(xt, wih_ref[2], preferred_element_type=jnp.float32) + bih_ref[2]
    gh_r = jnp.dot(h, whh_ref[0], preferred_element_type=jnp.float32) + bhh_ref[0]
    gh_z = jnp.dot(h, whh_ref[1], preferred_element_type=jnp.float32) + bhh_ref[1]
    gh_n = jnp.dot(h, whh_ref[2], preferred_element_type=jnp.float32) + bhh_ref[2]
    r = jax.nn.sigmoid(gi_r + gh_r)
    z = jax.nn.sigmoid(gi_z + gh_z)
    n = jnp.tanh(gi_n + r * gh_n)
    return (1.0 - z) * n + z * h


# ----------------------------------------------------------------------------
# Kernel 1: bidirectional GRU (both directions in one kernel / one launch)
# ----------------------------------------------------------------------------
def _bigru_kernel(xf_ref, xb_ref,
                  wih_f, whh_f, bih_f, bhh_f,
                  wih_b, whh_b, bih_b, bhh_b,
                  of_ref, ob_ref, hf_ref, hb_ref, *, chunk):
    @pl.when(pl.program_id(0) == 0)
    def _():
        hf_ref[...] = jnp.zeros_like(hf_ref)
        hb_ref[...] = jnp.zeros_like(hb_ref)

    hf = hf_ref[...]
    hb = hb_ref[...]
    for i in range(chunk):                       # static, fully unrolled
        # forward direction: global time increases
        hf = _gru_cell(xf_ref[i].astype(jnp.float32), hf,
                       wih_f, whh_f, bih_f, bhh_f)
        of_ref[i] = hf.astype(of_ref.dtype)
        # backward direction: global time decreases (block already reversed
        # via its index_map, so walk it back-to-front)
        j = chunk - 1 - i
        hb = _gru_cell(xb_ref[j].astype(jnp.float32), hb,
                       wih_b, whh_b, bih_b, bhh_b)
        ob_ref[j] = hb.astype(ob_ref.dtype)
    hf_ref[...] = hf
    hb_ref[...] = hb


def bigru_forward(x, params_f, params_b, *, chunk):
    """x: (T, B, E) time-major.  Returns (fwd, bwd) each (T, B, H)."""
    T, B, E = x.shape
    wih_f, whh_f, bih_f, bhh_f = params_f
    wih_b, whh_b, bih_b, bhh_b = params_b
    H = whh_f.shape[-1]
    assert T % chunk == 0
    nb = T // chunk

    fwd = lambda t: (t, 0, 0)
    bwd = lambda t: (nb - 1 - t, 0, 0)
    cw3 = lambda t: (0, 0, 0)

    kernel = functools.partial(_bigru_kernel, chunk=chunk)
    return pl.pallas_call(
        kernel,
        out_shape=(jax.ShapeDtypeStruct((T, B, H), x.dtype),
                   jax.ShapeDtypeStruct((T, B, H), x.dtype)),
        grid_spec=pltpu.PrefetchScalarGridSpec(
            num_scalar_prefetch=0,
            grid=(nb,),
            in_specs=[
                pl.BlockSpec((chunk, B, E), fwd),    # x, forward walk
                pl.BlockSpec((chunk, B, E), bwd),    # x, reversed walk
                pl.BlockSpec((3, E, H), cw3),        # W_ih fwd (resident)
                pl.BlockSpec((3, H, H), cw3),        # W_hh fwd
                pl.BlockSpec((3, 1, H), cw3),        # b_ih fwd
                pl.BlockSpec((3, 1, H), cw3),        # b_hh fwd
                pl.BlockSpec((3, E, H), cw3),        # W_ih bwd
                pl.BlockSpec((3, H, H), cw3),        # W_hh bwd
                pl.BlockSpec((3, 1, H), cw3),        # b_ih bwd
                pl.BlockSpec((3, 1, H), cw3),        # b_hh bwd
            ],
            out_specs=(pl.BlockSpec((chunk, B, H), fwd),
                       pl.BlockSpec((chunk, B, H), bwd)),
            scratch_shapes=[pltpu.VMEM((B, H), jnp.float32),
                            pltpu.VMEM((B, H), jnp.float32)],
        ),
        compiler_params=pltpu.CompilerParams(
            dimension_semantics=("arbitrary",)),   # sequential recurrence
    )(x, x, wih_f, whh_f, bih_f, bhh_f, wih_b, whh_b, bih_b, bhh_b)


# ----------------------------------------------------------------------------
# Kernel 2: GRU with fused (optional residual-add +) LayerNorm on its input
# ----------------------------------------------------------------------------
def _gru_ln_kernel(*refs, chunk, eps, has_residual):
    if has_residual:
        (x_ref, res_ref, gamma_ref, beta_ref,
         wih_ref, whh_ref, bih_ref, bhh_ref, o_ref, h_ref) = refs
    else:
        (x_ref, gamma_ref, beta_ref,
         wih_ref, whh_ref, bih_ref, bhh_ref, o_ref, h_ref) = refs
        res_ref = None

    @pl.when(pl.program_id(0) == 0)
    def _():
        h_ref[...] = jnp.zeros_like(h_ref)

    gamma = gamma_ref[...]
    beta = beta_ref[...]
    h = h_ref[...]
    for i in range(chunk):                       # static, fully unrolled
        xt = x_ref[i].astype(jnp.float32)
        if res_ref is not None:
            xt = xt + res_ref[i].astype(jnp.float32)
        mu = jnp.mean(xt, axis=-1, keepdims=True)
        var = jnp.mean(jnp.square(xt - mu), axis=-1, keepdims=True)
        xt = (xt - mu) * jax.lax.rsqrt(var + eps) * gamma + beta
        h = _gru_cell(xt, h, wih_ref, whh_ref, bih_ref, bhh_ref)
        o_ref[i] = h.astype(o_ref.dtype)
    h_ref[...] = h


def gru_ln_forward(x, residual, gamma, beta, gru_params, *, chunk, eps=1e-5):
    """x (and optional residual): (T, B, D) time-major.  Returns (T, B, H)."""
    T, B, D = x.shape
    wih, whh, bih, bhh = gru_params
    H = whh.shape[-1]
    assert T % chunk == 0
    nb = T // chunk
    step = lambda t: (t, 0, 0)
    c2 = lambda t: (0, 0)
    c3 = lambda t: (0, 0, 0)
    has_res = residual is not None

    in_specs = [pl.BlockSpec((chunk, B, D), step)]
    args = [x]
    if has_res:
        in_specs.append(pl.BlockSpec((chunk, B, D), step))
        args.append(residual)
    in_specs += [
        pl.BlockSpec((1, D), c2),       # LN gamma (resident)
        pl.BlockSpec((1, D), c2),       # LN beta
        pl.BlockSpec((3, D, H), c3),    # W_ih
        pl.BlockSpec((3, H, H), c3),    # W_hh
        pl.BlockSpec((3, 1, H), c3),    # b_ih
        pl.BlockSpec((3, 1, H), c3),    # b_hh
    ]
    args += [gamma, beta, wih, whh, bih, bhh]

    kernel = functools.partial(_gru_ln_kernel, chunk=chunk, eps=eps,
                               has_residual=has_res)
    return pl.pallas_call(
        kernel,
        out_shape=jax.ShapeDtypeStruct((T, B, H), x.dtype),
        grid_spec=pltpu.PrefetchScalarGridSpec(
            num_scalar_prefetch=0,
            grid=(nb,),
            in_specs=in_specs,
            out_specs=pl.BlockSpec((chunk, B, H), step),
            scratch_shapes=[pltpu.VMEM((B, H), jnp.float32)],
        ),
        compiler_params=pltpu.CompilerParams(
            dimension_semantics=("arbitrary",)),
    )(*args)


# ----------------------------------------------------------------------------
# Full forward
# ----------------------------------------------------------------------------
def _pick_chunk(T, max_chunk=8):
    for c in range(min(max_chunk, T), 0, -1):
        if T % c == 0:
            return c
    return 1


def extraction_gru_forward(inp, inp_len, params, *, time_chunk=None):
    """inp: (B, T, embed_size) batch-first, matching the PyTorch module."""
    del inp_len  # present in the PyTorch signature but never used in forward
    (bi_f, bi_b), (g1, b1), gru1, (g2, b2), gru2 = params
    B, T, E = inp.shape
    chunk = time_chunk or _pick_chunk(T)

    x = jnp.transpose(inp, (1, 0, 2))                     # time-major (T, B, E)
    out_f, out_b = bigru_forward(x, bi_f, bi_b, chunk=chunk)
    h_bi = jnp.concatenate([out_f, out_b], axis=-1)       # dropout_1 = identity
    h_g1 = gru_ln_forward(h_bi, None, g1, b1, gru1, chunk=chunk)   # LN1 + gru_1
    out = gru_ln_forward(h_bi, h_g1, g2, b2, gru2, chunk=chunk)    # +res, LN2, gru_2
    return jnp.transpose(out, (1, 0, 2))                  # back to (B, T, 2H)


# ----------------------------------------------------------------------------
# Pure-JAX reference (eval-mode semantics) for correctness checking
# ----------------------------------------------------------------------------
def _hp_dot(a, b):
    return jnp.dot(a, b, precision=jax.lax.Precision.HIGHEST)


def _gru_scan_ref(x, wih, whh, bih, bhh, reverse=False):
    T, B, _ = x.shape
    H = whh.shape[-1]

    def step(h, xt):
        r = jax.nn.sigmoid(_hp_dot(xt, wih[0]) + bih[0] + _hp_dot(h, whh[0]) + bhh[0])
        z = jax.nn.sigmoid(_hp_dot(xt, wih[1]) + bih[1] + _hp_dot(h, whh[1]) + bhh[1])
        n = jnp.tanh(_hp_dot(xt, wih[2]) + bih[2] + r * (_hp_dot(h, whh[2]) + bhh[2]))
        hn = (1.0 - z) * n + z * h
        return hn, hn

    h0 = jnp.zeros((B, H), x.dtype)
    _, ys = jax.lax.scan(step, h0, x, reverse=reverse)
    return ys


def _layernorm_ref(x, gamma, beta, eps=1e-5):
    mu = jnp.mean(x, axis=-1, keepdims=True)
    var = jnp.mean(jnp.square(x - mu), axis=-1, keepdims=True)
    return (x - mu) * jax.lax.rsqrt(var + eps) * gamma + beta


def extraction_gru_reference(inp, params):
    (bi_f, bi_b), (g1, b1), gru1, (g2, b2), gru2 = params
    x = jnp.transpose(inp, (1, 0, 2))
    hf = _gru_scan_ref(x, *bi_f)
    hb = _gru_scan_ref(x, *bi_b, reverse=True)
    h_bi = jnp.concatenate([hf, hb], axis=-1)
    h1 = _layernorm_ref(h_bi, g1, b1)
    hg1 = _gru_scan_ref(h1, *gru1)
    h2 = _layernorm_ref(h_bi + hg1, g2, b2)
    out = _gru_scan_ref(h2, *gru2)
    return jnp.transpose(out, (1, 0, 2))


# ----------------------------------------------------------------------------
# Deterministic synthetic parameters (PyTorch-style init, JAX-friendly layout:
# gate-stacked weights (3, in, hidden) with gate order [r, z, n]).
# ----------------------------------------------------------------------------
def init_params(key, embed_size, hidden_size):
    H = hidden_size
    ks = jax.random.split(key, 6)

    def gru(k, inp, hid):
        k1, k2, k3, k4 = jax.random.split(k, 4)
        bound = 1.0 / (hid ** 0.5)
        wih = jax.random.uniform(k1, (3, inp, hid), jnp.float32, -bound, bound)
        whh = jax.random.uniform(k2, (3, hid, hid), jnp.float32, -bound, bound)
        bih = jax.random.uniform(k3, (3, 1, hid), jnp.float32, -bound, bound)
        bhh = jax.random.uniform(k4, (3, 1, hid), jnp.float32, -bound, bound)
        return wih, whh, bih, bhh

    def ln(k, d):
        k1, k2 = jax.random.split(k)
        gamma = 1.0 + 0.1 * jax.random.normal(k1, (1, d), jnp.float32)
        beta = 0.1 * jax.random.normal(k2, (1, d), jnp.float32)
        return gamma, beta

    bi_f = gru(ks[0], embed_size, H)
    bi_b = gru(ks[1], embed_size, H)
    ln1 = ln(ks[2], 2 * H)
    gru1 = gru(ks[3], 2 * H, 2 * H)
    ln2 = ln(ks[4], 2 * H)
    gru2 = gru(ks[5], 2 * H, 2 * H)
    return (bi_f, bi_b), ln1, gru1, ln2, gru2


if __name__ == "__main__":
    B, T = 2, 8            # batch, sequence length
    EMBED, HIDDEN = 16, 32  # embed_size, hidden_size  (output feature dim = 2*HIDDEN)

    key = jax.random.PRNGKey(0)
    kx, kp = jax.random.split(key)
    x = jax.random.normal(kx, (B, T, EMBED), jnp.float32)
    inp_len = jnp.full((B,), T, jnp.int32)   # unused by the forward (matches PyTorch)
    params = init_params(kp, EMBED, HIDDEN)

    out = extraction_gru_forward(x, inp_len, params)
    out = jax.block_until_ready(out)

    ref = extraction_gru_reference(x, params)
    assert out.shape == (B, T, 2 * HIDDEN), out.shape
    assert jnp.allclose(out, ref, atol=2e-3, rtol=2e-3), "mismatch vs reference"

    print("KERNEL_OK")
</pallas_src>

<mosaic_0001>
module attributes {stable_mosaic.version = 11 : i64} {
  func.func @_bigru_kernel(%arg0: i32, %arg1: memref<8x2x16xf32, #tpu.memory_space<vmem>>, %arg2: memref<8x2x16xf32, #tpu.memory_space<vmem>>, %arg3: memref<3x16x32xf32, #tpu.memory_space<vmem>>, %arg4: memref<3x32x32xf32, #tpu.memory_space<vmem>>, %arg5: memref<3x1x32xf32, #tpu.memory_space<vmem>>, %arg6: memref<3x1x32xf32, #tpu.memory_space<vmem>>, %arg7: memref<3x16x32xf32, #tpu.memory_space<vmem>>, %arg8: memref<3x32x32xf32, #tpu.memory_space<vmem>>, %arg9: memref<3x1x32xf32, #tpu.memory_space<vmem>>, %arg10: memref<3x1x32xf32, #tpu.memory_space<vmem>>, %arg11: memref<8x2x32xf32, #tpu.memory_space<vmem>>, %arg12: memref<8x2x32xf32, #tpu.memory_space<vmem>>, %arg13: memref<2x32xf32, #tpu.memory_space<vmem>>, %arg14: memref<2x32xf32, #tpu.memory_space<vmem>>) attributes {dimension_semantics = [#tpu.dimension_semantics<arbitrary>], iteration_bounds = array<i64: 1>, scalar_prefetch = 0 : i64, scratch_operands = 2 : i64, tpu.core_type = #tpu.core_type<tc>, window_params = [{transform_indices = @transform_0, window_bounds = array<i64: 8, 2, 16>}, {transform_indices = @transform_1, window_bounds = array<i64: 8, 2, 16>}, {pipeline_mode = #tpu.pipeline_mode<synchronous>, transform_indices = @transform_2, window_bounds = array<i64: 3, 16, 32>}, {pipeline_mode = #tpu.pipeline_mode<synchronous>, transform_indices = @transform_3, window_bounds = array<i64: 3, 32, 32>}, {pipeline_mode = #tpu.pipeline_mode<synchronous>, transform_indices = @transform_4, window_bounds = array<i64: 3, 1, 32>}, {pipeline_mode = #tpu.pipeline_mode<synchronous>, transform_indices = @transform_5, window_bounds = array<i64: 3, 1, 32>}, {pipeline_mode = #tpu.pipeline_mode<synchronous>, transform_indices = @transform_6, window_bounds = array<i64: 3, 16, 32>}, {pipeline_mode = #tpu.pipeline_mode<synchronous>, transform_indices = @transform_7, window_bounds = array<i64: 3, 32, 32>}, {pipeline_mode = #tpu.pipeline_mode<synchronous>, transform_indices = @transform_8, window_bounds = array<i64: 3, 1, 32>}, {pipeline_mode = #tpu.pipeline_mode<synchronous>, transform_indices = @transform_9, window_bounds = array<i64: 3, 1, 32>}, {transform_indices = @transform_10, window_bounds = array<i64: 8, 2, 32>}, {transform_indices = @transform_11, window_bounds = array<i64: 8, 2, 32>}]} {
    %c0_i32 = arith.constant 0 : i32
    %0 = arith.cmpi eq, %arg0, %c0_i32 : i32
    %1 = arith.extui %0 : i1 to i32
    %c0_i32_0 = arith.constant 0 : i32
    %2 = arith.cmpi ne, %1, %c0_i32_0 : i32
    scf.if %2 {
      %cst_816 = arith.constant 0.000000e+00 : f32
      %1079 = vector.broadcast %cst_816 : f32 to vector<2x32xf32>
      %c0_817 = arith.constant 0 : index
      %c0_818 = arith.constant 0 : index
      %1080 = vector.load %arg13[%c0_817, %c0_818] : memref<2x32xf32, #tpu.memory_space<vmem>>, vector<2x32xf32>
      tpu.vector_store %arg13[%c0_817, %c0_818], %1079 {strides = array<i32>} : memref<2x32xf32, #tpu.memory_space<vmem>>, vector<2x32xf32>,
      %cst_819 = arith.constant 0.000000e+00 : f32
      %1081 = vector.broadcast %cst_819 : f32 to vector<2x32xf32>
      %c0_820 = arith.constant 0 : index
      %c0_821 = arith.constant 0 : index
      %1082 = vector.load %arg14[%c0_820, %c0_821] : memref<2x32xf32, #tpu.memory_space<vmem>>, vector<2x32xf32>
      tpu.vector_store %arg14[%c0_820, %c0_821], %1081 {strides = array<i32>} : memref<2x32xf32, #tpu.memory_space<vmem>>, vector<2x32xf32>,
    } else {
    }
    %c0 = arith.constant 0 : index
    %c0_1 = arith.constant 0 : index
    %3 = vector.load %arg13[%c0, %c0_1] : memref<2x32xf32, #tpu.memory_space<vmem>>, vector<2x32xf32>
    %c0_2 = arith.constant 0 : index
    %c0_3 = arith.constant 0 : index
    %4 = vector.load %arg14[%c0_2, %c0_3] : memref<2x32xf32, #tpu.memory_space<vmem>>, vector<2x32xf32>
    %c0_4 = arith.constant 0 : index
    %c0_5 = arith.constant 0 : index
    %c0_6 = arith.constant 0 : index
    %5 = vector.load %arg1[%c0_4, %c0_5, %c0_6] : memref<8x2x16xf32, #tpu.memory_space<vmem>>, vector<1x2x16xf32>
    %6 = vector.shape_cast %5 : vector<1x2x16xf32> to vector<2x16xf32>
    %c0_7 = arith.constant 0 : index
    %c0_8 = arith.constant 0 : index
    %c0_9 = arith.constant 0 : index
    %7 = vector.load %arg3[%c0_7, %c0_8, %c0_9] : memref<3x16x32xf32, #tpu.memory_space<vmem>>, vector<1x16x32xf32>
    %8 = vector.shape_cast %7 : vector<1x16x32xf32> to vector<16x32xf32>
    %cst = arith.constant dense<0.000000e+00> : vector<2x32xf32>
    %9 = tpu.matmul %6, %8, %cst {dimension_numbers = #tpu.dot_dimension_numbers<[1], [0], [0], [1], [0, 0, 1, 1], [], []>} : vector<2x16xf32>, vector<16x32xf32>, vector<2x32xf32> -> vector<2x32xf32>
    %c0_10 = arith.constant 0 : index
    %c0_11 = arith.constant 0 : index
    %c0_12 = arith.constant 0 : index
    %10 = vector.load %arg5[%c0_10, %c0_11, %c0_12] : memref<3x1x32xf32, #tpu.memory_space<vmem>>, vector<1x1x32xf32>
    %11 = vector.shape_cast %10 : vector<1x1x32xf32> to vector<1x32xf32>
    %12 = vector.broadcast %11 : vector<1x32xf32> to vector<2x32xf32>
    %13 = arith.addf %9, %12 : vector<2x32xf32>
    %c1 = arith.constant 1 : index
    %c0_13 = arith.constant 0 : index
    %c0_14 = arith.constant 0 : index
    %14 = vector.load %arg3[%c1, %c0_13, %c0_14] : memref<3x16x32xf32, #tpu.memory_space<vmem>>, vector<1x16x32xf32>
    %15 = vector.shape_cast %14 : vector<1x16x32xf32> to vector<16x32xf32>
    %cst_15 = arith.constant dense<0.000000e+00> : vector<2x32xf32>
    %16 = tpu.matmul %6, %15, %cst_15 {dimension_numbers = #tpu.dot_dimension_numbers<[1], [0], [0], [1], [0, 0, 1, 1], [], []>} : vector<2x16xf32>, vector<16x32xf32>, vector<2x32xf32> -> vector<2x32xf32>
    %c1_16 = arith.constant 1 : index
    %c0_17 = arith.constant 0 : index
    %c0_18 = arith.constant 0 : index
    %17 = vector.load %arg5[%c1_16, %c0_17, %c0_18] : memref<3x1x32xf32, #tpu.memory_space<vmem>>, vector<1x1x32xf32>
    %18 = vector.shape_cast %17 : vector<1x1x32xf32> to vector<1x32xf32>
    %19 = vector.broadcast %18 : vector<1x32xf32> to vector<2x32xf32>
    %20 = arith.addf %16, %19 : vector<2x32xf32>
    %c2 = arith.constant 2 : index
    %c0_19 = arith.constant 0 : index
    %c0_20 = arith.constant 0 : index
    %21 = vector.load %arg3[%c2, %c0_19, %c0_20] : memref<3x16x32xf32, #tpu.memory_space<vmem>>, vector<1x16x32xf32>
    %22 = vector.shape_cast %21 : vector<1x16x32xf32> to vector<16x32xf32>
    %cst_21 = arith.constant dense<0.000000e+00> : vector<2x32xf32>
    %23 = tpu.matmul %6, %22, %cst_21 {dimension_numbers = #tpu.dot_dimension_numbers<[1], [0], [0], [1], [0, 0, 1, 1], [], []>} : vector<2x16xf32>, vector<16x32xf32>, vector<2x32xf32> -> vector<2x32xf32>
    %c2_22 = arith.constant 2 : index
    %c0_23 = arith.constant 0 : index
    %c0_24 = arith.constant 0 : index
    %24 = vector.load %arg5[%c2_22, %c0_23, %c0_24] : memref<3x1x32xf32, #tpu.memory_space<vmem>>, vector<1x1x32xf32>
    %25 = vector.shape_cast %24 : vector<1x1x32xf32> to vector<1x32xf32>
    %26 = vector.broadcast %25 : vector<1x32xf32> to vector<2x32xf32>
    %27 = arith.addf %23, %26 : vector<2x32xf32>
    %c0_25 = arith.constant 0 : index
    %c0_26 = arith.constant 0 : index
    %c0_27 = arith.constant 0 : index
    %28 = vector.load %arg4[%c0_25, %c0_26, %c0_27] : memref<3x32x32xf32, #tpu.memory_space<vmem>>, vector<1x32x32xf32>
    %29 = vector.shape_cast %28 : vector<1x32x32xf32> to vector<32x32xf32>
    %cst_28 = arith.constant dense<0.000000e+00> : vector<2x32xf32>
    %30 = tpu.matmul %3, %29, %cst_28 {dimension_numbers = #tpu.dot_dimension_numbers<[1], [0], [0], [1], [0, 0, 1, 1], [], []>} : vector<2x32xf32>, vector<32x32xf32>, vector<2x32xf32> -> vector<2x32xf32>
    %c0_29 = arith.constant 0 : index
    %c0_30 = arith.constant 0 : index
    %c0_31 = arith.constant 0 : index
    %31 = vector.load %arg6[%c0_29, %c0_30, %c0_31] : memref<3x1x32xf32, #tpu.memory_space<vmem>>, vector<1x1x32xf32>
    %32 = vector.shape_cast %31 : vector<1x1x32xf32> to vector<1x32xf32>
    %33 = vector.broadcast %32 : vector<1x32xf32> to vector<2x32xf32>
    %34 = arith.addf %30, %33 : vector<2x32xf32>
    %c1_32 = arith.constant 1 : index
    %c0_33 = arith.constant 0 : index
    %c0_34 = arith.constant 0 : index
    %35 = vector.load %arg4[%c1_32, %c0_33, %c0_34] : memref<3x32x32xf32, #tpu.memory_space<vmem>>, vector<1x32x32xf32>
    %36 = vector.shape_cast %35 : vector<1x32x32xf32> to vector<32x32xf32>
    %cst_35 = arith.constant dense<0.000000e+00> : vector<2x32xf32>
    %37 = tpu.matmul %3, %36, %cst_35 {dimension_numbers = #tpu.dot_dimension_numbers<[1], [0], [0], [1], [0, 0, 1, 1], [], []>} : vector<2x32xf32>, vector<32x32xf32>, vector<2x32xf32> -> vector<2x32xf32>
    %c1_36 = arith.constant 1 : index
    %c0_37 = arith.constant 0 : index
    %c0_38 = arith.constant 0 : index
    %38 = vector.load %arg6[%c1_36, %c0_37, %c0_38] : memref<3x1x32xf32, #tpu.memory_space<vmem>>, vector<1x1x32xf32>
    %39 = vector.shape_cast %38 : vector<1x1x32xf32> to vector<1x32xf32>
    %40 = vector.broadcast %39 : vector<1x32xf32> to vector<2x32xf32>
    %41 = arith.addf %37, %40 : vector<2x32xf32>
    %c2_39 = arith.constant 2 : index
    %c0_40 = arith.constant 0 : index
    %c0_41 = arith.constant 0 : index
    %42 = vector.load %arg4[%c2_39, %c0_40, %c0_41] : memref<3x32x32xf32, #tpu.memory_space<vmem>>, vector<1x32x32xf32>
    %43 = vector.shape_cast %42 : vector<1x32x32xf32> to vector<32x32xf32>
    %cst_42 = arith.constant dense<0.000000e+00> : vector<2x32xf32>
    %44 = tpu.matmul %3, %43, %cst_42 {dimension_numbers = #tpu.dot_dimension_numbers<[1], [0], [0], [1], [0, 0, 1, 1], [], []>} : vector<2x32xf32>, vector<32x32xf32>, vector<2x32xf32> -> vector<2x32xf32>
    %c2_43 = arith.constant 2 : index
    %c0_44 = arith.constant 0 : index
    %c0_45 = arith.constant 0 : index
    %45 = vector.load %arg6[%c2_43, %c0_44, %c0_45] : memref<3x1x32xf32, #tpu.memory_space<vmem>>, vector<1x1x32xf32>
    %46 = vector.shape_cast %45 : vector<1x1x32xf32> to vector<1x32xf32>
    %47 = vector.broadcast %46 : vector<1x32xf32> to vector<2x32xf32>
    %48 = arith.addf %44, %47 : vector<2x32xf32>
    %49 = arith.addf %13, %34 : vector<2x32xf32>
    %50 = arith.negf %49 : vector<2x32xf32>
    %51 = math.exp %50 : vector<2x32xf32>
    %cst_46 = arith.constant 1.000000e+00 : f32
    %52 = vector.broadcast %cst_46 : f32 to vector<2x32xf32>
    %53 = arith.addf %52, %51 : vector<2x32xf32>
    %54 = arith.divf %52, %53 : vector<2x32xf32>
    %55 = arith.addf %20, %41 : vector<2x32xf32>
    %56 = arith.negf %55 : vector<2x32xf32>
    %57 = math.exp %56 : vector<2x32xf32>
    %cst_47 = arith.constant 1.000000e+00 : f32
    %58 = vector.broadcast %cst_47 : f32 to vector<2x32xf32>
    %59 = arith.addf %58, %57 : vector<2x32xf32>
    %60 = arith.divf %58, %59 : vector<2x32xf32>
    %61 = arith.mulf %54, %48 : vector<2x32xf32>
    %62 = arith.addf %27, %61 : vector<2x32xf32>
    %63 = math.tanh %62 : vector<2x32xf32>
    %cst_48 = arith.constant 1.000000e+00 : f32
    %64 = vector.broadcast %cst_48 : f32 to vector<2x32xf32>
    %65 = arith.subf %64, %60 : vector<2x32xf32>
    %66 = arith.mulf %65, %63 : vector<2x32xf32>
    %67 = arith.mulf %60, %3 : vector<2x32xf32>
    %68 = arith.addf %66, %67 : vector<2x32xf32>
    %c0_49 = arith.constant 0 : index
    %c0_50 = arith.constant 0 : index
    %c0_51 = arith.constant 0 : index
    %69 = vector.load %arg11[%c0_49, %c0_50, %c0_51] : memref<8x2x32xf32, #tpu.memory_space<vmem>>, vector<1x2x32xf32>
    %70 = vector.shape_cast %69 : vector<1x2x32xf32> to vector<2x32xf32>
    %71 = vector.shape_cast %68 : vector<2x32xf32> to vector<1x2x32xf32>
    tpu.vector_store %arg11[%c0_49, %c0_50, %c0_51], %71 {strides = array<i32>} : memref<8x2x32xf32, #tpu.memory_space<vmem>>, vector<1x2x32xf32>,
    %c7 = arith.constant 7 : index
    %c0_52 = arith.constant 0 : index
    %c0_53 = arith.constant 0 : index
    %72 = vector.load %arg2[%c7, %c0_52, %c0_53] : memref<8x2x16xf32, #tpu.memory_space<vmem>>, vector<1x2x16xf32>
    %73 = vector.shape_cast %72 : vector<1x2x16xf32> to vector<2x16xf32>
    %c0_54 = arith.constant 0 : index
    %c0_55 = arith.constant 0 : index
    %c0_56 = arith.constant 0 : index
    %74 = vector.load %arg7[%c0_54, %c0_55, %c0_56] : memref<3x16x32xf32, #tpu.memory_space<vmem>>, vector<1x16x32xf32>
    %75 = vector.shape_cast %74 : vector<1x16x32xf32> to vector<16x32xf32>
    %cst_57 = arith.constant dense<0.000000e+00> : vector<2x32xf32>
    %76 = tpu.matmul %73, %75, %cst_57 {dimension_numbers = #tpu.dot_dimension_numbers<[1], [0], [0], [1], [0, 0, 1, 1], [], []>} : vector<2x16xf32>, vector<16x32xf32>, vector<2x32xf32> -> vector<2x32xf32>
    %c0_58 = arith.constant 0 : index
    %c0_59 = arith.constant 0 : index
    %c0_60 = arith.constant 0 : index
    %77 = vector.load %arg9[%c0_58, %c0_59, %c0_60] : memref<3x1x32xf32, #tpu.memory_space<vmem>>, vector<1x1x32xf32>
    %78 = vector.shape_cast %77 : vector<1x1x32xf32> to vector<1x32xf32>
    %79 = vector.broadcast %78 : vector<1x32xf32> to vector<2x32xf32>
    %80 = arith.addf %76, %79 : vector<2x32xf32>
    %c1_61 = arith.constant 1 : index
    %c0_62 = arith.constant 0 : index
    %c0_63 = arith.constant 0 : index
    %81 = vector.load %arg7[%c1_61, %c0_62, %c0_63] : memref<3x16x32xf32, #tpu.memory_space<vmem>>, vector<1x16x32xf32>
    %82 = vector.shape_cast %81 : vector<1x16x32xf32> to vector<16x32xf32>
    %cst_64 = arith.constant dense<0.000000e+00> : vector<2x32xf32>
    %83 = tpu.matmul %73, %82, %cst_64 {dimension_numbers = #tpu.dot_dimension_numbers<[1], [0], [0], [1], [0, 0, 1, 1], [], []>} : vector<2x16xf32>, vector<16x32xf32>, vector<2x32xf32> -> vector<2x32xf32>
    %c1_65 = arith.constant 1 : index
    %c0_66 = arith.constant 0 : index
    %c0_67 = arith.constant 0 : index
    %84 = vector.load %arg9[%c1_65, %c0_66, %c0_67] : memref<3x1x32xf32, #tpu.memory_space<vmem>>, vector<1x1x32xf32>
    %85 = vector.shape_cast %84 : vector<1x1x32xf32> to vector<1x32xf32>
    %86 = vector.broadcast %85 : vector<1x32xf32> to vector<2x32xf32>
    %87 = arith.addf %83, %86 : vector<2x32xf32>
    %c2_68 = arith.constant 2 : index
    %c0_69 = arith.constant 0 : index
    %c0_70 = arith.constant 0 : index
    %88 = vector.load %arg7[%c2_68, %c0_69, %c0_70] : memref<3x16x32xf32, #tpu.memory_space<vmem>>, vector<1x16x32xf32>
    %89 = vector.shape_cast %88 : vector<1x16x32xf32> to vector<16x32xf32>
    %cst_71 = arith.constant dense<0.000000e+00> : vector<2x32xf32>
    %90 = tpu.matmul %73, %89, %cst_71 {dimension_numbers = #tpu.dot_dimension_numbers<[1], [0], [0], [1], [0, 0, 1, 1], [], []>} : vector<2x16xf32>, vector<16x32xf32>, vector<2x32xf32> -> vector<2x32xf32>
    %c2_72 = arith.constant 2 : index
    %c0_73 = arith.constant 0 : index
    %c0_74 = arith.constant 0 : index
    %91 = vector.load %arg9[%c2_72, %c0_73, %c0_74] : memref<3x1x32xf32, #tpu.memory_space<vmem>>, vector<1x1x32xf32>
    %92 = vector.shape_cast %91 : vector<1x1x32xf32> to vector<1x32xf32>
    %93 = vector.broadcast %92 : vector<1x32xf32> to vector<2x32xf32>
    %94 = arith.addf %90, %93 : vector<2x32xf32>
    %c0_75 = arith.constant 0 : index
    %c0_76 = arith.constant 0 : index
    %c0_77 = arith.constant 0 : index
    %95 = vector.load %arg8[%c0_75, %c0_76, %c0_77] : memref<3x32x32xf32, #tpu.memory_space<vmem>>, vector<1x32x32xf32>
    %96 = vector.shape_cast %95 : vector<1x32x32xf32> to vector<32x32xf32>
    %cst_78 = arith.constant dense<0.000000e+00> : vector<2x32xf32>
    %97 = tpu.matmul %4, %96, %cst_78 {dimension_numbers = #tpu.dot_dimension_numbers<[1], [0], [0], [1], [0, 0, 1, 1], [], []>} : vector<2x32xf32>, vector<32x32xf32>, vector<2x32xf32> -> vector<2x32xf32>
    %c0_79 = arith.constant 0 : index
    %c0_80 = arith.constant 0 : index
    %c0_81 = arith.constant 0 : index
    %98 = vector.load %arg10[%c0_79, %c0_80, %c0_81] : memref<3x1x32xf32, #tpu.memory_space<vmem>>, vector<1x1x32xf32>
    %99 = vector.shape_cast %98 : vector<1x1x32xf32> to vector<1x32xf32>
    %100 = vector.broadcast %99 : vector<1x32xf32> to vector<2x32xf32>
    %101 = arith.addf %97, %100 : vector<2x32xf32>
    %c1_82 = arith.constant 1 : index
    %c0_83 = arith.constant 0 : index
    %c0_84 = arith.constant 0 : index
    %102 = vector.load %arg8[%c1_82, %c0_83, %c0_84] : memref<3x32x32xf32, #tpu.memory_space<vmem>>, vector<1x32x32xf32>
    %103 = vector.shape_cast %102 : vector<1x32x32xf32> to vector<32x32xf32>
    %cst_85 = arith.constant dense<0.000000e+00> : vector<2x32xf32>
    %104 = tpu.matmul %4, %103, %cst_85 {dimension_numbers = #tpu.dot_dimension_numbers<[1], [0], [0], [1], [0, 0, 1, 1], [], []>} : vector<2x32xf32>, vector<32x32xf32>, vector<2x32xf32> -> vector<2x32xf32>
    %c1_86 = arith.constant 1 : index
    %c0_87 = arith.constant 0 : index
    %c0_88 = arith.constant 0 : index
    %105 = vector.load %arg10[%c1_86, %c0_87, %c0_88] : memref<3x1x32xf32, #tpu.memory_space<vmem>>, vector<1x1x32xf32>
    %106 = vector.shape_cast %105 : vector<1x1x32xf32> to vector<1x32xf32>
    %107 = vector.broadcast %106 : vector<1x32xf32> to vector<2x32xf32>
    %108 = arith.addf %104, %107 : vector<2x32xf32>
    %c2_89 = arith.constant 2 : index
    %c0_90 = arith.constant 0 : index
    %c0_91 = arith.constant 0 : index
    %109 = vector.load %arg8[%c2_89, %c0_90, %c0_91] : memref<3x32x32xf32, #tpu.memory_space<vmem>>, vector<1x32x32xf32>
    %110 = vector.shape_cast %109 : vector<1x32x32xf32> to vector<32x32xf32>
    %cst_92 = arith.constant dense<0.000000e+00> : vector<2x32xf32>
    %111 = tpu.matmul %4, %110, %cst_92 {dimension_numbers = #tpu.dot_dimension_numbers<[1], [0], [0], [1], [0, 0, 1, 1], [], []>} : vector<2x32xf32>, vector<32x32xf32>, vector<2x32xf32> -> vector<2x32xf32>
    %c2_93 = arith.constant 2 : index
    %c0_94 = arith.constant 0 : index
    %c0_95 = arith.constant 0 : index
    %112 = vector.load %arg10[%c2_93, %c0_94, %c0_95] : memref<3x1x32xf32, #tpu.memory_space<vmem>>, vector<1x1x32xf32>
    %113 = vector.shape_cast %112 : vector<1x1x32xf32> to vector<1x32xf32>
    %114 = vector.broadcast %113 : vector<1x32xf32> to vector<2x32xf32>
    %115 = arith.addf %111, %114 : vector<2x32xf32>
    %116 = arith.addf %80, %101 : vector<2x32xf32>
    %117 = arith.negf %116 : vector<2x32xf32>
    %118 = math.exp %117 : vector<2x32xf32>
    %cst_96 = arith.constant 1.000000e+00 : f32
    %119 = vector.broadcast %cst_96 : f32 to vector<2x32xf32>
    %120 = arith.addf %119, %118 : vector<2x32xf32>
    %121 = arith.divf %119, %120 : vector<2x32xf32>
    %122 = arith.addf %87, %108 : vector<2x32xf32>
    %123 = arith.negf %122 : vector<2x32xf32>
    %124 = math.exp %123 : vector<2x32xf32>
    %cst_97 = arith.constant 1.000000e+00 : f32
    %125 = vector.broadcast %cst_97 : f32 to vector<2x32xf32>
    %126 = arith.addf %125, %124 : vector<2x32xf32>
    %127 = arith.divf %125, %126 : vector<2x32xf32>
    %128 = arith.mulf %121, %115 : vector<2x32xf32>
    %129 = arith.addf %94, %128 : vector<2x32xf32>
    %130 = math.tanh %129 : vector<2x32xf32>
    %cst_98 = arith.constant 1.000000e+00 : f32
    %131 = vector.broadcast %cst_98 : f32 to vector<2x32xf32>
    %132 = arith.subf %131, %127 : vector<2x32xf32>
    %133 = arith.mulf %132, %130 : vector<2x32xf32>
    %134 = arith.mulf %127, %4 : vector<2x32xf32>
    %135 = arith.addf %133, %134 : vector<2x32xf32>
    %c7_99 = arith.constant 7 : index
    %c0_100 = arith.constant 0 : index
    %c0_101 = arith.constant 0 : index
    %136 = vector.load %arg12[%c7_99, %c0_100, %c0_101] : memref<8x2x32xf32, #tpu.memory_space<vmem>>, vector<1x2x32xf32>
    %137 = vector.shape_cast %136 : vector<1x2x32xf32> to vector<2x32xf32>
    %138 = vector.shape_cast %135 : vector<2x32xf32> to vector<1x2x32xf32>
    tpu.vector_store %arg12[%c7_99, %c0_100, %c0_101], %138 {strides = array<i32>} : memref<8x2x32xf32, #tpu.memory_space<vmem>>, vector<1x2x32xf32>,
    %c1_102 = arith.constant 1 : index
    %c0_103 = arith.constant 0 : index
    %c0_104 = arith.constant 0 : index
    %139 = vector.load %arg1[%c1_102, %c0_103, %c0_104] : memref<8x2x16xf32, #tpu.memory_space<vmem>>, vector<1x2x16xf32>
    %140 = vector.shape_cast %139 : vector<1x2x16xf32> to vector<2x16xf32>
    %c0_105 = arith.constant 0 : index
    %c0_106 = arith.constant 0 : index
    %c0_107 = arith.constant 0 : index
    %141 = vector.load %arg3[%c0_105, %c0_106, %c0_107] : memref<3x16x32xf32, #tpu.memory_space<vmem>>, vector<1x16x32xf32>
    %142 = vector.shape_cast %141 : vector<1x16x32xf32> to vector<16x32xf32>
    %cst_108 = arith.constant dense<0.000000e+00> : vector<2x32xf32>
    %143 = tpu.matmul %140, %142, %cst_108 {dimension_numbers = #tpu.dot_dimension_numbers<[1], [0], [0], [1], [0, 0, 1, 1], [], []>} : vector<2x16xf32>, vector<16x32xf32>, vector<2x32xf32> -> vector<2x32xf32>
    %c0_109 = arith.constant 0 : index
    %c0_110 = arith.constant 0 : index
    %c0_111 = arith.constant 0 : index
    %144 = vector.load %arg5[%c0_109, %c0_110, %c0_111] : memref<3x1x32xf32, #tpu.memory_space<vmem>>, vector<1x1x32xf32>
    %145 = vector.shape_cast %144 : vector<1x1x32xf32> to vector<1x32xf32>
    %146 = vector.broadcast %145 : vector<1x32xf32> to vector<2x32xf32>
    %147 = arith.addf %143, %146 : vector<2x32xf32>
    %c1_112 = arith.constant 1 : index
    %c0_113 = arith.constant 0 : index
    %c0_114 = arith.constant 0 : index
    %148 = vector.load %arg3[%c1_112, %c0_113, %c0_114] : memref<3x16x32xf32, #tpu.memory_space<vmem>>, vector<1x16x32xf32>
    %149 = vector.shape_cast %148 : vector<1x16x32xf32> to vector<16x32xf32>
    %cst_115 = arith.constant dense<0.000000e+00> : vector<2x32xf32>
    %150 = tpu.matmul %140, %149, %cst_115 {dimension_numbers = #tpu.dot_dimension_numbers<[1], [0], [0], [1], [0, 0, 1, 1], [], []>} : vector<2x16xf32>, vector<16x32xf32>, vector<2x32xf32> -> vector<2x32xf32>
    %c1_116 = arith.constant 1 : index
    %c0_117 = arith.constant 0 : index
    %c0_118 = arith.constant 0 : index
    %151 = vector.load %arg5[%c1_116, %c0_117, %c0_118] : memref<3x1x32xf32, #tpu.memory_space<vmem>>, vector<1x1x32xf32>
    %152 = vector.shape_cast %151 : vector<1x1x32xf32> to vector<1x32xf32>
    %153 = vector.broadcast %152 : vector<1x32xf32> to vector<2x32xf32>
    %154 = arith.addf %150, %153 : vector<2x32xf32>
    %c2_119 = arith.constant 2 : index
    %c0_120 = arith.constant 0 : index
    %c0_121 = arith.constant 0 : index
    %155 = vector.load %arg3[%c2_119, %c0_120, %c0_121] : memref<3x16x32xf32, #tpu.memory_space<vmem>>, vector<1x16x32xf32>
    %156 = vector.shape_cast %155 : vector<1x16x32xf32> to vector<16x32xf32>
    %cst_122 = arith.constant dense<0.000000e+00> : vector<2x32xf32>
    %157 = tpu.matmul %140, %156, %cst_122 {dimension_numbers = #tpu.dot_dimension_numbers<[1], [0], [0], [1], [0, 0, 1, 1], [], []>} : vector<2x16xf32>, vector<16x32xf32>, vector<2x32xf32> -> vector<2x32xf32>
    %c2_123 = arith.constant 2 : index
    %c0_124 = arith.constant 0 : index
    %c0_125 = arith.constant 0 : index
    %158 = vector.load %arg5[%c2_123, %c0_124, %c0_125] : memref<3x1x32xf32, #tpu.memory_space<vmem>>, vector<1x1x32xf32>
    %159 = vector.shape_cast %158 : vector<1x1x32xf32> to vector<1x32xf32>
    %160 = vector.broadcast %159 : vector<1x32xf32> to vector<2x32xf32>
    %161 = arith.addf %157, %160 : vector<2x32xf32>
    %c0_126 = arith.constant 0 : index
    %c0_127 = arith.constant 0 : index
    %c0_128 = arith.constant 0 : index
    %162 = vector.load %arg4[%c0_126, %c0_127, %c0_128] : memref<3x32x32xf32, #tpu.memory_space<vmem>>, vector<1x32x32xf32>
    %163 = vector.shape_cast %162 : vector<1x32x32xf32> to vector<32x32xf32>
    %cst_129 = arith.constant dense<0.000000e+00> : vector<2x32xf32>
    %164 = tpu.matmul %68, %163, %cst_129 {dimension_numbers = #tpu.dot_dimension_numbers<[1], [0], [0], [1], [0, 0, 1, 1], [], []>} : vector<2x32xf32>, vector<32x32xf32>, vector<2x32xf32> -> vector<2x32xf32>
    %c0_130 = arith.constant 0 : index
    %c0_131 = arith.constant 0 : index
    %c0_132 = arith.constant 0 : index
    %165 = vector.load %arg6[%c0_130, %c0_131, %c0_132] : memref<3x1x32xf32, #tpu.memory_space<vmem>>, vector<1x1x32xf32>
    %166 = vector.shape_cast %165 : vector<1x1x32xf32> to vector<1x32xf32>
    %167 = vector.broadcast %166 : vector<1x32xf32> to vector<2x32xf32>
    %168 = arith.addf %164, %167 : vector<2x32xf32>
    %c1_133 = arith.constant 1 : index
    %c0_134 = arith.constant 0 : index
    %c0_135 = arith.constant 0 : index
    %169 = vector.load %arg4[%c1_133, %c0_134, %c0_135] : memref<3x32x32xf32, #tpu.memory_space<vmem>>, vector<1x32x32xf32>
    %170 = vector.shape_cast %169 : vector<1x32x32xf32> to vector<32x32xf32>
    %cst_136 = arith.constant dense<0.000000e+00> : vector<2x32xf32>
    %171 = tpu.matmul %68, %170, %cst_136 {dimension_numbers = #tpu.dot_dimension_numbers<[1], [0], [0], [1], [0, 0, 1, 1], [], []>} : vector<2x32xf32>, vector<32x32xf32>, vector<2x32xf32> -> vector<2x32xf32>
    %c1_137 = arith.constant 1 : index
    %c0_138 = arith.constant 0 : index
    %c0_139 = arith.constant 0 : index
    %172 = vector.load %arg6[%c1_137, %c0_138, %c0_139] : memref<3x1x32xf32, #tpu.memory_space<vmem>>, vector<1x1x32xf32>
    %173 = vector.shape_cast %172 : vector<1x1x32xf32> to vector<1x32xf32>
    %174 = vector.broadcast %173 : vector<1x32xf32> to vector<2x32xf32>
    %175 = arith.addf %171, %174 : vector<2x32xf32>
    %c2_140 = arith.constant 2 : index
    %c0_141 = arith.constant 0 : index
    %c0_142 = arith.constant 0 : index
    %176 = vector.load %arg4[%c2_140, %c0_141, %c0_142] : memref<3x32x32xf32, #tpu.memory_space<vmem>>, vector<1x32x32xf32>
    %177 = vector.shape_cast %176 : vector<1x32x32xf32> to vector<32x32xf32>
    %cst_143 = arith.constant dense<0.000000e+00> : vector<2x32xf32>
    %178 = tpu.matmul %68, %177, %cst_143 {dimension_numbers = #tpu.dot_dimension_numbers<[1], [0], [0], [1], [0, 0, 1, 1], [], []>} : vector<2x32xf32>, vector<32x32xf32>, vector<2x32xf32> -> vector<2x32xf32>
    %c2_144 = arith.constant 2 : index
    %c0_145 = arith.constant 0 : index
    %c0_146 = arith.constant 0 : index
    %179 = vector.load %arg6[%c2_144, %c0_145, %c0_146] : memref<3x1x32xf32, #tpu.memory_space<vmem>>, vector<1x1x32xf32>
    %180 = vector.shape_cast %179 : vector<1x1x32xf32> to vector<1x32xf32>
    %181 = vector.broadcast %180 : vector<1x32xf32> to vector<2x32xf32>
    %182 = arith.addf %178, %181 : vector<2x32xf32>
    %183 = arith.addf %147, %168 : vector<2x32xf32>
    %184 = arith.negf %183 : vector<2x32xf32>
    %185 = math.exp %184 : vector<2x32xf32>
    %cst_147 = arith.constant 1.000000e+00 : f32
    %186 = vector.broadcast %cst_147 : f32 to vector<2x32xf32>
    %187 = arith.addf %186, %185 : vector<2x32xf32>
    %188 = arith.divf %186, %187 : vector<2x32xf32>
    %189 = arith.addf %154, %175 : vector<2x32xf32>
    %190 = arith.negf %189 : vector<2x32xf32>
    %191 = math.exp %190 : vector<2x32xf32>
    %cst_148 = arith.constant 1.000000e+00 : f32
    %192 = vector.broadcast %cst_148 : f32 to vector<2x32xf32>
    %193 = arith.addf %192, %191 : vector<2x32xf32>
    %194 = arith.divf %192, %193 : vector<2x32xf32>
    %195 = arith.mulf %188, %182 : vector<2x32xf32>
    %196 = arith.addf %161, %195 : vector<2x32xf32>
    %197 = math.tanh %196 : vector<2x32xf32>
    %cst_149 = arith.constant 1.000000e+00 : f32
    %198 = vector.broadcast %cst_149 : f32 to vector<2x32xf32>
    %199 = arith.subf %198, %194 : vector<2x32xf32>
    %200 = arith.mulf %199, %197 : vector<2x32xf32>
    %201 = arith.mulf %194, %68 : vector<2x32xf32>
    %202 = arith.addf %200, %201 : vector<2x32xf32>
    %c1_150 = arith.constant 1 : index
    %c0_151 = arith.constant 0 : index
    %c0_152 = arith.constant 0 : index
    %203 = vector.load %arg11[%c1_150, %c0_151, %c0_152] : memref<8x2x32xf32, #tpu.memory_space<vmem>>, vector<1x2x32xf32>
    %204 = vector.shape_cast %203 : vector<1x2x32xf32> to vector<2x32xf32>
    %205 = vector.shape_cast %202 : vector<2x32xf32> to vector<1x2x32xf32>
    tpu.vector_store %arg11[%c1_150, %c0_151, %c0_152], %205 {strides = array<i32>} : memref<8x2x32xf32, #tpu.memory_space<vmem>>, vector<1x2x32xf32>,
    %c6 = arith.constant 6 : index
    %c0_153 = arith.constant 0 : index
    %c0_154 = arith.constant 0 : index
    %206 = vector.load %arg2[%c6, %c0_153, %c0_154] : memref<8x2x16xf32, #tpu.memory_space<vmem>>, vector<1x2x16xf32>
    %207 = vector.shape_cast %206 : vector<1x2x16xf32> to vector<2x16xf32>
    %c0_155 = arith.constant 0 : index
    %c0_156 = arith.constant 0 : index
    %c0_157 = arith.constant 0 : index
    %208 = vector.load %arg7[%c0_155, %c0_156, %c0_157] : memref<3x16x32xf32, #tpu.memory_space<vmem>>, vector<1x16x32xf32>
    %209 = vector.shape_cast %208 : vector<1x16x32xf32> to vector<16x32xf32>
    %cst_158 = arith.constant dense<0.000000e+00> : vector<2x32xf32>
    %210 = tpu.matmul %207, %209, %cst_158 {dimension_numbers = #tpu.dot_dimension_numbers<[1], [0], [0], [1], [0, 0, 1, 1], [], []>} : vector<2x16xf32>, vector<16x32xf32>, vector<2x32xf32> -> vector<2x32xf32>
    %c0_159 = arith.constant 0 : index
    %c0_160 = arith.constant 0 : index
    %c0_161 = arith.constant 0 : index
    %211 = vector.load %arg9[%c0_159, %c0_160, %c0_161] : memref<3x1x32xf32, #tpu.memory_space<vmem>>, vector<1x1x32xf32>
    %212 = vector.shape_cast %211 : vector<1x1x32xf32> to vector<1x32xf32>
    %213 = vector.broadcast %212 : vector<1x32xf32> to vector<2x32xf32>
    %214 = arith.addf %210, %213 : vector<2x32xf32>
    %c1_162 = arith.constant 1 : index
    %c0_163 = arith.constant 0 : index
    %c0_164 = arith.constant 0 : index
    %215 = vector.load %arg7[%c1_162, %c0_163, %c0_164] : memref<3x16x32xf32, #tpu.memory_space<vmem>>, vector<1x16x32xf32>
    %216 = vector.shape_cast %215 : vector<1x16x32xf32> to vector<16x32xf32>
    %cst_165 = arith.constant dense<0.000000e+00> : vector<2x32xf32>
    %217 = tpu.matmul %207, %216, %cst_165 {dimension_numbers = #tpu.dot_dimension_numbers<[1], [0], [0], [1], [0, 0, 1, 1], [], []>} : vector<2x16xf32>, vector<16x32xf32>, vector<2x32xf32> -> vector<2x32xf32>
    %c1_166 = arith.constant 1 : index
    %c0_167 = arith.constant 0 : index
    %c0_168 = arith.constant 0 : index
    %218 = vector.load %arg9[%c1_166, %c0_167, %c0_168] : memref<3x1x32xf32, #tpu.memory_space<vmem>>, vector<1x1x32xf32>
    %219 = vector.shape_cast %218 : vector<1x1x32xf32> to vector<1x32xf32>
    %220 = vector.broadcast %219 : vector<1x32xf32> to vector<2x32xf32>
    %221 = arith.addf %217, %220 : vector<2x32xf32>
    %c2_169 = arith.constant 2 : index
    %c0_170 = arith.constant 0 : index
    %c0_171 = arith.constant 0 : index
    %222 = vector.load %arg7[%c2_169, %c0_170, %c0_171] : memref<3x16x32xf32, #tpu.memory_space<vmem>>, vector<1x16x32xf32>
    %223 = vector.shape_cast %222 : vector<1x16x32xf32> to vector<16x32xf32>
    %cst_172 = arith.constant dense<0.000000e+00> : vector<2x32xf32>
    %224 = tpu.matmul %207, %223, %cst_172 {dimension_numbers = #tpu.dot_dimension_numbers<[1], [0], [0], [1], [0, 0, 1, 1], [], []>} : vector<2x16xf32>, vector<16x32xf32>, vector<2x32xf32> -> vector<2x32xf32>
    %c2_173 = arith.constant 2 : index
    %c0_174 = arith.constant 0 : index
    %c0_175 = arith.constant 0 : index
    %225 = vector.load %arg9[%c2_173, %c0_174, %c0_175] : memref<3x1x32xf32, #tpu.memory_space<vmem>>, vector<1x1x32xf32>
    %226 = vector.shape_cast %225 : vector<1x1x32xf32> to vector<1x32xf32>
    %227 = vector.broadcast %226 : vector<1x32xf32> to vector<2x32xf32>
    %228 = arith.addf %224, %227 : vector<2x32xf32>
    %c0_176 = arith.constant 0 : index
    %c0_177 = arith.constant 0 : index
    %c0_178 = arith.constant 0 : index
    %229 = vector.load %arg8[%c0_176, %c0_177, %c0_178] : memref<3x32x32xf32, #tpu.memory_space<vmem>>, vector<1x32x32xf32>
    %230 = vector.shape_cast %229 : vector<1x32x32xf32> to vector<32x32xf32>
    %cst_179 = arith.constant dense<0.000000e+00> : vector<2x32xf32>
    %231 = tpu.matmul %135, %230, %cst_179 {dimension_numbers = #tpu.dot_dimension_numbers<[1], [0], [0], [1], [0, 0, 1, 1], [], []>} : vector<2x32xf32>, vector<32x32xf32>, vector<2x32xf32> -> vector<2x32xf32>
    %c0_180 = arith.constant 0 : index
    %c0_181 = arith.constant 0 : index
    %c0_182 = arith.constant 0 : index
    %232 = vector.load %arg10[%c0_180, %c0_181, %c0_182] : memref<3x1x32xf32, #tpu.memory_space<vmem>>, vector<1x1x32xf32>
    %233 = vector.shape_cast %232 : vector<1x1x32xf32> to vector<1x32xf32>
    %234 = vector.broadcast %233 : vector<1x32xf32> to vector<2x32xf32>
    %235 = arith.addf %231, %234 : vector<2x32xf32>
    %c1_183 = arith.constant 1 : index
    %c0_184 = arith.constant 0 : index
    %c0_185 = arith.constant 0 : index
    %236 = vector.load %arg8[%c1_183, %c0_184, %c0_185] : memref<3x32x32xf32, #tpu.memory_space<vmem>>, vector<1x32x32xf32>
    %237 = vector.shape_cast %236 : vector<1x32x32xf32> to vector<32x32xf32>
    %cst_186 = arith.constant dense<0.000000e+00> : vector<2x32xf32>
    %238 = tpu.matmul %135, %237, %cst_186 {dimension_numbers = #tpu.dot_dimension_numbers<[1], [0], [0], [1], [0, 0, 1, 1], [], []>} : vector<2x32xf32>, vector<32x32xf32>, vector<2x32xf32> -> vector<2x32xf32>
    %c1_187 = arith.constant 1 : index
    %c0_188 = arith.constant 0 : index
    %c0_189 = arith.constant 0 : index
    %239 = vector.load %arg10[%c1_187, %c0_188, %c0_189] : memref<3x1x32xf32, #tpu.memory_space<vmem>>, vector<1x1x32xf32>
    %240 = vector.shape_cast %239 : vector<1x1x32xf32> to vector<1x32xf32>
    %241 = vector.broadcast %240 : vector<1x32xf32> to vector<2x32xf32>
    %242 = arith.addf %238, %241 : vector<2x32xf32>
    %c2_190 = arith.constant 2 : index
    %c0_191 = arith.constant 0 : index
    %c0_192 = arith.constant 0 : index
    %243 = vector.load %arg8[%c2_190, %c0_191, %c0_192] : memref<3x32x32xf32, #tpu.memory_space<vmem>>, vector<1x32x32xf32>
    %244 = vector.shape_cast %243 : vector<1x32x32xf32> to vector<32x32xf32>
    %cst_193 = arith.constant dense<0.000000e+00> : vector<2x32xf32>
    %245 = tpu.matmul %135, %244, %cst_193 {dimension_numbers = #tpu.dot_dimension_numbers<[1], [0], [0], [1], [0, 0, 1, 1], [], []>} : vector<2x32xf32>, vector<32x32xf32>, vector<2x32xf32> -> vector<2x32xf32>
    %c2_194 = arith.constant 2 : index
    %c0_195 = arith.constant 0 : index
    %c0_196 = arith.constant 0 : index
    %246 = vector.load %arg10[%c2_194, %c0_195, %c0_196] : memref<3x1x32xf32, #tpu.memory_space<vmem>>, vector<1x1x32xf32>
    %247 = vector.shape_cast %246 : vector<1x1x32xf32> to vector<1x32xf32>
    %248 = vector.broadcast %247 : vector<1x32xf32> to vector<2x32xf32>
    %249 = arith.addf %245, %248 : vector<2x32xf32>
    %250 = arith.addf %214, %235 : vector<2x32xf32>
    %251 = arith.negf %250 : vector<2x32xf32>
    %252 = math.exp %251 : vector<2x32xf32>
    %cst_197 = arith.constant 1.000000e+00 : f32
    %253 = vector.broadcast %cst_197 : f32 to vector<2x32xf32>
    %254 = arith.addf %253, %252 : vector<2x32xf32>
    %255 = arith.divf %253, %254 : vector<2x32xf32>
    %256 = arith.addf %221, %242 : vector<2x32xf32>
    %257 = arith.negf %256 : vector<2x32xf32>
    %258 = math.exp %257 : vector<2x32xf32>
    %cst_198 = arith.constant 1.000000e+00 : f32
    %259 = vector.broadcast %cst_198 : f32 to vector<2x32xf32>
    %260 = arith.addf %259, %258 : vector<2x32xf32>
    %261 = arith.divf %259, %260 : vector<2x32xf32>
    %262 = arith.mulf %255, %249 : vector<2x32xf32>
    %263 = arith.addf %228, %262 : vector<2x32xf32>
    %264 = math.tanh %263 : vector<2x32xf32>
    %cst_199 = arith.constant 1.000000e+00 : f32
    %265 = vector.broadcast %cst_199 : f32 to vector<2x32xf32>
    %266 = arith.subf %265, %261 : vector<2x32xf32>
    %267 = arith.mulf %266, %264 : vector<2x32xf32>
    %268 = arith.mulf %261, %135 : vector<2x32xf32>
    %269 = arith.addf %267, %268 : vector<2x32xf32>
    %c6_200 = arith.constant 6 : index
    %c0_201 = arith.constant 0 : index
    %c0_202 = arith.constant 0 : index
    %270 = vector.load %arg12[%c6_200, %c0_201, %c0_202] : memref<8x2x32xf32, #tpu.memory_space<vmem>>, vector<1x2x32xf32>
    %271 = vector.shape_cast %270 : vector<1x2x32xf32> to vector<2x32xf32>
    %272 = vector.shape_cast %269 : vector<2x32xf32> to vector<1x2x32xf32>
    tpu.vector_store %arg12[%c6_200, %c0_201, %c0_202], %272 {strides = array<i32>} : memref<8x2x32xf32, #tpu.memory_space<vmem>>, vector<1x2x32xf32>,
    %c2_203 = arith.constant 2 : index
    %c0_204 = arith.constant 0 : index
    %c0_205 = arith.constant 0 : index
    %273 = vector.load %arg1[%c2_203, %c0_204, %c0_205] : memref<8x2x16xf32, #tpu.memory_space<vmem>>, vector<1x2x16xf32>
    %274 = vector.shape_cast %273 : vector<1x2x16xf32> to vector<2x16xf32>
    %c0_206 = arith.constant 0 : index
    %c0_207 = arith.constant 0 : index
    %c0_208 = arith.constant 0 : index
    %275 = vector.load %arg3[%c0_206, %c0_207, %c0_208] : memref<3x16x32xf32, #tpu.memory_space<vmem>>, vector<1x16x32xf32>
    %276 = vector.shape_cast %275 : vector<1x16x32xf32> to vector<16x32xf32>
    %cst_209 = arith.constant dense<0.000000e+00> : vector<2x32xf32>
    %277 = tpu.matmul %274, %276, %cst_209 {dimension_numbers = #tpu.dot_dimension_numbers<[1], [0], [0], [1], [0, 0, 1, 1], [], []>} : vector<2x16xf32>, vector<16x32xf32>, vector<2x32xf32> -> vector<2x32xf32>
    %c0_210 = arith.constant 0 : index
    %c0_211 = arith.constant 0 : index
    %c0_212 = arith.constant 0 : index
    %278 = vector.load %arg5[%c0_210, %c0_211, %c0_212] : memref<3x1x32xf32, #tpu.memory_space<vmem>>, vector<1x1x32xf32>
    %279 = vector.shape_cast %278 : vector<1x1x32xf32> to vector<1x32xf32>
    %280 = vector.broadcast %279 : vector<1x32xf32> to vector<2x32xf32>
    %281 = arith.addf %277, %280 : vector<2x32xf32>
    %c1_213 = arith.constant 1 : index
    %c0_214 = arith.constant 0 : index
    %c0_215 = arith.constant 0 : index
    %282 = vector.load %arg3[%c1_213, %c0_214, %c0_215] : memref<3x16x32xf32, #tpu.memory_space<vmem>>, vector<1x16x32xf32>
    %283 = vector.shape_cast %282 : vector<1x16x32xf32> to vector<16x32xf32>
    %cst_216 = arith.constant dense<0.000000e+00> : vector<2x32xf32>
    %284 = tpu.matmul %274, %283, %cst_216 {dimension_numbers = #tpu.dot_dimension_numbers<[1], [0], [0], [1], [0, 0, 1, 1], [], []>} : vector<2x16xf32>, vector<16x32xf32>, vector<2x32xf32> -> vector<2x32xf32>
    %c1_217 = arith.constant 1 : index
    %c0_218 = arith.constant 0 : index
    %c0_219 = arith.constant 0 : index
    %285 = vector.load %arg5[%c1_217, %c0_218, %c0_219] : memref<3x1x32xf32, #tpu.memory_space<vmem>>, vector<1x1x32xf32>
    %286 = vector.shape_cast %285 : vector<1x1x32xf32> to vector<1x32xf32>
    %287 = vector.broadcast %286 : vector<1x32xf32> to vector<2x32xf32>
    %288 = arith.addf %284, %287 : vector<2x32xf32>
    %c2_220 = arith.constant 2 : index
    %c0_221 = arith.constant 0 : index
    %c0_222 = arith.constant 0 : index
    %289 = vector.load %arg3[%c2_220, %c0_221, %c0_222] : memref<3x16x32xf32, #tpu.memory_space<vmem>>, vector<1x16x32xf32>
    %290 = vector.shape_cast %289 : vector<1x16x32xf32> to vector<16x32xf32>
    %cst_223 = arith.constant dense<0.000000e+00> : vector<2x32xf32>
    %291 = tpu.matmul %274, %290, %cst_223 {dimension_numbers = #tpu.dot_dimension_numbers<[1], [0], [0], [1], [0, 0, 1, 1], [], []>} : vector<2x16xf32>, vector<16x32xf32>, vector<2x32xf32> -> vector<2x32xf32>
    %c2_224 = arith.constant 2 : index
    %c0_225 = arith.constant 0 : index
    %c0_226 = arith.constant 0 : index
    %292 = vector.load %arg5[%c2_224, %c0_225, %c0_226] : memref<3x1x32xf32, #tpu.memory_space<vmem>>, vector<1x1x32xf32>
    %293 = vector.shape_cast %292 : vector<1x1x32xf32> to vector<1x32xf32>
    %294 = vector.broadcast %293 : vector<1x32xf32> to vector<2x32xf32>
    %295 = arith.addf %291, %294 : vector<2x32xf32>
    %c0_227 = arith.constant 0 : index
    %c0_228 = arith.constant 0 : index
    %c0_229 = arith.constant 0 : index
    %296 = vector.load %arg4[%c0_227, %c0_228, %c0_229] : memref<3x32x32xf32, #tpu.memory_space<vmem>>, vector<1x32x32xf32>
    %297 = vector.shape_cast %296 : vector<1x32x32xf32> to vector<32x32xf32>
    %cst_230 = arith.constant dense<0.000000e+00> : vector<2x32xf32>
    %298 = tpu.matmul %202, %297, %cst_230 {dimension_numbers = #tpu.dot_dimension_numbers<[1], [0], [0], [1], [0, 0, 1, 1], [], []>} : vector<2x32xf32>, vector<32x32xf32>, vector<2x32xf32> -> vector<2x32xf32>
    %c0_231 = arith.constant 0 : index
    %c0_232 = arith.constant 0 : index
    %c0_233 = arith.constant 0 : index
    %299 = vector.load %arg6[%c0_231, %c0_232, %c0_233] : memref<3x1x32xf32, #tpu.memory_space<vmem>>, vector<1x1x32xf32>
    %300 = vector.shape_cast %299 : vector<1x1x32xf32> to vector<1x32xf32>
    %301 = vector.broadcast %300 : vector<1x32xf32> to vector<2x32xf32>
    %302 = arith.addf %298, %301 : vector<2x32xf32>
    %c1_234 = arith.constant 1 : index
    %c0_235 = arith.constant 0 : index
    %c0_236 = arith.constant 0 : index
    %303 = vector.load %arg4[%c1_234, %c0_235, %c0_236] : memref<3x32x32xf32, #tpu.memory_space<vmem>>, vector<1x32x32xf32>
    %304 = vector.shape_cast %303 : vector<1x32x32xf32> to vector<32x32xf32>
    %cst_237 = arith.constant dense<0.000000e+00> : vector<2x32xf32>
    %305 = tpu.matmul %202, %304, %cst_237 {dimension_numbers = #tpu.dot_dimension_numbers<[1], [0], [0], [1], [0, 0, 1, 1], [], []>} : vector<2x32xf32>, vector<32x32xf32>, vector<2x32xf32> -> vector<2x32xf32>
    %c1_238 = arith.constant 1 : index
    %c0_239 = arith.constant 0 : index
    %c0_240 = arith.constant 0 : index
    %306 = vector.load %arg6[%c1_238, %c0_239, %c0_240] : memref<3x1x32xf32, #tpu.memory_space<vmem>>, vector<1x1x32xf32>
    %307 = vector.shape_cast %306 : vector<1x1x32xf32> to vector<1x32xf32>
    %308 = vector.broadcast %307 : vector<1x32xf32> to vector<2x32xf32>
    %309 = arith.addf %305, %308 : vector<2x32xf32>
    %c2_241 = arith.constant 2 : index
    %c0_242 = arith.constant 0 : index
    %c0_243 = arith.constant 0 : index
    %310 = vector.load %arg4[%c2_241, %c0_242, %c0_243] : memref<3x32x32xf32, #tpu.memory_space<vmem>>, vector<1x32x32xf32>
    %311 = vector.shape_cast %310 : vector<1x32x32xf32> to vector<32x32xf32>
    %cst_244 = arith.constant dense<0.000000e+00> : vector<2x32xf32>
    %312 = tpu.matmul %202, %311, %cst_244 {dimension_numbers = #tpu.dot_dimension_numbers<[1], [0], [0], [1], [0, 0, 1, 1], [], []>} : vector<2x32xf32>, vector<32x32xf32>, vector<2x32xf32> -> vector<2x32xf32>
    %c2_245 = arith.constant 2 : index
    %c0_246 = arith.constant 0 : index
    %c0_247 = arith.constant 0 : index
    %313 = vector.load %arg6[%c2_245, %c0_246, %c0_247] : memref<3x1x32xf32, #tpu.memory_space<vmem>>, vector<1x1x32xf32>
    %314 = vector.shape_cast %313 : vector<1x1x32xf32> to vector<1x32xf32>
    %315 = vector.broadcast %314 : vector<1x32xf32> to vector<2x32xf32>
    %316 = arith.addf %312, %315 : vector<2x32xf32>
    %317 = arith.addf %281, %302 : vector<2x32xf32>
    %318 = arith.negf %317 : vector<2x32xf32>
    %319 = math.exp %318 : vector<2x32xf32>
    %cst_248 = arith.constant 1.000000e+00 : f32
    %320 = vector.broadcast %cst_248 : f32 to vector<2x32xf32>
    %321 = arith.addf %320, %319 : vector<2x32xf32>
    %322 = arith.divf %320, %321 : vector<2x32xf32>
    %323 = arith.addf %288, %309 : vector<2x32xf32>
    %324 = arith.negf %323 : vector<2x32xf32>
    %325 = math.exp %324 : vector<2x32xf32>
    %cst_249 = arith.constant 1.000000e+00 : f32
    %326 = vector.broadcast %cst_249 : f32 to vector<2x32xf32>
    %327 = arith.addf %326, %325 : vector<2x32xf32>
    %328 = arith.divf %326, %327 : vector<2x32xf32>
    %329 = arith.mulf %322, %316 : vector<2x32xf32>
    %330 = arith.addf %295, %329 : vector<2x32xf32>
    %331 = math.tanh %330 : vector<2x32xf32>
    %cst_250 = arith.constant 1.000000e+00 : f32
    %332 = vector.broadcast %cst_250 : f32 to vector<2x32xf32>
    %333 = arith.subf %332, %328 : vector<2x32xf32>
    %334 = arith.mulf %333, %331 : vector<2x32xf32>
    %335 = arith.mulf %328, %202 : vector<2x32xf32>
    %336 = arith.addf %334, %335 : vector<2x32xf32>
    %c2_251 = arith.constant 2 : index
    %c0_252 = arith.constant 0 : index
    %c0_253 = arith.constant 0 : index
    %337 = vector.load %arg11[%c2_251, %c0_252, %c0_253] : memref<8x2x32xf32, #tpu.memory_space<vmem>>, vector<1x2x32xf32>
    %338 = vector.shape_cast %337 : vector<1x2x32xf32> to vector<2x32xf32>
    %339 = vector.shape_cast %336 : vector<2x32xf32> to vector<1x2x32xf32>
    tpu.vector_store %arg11[%c2_251, %c0_252, %c0_253], %339 {strides = array<i32>} : memref<8x2x32xf32, #tpu.memory_space<vmem>>, vector<1x2x32xf32>,
    %c5 = arith.constant 5 : index
    %c0_254 = arith.constant 0 : index
    %c0_255 = arith.constant 0 : index
    %340 = vector.load %arg2[%c5, %c0_254, %c0_255] : memref<8x2x16xf32, #tpu.memory_space<vmem>>, vector<1x2x16xf32>
    %341 = vector.shape_cast %340 : vector<1x2x16xf32> to vector<2x16xf32>
    %c0_256 = arith.constant 0 : index
    %c0_257 = arith.constant 0 : index
    %c0_258 = arith.constant 0 : index
    %342 = vector.load %arg7[%c0_256, %c0_257, %c0_258] : memref<3x16x32xf32, #tpu.memory_space<vmem>>, vector<1x16x32xf32>
    %343 = vector.shape_cast %342 : vector<1x16x32xf32> to vector<16x32xf32>
    %cst_259 = arith.constant dense<0.000000e+00> : vector<2x32xf32>
    %344 = tpu.matmul %341, %343, %cst_259 {dimension_numbers = #tpu.dot_dimension_numbers<[1], [0], [0], [1], [0, 0, 1, 1], [], []>} : vector<2x16xf32>, vector<16x32xf32>, vector<2x32xf32> -> vector<2x32xf32>
    %c0_260 = arith.constant 0 : index
    %c0_261 = arith.constant 0 : index
    %c0_262 = arith.constant 0 : index
    %345 = vector.load %arg9[%c0_260, %c0_261, %c0_262] : memref<3x1x32xf32, #tpu.memory_space<vmem>>, vector<1x1x32xf32>
    %346 = vector.shape_cast %345 : vector<1x1x32xf32> to vector<1x32xf32>
    %347 = vector.broadcast %346 : vector<1x32xf32> to vector<2x32xf32>
    %348 = arith.addf %344, %347 : vector<2x32xf32>
    %c1_263 = arith.constant 1 : index
    %c0_264 = arith.constant 0 : index
    %c0_265 = arith.constant 0 : index
    %349 = vector.load %arg7[%c1_263, %c0_264, %c0_265] : memref<3x16x32xf32, #tpu.memory_space<vmem>>, vector<1x16x32xf32>
    %350 = vector.shape_cast %349 : vector<1x16x32xf32> to vector<16x32xf32>
    %cst_266 = arith.constant dense<0.000000e+00> : vector<2x32xf32>
    %351 = tpu.matmul %341, %350, %cst_266 {dimension_numbers = #tpu.dot_dimension_numbers<[1], [0], [0], [1], [0, 0, 1, 1], [], []>} : vector<2x16xf32>, vector<16x32xf32>, vector<2x32xf32> -> vector<2x32xf32>
    %c1_267 = arith.constant 1 : index
    %c0_268 = arith.constant 0 : index
    %c0_269 = arith.constant 0 : index
    %352 = vector.load %arg9[%c1_267, %c0_268, %c0_269] : memref<3x1x32xf32, #tpu.memory_space<vmem>>, vector<1x1x32xf32>
    %353 = vector.shape_cast %352 : vector<1x1x32xf32> to vector<1x32xf32>
    %354 = vector.broadcast %353 : vector<1x32xf32> to vector<2x32xf32>
    %355 = arith.addf %351, %354 : vector<2x32xf32>
    %c2_270 = arith.constant 2 : index
    %c0_271 = arith.constant 0 : index
    %c0_272 = arith.constant 0 : index
    %356 = vector.load %arg7[%c2_270, %c0_271, %c0_272] : memref<3x16x32xf32, #tpu.memory_space<vmem>>, vector<1x16x32xf32>
    %357 = vector.shape_cast %356 : vector<1x16x32xf32> to vector<16x32xf32>
    %cst_273 = arith.constant dense<0.000000e+00> : vector<2x32xf32>
    %358 = tpu.matmul %341, %357, %cst_273 {dimension_numbers = #tpu.dot_dimension_numbers<[1], [0], [0], [1], [0, 0, 1, 1], [], []>} : vector<2x16xf32>, vector<16x32xf32>, vector<2x32xf32> -> vector<2x32xf32>
    %c2_274 = arith.constant 2 : index
    %c0_275 = arith.constant 0 : index
    %c0_276 = arith.constant 0 : index
    %359 = vector.load %arg9[%c2_274, %c0_275, %c0_276] : memref<3x1x32xf32, #tpu.memory_space<vmem>>, vector<1x1x32xf32>
    %360 = vector.shape_cast %359 : vector<1x1x32xf32> to vector<1x32xf32>
    %361 = vector.broadcast %360 : vector<1x32xf32> to vector<2x32xf32>
    %362 = arith.addf %358, %361 : vector<2x32xf32>
    %c0_277 = arith.constant 0 : index
    %c0_278 = arith.constant 0 : index
    %c0_279 = arith.constant 0 : index
    %363 = vector.load %arg8[%c0_277, %c0_278, %c0_279] : memref<3x32x32xf32, #tpu.memory_space<vmem>>, vector<1x32x32xf32>
    %364 = vector.shape_cast %363 : vector<1x32x32xf32> to vector<32x32xf32>
    %cst_280 = arith.constant dense<0.000000e+00> : vector<2x32xf32>
    %365 = tpu.matmul %269, %364, %cst_280 {dimension_numbers = #tpu.dot_dimension_numbers<[1], [0], [0], [1], [0, 0, 1, 1], [], []>} : vector<2x32xf32>, vector<32x32xf32>, vector<2x32xf32> -> vector<2x32xf32>
    %c0_281 = arith.constant 0 : index
    %c0_282 = arith.constant 0 : index
    %c0_283 = arith.constant 0 : index
    %366 = vector.load %arg10[%c0_281, %c0_282, %c0_283] : memref<3x1x32xf32, #tpu.memory_space<vmem>>, vector<1x1x32xf32>
    %367 = vector.shape_cast %366 : vector<1x1x32xf32> to vector<1x32xf32>
    %368 = vector.broadcast %367 : vector<1x32xf32> to vector<2x32xf32>
    %369 = arith.addf %365, %368 : vector<2x32xf32>
    %c1_284 = arith.constant 1 : index
    %c0_285 = arith.constant 0 : index
    %c0_286 = arith.constant 0 : index
    %370 = vector.load %arg8[%c1_284, %c0_285, %c0_286] : memref<3x32x32xf32, #tpu.memory_space<vmem>>, vector<1x32x32xf32>
    %371 = vector.shape_cast %370 : vector<1x32x32xf32> to vector<32x32xf32>
    %cst_287 = arith.constant dense<0.000000e+00> : vector<2x32xf32>
    %372 = tpu.matmul %269, %371, %cst_287 {dimension_numbers = #tpu.dot_dimension_numbers<[1], [0], [0], [1], [0, 0, 1, 1], [], []>} : vector<2x32xf32>, vector<32x32xf32>, vector<2x32xf32> -> vector<2x32xf32>
    %c1_288 = arith.constant 1 : index
    %c0_289 = arith.constant 0 : index
    %c0_290 = arith.constant 0 : index
    %373 = vector.load %arg10[%c1_288, %c0_289, %c0_290] : memref<3x1x32xf32, #tpu.memory_space<vmem>>, vector<1x1x32xf32>
    %374 = vector.shape_cast %373 : vector<1x1x32xf32> to vector<1x32xf32>
    %375 = vector.broadcast %374 : vector<1x32xf32> to vector<2x32xf32>
    %376 = arith.addf %372, %375 : vector<2x32xf32>
    %c2_291 = arith.constant 2 : index
    %c0_292 = arith.constant 0 : index
    %c0_293 = arith.constant 0 : index
    %377 = vector.load %arg8[%c2_291, %c0_292, %c0_293] : memref<3x32x32xf32, #tpu.memory_space<vmem>>, vector<1x32x32xf32>
    %378 = vector.shape_cast %377 : vector<1x32x32xf32> to vector<32x32xf32>
    %cst_294 = arith.constant dense<0.000000e+00> : vector<2x32xf32>
    %379 = tpu.matmul %269, %378, %cst_294 {dimension_numbers = #tpu.dot_dimension_numbers<[1], [0], [0], [1], [0, 0, 1, 1], [], []>} : vector<2x32xf32>, vector<32x32xf32>, vector<2x32xf32> -> vector<2x32xf32>
    %c2_295 = arith.constant 2 : index
    %c0_296 = arith.constant 0 : index
    %c0_297 = arith.constant 0 : index
    %380 = vector.load %arg10[%c2_295, %c0_296, %c0_297] : memref<3x1x32xf32, #tpu.memory_space<vmem>>, vector<1x1x32xf32>
    %381 = vector.shape_cast %380 : vector<1x1x32xf32> to vector<1x32xf32>
    %382 = vector.broadcast %381 : vector<1x32xf32> to vector<2x32xf32>
    %383 = arith.addf %379, %382 : vector<2x32xf32>
    %384 = arith.addf %348, %369 : vector<2x32xf32>
    %385 = arith.negf %384 : vector<2x32xf32>
    %386 = math.exp %385 : vector<2x32xf32>
    %cst_298 = arith.constant 1.000000e+00 : f32
    %387 = vector.broadcast %cst_298 : f32 to vector<2x32xf32>
    %388 = arith.addf %387, %386 : vector<2x32xf32>
    %389 = arith.divf %387, %388 : vector<2x32xf32>
    %390 = arith.addf %355, %376 : vector<2x32xf32>
    %391 = arith.negf %390 : vector<2x32xf32>
    %392 = math.exp %391 : vector<2x32xf32>
    %cst_299 = arith.constant 1.000000e+00 : f32
    %393 = vector.broadcast %cst_299 : f32 to vector<2x32xf32>
    %394 = arith.addf %393, %392 : vector<2x32xf32>
    %395 = arith.divf %393, %394 : vector<2x32xf32>
    %396 = arith.mulf %389, %383 : vector<2x32xf32>
    %397 = arith.addf %362, %396 : vector<2x32xf32>
    %398 = math.tanh %397 : vector<2x32xf32>
    %cst_300 = arith.constant 1.000000e+00 : f32
    %399 = vector.broadcast %cst_300 : f32 to vector<2x32xf32>
    %400 = arith.subf %399, %395 : vector<2x32xf32>
    %401 = arith.mulf %400, %398 : vector<2x32xf32>
    %402 = arith.mulf %395, %269 : vector<2x32xf32>
    %403 = arith.addf %401, %402 : vector<2x32xf32>
    %c5_301 = arith.constant 5 : index
    %c0_302 = arith.constant 0 : index
    %c0_303 = arith.constant 0 : index
    %404 = vector.load %arg12[%c5_301, %c0_302, %c0_303] : memref<8x2x32xf32, #tpu.memory_space<vmem>>, vector<1x2x32xf32>
    %405 = vector.shape_cast %404 : vector<1x2x32xf32> to vector<2x32xf32>
    %406 = vector.shape_cast %403 : vector<2x32xf32> to vector<1x2x32xf32>
    tpu.vector_store %arg12[%c5_301, %c0_302, %c0_303], %406 {strides = array<i32>} : memref<8x2x32xf32, #tpu.memory_space<vmem>>, vector<1x2x32xf32>,
    %c3 = arith.constant 3 : index
    %c0_304 = arith.constant 0 : index
    %c0_305 = arith.constant 0 : index
    %407 = vector.load %arg1[%c3, %c0_304, %c0_305] : memref<8x2x16xf32, #tpu.memory_space<vmem>>, vector<1x2x16xf32>
    %408 = vector.shape_cast %407 : vector<1x2x16xf32> to vector<2x16xf32>
    %c0_306 = arith.constant 0 : index
    %c0_307 = arith.constant 0 : index
    %c0_308 = arith.constant 0 : index
    %409 = vector.load %arg3[%c0_306, %c0_307, %c0_308] : memref<3x16x32xf32, #tpu.memory_space<vmem>>, vector<1x16x32xf32>
    %410 = vector.shape_cast %409 : vector<1x16x32xf32> to vector<16x32xf32>
    %cst_309 = arith.constant dense<0.000000e+00> : vector<2x32xf32>
    %411 = tpu.matmul %408, %410, %cst_309 {dimension_numbers = #tpu.dot_dimension_numbers<[1], [0], [0], [1], [0, 0, 1, 1], [], []>} : vector<2x16xf32>, vector<16x32xf32>, vector<2x32xf32> -> vector<2x32xf32>
    %c0_310 = arith.constant 0 : index
    %c0_311 = arith.constant 0 : index
    %c0_312 = arith.constant 0 : index
    %412 = vector.load %arg5[%c0_310, %c0_311, %c0_312] : memref<3x1x32xf32, #tpu.memory_space<vmem>>, vector<1x1x32xf32>
    %413 = vector.shape_cast %412 : vector<1x1x32xf32> to vector<1x32xf32>
    %414 = vector.broadcast %413 : vector<1x32xf32> to vector<2x32xf32>
    %415 = arith.addf %411, %414 : vector<2x32xf32>
    %c1_313 = arith.constant 1 : index
    %c0_314 = arith.constant 0 : index
    %c0_315 = arith.constant 0 : index
    %416 = vector.load %arg3[%c1_313, %c0_314, %c0_315] : memref<3x16x32xf32, #tpu.memory_space<vmem>>, vector<1x16x32xf32>
    %417 = vector.shape_cast %416 : vector<1x16x32xf32> to vector<16x32xf32>
    %cst_316 = arith.constant dense<0.000000e+00> : vector<2x32xf32>
    %418 = tpu.matmul %408, %417, %cst_316 {dimension_numbers = #tpu.dot_dimension_numbers<[1], [0], [0], [1], [0, 0, 1, 1], [], []>} : vector<2x16xf32>, vector<16x32xf32>, vector<2x32xf32> -> vector<2x32xf32>
    %c1_317 = arith.constant 1 : index
    %c0_318 = arith.constant 0 : index
    %c0_319 = arith.constant 0 : index
    %419 = vector.load %arg5[%c1_317, %c0_318, %c0_319] : memref<3x1x32xf32, #tpu.memory_space<vmem>>, vector<1x1x32xf32>
    %420 = vector.shape_cast %419 : vector<1x1x32xf32> to vector<1x32xf32>
    %421 = vector.broadcast %420 : vector<1x32xf32> to vector<2x32xf32>
    %422 = arith.addf %418, %421 : vector<2x32xf32>
    %c2_320 = arith.constant 2 : index
    %c0_321 = arith.constant 0 : index
    %c0_322 = arith.constant 0 : index
    %423 = vector.load %arg3[%c2_320, %c0_321, %c0_322] : memref<3x16x32xf32, #tpu.memory_space<vmem>>, vector<1x16x32xf32>
    %424 = vector.shape_cast %423 : vector<1x16x32xf32> to vector<16x32xf32>
    %cst_323 = arith.constant dense<0.000000e+00> : vector<2x32xf32>
    %425 = tpu.matmul %408, %424, %cst_323 {dimension_numbers = #tpu.dot_dimension_numbers<[1], [0], [0], [1], [0, 0, 1, 1], [], []>} : vector<2x16xf32>, vector<16x32xf32>, vector<2x32xf32> -> vector<2x32xf32>
    %c2_324 = arith.constant 2 : index
    %c0_325 = arith.constant 0 : index
    %c0_326 = arith.constant 0 : index
    %426 = vector.load %arg5[%c2_324, %c0_325, %c0_326] : memref<3x1x32xf32, #tpu.memory_space<vmem>>, vector<1x1x32xf32>
    %427 = vector.shape_cast %426 : vector<1x1x32xf32> to vector<1x32xf32>
    %428 = vector.broadcast %427 : vector<1x32xf32> to vector<2x32xf32>
    %429 = arith.addf %425, %428 : vector<2x32xf32>
    %c0_327 = arith.constant 0 : index
    %c0_328 = arith.constant 0 : index
    %c0_329 = arith.constant 0 : index
    %430 = vector.load %arg4[%c0_327, %c0_328, %c0_329] : memref<3x32x32xf32, #tpu.memory_space<vmem>>, vector<1x32x32xf32>
    %431 = vector.shape_cast %430 : vector<1x32x32xf32> to vector<32x32xf32>
    %cst_330 = arith.constant dense<0.000000e+00> : vector<2x32xf32>
    %432 = tpu.matmul %336, %431, %cst_330 {dimension_numbers = #tpu.dot_dimension_numbers<[1], [0], [0], [1], [0, 0, 1, 1], [], []>} : vector<2x32xf32>, vector<32x32xf32>, vector<2x32xf32> -> vector<2x32xf32>
    %c0_331 = arith.constant 0 : index
    %c0_332 = arith.constant 0 : index
    %c0_333 = arith.constant 0 : index
    %433 = vector.load %arg6[%c0_331, %c0_332, %c0_333] : memref<3x1x32xf32, #tpu.memory_space<vmem>>, vector<1x1x32xf32>
    %434 = vector.shape_cast %433 : vector<1x1x32xf32> to vector<1x32xf32>
    %435 = vector.broadcast %434 : vector<1x32xf32> to vector<2x32xf32>
    %436 = arith.addf %432, %435 : vector<2x32xf32>
    %c1_334 = arith.constant 1 : index
    %c0_335 = arith.constant 0 : index
    %c0_336 = arith.constant 0 : index
    %437 = vector.load %arg4[%c1_334, %c0_335, %c0_336] : memref<3x32x32xf32, #tpu.memory_space<vmem>>, vector<1x32x32xf32>
    %438 = vector.shape_cast %437 : vector<1x32x32xf32> to vector<32x32xf32>
    %cst_337 = arith.constant dense<0.000000e+00> : vector<2x32xf32>
    %439 = tpu.matmul %336, %438, %cst_337 {dimension_numbers = #tpu.dot_dimension_numbers<[1], [0], [0], [1], [0, 0, 1, 1], [], []>} : vector<2x32xf32>, vector<32x32xf32>, vector<2x32xf32> -> vector<2x32xf32>
    %c1_338 = arith.constant 1 : index
    %c0_339 = arith.constant 0 : index
    %c0_340 = arith.constant 0 : index
    %440 = vector.load %arg6[%c1_338, %c0_339, %c0_340] : memref<3x1x32xf32, #tpu.memory_space<vmem>>, vector<1x1x32xf32>
    %441 = vector.shape_cast %440 : vector<1x1x32xf32> to vector<1x32xf32>
    %442 = vector.broadcast %441 : vector<1x32xf32> to vector<2x32xf32>
    %443 = arith.addf %439, %442 : vector<2x32xf32>
    %c2_341 = arith.constant 2 : index
    %c0_342 = arith.constant 0 : index
    %c0_343 = arith.constant 0 : index
    %444 = vector.load %arg4[%c2_341, %c0_342, %c0_343] : memref<3x32x32xf32, #tpu.memory_space<vmem>>, vector<1x32x32xf32>
    %445 = vector.shape_cast %444 : vector<1x32x32xf32> to vector<32x32xf32>
    %cst_344 = arith.constant dense<0.000000e+00> : vector<2x32xf32>
    %446 = tpu.matmul %336, %445, %cst_344 {dimension_numbers = #tpu.dot_dimension_numbers<[1], [0], [0], [1], [0, 0, 1, 1], [], []>} : vector<2x32xf32>, vector<32x32xf32>, vector<2x32xf32> -> vector<2x32xf32>
    %c2_345 = arith.constant 2 : index
    %c0_346 = arith.constant 0 : index
    %c0_347 = arith.constant 0 : index
    %447 = vector.load %arg6[%c2_345, %c0_346, %c0_347] : memref<3x1x32xf32, #tpu.memory_space<vmem>>, vector<1x1x32xf32>
    %448 = vector.shape_cast %447 : vector<1x1x32xf32> to vector<1x32xf32>
    %449 = vector.broadcast %448 : vector<1x32xf32> to vector<2x32xf32>
    %450 = arith.addf %446, %449 : vector<2x32xf32>
    %451 = arith.addf %415, %436 : vector<2x32xf32>
    %452 = arith.negf %451 : vector<2x32xf32>
    %453 = math.exp %452 : vector<2x32xf32>
    %cst_348 = arith.constant 1.000000e+00 : f32
    %454 = vector.broadcast %cst_348 : f32 to vector<2x32xf32>
    %455 = arith.addf %454, %453 : vector<2x32xf32>
    %456 = arith.divf %454, %455 : vector<2x32xf32>
    %457 = arith.addf %422, %443 : vector<2x32xf32>
    %458 = arith.negf %457 : vector<2x32xf32>
    %459 = math.exp %458 : vector<2x32xf32>
    %cst_349 = arith.constant 1.000000e+00 : f32
    %460 = vector.broadcast %cst_349 : f32 to vector<2x32xf32>
    %461 = arith.addf %460, %459 : vector<2x32xf32>
    %462 = arith.divf %460, %461 : vector<2x32xf32>
    %463 = arith.mulf %456, %450 : vector<2x32xf32>
    %464 = arith.addf %429, %463 : vector<2x32xf32>
    %465 = math.tanh %464 : vector<2x32xf32>
    %cst_350 = arith.constant 1.000000e+00 : f32
    %466 = vector.broadcast %cst_350 : f32 to vector<2x32xf32>
    %467 = arith.subf %466, %462 : vector<2x32xf32>
    %468 = arith.mulf %467, %465 : vector<2x32xf32>
    %469 = arith.mulf %462, %336 : vector<2x32xf32>
    %470 = arith.addf %468, %469 : vector<2x32xf32>
    %c3_351 = arith.constant 3 : index
    %c0_352 = arith.constant 0 : index
    %c0_353 = arith.constant 0 : index
    %471 = vector.load %arg11[%c3_351, %c0_352, %c0_353] : memref<8x2x32xf32, #tpu.memory_space<vmem>>, vector<1x2x32xf32>
    %472 = vector.shape_cast %471 : vector<1x2x32xf32> to vector<2x32xf32>
    %473 = vector.shape_cast %470 : vector<2x32xf32> to vector<1x2x32xf32>
    tpu.vector_store %arg11[%c3_351, %c0_352, %c0_353], %473 {strides = array<i32>} : memref<8x2x32xf32, #tpu.memory_space<vmem>>, vector<1x2x32xf32>,
    %c4 = arith.constant 4 : index
    %c0_354 = arith.constant 0 : index
    %c0_355 = arith.constant 0 : index
    %474 = vector.load %arg2[%c4, %c0_354, %c0_355] : memref<8x2x16xf32, #tpu.memory_space<vmem>>, vector<1x2x16xf32>
    %475 = vector.shape_cast %474 : vector<1x2x16xf32> to vector<2x16xf32>
    %c0_356 = arith.constant 0 : index
    %c0_357 = arith.constant 0 : index
    %c0_358 = arith.constant 0 : index
    %476 = vector.load %arg7[%c0_356, %c0_357, %c0_358] : memref<3x16x32xf32, #tpu.memory_space<vmem>>, vector<1x16x32xf32>
    %477 = vector.shape_cast %476 : vector<1x16x32xf32> to vector<16x32xf32>
    %cst_359 = arith.constant dense<0.000000e+00> : vector<2x32xf32>
    %478 = tpu.matmul %475, %477, %cst_359 {dimension_numbers = #tpu.dot_dimension_numbers<[1], [0], [0], [1], [0, 0, 1, 1], [], []>} : vector<2x16xf32>, vector<16x32xf32>, vector<2x32xf32> -> vector<2x32xf32>
    %c0_360 = arith.constant 0 : index
    %c0_361 = arith.constant 0 : index
    %c0_362 = arith.constant 0 : index
    %479 = vector.load %arg9[%c0_360, %c0_361, %c0_362] : memref<3x1x32xf32, #tpu.memory_space<vmem>>, vector<1x1x32xf32>
    %480 = vector.shape_cast %479 : vector<1x1x32xf32> to vector<1x32xf32>
    %481 = vector.broadcast %480 : vector<1x32xf32> to vector<2x32xf32>
    %482 = arith.addf %478, %481 : vector<2x32xf32>
    %c1_363 = arith.constant 1 : index
    %c0_364 = arith.constant 0 : index
    %c0_365 = arith.constant 0 : index
    %483 = vector.load %arg7[%c1_363, %c0_364, %c0_365] : memref<3x16x32xf32, #tpu.memory_space<vmem>>, vector<1x16x32xf32>
    %484 = vector.shape_cast %483 : vector<1x16x32xf32> to vector<16x32xf32>
    %cst_366 = arith.constant dense<0.000000e+00> : vector<2x32xf32>
    %485 = tpu.matmul %475, %484, %cst_366 {dimension_numbers = #tpu.dot_dimension_numbers<[1], [0], [0], [1], [0, 0, 1, 1], [], []>} : vector<2x16xf32>, vector<16x32xf32>, vector<2x32xf32> -> vector<2x32xf32>
    %c1_367 = arith.constant 1 : index
    %c0_368 = arith.constant 0 : index
    %c0_369 = arith.constant 0 : index
    %486 = vector.load %arg9[%c1_367, %c0_368, %c0_369] : memref<3x1x32xf32, #tpu.memory_space<vmem>>, vector<1x1x32xf32>
    %487 = vector.shape_cast %486 : vector<1x1x32xf32> to vector<1x32xf32>
    %488 = vector.broadcast %487 : vector<1x32xf32> to vector<2x32xf32>
    %489 = arith.addf %485, %488 : vector<2x32xf32>
    %c2_370 = arith.constant 2 : index
    %c0_371 = arith.constant 0 : index
    %c0_372 = arith.constant 0 : index
    %490 = vector.load %arg7[%c2_370, %c0_371, %c0_372] : memref<3x16x32xf32, #tpu.memory_space<vmem>>, vector<1x16x32xf32>
    %491 = vector.shape_cast %490 : vector<1x16x32xf32> to vector<16x32xf32>
    %cst_373 = arith.constant dense<0.000000e+00> : vector<2x32xf32>
    %492 = tpu.matmul %475, %491, %cst_373 {dimension_numbers = #tpu.dot_dimension_numbers<[1], [0], [0], [1], [0, 0, 1, 1], [], []>} : vector<2x16xf32>, vector<16x32xf32>, vector<2x32xf32> -> vector<2x32xf32>
    %c2_374 = arith.constant 2 : index
    %c0_375 = arith.constant 0 : index
    %c0_376 = arith.constant 0 : index
    %493 = vector.load %arg9[%c2_374, %c0_375, %c0_376] : memref<3x1x32xf32, #tpu.memory_space<vmem>>, vector<1x1x32xf32>
    %494 = vector.shape_cast %493 : vector<1x1x32xf32> to vector<1x32xf32>
    %495 = vector.broadcast %494 : vector<1x32xf32> to vector<2x32xf32>
    %496 = arith.addf %492, %495 : vector<2x32xf32>
    %c0_377 = arith.constant 0 : index
    %c0_378 = arith.constant 0 : index
    %c0_379 = arith.constant 0 : index
    %497 = vector.load %arg8[%c0_377, %c0_378, %c0_379] : memref<3x32x32xf32, #tpu.memory_space<vmem>>, vector<1x32x32xf32>
    %498 = vector.shape_cast %497 : vector<1x32x32xf32> to vector<32x32xf32>
    %cst_380 = arith.constant dense<0.000000e+00> : vector<2x32xf32>
    %499 = tpu.matmul %403, %498, %cst_380 {dimension_numbers = #tpu.dot_dimension_numbers<[1], [0], [0], [1], [0, 0, 1, 1], [], []>} : vector<2x32xf32>, vector<32x32xf32>, vector<2x32xf32> -> vector<2x32xf32>
    %c0_381 = arith.constant 0 : index
    %c0_382 = arith.constant 0 : index
    %c0_383 = arith.constant 0 : index
    %500 = vector.load %arg10[%c0_381, %c0_382, %c0_383] : memref<3x1x32xf32, #tpu.memory_space<vmem>>, vector<1x1x32xf32>
    %501 = vector.shape_cast %500 : vector<1x1x32xf32> to vector<1x32xf32>
    %502 = vector.broadcast %501 : vector<1x32xf32> to vector<2x32xf32>
    %503 = arith.addf %499, %502 : vector<2x32xf32>
    %c1_384 = arith.constant 1 : index
    %c0_385 = arith.constant 0 : index
    %c0_386 = arith.constant 0 : index
    %504 = vector.load %arg8[%c1_384, %c0_385, %c0_386] : memref<3x32x32xf32, #tpu.memory_space<vmem>>, vector<1x32x32xf32>
    %505 = vector.shape_cast %504 : vector<1x32x32xf32> to vector<32x32xf32>
    %cst_387 = arith.constant dense<0.000000e+00> : vector<2x32xf32>
    %506 = tpu.matmul %403, %505, %cst_387 {dimension_numbers = #tpu.dot_dimension_numbers<[1], [0], [0], [1], [0, 0, 1, 1], [], []>} : vector<2x32xf32>, vector<32x32xf32>, vector<2x32xf32> -> vector<2x32xf32>
    %c1_388 = arith.constant 1 : index
    %c0_389 = arith.constant 0 : index
    %c0_390 = arith.constant 0 : index
    %507 = vector.load %arg10[%c1_388, %c0_389, %c0_390] : memref<3x1x32xf32, #tpu.memory_space<vmem>>, vector<1x1x32xf32>
    %508 = vector.shape_cast %507 : vector<1x1x32xf32> to vector<1x32xf32>
    %509 = vector.broadcast %508 : vector<1x32xf32> to vector<2x32xf32>
    %510 = arith.addf %506, %509 : vector<2x32xf32>
    %c2_391 = arith.constant 2 : index
    %c0_392 = arith.constant 0 : index
    %c0_393 = arith.constant 0 : index
    %511 = vector.load %arg8[%c2_391, %c0_392, %c0_393] : memref<3x32x32xf32, #tpu.memory_space<vmem>>, vector<1x32x32xf32>
    %512 = vector.shape_cast %511 : vector<1x32x32xf32> to vector<32x32xf32>
    %cst_394 = arith.constant dense<0.000000e+00> : vector<2x32xf32>
    %513 = tpu.matmul %403, %512, %cst_394 {dimension_numbers = #tpu.dot_dimension_numbers<[1], [0], [0], [1], [0, 0, 1, 1], [], []>} : vector<2x32xf32>, vector<32x32xf32>, vector<2x32xf32> -> vector<2x32xf32>
    %c2_395 = arith.constant 2 : index
    %c0_396 = arith.constant 0 : index
    %c0_397 = arith.constant 0 : index
    %514 = vector.load %arg10[%c2_395, %c0_396, %c0_397] : memref<3x1x32xf32, #tpu.memory_space<vmem>>, vector<1x1x32xf32>
    %515 = vector.shape_cast %514 : vector<1x1x32xf32> to vector<1x32xf32>
    %516 = vector.broadcast %515 : vector<1x32xf32> to vector<2x32xf32>
    %517 = arith.addf %513, %516 : vector<2x32xf32>
    %518 = arith.addf %482, %503 : vector<2x32xf32>
    %519 = arith.negf %518 : vector<2x32xf32>
    %520 = math.exp %519 : vector<2x32xf32>
    %cst_398 = arith.constant 1.000000e+00 : f32
    %521 = vector.broadcast %cst_398 : f32 to vector<2x32xf32>
    %522 = arith.addf %521, %520 : vector<2x32xf32>
    %523 = arith.divf %521, %522 : vector<2x32xf32>
    %524 = arith.addf %489, %510 : vector<2x32xf32>
    %525 = arith.negf %524 : vector<2x32xf32>
    %526 = math.exp %525 : vector<2x32xf32>
    %cst_399 = arith.constant 1.000000e+00 : f32
    %527 = vector.broadcast %cst_399 : f32 to vector<2x32xf32>
    %528 = arith.addf %527, %526 : vector<2x32xf32>
    %529 = arith.divf %527, %528 : vector<2x32xf32>
    %530 = arith.mulf %523, %517 : vector<2x32xf32>
    %531 = arith.addf %496, %530 : vector<2x32xf32>
    %532 = math.tanh %531 : vector<2x32xf32>
    %cst_400 = arith.constant 1.000000e+00 : f32
    %533 = vector.broadcast %cst_400 : f32 to vector<2x32xf32>
    %534 = arith.subf %533, %529 : vector<2x32xf32>
    %535 = arith.mulf %534, %532 : vector<2x32xf32>
    %536 = arith.mulf %529, %403 : vector<2x32xf32>
    %537 = arith.addf %535, %536 : vector<2x32xf32>
    %c4_401 = arith.constant 4 : index
    %c0_402 = arith.constant 0 : index
    %c0_403 = arith.constant 0 : index
    %538 = vector.load %arg12[%c4_401, %c0_402, %c0_403] : memref<8x2x32xf32, #tpu.memory_space<vmem>>, vector<1x2x32xf32>
    %539 = vector.shape_cast %538 : vector<1x2x32xf32> to vector<2x32xf32>
    %540 = vector.shape_cast %537 : vector<2x32xf32> to vector<1x2x32xf32>
    tpu.vector_store %arg12[%c4_401, %c0_402, %c0_403], %540 {strides = array<i32>} : memref<8x2x32xf32, #tpu.memory_space<vmem>>, vector<1x2x32xf32>,
    %c4_404 = arith.constant 4 : index
    %c0_405 = arith.constant 0 : index
    %c0_406 = arith.constant 0 : index
    %541 = vector.load %arg1[%c4_404, %c0_405, %c0_406] : memref<8x2x16xf32, #tpu.memory_space<vmem>>, vector<1x2x16xf32>
    %542 = vector.shape_cast %541 : vector<1x2x16xf32> to vector<2x16xf32>
    %c0_407 = arith.constant 0 : index
    %c0_408 = arith.constant 0 : index
    %c0_409 = arith.constant 0 : index
    %543 = vector.load %arg3[%c0_407, %c0_408, %c0_409] : memref<3x16x32xf32, #tpu.memory_space<vmem>>, vector<1x16x32xf32>
    %544 = vector.shape_cast %543 : vector<1x16x32xf32> to vector<16x32xf32>
    %cst_410 = arith.constant dense<0.000000e+00> : vector<2x32xf32>
    %545 = tpu.matmul %542, %544, %cst_410 {dimension_numbers = #tpu.dot_dimension_numbers<[1], [0], [0], [1], [0, 0, 1, 1], [], []>} : vector<2x16xf32>, vector<16x32xf32>, vector<2x32xf32> -> vector<2x32xf32>
    %c0_411 = arith.constant 0 : index
    %c0_412 = arith.constant 0 : index
    %c0_413 = arith.constant 0 : index
    %546 = vector.load %arg5[%c0_411, %c0_412, %c0_413] : memref<3x1x32xf32, #tpu.memory_space<vmem>>, vector<1x1x32xf32>
    %547 = vector.shape_cast %546 : vector<1x1x32xf32> to vector<1x32xf32>
    %548 = vector.broadcast %547 : vector<1x32xf32> to vector<2x32xf32>
    %549 = arith.addf %545, %548 : vector<2x32xf32>
    %c1_414 = arith.constant 1 : index
    %c0_415 = arith.constant 0 : index
    %c0_416 = arith.constant 0 : index
    %550 = vector.load %arg3[%c1_414, %c0_415, %c0_416] : memref<3x16x32xf32, #tpu.memory_space<vmem>>, vector<1x16x32xf32>
    %551 = vector.shape_cast %550 : vector<1x16x32xf32> to vector<16x32xf32>
    %cst_417 = arith.constant dense<0.000000e+00> : vector<2x32xf32>
    %552 = tpu.matmul %542, %551, %cst_417 {dimension_numbers = #tpu.dot_dimension_numbers<[1], [0], [0], [1], [0, 0, 1, 1], [], []>} : vector<2x16xf32>, vector<16x32xf32>, vector<2x32xf32> -> vector<2x32xf32>
    %c1_418 = arith.constant 1 : index
    %c0_419 = arith.constant 0 : index
    %c0_420 = arith.constant 0 : index
    %553 = vector.load %arg5[%c1_418, %c0_419, %c0_420] : memref<3x1x32xf32, #tpu.memory_space<vmem>>, vector<1x1x32xf32>
    %554 = vector.shape_cast %553 : vector<1x1x32xf32> to vector<1x32xf32>
    %555 = vector.broadcast %554 : vector<1x32xf32> to vector<2x32xf32>
    %556 = arith.addf %552, %555 : vector<2x32xf32>
    %c2_421 = arith.constant 2 : index
    %c0_422 = arith.constant 0 : index
    %c0_423 = arith.constant 0 : index
    %557 = vector.load %arg3[%c2_421, %c0_422, %c0_423] : memref<3x16x32xf32, #tpu.memory_space<vmem>>, vector<1x16x32xf32>
    %558 = vector.shape_cast %557 : vector<1x16x32xf32> to vector<16x32xf32>
    %cst_424 = arith.constant dense<0.000000e+00> : vector<2x32xf32>
    %559 = tpu.matmul %542, %558, %cst_424 {dimension_numbers = #tpu.dot_dimension_numbers<[1], [0], [0], [1], [0, 0, 1, 1], [], []>} : vector<2x16xf32>, vector<16x32xf32>, vector<2x32xf32> -> vector<2x32xf32>
    %c2_425 = arith.constant 2 : index
    %c0_426 = arith.constant 0 : index
    %c0_427 = arith.constant 0 : index
    %560 = vector.load %arg5[%c2_425, %c0_426, %c0_427] : memref<3x1x32xf32, #tpu.memory_space<vmem>>, vector<1x1x32xf32>
    %561 = vector.shape_cast %560 : vector<1x1x32xf32> to vector<1x32xf32>
    %562 = vector.broadcast %561 : vector<1x32xf32> to vector<2x32xf32>
    %563 = arith.addf %559, %562 : vector<2x32xf32>
    %c0_428 = arith.constant 0 : index
    %c0_429 = arith.constant 0 : index
    %c0_430 = arith.constant 0 : index
    %564 = vector.load %arg4[%c0_428, %c0_429, %c0_430] : memref<3x32x32xf32, #tpu.memory_space<vmem>>, vector<1x32x32xf32>
    %565 = vector.shape_cast %564 : vector<1x32x32xf32> to vector<32x32xf32>
    %cst_431 = arith.constant dense<0.000000e+00> : vector<2x32xf32>
    %566 = tpu.matmul %470, %565, %cst_431 {dimension_numbers = #tpu.dot_dimension_numbers<[1], [0], [0], [1], [0, 0, 1, 1], [], []>} : vector<2x32xf32>, vector<32x32xf32>, vector<2x32xf32> -> vector<2x32xf32>
    %c0_432 = arith.constant 0 : index
    %c0_433 = arith.constant 0 : index
    %c0_434 = arith.constant 0 : index
    %567 = vector.load %arg6[%c0_432, %c0_433, %c0_434] : memref<3x1x32xf32, #tpu.memory_space<vmem>>, vector<1x1x32xf32>
    %568 = vector.shape_cast %567 : vector<1x1x32xf32> to vector<1x32xf32>
    %569 = vector.broadcast %568 : vector<1x32xf32> to vector<2x32xf32>
    %570 = arith.addf %566, %569 : vector<2x32xf32>
    %c1_435 = arith.constant 1 : index
    %c0_436 = arith.constant 0 : index
    %c0_437 = arith.constant 0 : index
    %571 = vector.load %arg4[%c1_435, %c0_436, %c0_437] : memref<3x32x32xf32, #tpu.memory_space<vmem>>, vector<1x32x32xf32>
    %572 = vector.shape_cast %571 : vector<1x32x32xf32> to vector<32x32xf32>
    %cst_438 = arith.constant dense<0.000000e+00> : vector<2x32xf32>
    %573 = tpu.matmul %470, %572, %cst_438 {dimension_numbers = #tpu.dot_dimension_numbers<[1], [0], [0], [1], [0, 0, 1, 1], [], []>} : vector<2x32xf32>, vector<32x32xf32>, vector<2x32xf32> -> vector<2x32xf32>
    %c1_439 = arith.constant 1 : index
    %c0_440 = arith.constant 0 : index
    %c0_441 = arith.constant 0 : index
    %574 = vector.load %arg6[%c1_439, %c0_440, %c0_441] : memref<3x1x32xf32, #tpu.memory_space<vmem>>, vector<1x1x32xf32>
    %575 = vector.shape_cast %574 : vector<1x1x32xf32> to vector<1x32xf32>
    %576 = vector.broadcast %575 : vector<1x32xf32> to vector<2x32xf32>
    %577 = arith.addf %573, %576 : vector<2x32xf32>
    %c2_442 = arith.constant 2 : index
    %c0_443 = arith.constant 0 : index
    %c0_444 = arith.constant 0 : index
    %578 = vector.load %arg4[%c2_442, %c0_443, %c0_444] : memref<3x32x32xf32, #tpu.memory_space<vmem>>, vector<1x32x32xf32>
    %579 = vector.shape_cast %578 : vector<1x32x32xf32> to vector<32x32xf32>
    %cst_445 = arith.constant dense<0.000000e+00> : vector<2x32xf32>
    %580 = tpu.matmul %470, %579, %cst_445 {dimension_numbers = #tpu.dot_dimension_numbers<[1], [0], [0], [1], [0, 0, 1, 1], [], []>} : vector<2x32xf32>, vector<32x32xf32>, vector<2x32xf32> -> vector<2x32xf32>
    %c2_446 = arith.constant 2 : index
    %c0_447 = arith.constant 0 : index
    %c0_448 = arith.constant 0 : index
    %581 = vector.load %arg6[%c2_446, %c0_447, %c0_448] : memref<3x1x32xf32, #tpu.memory_space<vmem>>, vector<1x1x32xf32>
    %582 = vector.shape_cast %581 : vector<1x1x32xf32> to vector<1x32xf32>
    %583 = vector.broadcast %582 : vector<1x32xf32> to vector<2x32xf32>
    %584 = arith.addf %580, %583 : vector<2x32xf32>
    %585 = arith.addf %549, %570 : vector<2x32xf32>
    %586 = arith.negf %585 : vector<2x32xf32>
    %587 = math.exp %586 : vector<2x32xf32>
    %cst_449 = arith.constant 1.000000e+00 : f32
    %588 = vector.broadcast %cst_449 : f32 to vector<2x32xf32>
    %589 = arith.addf %588, %587 : vector<2x32xf32>
    %590 = arith.divf %588, %589 : vector<2x32xf32>
    %591 = arith.addf %556, %577 : vector<2x32xf32>
    %592 = arith.negf %591 : vector<2x32xf32>
    %593 = math.exp %592 : vector<2x32xf32>
    %cst_450 = arith.constant 1.000000e+00 : f32
    %594 = vector.broadcast %cst_450 : f32 to vector<2x32xf32>
    %595 = arith.addf %594, %593 : vector<2x32xf32>
    %596 = arith.divf %594, %595 : vector<2x32xf32>
    %597 = arith.mulf %590, %584 : vector<2x32xf32>
    %598 = arith.addf %563, %597 : vector<2x32xf32>
    %599 = math.tanh %598 : vector<2x32xf32>
    %cst_451 = arith.constant 1.000000e+00 : f32
    %600 = vector.broadcast %cst_451 : f32 to vector<2x32xf32>
    %601 = arith.subf %600, %596 : vector<2x32xf32>
    %602 = arith.mulf %601, %599 : vector<2x32xf32>
    %603 = arith.mulf %596, %470 : vector<2x32xf32>
    %604 = arith.addf %602, %603 : vector<2x32xf32>
    %c4_452 = arith.constant 4 : index
    %c0_453 = arith.constant 0 : index
    %c0_454 = arith.constant 0 : index
    %605 = vector.load %arg11[%c4_452, %c0_453, %c0_454] : memref<8x2x32xf32, #tpu.memory_space<vmem>>, vector<1x2x32xf32>
    %606 = vector.shape_cast %605 : vector<1x2x32xf32> to vector<2x32xf32>
    %607 = vector.shape_cast %604 : vector<2x32xf32> to vector<1x2x32xf32>
    tpu.vector_store %arg11[%c4_452, %c0_453, %c0_454], %607 {strides = array<i32>} : memref<8x2x32xf32, #tpu.memory_space<vmem>>, vector<1x2x32xf32>,
    %c3_455 = arith.constant 3 : index
    %c0_456 = arith.constant 0 : index
    %c0_457 = arith.constant 0 : index
    %608 = vector.load %arg2[%c3_455, %c0_456, %c0_457] : memref<8x2x16xf32, #tpu.memory_space<vmem>>, vector<1x2x16xf32>
    %609 = vector.shape_cast %608 : vector<1x2x16xf32> to vector<2x16xf32>
    %c0_458 = arith.constant 0 : index
    %c0_459 = arith.constant 0 : index
    %c0_460 = arith.constant 0 : index
    %610 = vector.load %arg7[%c0_458, %c0_459, %c0_460] : memref<3x16x32xf32, #tpu.memory_space<vmem>>, vector<1x16x32xf32>
    %611 = vector.shape_cast %610 : vector<1x16x32xf32> to vector<16x32xf32>
    %cst_461 = arith.constant dense<0.000000e+00> : vector<2x32xf32>
    %612 = tpu.matmul %609, %611, %cst_461 {dimension_numbers = #tpu.dot_dimension_numbers<[1], [0], [0], [1], [0, 0, 1, 1], [], []>} : vector<2x16xf32>, vector<16x32xf32>, vector<2x32xf32> -> vector<2x32xf32>
    %c0_462 = arith.constant 0 : index
    %c0_463 = arith.constant 0 : index
    %c0_464 = arith.constant 0 : index
    %613 = vector.load %arg9[%c0_462, %c0_463, %c0_464] : memref<3x1x32xf32, #tpu.memory_space<vmem>>, vector<1x1x32xf32>
    %614 = vector.shape_cast %613 : vector<1x1x32xf32> to vector<1x32xf32>
    %615 = vector.broadcast %614 : vector<1x32xf32> to vector<2x32xf32>
    %616 = arith.addf %612, %615 : vector<2x32xf32>
    %c1_465 = arith.constant 1 : index
    %c0_466 = arith.constant 0 : index
    %c0_467 = arith.constant 0 : index
    %617 = vector.load %arg7[%c1_465, %c0_466, %c0_467] : memref<3x16x32xf32, #tpu.memory_space<vmem>>, vector<1x16x32xf32>
    %618 = vector.shape_cast %617 : vector<1x16x32xf32> to vector<16x32xf32>
    %cst_468 = arith.constant dense<0.000000e+00> : vector<2x32xf32>
    %619 = tpu.matmul %609, %618, %cst_468 {dimension_numbers = #tpu.dot_dimension_numbers<[1], [0], [0], [1], [0, 0, 1, 1], [], []>} : vector<2x16xf32>, vector<16x32xf32>, vector<2x32xf32> -> vector<2x32xf32>
    %c1_469 = arith.constant 1 : index
    %c0_470 = arith.constant 0 : index
    %c0_471 = arith.constant 0 : index
    %620 = vector.load %arg9[%c1_469, %c0_470, %c0_471] : memref<3x1x32xf32, #tpu.memory_space<vmem>>, vector<1x1x32xf32>
    %621 = vector.shape_cast %620 : vector<1x1x32xf32> to vector<1x32xf32>
    %622 = vector.broadcast %621 : vector<1x32xf32> to vector<2x32xf32>
    %623 = arith.addf %619, %622 : vector<2x32xf32>
    %c2_472 = arith.constant 2 : index
    %c0_473 = arith.constant 0 : index
    %c0_474 = arith.constant 0 : index
    %624 = vector.load %arg7[%c2_472, %c0_473, %c0_474] : memref<3x16x32xf32, #tpu.memory_space<vmem>>, vector<1x16x32xf32>
    %625 = vector.shape_cast %624 : vector<1x16x32xf32> to vector<16x32xf32>
    %cst_475 = arith.constant dense<0.000000e+00> : vector<2x32xf32>
    %626 = tpu.matmul %609, %625, %cst_475 {dimension_numbers = #tpu.dot_dimension_numbers<[1], [0], [0], [1], [0, 0, 1, 1], [], []>} : vector<2x16xf32>, vector<16x32xf32>, vector<2x32xf32> -> vector<2x32xf32>
    %c2_476 = arith.constant 2 : index
    %c0_477 = arith.constant 0 : index
    %c0_478 = arith.constant 0 : index
    %627 = vector.load %arg9[%c2_476, %c0_477, %c0_478] : memref<3x1x32xf32, #tpu.memory_space<vmem>>, vector<1x1x32xf32>
    %628 = vector.shape_cast %627 : vector<1x1x32xf32> to vector<1x32xf32>
    %629 = vector.broadcast %628 : vector<1x32xf32> to vector<2x32xf32>
    %630 = arith.addf %626, %629 : vector<2x32xf32>
    %c0_479 = arith.constant 0 : index
    %c0_480 = arith.constant 0 : index
    %c0_481 = arith.constant 0 : index
    %631 = vector.load %arg8[%c0_479, %c0_480, %c0_481] : memref<3x32x32xf32, #tpu.memory_space<vmem>>, vector<1x32x32xf32>
    %632 = vector.shape_cast %631 : vector<1x32x32xf32> to vector<32x32xf32>
    %cst_482 = arith.constant dense<0.000000e+00> : vector<2x32xf32>
    %633 = tpu.matmul %537, %632, %cst_482 {dimension_numbers = #tpu.dot_dimension_numbers<[1], [0], [0], [1], [0, 0, 1, 1], [], []>} : vector<2x32xf32>, vector<32x32xf32>, vector<2x32xf32> -> vector<2x32xf32>
    %c0_483 = arith.constant 0 : index
    %c0_484 = arith.constant 0 : index
    %c0_485 = arith.constant 0 : index
    %634 = vector.load %arg10[%c0_483, %c0_484, %c0_485] : memref<3x1x32xf32, #tpu.memory_space<vmem>>, vector<1x1x32xf32>
    %635 = vector.shape_cast %634 : vector<1x1x32xf32> to vector<1x32xf32>
    %636 = vector.broadcast %635 : vector<1x32xf32> to vector<2x32xf32>
    %637 = arith.addf %633, %636 : vector<2x32xf32>
    %c1_486 = arith.constant 1 : index
    %c0_487 = arith.constant 0 : index
    %c0_488 = arith.constant 0 : index
    %638 = vector.load %arg8[%c1_486, %c0_487, %c0_488] : memref<3x32x32xf32, #tpu.memory_space<vmem>>, vector<1x32x32xf32>
    %639 = vector.shape_cast %638 : vector<1x32x32xf32> to vector<32x32xf32>
    %cst_489 = arith.constant dense<0.000000e+00> : vector<2x32xf32>
    %640 = tpu.matmul %537, %639, %cst_489 {dimension_numbers = #tpu.dot_dimension_numbers<[1], [0], [0], [1], [0, 0, 1, 1], [], []>} : vector<2x32xf32>, vector<32x32xf32>, vector<2x32xf32> -> vector<2x32xf32>
    %c1_490 = arith.constant 1 : index
    %c0_491 = arith.constant 0 : index
    %c0_492 = arith.constant 0 : index
    %641 = vector.load %arg10[%c1_490, %c0_491, %c0_492] : memref<3x1x32xf32, #tpu.memory_space<vmem>>, vector<1x1x32xf32>
    %642 = vector.shape_cast %641 : vector<1x1x32xf32> to vector<1x32xf32>
    %643 = vector.broadcast %642 : vector<1x32xf32> to vector<2x32xf32>
    %644 = arith.addf %640, %643 : vector<2x32xf32>
    %c2_493 = arith.constant 2 : index
    %c0_494 = arith.constant 0 : index
    %c0_495 = arith.constant 0 : index
    %645 = vector.load %arg8[%c2_493, %c0_494, %c0_495] : memref<3x32x32xf32, #tpu.memory_space<vmem>>, vector<1x32x32xf32>
    %646 = vector.shape_cast %645 : vector<1x32x32xf32> to vector<32x32xf32>
    %cst_496 = arith.constant dense<0.000000e+00> : vector<2x32xf32>
    %647 = tpu.matmul %537, %646, %cst_496 {dimension_numbers = #tpu.dot_dimension_numbers<[1], [0], [0], [1], [0, 0, 1, 1], [], []>} : vector<2x32xf32>, vector<32x32xf32>, vector<2x32xf32> -> vector<2x32xf32>
    %c2_497 = arith.constant 2 : index
    %c0_498 = arith.constant 0 : index
    %c0_499 = arith.constant 0 : index
    %648 = vector.load %arg10[%c2_497, %c0_498, %c0_499] : memref<3x1x32xf32, #tpu.memory_space<vmem>>, vector<1x1x32xf32>
    %649 = vector.shape_cast %648 : vector<1x1x32xf32> to vector<1x32xf32>
    %650 = vector.broadcast %649 : vector<1x32xf32> to vector<2x32xf32>
    %651 = arith.addf %647, %650 : vector<2x32xf32>
    %652 = arith.addf %616, %637 : vector<2x32xf32>
    %653 = arith.negf %652 : vector<2x32xf32>
    %654 = math.exp %653 : vector<2x32xf32>
    %cst_500 = arith.constant 1.000000e+00 : f32
    %655 = vector.broadcast %cst_500 : f32 to vector<2x32xf32>
    %656 = arith.addf %655, %654 : vector<2x32xf32>
    %657 = arith.divf %655, %656 : vector<2x32xf32>
    %658 = arith.addf %623, %644 : vector<2x32xf32>
    %659 = arith.negf %658 : vector<2x32xf32>
    %660 = math.exp %659 : vector<2x32xf32>
    %cst_501 = arith.constant 1.000000e+00 : f32
    %661 = vector.broadcast %cst_501 : f32 to vector<2x32xf32>
    %662 = arith.addf %661, %660 : vector<2x32xf32>
    %663 = arith.divf %661, %662 : vector<2x32xf32>
    %664 = arith.mulf %657, %651 : vector<2x32xf32>
    %665 = arith.addf %630, %664 : vector<2x32xf32>
    %666 = math.tanh %665 : vector<2x32xf32>
    %cst_502 = arith.constant 1.000000e+00 : f32
    %667 = vector.broadcast %cst_502 : f32 to vector<2x32xf32>
    %668 = arith.subf %667, %663 : vector<2x32xf32>
    %669 = arith.mulf %668, %666 : vector<2x32xf32>
    %670 = arith.mulf %663, %537 : vector<2x32xf32>
    %671 = arith.addf %669, %670 : vector<2x32xf32>
    %c3_503 = arith.constant 3 : index
    %c0_504 = arith.constant 0 : index
    %c0_505 = arith.constant 0 : index
    %672 = vector.load %arg12[%c3_503, %c0_504, %c0_505] : memref<8x2x32xf32, #tpu.memory_space<vmem>>, vector<1x2x32xf32>
    %673 = vector.shape_cast %672 : vector<1x2x32xf32> to vector<2x32xf32>
    %674 = vector.shape_cast %671 : vector<2x32xf32> to vector<1x2x32xf32>
    tpu.vector_store %arg12[%c3_503, %c0_504, %c0_505], %674 {strides = array<i32>} : memref<8x2x32xf32, #tpu.memory_space<vmem>>, vector<1x2x32xf32>,
    %c5_506 = arith.constant 5 : index
    %c0_507 = arith.constant 0 : index
    %c0_508 = arith.constant 0 : index
    %675 = vector.load %arg1[%c5_506, %c0_507, %c0_508] : memref<8x2x16xf32, #tpu.memory_space<vmem>>, vector<1x2x16xf32>
    %676 = vector.shape_cast %675 : vector<1x2x16xf32> to vector<2x16xf32>
    %c0_509 = arith.constant 0 : index
    %c0_510 = arith.constant 0 : index
    %c0_511 = arith.constant 0 : index
    %677 = vector.load %arg3[%c0_509, %c0_510, %c0_511] : memref<3x16x32xf32, #tpu.memory_space<vmem>>, vector<1x16x32xf32>
    %678 = vector.shape_cast %677 : vector<1x16x32xf32> to vector<16x32xf32>
    %cst_512 = arith.constant dense<0.000000e+00> : vector<2x32xf32>
    %679 = tpu.matmul %676, %678, %cst_512 {dimension_numbers = #tpu.dot_dimension_numbers<[1], [0], [0], [1], [0, 0, 1, 1], [], []>} : vector<2x16xf32>, vector<16x32xf32>, vector<2x32xf32> -> vector<2x32xf32>
    %c0_513 = arith.constant 0 : index
    %c0_514 = arith.constant 0 : index
    %c0_515 = arith.constant 0 : index
    %680 = vector.load %arg5[%c0_513, %c0_514, %c0_515] : memref<3x1x32xf32, #tpu.memory_space<vmem>>, vector<1x1x32xf32>
    %681 = vector.shape_cast %680 : vector<1x1x32xf32> to vector<1x32xf32>
    %682 = vector.broadcast %681 : vector<1x32xf32> to vector<2x32xf32>
    %683 = arith.addf %679, %682 : vector<2x32xf32>
    %c1_516 = arith.constant 1 : index
    %c0_517 = arith.constant 0 : index
    %c0_518 = arith.constant 0 : index
    %684 = vector.load %arg3[%c1_516, %c0_517, %c0_518] : memref<3x16x32xf32, #tpu.memory_space<vmem>>, vector<1x16x32xf32>
    %685 = vector.shape_cast %684 : vector<1x16x32xf32> to vector<16x32xf32>
    %cst_519 = arith.constant dense<0.000000e+00> : vector<2x32xf32>
    %686 = tpu.matmul %676, %685, %cst_519 {dimension_numbers = #tpu.dot_dimension_numbers<[1], [0], [0], [1], [0, 0, 1, 1], [], []>} : vector<2x16xf32>, vector<16x32xf32>, vector<2x32xf32> -> vector<2x32xf32>
    %c1_520 = arith.constant 1 : index
    %c0_521 = arith.constant 0 : index
    %c0_522 = arith.constant 0 : index
    %687 = vector.load %arg5[%c1_520, %c0_521, %c0_522] : memref<3x1x32xf32, #tpu.memory_space<vmem>>, vector<1x1x32xf32>
    %688 = vector.shape_cast %687 : vector<1x1x32xf32> to vector<1x32xf32>
    %689 = vector.broadcast %688 : vector<1x32xf32> to vector<2x32xf32>
    %690 = arith.addf %686, %689 : vector<2x32xf32>
    %c2_523 = arith.constant 2 : index
    %c0_524 = arith.constant 0 : index
    %c0_525 = arith.constant 0 : index
    %691 = vector.load %arg3[%c2_523, %c0_524, %c0_525] : memref<3x16x32xf32, #tpu.memory_space<vmem>>, vector<1x16x32xf32>
    %692 = vector.shape_cast %691 : vector<1x16x32xf32> to vector<16x32xf32>
    %cst_526 = arith.constant dense<0.000000e+00> : vector<2x32xf32>
    %693 = tpu.matmul %676, %692, %cst_526 {dimension_numbers = #tpu.dot_dimension_numbers<[1], [0], [0], [1], [0, 0, 1, 1], [], []>} : vector<2x16xf32>, vector<16x32xf32>, vector<2x32xf32> -> vector<2x32xf32>
    %c2_527 = arith.constant 2 : index
    %c0_528 = arith.constant 0 : index
    %c0_529 = arith.constant 0 : index
    %694 = vector.load %arg5[%c2_527, %c0_528, %c0_529] : memref<3x1x32xf32, #tpu.memory_space<vmem>>, vector<1x1x32xf32>
    %695 = vector.shape_cast %694 : vector<1x1x32xf32> to vector<1x32xf32>
    %696 = vector.broadcast %695 : vector<1x32xf32> to vector<2x32xf32>
    %697 = arith.addf %693, %696 : vector<2x32xf32>
    %c0_530 = arith.constant 0 : index
    %c0_531 = arith.constant 0 : index
    %c0_532 = arith.constant 0 : index
    %698 = vector.load %arg4[%c0_530, %c0_531, %c0_532] : memref<3x32x32xf32, #tpu.memory_space<vmem>>, vector<1x32x32xf32>
    %699 = vector.shape_cast %698 : vector<1x32x32xf32> to vector<32x32xf32>
    %cst_533 = arith.constant dense<0.000000e+00> : vector<2x32xf32>
    %700 = tpu.matmul %604, %699, %cst_533 {dimension_numbers = #tpu.dot_dimension_numbers<[1], [0], [0], [1], [0, 0, 1, 1], [], []>} : vector<2x32xf32>, vector<32x32xf32>, vector<2x32xf32> -> vector<2x32xf32>
    %c0_534 = arith.constant 0 : index
    %c0_535 = arith.constant 0 : index
    %c0_536 = arith.constant 0 : index
    %701 = vector.load %arg6[%c0_534, %c0_535, %c0_536] : memref<3x1x32xf32, #tpu.memory_space<vmem>>, vector<1x1x32xf32>
    %702 = vector.shape_cast %701 : vector<1x1x32xf32> to vector<1x32xf32>
    %703 = vector.broadcast %702 : vector<1x32xf32> to vector<2x32xf32>
    %704 = arith.addf %700, %703 : vector<2x32xf32>
    %c1_537 = arith.constant 1 : index
    %c0_538 = arith.constant 0 : index
    %c0_539 = arith.constant 0 : index
    %705 = vector.load %arg4[%c1_537, %c0_538, %c0_539] : memref<3x32x32xf32, #tpu.memory_space<vmem>>, vector<1x32x32xf32>
    %706 = vector.shape_cast %705 : vector<1x32x32xf32> to vector<32x32xf32>
    %cst_540 = arith.constant dense<0.000000e+00> : vector<2x32xf32>
    %707 = tpu.matmul %604, %706, %cst_540 {dimension_numbers = #tpu.dot_dimension_numbers<[1], [0], [0], [1], [0, 0, 1, 1], [], []>} : vector<2x32xf32>, vector<32x32xf32>, vector<2x32xf32> -> vector<2x32xf32>
    %c1_541 = arith.constant 1 : index
    %c0_542 = arith.constant 0 : index
    %c0_543 = arith.constant 0 : index
    %708 = vector.load %arg6[%c1_541, %c0_542, %c0_543] : memref<3x1x32xf32, #tpu.memory_space<vmem>>, vector<1x1x32xf32>
    %709 = vector.shape_cast %708 : vector<1x1x32xf32> to vector<1x32xf32>
    %710 = vector.broadcast %709 : vector<1x32xf32> to vector<2x32xf32>
    %711 = arith.addf %707, %710 : vector<2x32xf32>
    %c2_544 = arith.constant 2 : index
    %c0_545 = arith.constant 0 : index
    %c0_546 = arith.constant 0 : index
    %712 = vector.load %arg4[%c2_544, %c0_545, %c0_546] : memref<3x32x32xf32, #tpu.memory_space<vmem>>, vector<1x32x32xf32>
    %713 = vector.shape_cast %712 : vector<1x32x32xf32> to vector<32x32xf32>
    %cst_547 = arith.constant dense<0.000000e+00> : vector<2x32xf32>
    %714 = tpu.matmul %604, %713, %cst_547 {dimension_numbers = #tpu.dot_dimension_numbers<[1], [0], [0], [1], [0, 0, 1, 1], [], []>} : vector<2x32xf32>, vector<32x32xf32>, vector<2x32xf32> -> vector<2x32xf32>
    %c2_548 = arith.constant 2 : index
    %c0_549 = arith.constant 0 : index
    %c0_550 = arith.constant 0 : index
    %715 = vector.load %arg6[%c2_548, %c0_549, %c0_550] : memref<3x1x32xf32, #tpu.memory_space<vmem>>, vector<1x1x32xf32>
    %716 = vector.shape_cast %715 : vector<1x1x32xf32> to vector<1x32xf32>
    %717 = vector.broadcast %716 : vector<1x32xf32> to vector<2x32xf32>
    %718 = arith.addf %714, %717 : vector<2x32xf32>
    %719 = arith.addf %683, %704 : vector<2x32xf32>
    %720 = arith.negf %719 : vector<2x32xf32>
    %721 = math.exp %720 : vector<2x32xf32>
    %cst_551 = arith.constant 1.000000e+00 : f32
    %722 = vector.broadcast %cst_551 : f32 to vector<2x32xf32>
    %723 = arith.addf %722, %721 : vector<2x32xf32>
    %724 = arith.divf %722, %723 : vector<2x32xf32>
    %725 = arith.addf %690, %711 : vector<2x32xf32>
    %726 = arith.negf %725 : vector<2x32xf32>
    %727 = math.exp %726 : vector<2x32xf32>
    %cst_552 = arith.constant 1.000000e+00 : f32
    %728 = vector.broadcast %cst_552 : f32 to vector<2x32xf32>
    %729 = arith.addf %728, %727 : vector<2x32xf32>
    %730 = arith.divf %728, %729 : vector<2x32xf32>
    %731 = arith.mulf %724, %718 : vector<2x32xf32>
    %732 = arith.addf %697, %731 : vector<2x32xf32>
    %733 = math.tanh %732 : vector<2x32xf32>
    %cst_553 = arith.constant 1.000000e+00 : f32
    %734 = vector.broadcast %cst_553 : f32 to vector<2x32xf32>
    %735 = arith.subf %734, %730 : vector<2x32xf32>
    %736 = arith.mulf %735, %733 : vector<2x32xf32>
    %737 = arith.mulf %730, %604 : vector<2x32xf32>
    %738 = arith.addf %736, %737 : vector<2x32xf32>
    %c5_554 = arith.constant 5 : index
    %c0_555 = arith.constant 0 : index
    %c0_556 = arith.constant 0 : index
    %739 = vector.load %arg11[%c5_554, %c0_555, %c0_556] : memref<8x2x32xf32, #tpu.memory_space<vmem>>, vector<1x2x32xf32>
    %740 = vector.shape_cast %739 : vector<1x2x32xf32> to vector<2x32xf32>
    %741 = vector.shape_cast %738 : vector<2x32xf32> to vector<1x2x32xf32>
    tpu.vector_store %arg11[%c5_554, %c0_555, %c0_556], %741 {strides = array<i32>} : memref<8x2x32xf32, #tpu.memory_space<vmem>>, vector<1x2x32xf32>,
    %c2_557 = arith.constant 2 : index
    %c0_558 = arith.constant 0 : index
    %c0_559 = arith.constant 0 : index
    %742 = vector.load %arg2[%c2_557, %c0_558, %c0_559] : memref<8x2x16xf32, #tpu.memory_space<vmem>>, vector<1x2x16xf32>
    %743 = vector.shape_cast %742 : vector<1x2x16xf32> to vector<2x16xf32>
    %c0_560 = arith.constant 0 : index
    %c0_561 = arith.constant 0 : index
    %c0_562 = arith.constant 0 : index
    %744 = vector.load %arg7[%c0_560, %c0_561, %c0_562] : memref<3x16x32xf32, #tpu.memory_space<vmem>>, vector<1x16x32xf32>
    %745 = vector.shape_cast %744 : vector<1x16x32xf32> to vector<16x32xf32>
    %cst_563 = arith.constant dense<0.000000e+00> : vector<2x32xf32>
    %746 = tpu.matmul %743, %745, %cst_563 {dimension_numbers = #tpu.dot_dimension_numbers<[1], [0], [0], [1], [0, 0, 1, 1], [], []>} : vector<2x16xf32>, vector<16x32xf32>, vector<2x32xf32> -> vector<2x32xf32>
    %c0_564 = arith.constant 0 : index
    %c0_565 = arith.constant 0 : index
    %c0_566 = arith.constant 0 : index
    %747 = vector.load %arg9[%c0_564, %c0_565, %c0_566] : memref<3x1x32xf32, #tpu.memory_space<vmem>>, vector<1x1x32xf32>
    %748 = vector.shape_cast %747 : vector<1x1x32xf32> to vector<1x32xf32>
    %749 = vector.broadcast %748 : vector<1x32xf32> to vector<2x32xf32>
    %750 = arith.addf %746, %749 : vector<2x32xf32>
    %c1_567 = arith.constant 1 : index
    %c0_568 = arith.constant 0 : index
    %c0_569 = arith.constant 0 : index
    %751 = vector.load %arg7[%c1_567, %c0_568, %c0_569] : memref<3x16x32xf32, #tpu.memory_space<vmem>>, vector<1x16x32xf32>
    %752 = vector.shape_cast %751 : vector<1x16x32xf32> to vector<16x32xf32>
    %cst_570 = arith.constant dense<0.000000e+00> : vector<2x32xf32>
    %753 = tpu.matmul %743, %752, %cst_570 {dimension_numbers = #tpu.dot_dimension_numbers<[1], [0], [0], [1], [0, 0, 1, 1], [], []>} : vector<2x16xf32>, vector<16x32xf32>, vector<2x32xf32> -> vector<2x32xf32>
    %c1_571 = arith.constant 1 : index
    %c0_572 = arith.constant 0 : index
    %c0_573 = arith.constant 0 : index
    %754 = vector.load %arg9[%c1_571, %c0_572, %c0_573] : memref<3x1x32xf32, #tpu.memory_space<vmem>>, vector<1x1x32xf32>
    %755 = vector.shape_cast %754 : vector<1x1x32xf32> to vector<1x32xf32>
    %756 = vector.broadcast %755 : vector<1x32xf32> to vector<2x32xf32>
    %757 = arith.addf %753, %756 : vector<2x32xf32>
    %c2_574 = arith.constant 2 : index
    %c0_575 = arith.constant 0 : index
    %c0_576 = arith.constant 0 : index
    %758 = vector.load %arg7[%c2_574, %c0_575, %c0_576] : memref<3x16x32xf32, #tpu.memory_space<vmem>>, vector<1x16x32xf32>
    %759 = vector.shape_cast %758 : vector<1x16x32xf32> to vector<16x32xf32>
    %cst_577 = arith.constant dense<0.000000e+00> : vector<2x32xf32>
    %760 = tpu.matmul %743, %759, %cst_577 {dimension_numbers = #tpu.dot_dimension_numbers<[1], [0], [0], [1], [0, 0, 1, 1], [], []>} : vector<2x16xf32>, vector<16x32xf32>, vector<2x32xf32> -> vector<2x32xf32>
    %c2_578 = arith.constant 2 : index
    %c0_579 = arith.constant 0 : index
    %c0_580 = arith.constant 0 : index
    %761 = vector.load %arg9[%c2_578, %c0_579, %c0_580] : memref<3x1x32xf32, #tpu.memory_space<vmem>>, vector<1x1x32xf32>
    %762 = vector.shape_cast %761 : vector<1x1x32xf32> to vector<1x32xf32>
    %763 = vector.broadcast %762 : vector<1x32xf32> to vector<2x32xf32>
    %764 = arith.addf %760, %763 : vector<2x32xf32>
    %c0_581 = arith.constant 0 : index
    %c0_582 = arith.constant 0 : index
    %c0_583 = arith.constant 0 : index
    %765 = vector.load %arg8[%c0_581, %c0_582, %c0_583] : memref<3x32x32xf32, #tpu.memory_space<vmem>>, vector<1x32x32xf32>
    %766 = vector.shape_cast %765 : vector<1x32x32xf32> to vector<32x32xf32>
    %cst_584 = arith.constant dense<0.000000e+00> : vector<2x32xf32>
    %767 = tpu.matmul %671, %766, %cst_584 {dimension_numbers = #tpu.dot_dimension_numbers<[1], [0], [0], [1], [0, 0, 1, 1], [], []>} : vector<2x32xf32>, vector<32x32xf32>, vector<2x32xf32> -> vector<2x32xf32>
    %c0_585 = arith.constant 0 : index
    %c0_586 = arith.constant 0 : index
    %c0_587 = arith.constant 0 : index
    %768 = vector.load %arg10[%c0_585, %c0_586, %c0_587] : memref<3x1x32xf32, #tpu.memory_space<vmem>>, vector<1x1x32xf32>
    %769 = vector.shape_cast %768 : vector<1x1x32xf32> to vector<1x32xf32>
    %770 = vector.broadcast %769 : vector<1x32xf32> to vector<2x32xf32>
    %771 = arith.addf %767, %770 : vector<2x32xf32>
    %c1_588 = arith.constant 1 : index
    %c0_589 = arith.constant 0 : index
    %c0_590 = arith.constant 0 : index
    %772 = vector.load %arg8[%c1_588, %c0_589, %c0_590] : memref<3x32x32xf32, #tpu.memory_space<vmem>>, vector<1x32x32xf32>
    %773 = vector.shape_cast %772 : vector<1x32x32xf32> to vector<32x32xf32>
    %cst_591 = arith.constant dense<0.000000e+00> : vector<2x32xf32>
    %774 = tpu.matmul %671, %773, %cst_591 {dimension_numbers = #tpu.dot_dimension_numbers<[1], [0], [0], [1], [0, 0, 1, 1], [], []>} : vector<2x32xf32>, vector<32x32xf32>, vector<2x32xf32> -> vector<2x32xf32>
    %c1_592 = arith.constant 1 : index
    %c0_593 = arith.constant 0 : index
    %c0_594 = arith.constant 0 : index
    %775 = vector.load %arg10[%c1_592, %c0_593, %c0_594] : memref<3x1x32xf32, #tpu.memory_space<vmem>>, vector<1x1x32xf32>
    %776 = vector.shape_cast %775 : vector<1x1x32xf32> to vector<1x32xf32>
    %777 = vector.broadcast %776 : vector<1x32xf32> to vector<2x32xf32>
    %778 = arith.addf %774, %777 : vector<2x32xf32>
    %c2_595 = arith.constant 2 : index
    %c0_596 = arith.constant 0 : index
    %c0_597 = arith.constant 0 : index
    %779 = vector.load %arg8[%c2_595, %c0_596, %c0_597] : memref<3x32x32xf32, #tpu.memory_space<vmem>>, vector<1x32x32xf32>
    %780 = vector.shape_cast %779 : vector<1x32x32xf32> to vector<32x32xf32>
    %cst_598 = arith.constant dense<0.000000e+00> : vector<2x32xf32>
    %781 = tpu.matmul %671, %780, %cst_598 {dimension_numbers = #tpu.dot_dimension_numbers<[1], [0], [0], [1], [0, 0, 1, 1], [], []>} : vector<2x32xf32>, vector<32x32xf32>, vector<2x32xf32> -> vector<2x32xf32>
    %c2_599 = arith.constant 2 : index
    %c0_600 = arith.constant 0 : index
    %c0_601 = arith.constant 0 : index
    %782 = vector.load %arg10[%c2_599, %c0_600, %c0_601] : memref<3x1x32xf32, #tpu.memory_space<vmem>>, vector<1x1x32xf32>
    %783 = vector.shape_cast %782 : vector<1x1x32xf32> to vector<1x32xf32>
    %784 = vector.broadcast %783 : vector<1x32xf32> to vector<2x32xf32>
    %785 = arith.addf %781, %784 : vector<2x32xf32>
    %786 = arith.addf %750, %771 : vector<2x32xf32>
    %787 = arith.negf %786 : vector<2x32xf32>
    %788 = math.exp %787 : vector<2x32xf32>
    %cst_602 = arith.constant 1.000000e+00 : f32
    %789 = vector.broadcast %cst_602 : f32 to vector<2x32xf32>
    %790 = arith.addf %789, %788 : vector<2x32xf32>
    %791 = arith.divf %789, %790 : vector<2x32xf32>
    %792 = arith.addf %757, %778 : vector<2x32xf32>
    %793 = arith.negf %792 : vector<2x32xf32>
    %794 = math.exp %793 : vector<2x32xf32>
    %cst_603 = arith.constant 1.000000e+00 : f32
    %795 = vector.broadcast %cst_603 : f32 to vector<2x32xf32>
    %796 = arith.addf %795, %794 : vector<2x32xf32>
    %797 = arith.divf %795, %796 : vector<2x32xf32>
    %798 = arith.mulf %791, %785 : vector<2x32xf32>
    %799 = arith.addf %764, %798 : vector<2x32xf32>
    %800 = math.tanh %799 : vector<2x32xf32>
    %cst_604 = arith.constant 1.000000e+00 : f32
    %801 = vector.broadcast %cst_604 : f32 to vector<2x32xf32>
    %802 = arith.subf %801, %797 : vector<2x32xf32>
    %803 = arith.mulf %802, %800 : vector<2x32xf32>
    %804 = arith.mulf %797, %671 : vector<2x32xf32>
    %805 = arith.addf %803, %804 : vector<2x32xf32>
    %c2_605 = arith.constant 2 : index
    %c0_606 = arith.constant 0 : index
    %c0_607 = arith.constant 0 : index
    %806 = vector.load %arg12[%c2_605, %c0_606, %c0_607] : memref<8x2x32xf32, #tpu.memory_space<vmem>>, vector<1x2x32xf32>
    %807 = vector.shape_cast %806 : vector<1x2x32xf32> to vector<2x32xf32>
    %808 = vector.shape_cast %805 : vector<2x32xf32> to vector<1x2x32xf32>
    tpu.vector_store %arg12[%c2_605, %c0_606, %c0_607], %808 {strides = array<i32>} : memref<8x2x32xf32, #tpu.memory_space<vmem>>, vector<1x2x32xf32>,
    %c6_608 = arith.constant 6 : index
    %c0_609 = arith.constant 0 : index
    %c0_610 = arith.constant 0 : index
    %809 = vector.load %arg1[%c6_608, %c0_609, %c0_610] : memref<8x2x16xf32, #tpu.memory_space<vmem>>, vector<1x2x16xf32>
    %810 = vector.shape_cast %809 : vector<1x2x16xf32> to vector<2x16xf32>
    %c0_611 = arith.constant 0 : index
    %c0_612 = arith.constant 0 : index
    %c0_613 = arith.constant 0 : index
    %811 = vector.load %arg3[%c0_611, %c0_612, %c0_613] : memref<3x16x32xf32, #tpu.memory_space<vmem>>, vector<1x16x32xf32>
    %812 = vector.shape_cast %811 : vector<1x16x32xf32> to vector<16x32xf32>
    %cst_614 = arith.constant dense<0.000000e+00> : vector<2x32xf32>
    %813 = tpu.matmul %810, %812, %cst_614 {dimension_numbers = #tpu.dot_dimension_numbers<[1], [0], [0], [1], [0, 0, 1, 1], [], []>} : vector<2x16xf32>, vector<16x32xf32>, vector<2x32xf32> -> vector<2x32xf32>
    %c0_615 = arith.constant 0 : index
    %c0_616 = arith.constant 0 : index
    %c0_617 = arith.constant 0 : index
    %814 = vector.load %arg5[%c0_615, %c0_616, %c0_617] : memref<3x1x32xf32, #tpu.memory_space<vmem>>, vector<1x1x32xf32>
    %815 = vector.shape_cast %814 : vector<1x1x32xf32> to vector<1x32xf32>
    %816 = vector.broadcast %815 : vector<1x32xf32> to vector<2x32xf32>
    %817 = arith.addf %813, %816 : vector<2x32xf32>
    %c1_618 = arith.constant 1 : index
    %c0_619 = arith.constant 0 : index
    %c0_620 = arith.constant 0 : index
    %818 = vector.load %arg3[%c1_618, %c0_619, %c0_620] : memref<3x16x32xf32, #tpu.memory_space<vmem>>, vector<1x16x32xf32>
    %819 = vector.shape_cast %818 : vector<1x16x32xf32> to vector<16x32xf32>
    %cst_621 = arith.constant dense<0.000000e+00> : vector<2x32xf32>
    %820 = tpu.matmul %810, %819, %cst_621 {dimension_numbers = #tpu.dot_dimension_numbers<[1], [0], [0], [1], [0, 0, 1, 1], [], []>} : vector<2x16xf32>, vector<16x32xf32>, vector<2x32xf32> -> vector<2x32xf32>
    %c1_622 = arith.constant 1 : index
    %c0_623 = arith.constant 0 : index
    %c0_624 = arith.constant 0 : index
    %821 = vector.load %arg5[%c1_622, %c0_623, %c0_624] : memref<3x1x32xf32, #tpu.memory_space<vmem>>, vector<1x1x32xf32>
    %822 = vector.shape_cast %821 : vector<1x1x32xf32> to vector<1x32xf32>
    %823 = vector.broadcast %822 : vector<1x32xf32> to vector<2x32xf32>
    %824 = arith.addf %820, %823 : vector<2x32xf32>
    %c2_625 = arith.constant 2 : index
    %c0_626 = arith.constant 0 : index
    %c0_627 = arith.constant 0 : index
    %825 = vector.load %arg3[%c2_625, %c0_626, %c0_627] : memref<3x16x32xf32, #tpu.memory_space<vmem>>, vector<1x16x32xf32>
    %826 = vector.shape_cast %825 : vector<1x16x32xf32> to vector<16x32xf32>
    %cst_628 = arith.constant dense<0.000000e+00> : vector<2x32xf32>
    %827 = tpu.matmul %810, %826, %cst_628 {dimension_numbers = #tpu.dot_dimension_numbers<[1], [0], [0], [1], [0, 0, 1, 1], [], []>} : vector<2x16xf32>, vector<16x32xf32>, vector<2x32xf32> -> vector<2x32xf32>
    %c2_629 = arith.constant 2 : index
    %c0_630 = arith.constant 0 : index
    %c0_631 = arith.constant 0 : index
    %828 = vector.load %arg5[%c2_629, %c0_630, %c0_631] : memref<3x1x32xf32, #tpu.memory_space<vmem>>, vector<1x1x32xf32>
    %829 = vector.shape_cast %828 : vector<1x1x32xf32> to vector<1x32xf32>
    %830 = vector.broadcast %829 : vector<1x32xf32> to vector<2x32xf32>
    %831 = arith.addf %827, %830 : vector<2x32xf32>
    %c0_632 = arith.constant 0 : index
    %c0_633 = arith.constant 0 : index
    %c0_634 = arith.constant 0 : index
    %832 = vector.load %arg4[%c0_632, %c0_633, %c0_634] : memref<3x32x32xf32, #tpu.memory_space<vmem>>, vector<1x32x32xf32>
    %833 = vector.shape_cast %832 : vector<1x32x32xf32> to vector<32x32xf32>
    %cst_635 = arith.constant dense<0.000000e+00> : vector<2x32xf32>
    %834 = tpu.matmul %738, %833, %cst_635 {dimension_numbers = #tpu.dot_dimension_numbers<[1], [0], [0], [1], [0, 0, 1, 1], [], []>} : vector<2x32xf32>, vector<32x32xf32>, vector<2x32xf32> -> vector<2x32xf32>
    %c0_636 = arith.constant 0 : index
    %c0_637 = arith.constant 0 : index
    %c0_638 = arith.constant 0 : index
    %835 = vector.load %arg6[%c0_636, %c0_637, %c0_638] : memref<3x1x32xf32, #tpu.memory_space<vmem>>, vector<1x1x32xf32>
    %836 = vector.shape_cast %835 : vector<1x1x32xf32> to vector<1x32xf32>
    %837 = vector.broadcast %836 : vector<1x32xf32> to vector<2x32xf32>
    %838 = arith.addf %834, %837 : vector<2x32xf32>
    %c1_639 = arith.constant 1 : index
    %c0_640 = arith.constant 0 : index
    %c0_641 = arith.constant 0 : index
    %839 = vector.load %arg4[%c1_639, %c0_640, %c0_641] : memref<3x32x32xf32, #tpu.memory_space<vmem>>, vector<1x32x32xf32>
    %840 = vector.shape_cast %839 : vector<1x32x32xf32> to vector<32x32xf32>
    %cst_642 = arith.constant dense<0.000000e+00> : vector<2x32xf32>
    %841 = tpu.matmul %738, %840, %cst_642 {dimension_numbers = #tpu.dot_dimension_numbers<[1], [0], [0], [1], [0, 0, 1, 1], [], []>} : vector<2x32xf32>, vector<32x32xf32>, vector<2x32xf32> -> vector<2x32xf32>
    %c1_643 = arith.constant 1 : index
    %c0_644 = arith.constant 0 : index
    %c0_645 = arith.constant 0 : index
    %842 = vector.load %arg6[%c1_643, %c0_644, %c0_645] : memref<3x1x32xf32, #tpu.memory_space<vmem>>, vector<1x1x32xf32>
    %843 = vector.shape_cast %842 : vector<1x1x32xf32> to vector<1x32xf32>
    %844 = vector.broadcast %843 : vector<1x32xf32> to vector<2x32xf32>
    %845 = arith.addf %841, %844 : vector<2x32xf32>
    %c2_646 = arith.constant 2 : index
    %c0_647 = arith.constant 0 : index
    %c0_648 = arith.constant 0 : index
    %846 = vector.load %arg4[%c2_646, %c0_647, %c0_648] : memref<3x32x32xf32, #tpu.memory_space<vmem>>, vector<1x32x32xf32>
    %847 = vector.shape_cast %846 : vector<1x32x32xf32> to vector<32x32xf32>
    %cst_649 = arith.constant dense<0.000000e+00> : vector<2x32xf32>
    %848 = tpu.matmul %738, %847, %cst_649 {dimension_numbers = #tpu.dot_dimension_numbers<[1], [0], [0], [1], [0, 0, 1, 1], [], []>} : vector<2x32xf32>, vector<32x32xf32>, vector<2x32xf32> -> vector<2x32xf32>
    %c2_650 = arith.constant 2 : index
    %c0_651 = arith.constant 0 : index
    %c0_652 = arith.constant 0 : index
    %849 = vector.load %arg6[%c2_650, %c0_651, %c0_652] : memref<3x1x32xf32, #tpu.memory_space<vmem>>, vector<1x1x32xf32>
    %850 = vector.shape_cast %849 : vector<1x1x32xf32> to vector<1x32xf32>
    %851 = vector.broadcast %850 : vector<1x32xf32> to vector<2x32xf32>
    %852 = arith.addf %848, %851 : vector<2x32xf32>
    %853 = arith.addf %817, %838 : vector<2x32xf32>
    %854 = arith.negf %853 : vector<2x32xf32>
    %855 = math.exp %854 : vector<2x32xf32>
    %cst_653 = arith.constant 1.000000e+00 : f32
    %856 = vector.broadcast %cst_653 : f32 to vector<2x32xf32>
    %857 = arith.addf %856, %855 : vector<2x32xf32>
    %858 = arith.divf %856, %857 : vector<2x32xf32>
    %859 = arith.addf %824, %845 : vector<2x32xf32>
    %860 = arith.negf %859 : vector<2x32xf32>
    %861 = math.exp %860 : vector<2x32xf32>
    %cst_654 = arith.constant 1.000000e+00 : f32
    %862 = vector.broadcast %cst_654 : f32 to vector<2x32xf32>
    %863 = arith.addf %862, %861 : vector<2x32xf32>
    %864 = arith.divf %862, %863 : vector<2x32xf32>
    %865 = arith.mulf %858, %852 : vector<2x32xf32>
    %866 = arith.addf %831, %865 : vector<2x32xf32>
    %867 = math.tanh %866 : vector<2x32xf32>
    %cst_655 = arith.constant 1.000000e+00 : f32
    %868 = vector.broadcast %cst_655 : f32 to vector<2x32xf32>
    %869 = arith.subf %868, %864 : vector<2x32xf32>
    %870 = arith.mulf %869, %867 : vector<2x32xf32>
    %871 = arith.mulf %864, %738 : vector<2x32xf32>
    %872 = arith.addf %870, %871 : vector<2x32xf32>
    %c6_656 = arith.constant 6 : index
    %c0_657 = arith.constant 0 : index
    %c0_658 = arith.constant 0 : index
    %873 = vector.load %arg11[%c6_656, %c0_657, %c0_658] : memref<8x2x32xf32, #tpu.memory_space<vmem>>, vector<1x2x32xf32>
    %874 = vector.shape_cast %873 : vector<1x2x32xf32> to vector<2x32xf32>
    %875 = vector.shape_cast %872 : vector<2x32xf32> to vector<1x2x32xf32>
    tpu.vector_store %arg11[%c6_656, %c0_657, %c0_658], %875 {strides = array<i32>} : memref<8x2x32xf32, #tpu.memory_space<vmem>>, vector<1x2x32xf32>,
    %c1_659 = arith.constant 1 : index
    %c0_660 = arith.constant 0 : index
    %c0_661 = arith.constant 0 : index
    %876 = vector.load %arg2[%c1_659, %c0_660, %c0_661] : memref<8x2x16xf32, #tpu.memory_space<vmem>>, vector<1x2x16xf32>
    %877 = vector.shape_cast %876 : vector<1x2x16xf32> to vector<2x16xf32>
    %c0_662 = arith.constant 0 : index
    %c0_663 = arith.constant 0 : index
    %c0_664 = arith.constant 0 : index
    %878 = vector.load %arg7[%c0_662, %c0_663, %c0_664] : memref<3x16x32xf32, #tpu.memory_space<vmem>>, vector<1x16x32xf32>
    %879 = vector.shape_cast %878 : vector<1x16x32xf32> to vector<16x32xf32>
    %cst_665 = arith.constant dense<0.000000e+00> : vector<2x32xf32>
    %880 = tpu.matmul %877, %879, %cst_665 {dimension_numbers = #tpu.dot_dimension_numbers<[1], [0], [0], [1], [0, 0, 1, 1], [], []>} : vector<2x16xf32>, vector<16x32xf32>, vector<2x32xf32> -> vector<2x32xf32>
    %c0_666 = arith.constant 0 : index
    %c0_667 = arith.constant 0 : index
    %c0_668 = arith.constant 0 : index
    %881 = vector.load %arg9[%c0_666, %c0_667, %c0_668] : memref<3x1x32xf32, #tpu.memory_space<vmem>>, vector<1x1x32xf32>
    %882 = vector.shape_cast %881 : vector<1x1x32xf32> to vector<1x32xf32>
    %883 = vector.broadcast %882 : vector<1x32xf32> to vector<2x32xf32>
    %884 = arith.addf %880, %883 : vector<2x32xf32>
    %c1_669 = arith.constant 1 : index
    %c0_670 = arith.constant 0 : index
    %c0_671 = arith.constant 0 : index
    %885 = vector.load %arg7[%c1_669, %c0_670, %c0_671] : memref<3x16x32xf32, #tpu.memory_space<vmem>>, vector<1x16x32xf32>
    %886 = vector.shape_cast %885 : vector<1x16x32xf32> to vector<16x32xf32>
    %cst_672 = arith.constant dense<0.000000e+00> : vector<2x32xf32>
    %887 = tpu.matmul %877, %886, %cst_672 {dimension_numbers = #tpu.dot_dimension_numbers<[1], [0], [0], [1], [0, 0, 1, 1], [], []>} : vector<2x16xf32>, vector<16x32xf32>, vector<2x32xf32> -> vector<2x32xf32>
    %c1_673 = arith.constant 1 : index
    %c0_674 = arith.constant 0 : index
    %c0_675 = arith.constant 0 : index
    %888 = vector.load %arg9[%c1_673, %c0_674, %c0_675] : memref<3x1x32xf32, #tpu.memory_space<vmem>>, vector<1x1x32xf32>
    %889 = vector.shape_cast %888 : vector<1x1x32xf32> to vector<1x32xf32>
    %890 = vector.broadcast %889 : vector<1x32xf32> to vector<2x32xf32>
    %891 = arith.addf %887, %890 : vector<2x32xf32>
    %c2_676 = arith.constant 2 : index
    %c0_677 = arith.constant 0 : index
    %c0_678 = arith.constant 0 : index
    %892 = vector.load %arg7[%c2_676, %c0_677, %c0_678] : memref<3x16x32xf32, #tpu.memory_space<vmem>>, vector<1x16x32xf32>
    %893 = vector.shape_cast %892 : vector<1x16x32xf32> to vector<16x32xf32>
    %cst_679 = arith.constant dense<0.000000e+00> : vector<2x32xf32>
    %894 = tpu.matmul %877, %893, %cst_679 {dimension_numbers = #tpu.dot_dimension_numbers<[1], [0], [0], [1], [0, 0, 1, 1], [], []>} : vector<2x16xf32>, vector<16x32xf32>, vector<2x32xf32> -> vector<2x32xf32>
    %c2_680 = arith.constant 2 : index
    %c0_681 = arith.constant 0 : index
    %c0_682 = arith.constant 0 : index
    %895 = vector.load %arg9[%c2_680, %c0_681, %c0_682] : memref<3x1x32xf32, #tpu.memory_space<vmem>>, vector<1x1x32xf32>
    %896 = vector.shape_cast %895 : vector<1x1x32xf32> to vector<1x32xf32>
    %897 = vector.broadcast %896 : vector<1x32xf32> to vector<2x32xf32>
    %898 = arith.addf %894, %897 : vector<2x32xf32>
    %c0_683 = arith.constant 0 : index
    %c0_684 = arith.constant 0 : index
    %c0_685 = arith.constant 0 : index
    %899 = vector.load %arg8[%c0_683, %c0_684, %c0_685] : memref<3x32x32xf32, #tpu.memory_space<vmem>>, vector<1x32x32xf32>
    %900 = vector.shape_cast %899 : vector<1x32x32xf32> to vector<32x32xf32>
    %cst_686 = arith.constant dense<0.000000e+00> : vector<2x32xf32>
    %901 = tpu.matmul %805, %900, %cst_686 {dimension_numbers = #tpu.dot_dimension_numbers<[1], [0], [0], [1], [0, 0, 1, 1], [], []>} : vector<2x32xf32>, vector<32x32xf32>, vector<2x32xf32> -> vector<2x32xf32>
    %c0_687 = arith.constant 0 : index
    %c0_688 = arith.constant 0 : index
    %c0_689 = arith.constant 0 : index
    %902 = vector.load %arg10[%c0_687, %c0_688, %c0_689] : memref<3x1x32xf32, #tpu.memory_space<vmem>>, vector<1x1x32xf32>
    %903 = vector.shape_cast %902 : vector<1x1x32xf32> to vector<1x32xf32>
    %904 = vector.broadcast %903 : vector<1x32xf32> to vector<2x32xf32>
    %905 = arith.addf %901, %904 : vector<2x32xf32>
    %c1_690 = arith.constant 1 : index
    %c0_691 = arith.constant 0 : index
    %c0_692 = arith.constant 0 : index
    %906 = vector.load %arg8[%c1_690, %c0_691, %c0_692] : memref<3x32x32xf32, #tpu.memory_space<vmem>>, vector<1x32x32xf32>
    %907 = vector.shape_cast %906 : vector<1x32x32xf32> to vector<32x32xf32>
    %cst_693 = arith.constant dense<0.000000e+00> : vector<2x32xf32>
    %908 = tpu.matmul %805, %907, %cst_693 {dimension_numbers = #tpu.dot_dimension_numbers<[1], [0], [0], [1], [0, 0, 1, 1], [], []>} : vector<2x32xf32>, vector<32x32xf32>, vector<2x32xf32> -> vector<2x32xf32>
    %c1_694 = arith.constant 1 : index
    %c0_695 = arith.constant 0 : index
    %c0_696 = arith.constant 0 : index
    %909 = vector.load %arg10[%c1_694, %c0_695, %c0_696] : memref<3x1x32xf32, #tpu.memory_space<vmem>>, vector<1x1x32xf32>
    %910 = vector.shape_cast %909 : vector<1x1x32xf32> to vector<1x32xf32>
    %911 = vector.broadcast %910 : vector<1x32xf32> to vector<2x32xf32>
    %912 = arith.addf %908, %911 : vector<2x32xf32>
    %c2_697 = arith.constant 2 : index
    %c0_698 = arith.constant 0 : index
    %c0_699 = arith.constant 0 : index
    %913 = vector.load %arg8[%c2_697, %c0_698, %c0_699] : memref<3x32x32xf32, #tpu.memory_space<vmem>>, vector<1x32x32xf32>
    %914 = vector.shape_cast %913 : vector<1x32x32xf32> to vector<32x32xf32>
    %cst_700 = arith.constant dense<0.000000e+00> : vector<2x32xf32>
    %915 = tpu.matmul %805, %914, %cst_700 {dimension_numbers = #tpu.dot_dimension_numbers<[1], [0], [0], [1], [0, 0, 1, 1], [], []>} : vector<2x32xf32>, vector<32x32xf32>, vector<2x32xf32> -> vector<2x32xf32>
    %c2_701 = arith.constant 2 : index
    %c0_702 = arith.constant 0 : index
    %c0_703 = arith.constant 0 : index
    %916 = vector.load %arg10[%c2_701, %c0_702, %c0_703] : memref<3x1x32xf32, #tpu.memory_space<vmem>>, vector<1x1x32xf32>
    %917 = vector.shape_cast %916 : vector<1x1x32xf32> to vector<1x32xf32>
    %918 = vector.broadcast %917 : vector<1x32xf32> to vector<2x32xf32>
    %919 = arith.addf %915, %918 : vector<2x32xf32>
    %920 = arith.addf %884, %905 : vector<2x32xf32>
    %921 = arith.negf %920 : vector<2x32xf32>
    %922 = math.exp %921 : vector<2x32xf32>
    %cst_704 = arith.constant 1.000000e+00 : f32
    %923 = vector.broadcast %cst_704 : f32 to vector<2x32xf32>
    %924 = arith.addf %923, %922 : vector<2x32xf32>
    %925 = arith.divf %923, %924 : vector<2x32xf32>
    %926 = arith.addf %891, %912 : vector<2x32xf32>
    %927 = arith.negf %926 : vector<2x32xf32>
    %928 = math.exp %927 : vector<2x32xf32>
    %cst_705 = arith.constant 1.000000e+00 : f32
    %929 = vector.broadcast %cst_705 : f32 to vector<2x32xf32>
    %930 = arith.addf %929, %928 : vector<2x32xf32>
    %931 = arith.divf %929, %930 : vector<2x32xf32>
    %932 = arith.mulf %925, %919 : vector<2x32xf32>
    %933 = arith.addf %898, %932 : vector<2x32xf32>
    %934 = math.tanh %933 : vector<2x32xf32>
    %cst_706 = arith.constant 1.000000e+00 : f32
    %935 = vector.broadcast %cst_706 : f32 to vector<2x32xf32>
    %936 = arith.subf %935, %931 : vector<2x32xf32>
    %937 = arith.mulf %936, %934 : vector<2x32xf32>
    %938 = arith.mulf %931, %805 : vector<2x32xf32>
    %939 = arith.addf %937, %938 : vector<2x32xf32>
    %c1_707 = arith.constant 1 : index
    %c0_708 = arith.constant 0 : index
    %c0_709 = arith.constant 0 : index
    %940 = vector.load %arg12[%c1_707, %c0_708, %c0_709] : memref<8x2x32xf32, #tpu.memory_space<vmem>>, vector<1x2x32xf32>
    %941 = vector.shape_cast %940 : vector<1x2x32xf32> to vector<2x32xf32>
    %942 = vector.shape_cast %939 : vector<2x32xf32> to vector<1x2x32xf32>
    tpu.vector_store %arg12[%c1_707, %c0_708, %c0_709], %942 {strides = array<i32>} : memref<8x2x32xf32, #tpu.memory_space<vmem>>, vector<1x2x32xf32>,
    %c7_710 = arith.constant 7 : index
    %c0_711 = arith.constant 0 : index
    %c0_712 = arith.constant 0 : index
    %943 = vector.load %arg1[%c7_710, %c0_711, %c0_712] : memref<8x2x16xf32, #tpu.memory_space<vmem>>, vector<1x2x16xf32>
    %944 = vector.shape_cast %943 : vector<1x2x16xf32> to vector<2x16xf32>
    %c0_713 = arith.constant 0 : index
    %c0_714 = arith.constant 0 : index
    %c0_715 = arith.constant 0 : index
    %945 = vector.load %arg3[%c0_713, %c0_714, %c0_715] : memref<3x16x32xf32, #tpu.memory_space<vmem>>, vector<1x16x32xf32>
    %946 = vector.shape_cast %945 : vector<1x16x32xf32> to vector<16x32xf32>
    %cst_716 = arith.constant dense<0.000000e+00> : vector<2x32xf32>
    %947 = tpu.matmul %944, %946, %cst_716 {dimension_numbers = #tpu.dot_dimension_numbers<[1], [0], [0], [1], [0, 0, 1, 1], [], []>} : vector<2x16xf32>, vector<16x32xf32>, vector<2x32xf32> -> vector<2x32xf32>
    %c0_717 = arith.constant 0 : index
    %c0_718 = arith.constant 0 : index
    %c0_719 = arith.constant 0 : index
    %948 = vector.load %arg5[%c0_717, %c0_718, %c0_719] : memref<3x1x32xf32, #tpu.memory_space<vmem>>, vector<1x1x32xf32>
    %949 = vector.shape_cast %948 : vector<1x1x32xf32> to vector<1x32xf32>
    %950 = vector.broadcast %949 : vector<1x32xf32> to vector<2x32xf32>
    %951 = arith.addf %947, %950 : vector<2x32xf32>
    %c1_720 = arith.constant 1 : index
    %c0_721 = arith.constant 0 : index
    %c0_722 = arith.constant 0 : index
    %952 = vector.load %arg3[%c1_720, %c0_721, %c0_722] : memref<3x16x32xf32, #tpu.memory_space<vmem>>, vector<1x16x32xf32>
    %953 = vector.shape_cast %952 : vector<1x16x32xf32> to vector<16x32xf32>
    %cst_723 = arith.constant dense<0.000000e+00> : vector<2x32xf32>
    %954 = tpu.matmul %944, %953, %cst_723 {dimension_numbers = #tpu.dot_dimension_numbers<[1], [0], [0], [1], [0, 0, 1, 1], [], []>} : vector<2x16xf32>, vector<16x32xf32>, vector<2x32xf32> -> vector<2x32xf32>
    %c1_724 = arith.constant 1 : index
    %c0_725 = arith.constant 0 : index
    %c0_726 = arith.constant 0 : index
    %955 = vector.load %arg5[%c1_724, %c0_725, %c0_726] : memref<3x1x32xf32, #tpu.memory_space<vmem>>, vector<1x1x32xf32>
    %956 = vector.shape_cast %955 : vector<1x1x32xf32> to vector<1x32xf32>
    %957 = vector.broadcast %956 : vector<1x32xf32> to vector<2x32xf32>
    %958 = arith.addf %954, %957 : vector<2x32xf32>
    %c2_727 = arith.constant 2 : index
    %c0_728 = arith.constant 0 : index
    %c0_729 = arith.constant 0 : index
    %959 = vector.load %arg3[%c2_727, %c0_728, %c0_729] : memref<3x16x32xf32, #tpu.memory_space<vmem>>, vector<1x16x32xf32>
    %960 = vector.shape_cast %959 : vector<1x16x32xf32> to vector<16x32xf32>
    %cst_730 = arith.constant dense<0.000000e+00> : vector<2x32xf32>
    %961 = tpu.matmul %944, %960, %cst_730 {dimension_numbers = #tpu.dot_dimension_numbers<[1], [0], [0], [1], [0, 0, 1, 1], [], []>} : vector<2x16xf32>, vector<16x32xf32>, vector<2x32xf32> -> vector<2x32xf32>
    %c2_731 = arith.constant 2 : index
    %c0_732 = arith.constant 0 : index
    %c0_733 = arith.constant 0 : index
    %962 = vector.load %arg5[%c2_731, %c0_732, %c0_733] : memref<3x1x32xf32, #tpu.memory_space<vmem>>, vector<1x1x32xf32>
    %963 = vector.shape_cast %962 : vector<1x1x32xf32> to vector<1x32xf32>
    %964 = vector.broadcast %963 : vector<1x32xf32> to vector<2x32xf32>
    %965 = arith.addf %961, %964 : vector<2x32xf32>
    %c0_734 = arith.constant 0 : index
    %c0_735 = arith.constant 0 : index
    %c0_736 = arith.constant 0 : index
    %966 = vector.load %arg4[%c0_734, %c0_735, %c0_736] : memref<3x32x32xf32, #tpu.memory_space<vmem>>, vector<1x32x32xf32>
    %967 = vector.shape_cast %966 : vector<1x32x32xf32> to vector<32x32xf32>
    %cst_737 = arith.constant dense<0.000000e+00> : vector<2x32xf32>
    %968 = tpu.matmul %872, %967, %cst_737 {dimension_numbers = #tpu.dot_dimension_numbers<[1], [0], [0], [1], [0, 0, 1, 1], [], []>} : vector<2x32xf32>, vector<32x32xf32>, vector<2x32xf32> -> vector<2x32xf32>
    %c0_738 = arith.constant 0 : index
    %c0_739 = arith.constant 0 : index
    %c0_740 = arith.constant 0 : index
    %969 = vector.load %arg6[%c0_738, %c0_739, %c0_740] : memref<3x1x32xf32, #tpu.memory_space<vmem>>, vector<1x1x32xf32>
    %970 = vector.shape_cast %969 : vector<1x1x32xf32> to vector<1x32xf32>
    %971 = vector.broadcast %970 : vector<1x32xf32> to vector<2x32xf32>
    %972 = arith.addf %968, %971 : vector<2x32xf32>
    %c1_741 = arith.constant 1 : index
    %c0_742 = arith.constant 0 : index
    %c0_743 = arith.constant 0 : index
    %973 = vector.load %arg4[%c1_741, %c0_742, %c0_743] : memref<3x32x32xf32, #tpu.memory_space<vmem>>, vector<1x32x32xf32>
    %974 = vector.shape_cast %973 : vector<1x32x32xf32> to vector<32x32xf32>
    %cst_744 = arith.constant dense<0.000000e+00> : vector<2x32xf32>
    %975 = tpu.matmul %872, %974, %cst_744 {dimension_numbers = #tpu.dot_dimension_numbers<[1], [0], [0], [1], [0, 0, 1, 1], [], []>} : vector<2x32xf32>, vector<32x32xf32>, vector<2x32xf32> -> vector<2x32xf32>
    %c1_745 = arith.constant 1 : index
    %c0_746 = arith.constant 0 : index
    %c0_747 = arith.constant 0 : index
    %976 = vector.load %arg6[%c1_745, %c0_746, %c0_747] : memref<3x1x32xf32, #tpu.memory_space<vmem>>, vector<1x1x32xf32>
    %977 = vector.shape_cast %976 : vector<1x1x32xf32> to vector<1x32xf32>
    %978 = vector.broadcast %977 : vector<1x32xf32> to vector<2x32xf32>
    %979 = arith.addf %975, %978 : vector<2x32xf32>
    %c2_748 = arith.constant 2 : index
    %c0_749 = arith.constant 0 : index
    %c0_750 = arith.constant 0 : index
    %980 = vector.load %arg4[%c2_748, %c0_749, %c0_750] : memref<3x32x32xf32, #tpu.memory_space<vmem>>, vector<1x32x32xf32>
    %981 = vector.shape_cast %980 : vector<1x32x32xf32> to vector<32x32xf32>
    %cst_751 = arith.constant dense<0.000000e+00> : vector<2x32xf32>
    %982 = tpu.matmul %872, %981, %cst_751 {dimension_numbers = #tpu.dot_dimension_numbers<[1], [0], [0], [1], [0, 0, 1, 1], [], []>} : vector<2x32xf32>, vector<32x32xf32>, vector<2x32xf32> -> vector<2x32xf32>
    %c2_752 = arith.constant 2 : index
    %c0_753 = arith.constant 0 : index
    %c0_754 = arith.constant 0 : index
    %983 = vector.load %arg6[%c2_752, %c0_753, %c0_754] : memref<3x1x32xf32, #tpu.memory_space<vmem>>, vector<1x1x32xf32>
    %984 = vector.shape_cast %983 : vector<1x1x32xf32> to vector<1x32xf32>
    %985 = vector.broadcast %984 : vector<1x32xf32> to vector<2x32xf32>
    %986 = arith.addf %982, %985 : vector<2x32xf32>
    %987 = arith.addf %951, %972 : vector<2x32xf32>
    %988 = arith.negf %987 : vector<2x32xf32>
    %989 = math.exp %988 : vector<2x32xf32>
    %cst_755 = arith.constant 1.000000e+00 : f32
    %990 = vector.broadcast %cst_755 : f32 to vector<2x32xf32>
    %991 = arith.addf %990, %989 : vector<2x32xf32>
    %992 = arith.divf %990, %991 : vector<2x32xf32>
    %993 = arith.addf %958, %979 : vector<2x32xf32>
    %994 = arith.negf %993 : vector<2x32xf32>
    %995 = math.exp %994 : vector<2x32xf32>
    %cst_756 = arith.constant 1.000000e+00 : f32
    %996 = vector.broadcast %cst_756 : f32 to vector<2x32xf32>
    %997 = arith.addf %996, %995 : vector<2x32xf32>
    %998 = arith.divf %996, %997 : vector<2x32xf32>
    %999 = arith.mulf %992, %986 : vector<2x32xf32>
    %1000 = arith.addf %965, %999 : vector<2x32xf32>
    %1001 = math.tanh %1000 : vector<2x32xf32>
    %cst_757 = arith.constant 1.000000e+00 : f32
    %1002 = vector.broadcast %cst_757 : f32 to vector<2x32xf32>
    %1003 = arith.subf %1002, %998 : vector<2x32xf32>
    %1004 = arith.mulf %1003, %1001 : vector<2x32xf32>
    %1005 = arith.mulf %998, %872 : vector<2x32xf32>
    %1006 = arith.addf %1004, %1005 : vector<2x32xf32>
    %c7_758 = arith.constant 7 : index
    %c0_759 = arith.constant 0 : index
    %c0_760 = arith.constant 0 : index
    %1007 = vector.load %arg11[%c7_758, %c0_759, %c0_760] : memref<8x2x32xf32, #tpu.memory_space<vmem>>, vector<1x2x32xf32>
    %1008 = vector.shape_cast %1007 : vector<1x2x32xf32> to vector<2x32xf32>
    %1009 = vector.shape_cast %1006 : vector<2x32xf32> to vector<1x2x32xf32>
    tpu.vector_store %arg11[%c7_758, %c0_759, %c0_760], %1009 {strides = array<i32>} : memref<8x2x32xf32, #tpu.memory_space<vmem>>, vector<1x2x32xf32>,
    %c0_761 = arith.constant 0 : index
    %c0_762 = arith.constant 0 : index
    %c0_763 = arith.constant 0 : index
    %1010 = vector.load %arg2[%c0_761, %c0_762, %c0_763] : memref<8x2x16xf32, #tpu.memory_space<vmem>>, vector<1x2x16xf32>
    %1011 = vector.shape_cast %1010 : vector<1x2x16xf32> to vector<2x16xf32>
    %c0_764 = arith.constant 0 : index
    %c0_765 = arith.constant 0 : index
    %c0_766 = arith.constant 0 : index
    %1012 = vector.load %arg7[%c0_764, %c0_765, %c0_766] : memref<3x16x32xf32, #tpu.memory_space<vmem>>, vector<1x16x32xf32>
    %1013 = vector.shape_cast %1012 : vector<1x16x32xf32> to vector<16x32xf32>
    %cst_767 = arith.constant dense<0.000000e+00> : vector<2x32xf32>
    %1014 = tpu.matmul %1011, %1013, %cst_767 {dimension_numbers = #tpu.dot_dimension_numbers<[1], [0], [0], [1], [0, 0, 1, 1], [], []>} : vector<2x16xf32>, vector<16x32xf32>, vector<2x32xf32> -> vector<2x32xf32>
    %c0_768 = arith.constant 0 : index
    %c0_769 = arith.constant 0 : index
    %c0_770 = arith.constant 0 : index
    %1015 = vector.load %arg9[%c0_768, %c0_769, %c0_770] : memref<3x1x32xf32, #tpu.memory_space<vmem>>, vector<1x1x32xf32>
    %1016 = vector.shape_cast %1015 : vector<1x1x32xf32> to vector<1x32xf32>
    %1017 = vector.broadcast %1016 : vector<1x32xf32> to vector<2x32xf32>
    %1018 = arith.addf %1014, %1017 : vector<2x32xf32>
    %c1_771 = arith.constant 1 : index
    %c0_772 = arith.constant 0 : index
    %c0_773 = arith.constant 0 : index
    %1019 = vector.load %arg7[%c1_771, %c0_772, %c0_773] : memref<3x16x32xf32, #tpu.memory_space<vmem>>, vector<1x16x32xf32>
    %1020 = vector.shape_cast %1019 : vector<1x16x32xf32> to vector<16x32xf32>
    %cst_774 = arith.constant dense<0.000000e+00> : vector<2x32xf32>
    %1021 = tpu.matmul %1011, %1020, %cst_774 {dimension_numbers = #tpu.dot_dimension_numbers<[1], [0], [0], [1], [0, 0, 1, 1], [], []>} : vector<2x16xf32>, vector<16x32xf32>, vector<2x32xf32> -> vector<2x32xf32>
    %c1_775 = arith.constant 1 : index
    %c0_776 = arith.constant 0 : index
    %c0_777 = arith.constant 0 : index
    %1022 = vector.load %arg9[%c1_775, %c0_776, %c0_777] : memref<3x1x32xf32, #tpu.memory_space<vmem>>, vector<1x1x32xf32>
    %1023 = vector.shape_cast %1022 : vector<1x1x32xf32> to vector<1x32xf32>
    %1024 = vector.broadcast %1023 : vector<1x32xf32> to vector<2x32xf32>
    %1025 = arith.addf %1021, %1024 : vector<2x32xf32>
    %c2_778 = arith.constant 2 : index
    %c0_779 = arith.constant 0 : index
    %c0_780 = arith.constant 0 : index
    %1026 = vector.load %arg7[%c2_778, %c0_779, %c0_780] : memref<3x16x32xf32, #tpu.memory_space<vmem>>, vector<1x16x32xf32>
    %1027 = vector.shape_cast %1026 : vector<1x16x32xf32> to vector<16x32xf32>
    %cst_781 = arith.constant dense<0.000000e+00> : vector<2x32xf32>
    %1028 = tpu.matmul %1011, %1027, %cst_781 {dimension_numbers = #tpu.dot_dimension_numbers<[1], [0], [0], [1], [0, 0, 1, 1], [], []>} : vector<2x16xf32>, vector<16x32xf32>, vector<2x32xf32> -> vector<2x32xf32>
    %c2_782 = arith.constant 2 : index
    %c0_783 = arith.constant 0 : index
    %c0_784 = arith.constant 0 : index
    %1029 = vector.load %arg9[%c2_782, %c0_783, %c0_784] : memref<3x1x32xf32, #tpu.memory_space<vmem>>, vector<1x1x32xf32>
    %1030 = vector.shape_cast %1029 : vector<1x1x32xf32> to vector<1x32xf32>
    %1031 = vector.broadcast %1030 : vector<1x32xf32> to vector<2x32xf32>
    %1032 = arith.addf %1028, %1031 : vector<2x32xf32>
    %c0_785 = arith.constant 0 : index
    %c0_786 = arith.constant 0 : index
    %c0_787 = arith.constant 0 : index
    %1033 = vector.load %arg8[%c0_785, %c0_786, %c0_787] : memref<3x32x32xf32, #tpu.memory_space<vmem>>, vector<1x32x32xf32>
    %1034 = vector.shape_cast %1033 : vector<1x32x32xf32> to vector<32x32xf32>
    %cst_788 = arith.constant dense<0.000000e+00> : vector<2x32xf32>
    %1035 = tpu.matmul %939, %1034, %cst_788 {dimension_numbers = #tpu.dot_dimension_numbers<[1], [0], [0], [1], [0, 0, 1, 1], [], []>} : vector<2x32xf32>, vector<32x32xf32>, vector<2x32xf32> -> vector<2x32xf32>
    %c0_789 = arith.constant 0 : index
    %c0_790 = arith.constant 0 : index
    %c0_791 = arith.constant 0 : index
    %1036 = vector.load %arg10[%c0_789, %c0_790, %c0_791] : memref<3x1x32xf32, #tpu.memory_space<vmem>>, vector<1x1x32xf32>
    %1037 = vector.shape_cast %1036 : vector<1x1x32xf32> to vector<1x32xf32>
    %1038 = vector.broadcast %1037 : vector<1x32xf32> to vector<2x32xf32>
    %1039 = arith.addf %1035, %1038 : vector<2x32xf32>
    %c1_792 = arith.constant 1 : index
    %c0_793 = arith.constant 0 : index
    %c0_794 = arith.constant 0 : index
    %1040 = vector.load %arg8[%c1_792, %c0_793, %c0_794] : memref<3x32x32xf32, #tpu.memory_space<vmem>>, vector<1x32x32xf32>
    %1041 = vector.shape_cast %1040 : vector<1x32x32xf32> to vector<32x32xf32>
    %cst_795 = arith.constant dense<0.000000e+00> : vector<2x32xf32>
    %1042 = tpu.matmul %939, %1041, %cst_795 {dimension_numbers = #tpu.dot_dimension_numbers<[1], [0], [0], [1], [0, 0, 1, 1], [], []>} : vector<2x32xf32>, vector<32x32xf32>, vector<2x32xf32> -> vector<2x32xf32>
    %c1_796 = arith.constant 1 : index
    %c0_797 = arith.constant 0 : index
    %c0_798 = arith.constant 0 : index
    %1043 = vector.load %arg10[%c1_796, %c0_797, %c0_798] : memref<3x1x32xf32, #tpu.memory_space<vmem>>, vector<1x1x32xf32>
    %1044 = vector.shape_cast %1043 : vector<1x1x32xf32> to vector<1x32xf32>
    %1045 = vector.broadcast %1044 : vector<1x32xf32> to vector<2x32xf32>
    %1046 = arith.addf %1042, %1045 : vector<2x32xf32>
    %c2_799 = arith.constant 2 : index
    %c0_800 = arith.constant 0 : index
    %c0_801 = arith.constant 0 : index
    %1047 = vector.load %arg8[%c2_799, %c0_800, %c0_801] : memref<3x32x32xf32, #tpu.memory_space<vmem>>, vector<1x32x32xf32>
    %1048 = vector.shape_cast %1047 : vector<1x32x32xf32> to vector<32x32xf32>
    %cst_802 = arith.constant dense<0.000000e+00> : vector<2x32xf32>
    %1049 = tpu.matmul %939, %1048, %cst_802 {dimension_numbers = #tpu.dot_dimension_numbers<[1], [0], [0], [1], [0, 0, 1, 1], [], []>} : vector<2x32xf32>, vector<32x32xf32>, vector<2x32xf32> -> vector<2x32xf32>
    %c2_803 = arith.constant 2 : index
    %c0_804 = arith.constant 0 : index
    %c0_805 = arith.constant 0 : index
    %1050 = vector.load %arg10[%c2_803, %c0_804, %c0_805] : memref<3x1x32xf32, #tpu.memory_space<vmem>>, vector<1x1x32xf32>
    %1051 = vector.shape_cast %1050 : vector<1x1x32xf32> to vector<1x32xf32>
    %1052 = vector.broadcast %1051 : vector<1x32xf32> to vector<2x32xf32>
    %1053 = arith.addf %1049, %1052 : vector<2x32xf32>
    %1054 = arith.addf %1018, %1039 : vector<2x32xf32>
    %1055 = arith.negf %1054 : vector<2x32xf32>
    %1056 = math.exp %1055 : vector<2x32xf32>
    %cst_806 = arith.constant 1.000000e+00 : f32
    %1057 = vector.broadcast %cst_806 : f32 to vector<2x32xf32>
    %1058 = arith.addf %1057, %1056 : vector<2x32xf32>
    %1059 = arith.divf %1057, %1058 : vector<2x32xf32>
    %1060 = arith.addf %1025, %1046 : vector<2x32xf32>
    %1061 = arith.negf %1060 : vector<2x32xf32>
    %1062 = math.exp %1061 : vector<2x32xf32>
    %cst_807 = arith.constant 1.000000e+00 : f32
    %1063 = vector.broadcast %cst_807 : f32 to vector<2x32xf32>
    %1064 = arith.addf %1063, %1062 : vector<2x32xf32>
    %1065 = arith.divf %1063, %1064 : vector<2x32xf32>
    %1066 = arith.mulf %1059, %1053 : vector<2x32xf32>
    %1067 = arith.addf %1032, %1066 : vector<2x32xf32>
    %1068 = math.tanh %1067 : vector<2x32xf32>
    %cst_808 = arith.constant 1.000000e+00 : f32
    %1069 = vector.broadcast %cst_808 : f32 to vector<2x32xf32>
    %1070 = arith.subf %1069, %1065 : vector<2x32xf32>
    %1071 = arith.mulf %1070, %1068 : vector<2x32xf32>
    %1072 = arith.mulf %1065, %939 : vector<2x32xf32>
    %1073 = arith.addf %1071, %1072 : vector<2x32xf32>
    %c0_809 = arith.constant 0 : index
    %c0_810 = arith.constant 0 : index
    %c0_811 = arith.constant 0 : index
    %1074 = vector.load %arg12[%c0_809, %c0_810, %c0_811] : memref<8x2x32xf32, #tpu.memory_space<vmem>>, vector<1x2x32xf32>
    %1075 = vector.shape_cast %1074 : vector<1x2x32xf32> to vector<2x32xf32>
    %1076 = vector.shape_cast %1073 : vector<2x32xf32> to vector<1x2x32xf32>
    tpu.vector_store %arg12[%c0_809, %c0_810, %c0_811], %1076 {strides = array<i32>} : memref<8x2x32xf32, #tpu.memory_space<vmem>>, vector<1x2x32xf32>,
    %c0_812 = arith.constant 0 : index
    %c0_813 = arith.constant 0 : index
    %1077 = vector.load %arg13[%c0_812, %c0_813] : memref<2x32xf32, #tpu.memory_space<vmem>>, vector<2x32xf32>
    tpu.vector_store %arg13[%c0_812, %c0_813], %1006 {strides = array<i32>} : memref<2x32xf32, #tpu.memory_space<vmem>>, vector<2x32xf32>,
    %c0_814 = arith.constant 0 : index
    %c0_815 = arith.constant 0 : index
    %1078 = vector.load %arg14[%c0_814, %c0_815] : memref<2x32xf32, #tpu.memory_space<vmem>>, vector<2x32xf32>
    tpu.vector_store %arg14[%c0_814, %c0_815], %1073 {strides = array<i32>} : memref<2x32xf32, #tpu.memory_space<vmem>>, vector<2x32xf32>,
    return
  }
  func.func @transform_0(%arg0: i32) -> (i32, i32, i32) {
    %c0_i32 = arith.constant 0 : i32
    %c0_i32_0 = arith.constant 0 : i32
    %c0_i32_1 = arith.constant 0 : i32
    return %arg0, %c0_i32, %c0_i32_0 : i32, i32, i32
  }
  func.func @transform_1(%arg0: i32) -> (i32, i32, i32) {
    %c0_i32 = arith.constant 0 : i32
    %0 = arith.subi %c0_i32, %arg0 : i32
    %c0_i32_0 = arith.constant 0 : i32
    %c0_i32_1 = arith.constant 0 : i32
    %c0_i32_2 = arith.constant 0 : i32
    return %0, %c0_i32_0, %c0_i32_1 : i32, i32, i32
  }
  func.func @transform_2(%arg0: i32) -> (i32, i32, i32) {
    %c0_i32 = arith.constant 0 : i32
    %c0_i32_0 = arith.constant 0 : i32
    %c0_i32_1 = arith.constant 0 : i32
    %c0_i32_2 = arith.constant 0 : i32
    return %c0_i32, %c0_i32_0, %c0_i32_1 : i32, i32, i32
  }
  func.func @transform_3(%arg0: i32) -> (i32, i32, i32) {
    %c0_i32 = arith.constant 0 : i32
    %c0_i32_0 = arith.constant 0 : i32
    %c0_i32_1 = arith.constant 0 : i32
    %c0_i32_2 = arith.constant 0 : i32
    return %c0_i32, %c0_i32_0, %c0_i32_1 : i32, i32, i32
  }
  func.func @transform_4(%arg0: i32) -> (i32, i32, i32) {
    %c0_i32 = arith.constant 0 : i32
    %c0_i32_0 = arith.constant 0 : i32
    %c0_i32_1 = arith.constant 0 : i32
    %c0_i32_2 = arith.constant 0 : i32
    return %c0_i32, %c0_i32_0, %c0_i32_1 : i32, i32, i32
  }
  func.func @transform_5(%arg0: i32) -> (i32, i32, i32) {
    %c0_i32 = arith.constant 0 : i32
    %c0_i32_0 = arith.constant 0 : i32
    %c0_i32_1 = arith.constant 0 : i32
    %c0_i32_2 = arith.constant 0 : i32
    return %c0_i32, %c0_i32_0, %c0_i32_1 : i32, i32, i32
  }
  func.func @transform_6(%arg0: i32) -> (i32, i32, i32) {
    %c0_i32 = arith.constant 0 : i32
    %c0_i32_0 = arith.constant 0 : i32
    %c0_i32_1 = arith.constant 0 : i32
    %c0_i32_2 = arith.constant 0 : i32
    return %c0_i32, %c0_i32_0, %c0_i32_1 : i32, i32, i32
  }
  func.func @transform_7(%arg0: i32) -> (i32, i32, i32) {
    %c0_i32 = arith.constant 0 : i32
    %c0_i32_0 = arith.constant 0 : i32
    %c0_i32_1 = arith.constant 0 : i32
    %c0_i32_2 = arith.constant 0 : i32
    return %c0_i32, %c0_i32_0, %c0_i32_1 : i32, i32, i32
  }
  func.func @transform_8(%arg0: i32) -> (i32, i32, i32) {
    %c0_i32 = arith.constant 0 : i32
    %c0_i32_0 = arith.constant 0 : i32
    %c0_i32_1 = arith.constant 0 : i32
    %c0_i32_2 = arith.constant 0 : i32
    return %c0_i32, %c0_i32_0, %c0_i32_1 : i32, i32, i32
  }
  func.func @transform_9(%arg0: i32) -> (i32, i32, i32) {
    %c0_i32 = arith.constant 0 : i32
    %c0_i32_0 = arith.constant 0 : i32
    %c0_i32_1 = arith.constant 0 : i32
    %c0_i32_2 = arith.constant 0 : i32
    return %c0_i32, %c0_i32_0, %c0_i32_1 : i32, i32, i32
  }
  func.func @transform_10(%arg0: i32) -> (i32, i32, i32) {
    %c0_i32 = arith.constant 0 : i32
    %c0_i32_0 = arith.constant 0 : i32
    %c0_i32_1 = arith.constant 0 : i32
    return %arg0, %c0_i32, %c0_i32_0 : i32, i32, i32
  }
  func.func @transform_11(%arg0: i32) -> (i32, i32, i32) {
    %c0_i32 = arith.constant 0 : i32
    %0 = arith.subi %c0_i32, %arg0 : i32
    %c0_i32_0 = arith.constant 0 : i32
    %c0_i32_1 = arith.constant 0 : i32
    %c0_i32_2 = arith.constant 0 : i32
    return %0, %c0_i32_0, %c0_i32_1 : i32, i32, i32
  }
}

</mosaic_0001>

<llo_original>
// kernel: tpu_custom_call.1
$region0: #{tpu_custom_call.1}
  #allocation0 [shape = 'u32[]', space=smem, size = 0x4, offset = 0x4, fixed_abs, tag = 'smem constant byte address 0x4 - core index']
  #allocation1 [shape = 'u32[144,128]{1,0:T(1,128)}', space=vmem, size = 0x12000, scoped, tag = 'internal scratch']
  #allocation2 [shape = 'f32[2,32]{1,0:T(2,128)}', space=vmem, size = 0x400, scoped, tag = 'scratch operand']
  #allocation3 [shape = 'f32[2,32]{1,0:T(2,128)}', space=vmem, size = 0x400, scoped, tag = 'scratch operand']
  %s0 = inlined_call_operand.hbm [shape: f32[8,2,16], index: 0, kind: input, shape index: {}]
  %s1 = inlined_call_operand.hbm [shape: f32[8,2,16], index: 1, kind: input, shape index: {}]
  %s2 = inlined_call_operand.hbm [shape: f32[3,16,32], index: 2, kind: input, shape index: {}]
  %s3 = inlined_call_operand.hbm [shape: f32[3,32,32], index: 3, kind: input, shape index: {}]
  %s4 = inlined_call_operand.vmem [shape: f32[3,1,32], index: 4, kind: input, shape index: {}]
  %s5 = inlined_call_operand.vmem [shape: f32[3,1,32], index: 5, kind: input, shape index: {}]
  %s6 = inlined_call_operand.hbm [shape: f32[3,16,32], index: 6, kind: input, shape index: {}]
  %s7 = inlined_call_operand.hbm [shape: f32[3,32,32], index: 7, kind: input, shape index: {}]
  %s8 = inlined_call_operand.vmem [shape: f32[3,1,32], index: 8, kind: input, shape index: {}]
  %s9 = inlined_call_operand.vmem [shape: f32[3,1,32], index: 9, kind: input, shape index: {}]
  %s10 = inlined_call_operand.hbm [shape: f32[8,2,32], index: 10, kind: output, shape index: {0}]
  %s11 = inlined_call_operand.hbm [shape: f32[8,2,32], index: 11, kind: output, shape index: {1}]
  %12 = xla_tuple %s10, %s11
  %s13 = sld [smem:[#allocation0]]
  $region86: #{tpu_custom_call.1} parent=0
    _
  %s15 = ssub.s32 1, %s13
  %s16 = scalar_select 0, %s15, %s13
  $region1: #{tpu_custom_call.1} parent=0
    #allocation4 [shape = 'u8[8192]{0}', space=vmem, size = 0x2000, scoped, tag = 'input window, operand 0, single buffered']
    #allocation5 [shape = 's32[1]{0}', space=sflag, size = 0x4, scoped, tag = 'scoped memory for tpu_custom_call.1']
    #allocation6 [shape = 's32[1]{0}', space=sflag, size = 0x4, scoped, tag = 'scoped memory for tpu_custom_call.1']
    #allocation7 [shape = 'u8[8192]{0}', space=vmem, size = 0x2000, scoped, tag = 'input window, operand 1, single buffered']
    #allocation8 [shape = 's32[1]{0}', space=sflag, size = 0x4, scoped, tag = 'scoped memory for tpu_custom_call.1']
    #allocation9 [shape = 'u8[24576]{0}', space=vmem, size = 0x6000, scoped, tag = 'input window, operand 2, single buffered']
    #allocation10 [shape = 'u8[49152]{0}', space=vmem, size = 0xc000, scoped, tag = 'input window, operand 3, single buffered']
    #allocation11 [shape = 's32[1]{0}', space=sflag, size = 0x4, scoped, tag = 'scoped memory for tpu_custom_call.1']
    #allocation12 [shape = 'u8[24576]{0}', space=vmem, size = 0x6000, scoped, tag = 'input window, operand 6, single buffered']
    #allocation13 [shape = 'u8[49152]{0}', space=vmem, size = 0xc000, scoped, tag = 'input window, operand 7, single buffered']
    #allocation14 [shape = 's32[1]{0}', space=sflag, size = 0x4, scoped, tag = 'scoped memory for tpu_custom_call.1']
    #allocation15 [shape = 'u8[8192]{0}', space=vmem, size = 0x2000, scoped, tag = 'output window, operand 0, single buffered']
    #allocation16 [shape = 'u8[8192]{0}', space=vmem, size = 0x2000, scoped, tag = 'output window, operand 1, single buffered']
    #allocation17 [shape = 's32[1]{0}', space=sflag, size = 0x4, scoped, tag = 'scoped memory for tpu_custom_call.1']
    %17 = vsyncpa [#allocation5], 0
    %18 = vsyncpa [#allocation8], 0
    %19 = vsyncpa [#allocation11], 0
    %20 = vsyncpa [#allocation14], 0
    %21 = vsyncpa [#allocation6], 0
    %22 = vsyncpa [#allocation17], 0
    // Predicated region
    $region2: #{tpu_custom_call.1} parent=1 // pred_check
      _
    $region3: #{tpu_custom_call.1} parent=1 // pred_check_branch
      %24 = sbr.rel (0) target = $region5
    $region4: #{tpu_custom_call.1} parent=1 // pred_region
      %s26 = ssub.s32 256, 256
      %27 = vsyncadd [#allocation5], %s26
      %s28 = sshll.u32 [#allocation4], 4
      %s29 = int_to_ptr.vmem [resolvable:$true] %s28
      %34 = dma.hbm_to_vmem [thread:$0]  %s0, 256, %s29, [#allocation5], 32, 32, 2
    $region5: #{tpu_custom_call.1} parent=1 // pred_fallthru
      _
    // Predicated region
    $region6: #{tpu_custom_call.1} parent=1 // pred_check
      _
    $region7: #{tpu_custom_call.1} parent=1 // pred_check_branch
      %36 = sbr.rel (0) target = $region9
    $region8: #{tpu_custom_call.1} parent=1 // pred_region
      %s37 = ssub.s32 0, 0
      %s38 = smul.u32 8, %s37
      %s40 = ssub.s32 256, 256
      %41 = vsyncadd [#allocation8], %s40
      %s42 = smul.addr %s38, 32
      %s43 = scalar_lea.hbm %s1, %s42
      %s44 = sshll.u32 [#allocation7], 4
      %s45 = int_to_ptr.vmem [resolvable:$true] %s44
      %50 = dma.hbm_to_vmem [thread:$0]  %s43, 256, %s45, [#allocation8], 32, 32, 2
    $region9: #{tpu_custom_call.1} parent=1 // pred_fallthru
      _
    // Predicated region
    $region10: #{tpu_custom_call.1} parent=1 // pred_check
      _
    $region11: #{tpu_custom_call.1} parent=1 // pred_check_branch
      %52 = sbr.rel (0) target = $region13
    $region12: #{tpu_custom_call.1} parent=1 // pred_region
      %s54 = ssub.s32 768, 768
      %55 = vsyncadd [#allocation8], %s54
      %s56 = sshll.u32 [#allocation9], 4
      %s57 = int_to_ptr.vmem [resolvable:$true] %s56
      %62 = dma.hbm_to_vmem [thread:$0]  %s2, 768, %s57, [#allocation8], 128, 128, 8
    $region13: #{tpu_custom_call.1} parent=1 // pred_fallthru
      _
    // Predicated region
    $region14: #{tpu_custom_call.1} parent=1 // pred_check
      _
    $region15: #{tpu_custom_call.1} parent=1 // pred_check_branch
      %64 = sbr.rel (0) target = $region17
    $region16: #{tpu_custom_call.1} parent=1 // pred_region
      %s66 = ssub.s32 1536, 1536
      %67 = vsyncadd [#allocation11], %s66
      %s68 = sshll.u32 [#allocation10], 4
      %s69 = int_to_ptr.vmem [resolvable:$true] %s68
      %74 = dma.hbm_to_vmem [thread:$0]  %s3, 1536, %s69, [#allocation11], 128, 128, 8
    $region17: #{tpu_custom_call.1} parent=1 // pred_fallthru
      _
    // Predicated region
    $region18: #{tpu_custom_call.1} parent=1 // pred_check
      _
    $region19: #{tpu_custom_call.1} parent=1 // pred_check_branch
      %76 = sbr.rel (0) target = $region21
    $region20: #{tpu_custom_call.1} parent=1 // pred_region
      _
    $region21: #{tpu_custom_call.1} parent=1 // pred_fallthru
      _
    // Predicated region
    $region22: #{tpu_custom_call.1} parent=1 // pred_check
      _
    $region23: #{tpu_custom_call.1} parent=1 // pred_check_branch
      %78 = sbr.rel (0) target = $region25
    $region24: #{tpu_custom_call.1} parent=1 // pred_region
      _
    $region25: #{tpu_custom_call.1} parent=1 // pred_fallthru
      _
    // Predicated region
    $region26: #{tpu_custom_call.1} parent=1 // pred_check
      _
    $region27: #{tpu_custom_call.1} parent=1 // pred_check_branch
      %80 = sbr.rel (0) target = $region29
    $region28: #{tpu_custom_call.1} parent=1 // pred_region
      %s82 = ssub.s32 768, 768
      %83 = vsyncadd [#allocation11], %s82
      %s84 = sshll.u32 [#allocation12], 4
      %s85 = int_to_ptr.vmem [resolvable:$true] %s84
      %90 = dma.hbm_to_vmem [thread:$0]  %s6, 768, %s85, [#allocation11], 128, 128, 8
    $region29: #{tpu_custom_call.1} parent=1 // pred_fallthru
      _
    // Predicated region
    $region30: #{tpu_custom_call.1} parent=1 // pred_check
      _
    $region31: #{tpu_custom_call.1} parent=1 // pred_check_branch
      %92 = sbr.rel (0) target = $region33
    $region32: #{tpu_custom_call.1} parent=1 // pred_region
      %s94 = ssub.s32 1536, 1536
      %95 = vsyncadd [#allocation14], %s94
      %s96 = sshll.u32 [#allocation13], 4
      %s97 = int_to_ptr.vmem [resolvable:$true] %s96
      %102 = dma.hbm_to_vmem [thread:$0]  %s7, 1536, %s97, [#allocation14], 128, 128, 8
    $region33: #{tpu_custom_call.1} parent=1 // pred_fallthru
      _
    // Predicated region
    $region34: #{tpu_custom_call.1} parent=1 // pred_check
      _
    $region35: #{tpu_custom_call.1} parent=1 // pred_check_branch
      %104 = sbr.rel (0) target = $region37
    $region36: #{tpu_custom_call.1} parent=1 // pred_region
      _
    $region37: #{tpu_custom_call.1} parent=1 // pred_fallthru
      _
    // Predicated region
    $region38: #{tpu_custom_call.1} parent=1 // pred_check
      _
    $region39: #{tpu_custom_call.1} parent=1 // pred_check_branch
      %106 = sbr.rel (0) target = $region41
    $region40: #{tpu_custom_call.1} parent=1 // pred_region
      _
    $region41: #{tpu_custom_call.1} parent=1 // pred_fallthru
      _
    // Predicated region
    $region42: #{tpu_custom_call.1} parent=1 // pred_check
      _
    $region43: #{tpu_custom_call.1} parent=1 // pred_check_branch
      %108 = sbr.rel (0) target = $region45
    $region44: #{tpu_custom_call.1} parent=1 // pred_region
      %109 = dma.done [#allocation5], 256
    $region45: #{tpu_custom_call.1} parent=1 // pred_fallthru
      _
    // Predicated region
    $region46: #{tpu_custom_call.1} parent=1 // pred_check
      _
    $region47: #{tpu_custom_call.1} parent=1 // pred_check_branch
      %111 = sbr.rel (0) target = $region49
    $region48: #{tpu_custom_call.1} parent=1 // pred_region
      %112 = dma.done [#allocation8], 256
    $region49: #{tpu_custom_call.1} parent=1 // pred_fallthru
      _
    // Predicated region
    $region50: #{tpu_custom_call.1} parent=1 // pred_check
      _
    $region51: #{tpu_custom_call.1} parent=1 // pred_check_branch
      %114 = sbr.rel (0) target = $region53
    $region52: #{tpu_custom_call.1} parent=1 // pred_region
      %115 = dma.done [#allocation8], 768
    $region53: #{tpu_custom_call.1} parent=1 // pred_fallthru
      _
    // Predicated region
    $region54: #{tpu_custom_call.1} parent=1 // pred_check
      _
    $region55: #{tpu_custom_call.1} parent=1 // pred_check_branch
      %117 = sbr.rel (0) target = $region57
    $region56: #{tpu_custom_call.1} parent=1 // pred_region
      %118 = dma.done [#allocation11], 1536
    $region57: #{tpu_custom_call.1} parent=1 // pred_fallthru
      _
    // Predicated region
    $region58: #{tpu_custom_call.1} parent=1 // pred_check
      _
    $region59: #{tpu_custom_call.1} parent=1 // pred_check_branch
      %120 = sbr.rel (0) target = $region61
    $region60: #{tpu_custom_call.1} parent=1 // pred_region
      %121 = dma.done [#allocation11], 768
    $region61: #{tpu_custom_call.1} parent=1 // pred_fallthru
      _
    // Predicated region
    $region62: #{tpu_custom_call.1} parent=1 // pred_check
      _
    $region63: #{tpu_custom_call.1} parent=1 // pred_check_branch
      %123 = sbr.rel (0) target = $region65
    $region64: #{tpu_custom_call.1} parent=1 // pred_region
      %124 = dma.done [#allocation14], 1536
    $region65: #{tpu_custom_call.1} parent=1 // pred_fallthru
      _
    %s125 = ssub.s32 0, 0
    %s126 = smul.u32 8, %s125
    %s127 = ssub.s32 0, 0
    %s128 = smul.u32 8, %s127
    %p129 = scmp.eq.s32.totalorder 0, 0
    // Predicated region
    $region66: #{tpu_custom_call.1} parent=1 // pred_check
      %p130 = pneg %p129
    $region67: #{tpu_custom_call.1} parent=1 // pred_check_branch
      %132 = sbr.rel (%p130) target = $region69
    $region68: #{tpu_custom_call.1} parent=1 // pred_region
      %vm133 = vcmask 254976
      %134 = vst.msk [vmem:[#allocation2] sm:$0x3] %vm133, 0.0
      %135 = vst.msk [vmem:[#allocation3] sm:$0x3] %vm133, 0.0
    $region69: #{tpu_custom_call.1} parent=1 // pred_fallthru
      _
    %v136 = vld [vmem:[#allocation2] sm:$0x3]
    %v137 = vld [vmem:[#allocation3] sm:$0x3]
    %v138 = vld [vmem:[#allocation4] sm:$0x3]
    %v139 = vld [vmem:[#allocation9] sm:$0xff]
    %v140 = vld [vmem:[#allocation9 + $0x8] sm:$0xff]
    %v141 = vld [vmem:[%s4] sm:$0x1]
    %v143 = vlaneseq
    %v144 = vshrl.u32 %v143, 7
    %v145 = vsub.s32 0, %v144
    %v146 = vrot.slane %v141, %v145
    %vm148 = vcmask 130048
    %v150 = vsel %vm148, %v138, 0
    %152 = vmatprep.subr.mxu0 0.0
    %153 = vmatpush1.msra.mxu0 0.0
    %154 = vmatprep.subr.mxu0 0.0
    %155 = vmatpush1.msra.mxu0 0.0
    %156 = vmatprep.subr.mxu0 0.0
    %157 = vmatpush1.msra.mxu0 0.0
    %158 = vmatprep.subr.mxu0 0.0
    %159 = vmatpush1.msra.mxu0 0.0
    %160 = vmatprep.subr.mxu0 0.0
    %161 = vmatpush1.msra.mxu0 0.0
    %162 = vmatprep.subr.mxu0 0.0
    %163 = vmatpush1.msra.mxu0 0.0
    %164 = vmatprep.subr.mxu0 0.0
    %165 = vmatpush1.msra.mxu0 0.0
    %166 = vmatprep.subr.mxu0 0.0
    %167 = vmatpush1.msra.mxu0 0.0
    %168 = vmatprep.subr.mxu0 0.0
    %169 = vmatpush1.msra.mxu0 0.0
    %170 = vmatprep.subr.mxu0 0.0
    %171 = vmatpush1.msra.mxu0 0.0
    %172 = vmatprep.subr.mxu0 0.0
    %173 = vmatpush1.msra.mxu0 0.0
    %174 = vmatprep.subr.mxu0 0.0
    %175 = vmatpush1.msra.mxu0 0.0
    %176 = vmatprep.subr.mxu0 0.0
    %177 = vmatpush1.msra.mxu0 0.0
    %178 = vmatprep.subr.mxu0 0.0
    %179 = vmatpush1.msra.mxu0 0.0
    %180 = vmatprep.subr.mxu0 0.0
    %181 = vmatpush1.msra.mxu0 %v140
    %182 = vmatprep.subr.mxu0 0.0
    %183 = vmatpush1.msra.mxu0 %v139
    %184 = vmatprep.subr.mxu0 0.0
    %185 = vmatpush2.msra.mxu0 0.0
    %186 = vmatprep.subr.mxu0 0.0
    %187 = vmatpush2.msra.mxu0 0.0
    %188 = vmatprep.subr.mxu0 0.0
    %189 = vmatpush2.msra.mxu0 0.0
    %190 = vmatprep.subr.mxu0 0.0
    %191 = vmatpush2.msra.mxu0 0.0
    %192 = vmatprep.subr.mxu0 0.0
    %193 = vmatpush2.msra.mxu0 0.0
    %194 = vmatprep.subr.mxu0 0.0
    %195 = vmatpush2.msra.mxu0 0.0
    %196 = vmatprep.subr.mxu0 0.0
    %197 = vmatpush2.msra.mxu0 0.0
    %198 = vmatprep.subr.mxu0 0.0
    %199 = vmatpush2.msra.mxu0 0.0
    %200 = vmatprep.subr.mxu0 0.0
    %201 = vmatpush2.msra.mxu0 0.0
    %202 = vmatprep.subr.mxu0 0.0
    %203 = vmatpush2.msra.mxu0 0.0
    %204 = vmatprep.subr.mxu0 0.0
    %205 = vmatpush2.msra.mxu0 0.0
    %206 = vmatprep.subr.mxu0 0.0
    %207 = vmatpush2.msra.mxu0 0.0
    %208 = vmatprep.subr.mxu0 0.0
    %209 = vmatpush2.msra.mxu0 0.0
    %210 = vmatprep.subr.mxu0 0.0
    %211 = vmatpush2.msra.mxu0 0.0
    %212 = vmatprep.subr.mxu0 0.0
    %213 = vmatpush2.msra.mxu0 0.0
    %214 = vmatprep.subr.mxu0 0.0
    %215 = vmatpush2.msra.mxu0 0.0
    %216 = vmatprep.mubr.f32.mxu0 0.0
    %217 = vmatmul.mubr.f32.gmra.mxu0 %v150
    %v218 = vpop.f32.mrf.mxu0
    %v219 = vadd.f32 %v146, %v218
    %v220 = vpop.f32.mrf.mxu0
    %221 = vdwg.mxu0
    %s222 = scalar_lea.vmem [#allocation9], 16
    %v223 = vld [vmem:[%s222] sm:$0xff]
    %v224 = vld [vmem:[%s222 + $0x8] sm:$0xff]
    %s225 = scalar_lea.vmem %s4, 1
    %v226 = vld [vmem:[%s225] sm:$0x1]
    %v228 = vlaneseq
    %v229 = vshrl.u32 %v228, 7
    %v230 = vsub.s32 0, %v229
    %v231 = vrot.slane %v226, %v230
    %233 = vmatprep.subr.mxu0 0.0
    %234 = vmatpush1.msra.mxu0 0.0
    %235 = vmatprep.subr.mxu0 0.0
    %236 = vmatpush1.msra.mxu0 0.0
    %237 = vmatprep.subr.mxu0 0.0
    %238 = vmatpush1.msra.mxu0 0.0
    %239 = vmatprep.subr.mxu0 0.0
    %240 = vmatpush1.msra.mxu0 0.0
    %241 = vmatprep.subr.mxu0 0.0
    %242 = vmatpush1.msra.mxu0 0.0
    %243 = vmatprep.subr.mxu0 0.0
    %244 = vmatpush1.msra.mxu0 0.0
    %245 = vmatprep.subr.mxu0 0.0
    %246 = vmatpush1.msra.mxu0 0.0
    %247 = vmatprep.subr.mxu0 0.0
    %248 = vmatpush1.msra.mxu0 0.0
    %249 = vmatprep.subr.mxu0 0.0
    %250 = vmatpush1.msra.mxu0 0.0
    %251 = vmatprep.subr.mxu0 0.0
    %252 = vmatpush1.msra.mxu0 0.0
    %253 = vmatprep.subr.mxu0 0.0
    %254 = vmatpush1.msra.mxu0 0.0
    %255 = vmatprep.subr.mxu0 0.0
    %256 = vmatpush1.msra.mxu0 0.0
    %257 = vmatprep.subr.mxu0 0.0
    %258 = vmatpush1.msra.mxu0 0.0
    %259 = vmatprep.subr.mxu0 0.0
    %260 = vmatpush1.msra.mxu0 0.0
    %261 = vmatprep.subr.mxu0 0.0
    %262 = vmatpush1.msra.mxu0 %v224
    %263 = vmatprep.subr.mxu0 0.0
    %264 = vmatpush1.msra.mxu0 %v223
    %265 = vmatprep.subr.mxu0 0.0
    %266 = vmatpush2.msra.mxu0 0.0
    %267 = vmatprep.subr.mxu0 0.0
    %268 = vmatpush2.msra.mxu0 0.0
    %269 = vmatprep.subr.mxu0 0.0
    %270 = vmatpush2.msra.mxu0 0.0
    %271 = vmatprep.subr.mxu0 0.0
    %272 = vmatpush2.msra.mxu0 0.0
    %273 = vmatprep.subr.mxu0 0.0
    %274 = vmatpush2.msra.mxu0 0.0
    %275 = vmatprep.subr.mxu0 0.0
    %276 = vmatpush2.msra.mxu0 0.0
    %277 = vmatprep.subr.mxu0 0.0
    %278 = vmatpush2.msra.mxu0 0.0
    %279 = vmatprep.subr.mxu0 0.0
    %280 = vmatpush2.msra.mxu0 0.0
    %281 = vmatprep.subr.mxu0 0.0
    %282 = vmatpush2.msra.mxu0 0.0
    %283 = vmatprep.subr.mxu0 0.0
    %284 = vmatpush2.msra.mxu0 0.0
    %285 = vmatprep.subr.mxu0 0.0
    %286 = vmatpush2.msra.mxu0 0.0
    %287 = vmatprep.subr.mxu0 0.0
    %288 = vmatpush2.msra.mxu0 0.0
    %289 = vmatprep.subr.mxu0 0.0
    %290 = vmatpush2.msra.mxu0 0.0
    %291 = vmatprep.subr.mxu0 0.0
    %292 = vmatpush2.msra.mxu0 0.0
    %293 = vmatprep.subr.mxu0 0.0
    %294 = vmatpush2.msra.mxu0 0.0
    %295 = vmatprep.subr.mxu0 0.0
    %296 = vmatpush2.msra.mxu0 0.0
    %297 = vmatprep.mubr.f32.mxu0 0.0
    %298 = vmatmul.mubr.f32.gmra.mxu0 %v150
    %v299 = vpop.f32.mrf.mxu0
    %v300 = vadd.f32 %v231, %v299
    %v301 = vpop.f32.mrf.mxu0
    %302 = vdwg.mxu0
    %s303 = scalar_lea.vmem [#allocation9], 32
    %v304 = vld [vmem:[%s303] sm:$0xff]
    %v305 = vld [vmem:[%s303 + $0x8] sm:$0xff]
    %s306 = scalar_lea.vmem %s4, 2
    %v307 = vld [vmem:[%s306] sm:$0x1]
    %v309 = vlaneseq
    %v310 = vshrl.u32 %v309, 7
    %v311 = vsub.s32 0, %v310
    %v312 = vrot.slane %v307, %v311
    %314 = vmatprep.subr.mxu0 0.0
    %315 = vmatpush1.msra.mxu0 0.0
    %316 = vmatprep.subr.mxu0 0.0
    %317 = vmatpush1.msra.mxu0 0.0
    %318 = vmatprep.subr.mxu0 0.0
    %319 = vmatpush1.msra.mxu0 0.0
    %320 = vmatprep.subr.mxu0 0.0
    %321 = vmatpush1.msra.mxu0 0.0
    %322 = vmatprep.subr.mxu0 0.0
    %323 = vmatpush1.msra.mxu0 0.0
    %324 = vmatprep.subr.mxu0 0.0
    %325 = vmatpush1.msra.mxu0 0.0
    %326 = vmatprep.subr.mxu0 0.0
    %327 = vmatpush1.msra.mxu0 0.0
    %328 = vmatprep.subr.mxu0 0.0
    %329 = vmatpush1.msra.mxu0 0.0
    %330 = vmatprep.subr.mxu0 0.0
    %331 = vmatpush1.msra.mxu0 0.0
    %332 = vmatprep.subr.mxu0 0.0
    %333 = vmatpush1.msra.mxu0 0.0
    %334 = vmatprep.subr.mxu0 0.0
    %335 = vmatpush1.msra.mxu0 0.0
    %336 = vmatprep.subr.mxu0 0.0
    %337 = vmatpush1.msra.mxu0 0.0
    %338 = vmatprep.subr.mxu0 0.0
    %339 = vmatpush1.msra.mxu0 0.0
    %340 = vmatprep.subr.mxu0 0.0
    %341 = vmatpush1.msra.mxu0 0.0
    %342 = vmatprep.subr.mxu0 0.0
    %343 = vmatpush1.msra.mxu0 %v305
    %344 = vmatprep.subr.mxu0 0.0
    %345 = vmatpush1.msra.mxu0 %v304
    %346 = vmatprep.subr.mxu0 0.0
    %347 = vmatpush2.msra.mxu0 0.0
    %348 = vmatprep.subr.mxu0 0.0
    %349 = vmatpush2.msra.mxu0 0.0
    %350 = vmatprep.subr.mxu0 0.0
    %351 = vmatpush2.msra.mxu0 0.0
    %352 = vmatprep.subr.mxu0 0.0
    %353 = vmatpush2.msra.mxu0 0.0
    %354 = vmatprep.subr.mxu0 0.0
    %355 = vmatpush2.msra.mxu0 0.0
    %356 = vmatprep.subr.mxu0 0.0
    %357 = vmatpush2.msra.mxu0 0.0
    %358 = vmatprep.subr.mxu0 0.0
    %359 = vmatpush2.msra.mxu0 0.0
    %360 = vmatprep.subr.mxu0 0.0
    %361 = vmatpush2.msra.mxu0 0.0
    %362 = vmatprep.subr.mxu0 0.0
    %363 = vmatpush2.msra.mxu0 0.0
    %364 = vmatprep.subr.mxu0 0.0
    %365 = vmatpush2.msra.mxu0 0.0
    %366 = vmatprep.subr.mxu0 0.0
    %367 = vmatpush2.msra.mxu0 0.0
    %368 = vmatprep.subr.mxu0 0.0
    %369 = vmatpush2.msra.mxu0 0.0
    %370 = vmatprep.subr.mxu0 0.0
    %371 = vmatpush2.msra.mxu0 0.0
    %372 = vmatprep.subr.mxu0 0.0
    %373 = vmatpush2.msra.mxu0 0.0
    %374 = vmatprep.subr.mxu0 0.0
    %375 = vmatpush2.msra.mxu0 0.0
    %376 = vmatprep.subr.mxu0 0.0
    %377 = vmatpush2.msra.mxu0 0.0
    %378 = vmatprep.mubr.f32.mxu0 0.0
    %379 = vmatmul.mubr.f32.gmra.mxu0 %v150
    %v380 = vpop.f32.mrf.mxu0
    %v381 = vadd.f32 %v312, %v380
    %v382 = vpop.f32.mrf.mxu0
    %383 = vdwg.mxu0
    %v384 = vld [vmem:[#allocation10] sm:$0xff]
    %v385 = vld [vmem:[#allocation10 + $0x8] sm:$0xff]
    %v386 = vld [vmem:[#allocation10 + $0x10] sm:$0xff]
    %v387 = vld [vmem:[#allocation10 + $0x18] sm:$0xff]
    %v388 = vld [vmem:[%s5] sm:$0x1]
    %v390 = vlaneseq
    %v391 = vshrl.u32 %v390, 7
    %v392 = vsub.s32 0, %v391
    %v393 = vrot.slane %v388, %v392
    %vm395 = vcmask 261120
    %v397 = vsel %vm395, %v136, 0
    %399 = vmatprep.subr.mxu0 0.0
    %400 = vmatpush1.msra.mxu0 0.0
    %401 = vmatprep.subr.mxu0 0.0
    %402 = vmatpush1.msra.mxu0 0.0
    %403 = vmatprep.subr.mxu0 0.0
    %404 = vmatpush1.msra.mxu0 0.0
    %405 = vmatprep.subr.mxu0 0.0
    %406 = vmatpush1.msra.mxu0 0.0
    %407 = vmatprep.subr.mxu0 0.0
    %408 = vmatpush1.msra.mxu0 0.0
    %409 = vmatprep.subr.mxu0 0.0
    %410 = vmatpush1.msra.mxu0 0.0
    %411 = vmatprep.subr.mxu0 0.0
    %412 = vmatpush1.msra.mxu0 0.0
    %413 = vmatprep.subr.mxu0 0.0
    %414 = vmatpush1.msra.mxu0 0.0
    %415 = vmatprep.subr.mxu0 0.0
    %416 = vmatpush1.msra.mxu0 0.0
    %417 = vmatprep.subr.mxu0 0.0
    %418 = vmatpush1.msra.mxu0 0.0
    %419 = vmatprep.subr.mxu0 0.0
    %420 = vmatpush1.msra.mxu0 0.0
    %421 = vmatprep.subr.mxu0 0.0
    %422 = vmatpush1.msra.mxu0 0.0
    %423 = vmatprep.subr.mxu0 0.0
    %424 = vmatpush1.msra.mxu0 %v387
    %425 = vmatprep.subr.mxu0 0.0
    %426 = vmatpush1.msra.mxu0 %v386
    %427 = vmatprep.subr.mxu0 0.0
    %428 = vmatpush1.msra.mxu0 %v385
    %429 = vmatprep.subr.mxu0 0.0
    %430 = vmatpush1.msra.mxu0 %v384
    %431 = vmatprep.subr.mxu0 0.0
    %432 = vmatpush2.msra.mxu0 0.0
    %433 = vmatprep.subr.mxu0 0.0
    %434 = vmatpush2.msra.mxu0 0.0
    %435 = vmatprep.subr.mxu0 0.0
    %436 = vmatpush2.msra.mxu0 0.0
    %437 = vmatprep.subr.mxu0 0.0
    %438 = vmatpush2.msra.mxu0 0.0
    %439 = vmatprep.subr.mxu0 0.0
    %440 = vmatpush2.msra.mxu0 0.0
    %441 = vmatprep.subr.mxu0 0.0
    %442 = vmatpush2.msra.mxu0 0.0
    %443 = vmatprep.subr.mxu0 0.0
    %444 = vmatpush2.msra.mxu0 0.0
    %445 = vmatprep.subr.mxu0 0.0
    %446 = vmatpush2.msra.mxu0 0.0
    %447 = vmatprep.subr.mxu0 0.0
    %448 = vmatpush2.msra.mxu0 0.0
    %449 = vmatprep.subr.mxu0 0.0
    %450 = vmatpush2.msra.mxu0 0.0
    %451 = vmatprep.subr.mxu0 0.0
    %452 = vmatpush2.msra.mxu0 0.0
    %453 = vmatprep.subr.mxu0 0.0
    %454 = vmatpush2.msra.mxu0 0.0
    %455 = vmatprep.subr.mxu0 0.0
    %456 = vmatpush2.msra.mxu0 0.0
    %457 = vmatprep.subr.mxu0 0.0
    %458 = vmatpush2.msra.mxu0 0.0
    %459 = vmatprep.subr.mxu0 0.0
    %460 = vmatpush2.msra.mxu0 0.0
    %461 = vmatprep.subr.mxu0 0.0
    %462 = vmatpush2.msra.mxu0 0.0
    %463 = vmatprep.mubr.f32.mxu0 0.0
    %464 = vmatmul.mubr.f32.gmra.mxu0 %v397
    %v465 = vpop.f32.mrf.mxu0
    %v466 = vadd.f32 %v393, %v465
    %v467 = vpop.f32.mrf.mxu0
    %468 = vdwg.mxu0
    %s469 = scalar_lea.vmem [#allocation10], 32
    %v470 = vld [vmem:[%s469] sm:$0xff]
    %v471 = vld [vmem:[%s469 + $0x8] sm:$0xff]
    %v472 = vld [vmem:[%s469 + $0x10] sm:$0xff]
    %v473 = vld [vmem:[%s469 + $0x18] sm:$0xff]
    %s474 = scalar_lea.vmem %s5, 1
    %v475 = vld [vmem:[%s474] sm:$0x1]
    %v477 = vlaneseq
    %v478 = vshrl.u32 %v477, 7
    %v479 = vsub.s32 0, %v478
    %v480 = vrot.slane %v475, %v479
    %482 = vmatprep.subr.mxu0 0.0
    %483 = vmatpush1.msra.mxu0 0.0
    %484 = vmatprep.subr.mxu0 0.0
    %485 = vmatpush1.msra.mxu0 0.0
    %486 = vmatprep.subr.mxu0 0.0
    %487 = vmatpush1.msra.mxu0 0.0
    %488 = vmatprep.subr.mxu0 0.0
    %489 = vmatpush1.msra.mxu0 0.0
    %490 = vmatprep.subr.mxu0 0.0
    %491 = vmatpush1.msra.mxu0 0.0
    %492 = vmatprep.subr.mxu0 0.0
    %493 = vmatpush1.msra.mxu0 0.0
    %494 = vmatprep.subr.mxu0 0.0
    %495 = vmatpush1.msra.mxu0 0.0
    %496 = vmatprep.subr.mxu0 0.0
    %497 = vmatpush1.msra.mxu0 0.0
    %498 = vmatprep.subr.mxu0 0.0
    %499 = vmatpush1.msra.mxu0 0.0
    %500 = vmatprep.subr.mxu0 0.0
    %501 = vmatpush1.msra.mxu0 0.0
    %502 = vmatprep.subr.mxu0 0.0
    %503 = vmatpush1.msra.mxu0 0.0
    %504 = vmatprep.subr.mxu0 0.0
    %505 = vmatpush1.msra.mxu0 0.0
    %506 = vmatprep.subr.mxu0 0.0
    %507 = vmatpush1.msra.mxu0 %v473
    %508 = vmatprep.subr.mxu0 0.0
    %509 = vmatpush1.msra.mxu0 %v472
    %510 = vmatprep.subr.mxu0 0.0
    %511 = vmatpush1.msra.mxu0 %v471
    %512 = vmatprep.subr.mxu0 0.0
    %513 = vmatpush1.msra.mxu0 %v470
    %514 = vmatprep.subr.mxu0 0.0
    %515 = vmatpush2.msra.mxu0 0.0
    %516 = vmatprep.subr.mxu0 0.0
    %517 = vmatpush2.msra.mxu0 0.0
    %518 = vmatprep.subr.mxu0 0.0
    %519 = vmatpush2.msra.mxu0 0.0
    %520 = vmatprep.subr.mxu0 0.0
    %521 = vmatpush2.msra.mxu0 0.0
    %522 = vmatprep.subr.mxu0 0.0
    %523 = vmatpush2.msra.mxu0 0.0
    %524 = vmatprep.subr.mxu0 0.0
    %525 = vmatpush2.msra.mxu0 0.0
    %526 = vmatprep.subr.mxu0 0.0
    %527 = vmatpush2.msra.mxu0 0.0
    %528 = vmatprep.subr.mxu0 0.0
    %529 = vmatpush2.msra.mxu0 0.0
    %530 = vmatprep.subr.mxu0 0.0
    %531 = vmatpush2.msra.mxu0 0.0
    %532 = vmatprep.subr.mxu0 0.0
    %533 = vmatpush2.msra.mxu0 0.0
    %534 = vmatprep.subr.mxu0 0.0
    %535 = vmatpush2.msra.mxu0 0.0
    %536 = vmatprep.subr.mxu0 0.0
    %537 = vmatpush2.msra.mxu0 0.0
    %538 = vmatprep.subr.mxu0 0.0
    %539 = vmatpush2.msra.mxu0 0.0
    %540 = vmatprep.subr.mxu0 0.0
    %541 = vmatpush2.msra.mxu0 0.0
    %542 = vmatprep.subr.mxu0 0.0
    %543 = vmatpush2.msra.mxu0 0.0
    %544 = vmatprep.subr.mxu0 0.0
    %545 = vmatpush2.msra.mxu0 0.0
    %546 = vmatprep.mubr.f32.mxu0 0.0
    %547 = vmatmul.mubr.f32.gmra.mxu0 %v397
    %v548 = vpop.f32.mrf.mxu0
    %v549 = vadd.f32 %v480, %v548
    %v550 = vpop.f32.mrf.mxu0
    %551 = vdwg.mxu0
    %s552 = scalar_lea.vmem [#allocation10], 64
    %v553 = vld [vmem:[%s552] sm:$0xff]
    %v554 = vld [vmem:[%s552 + $0x8] sm:$0xff]
    %v555 = vld [vmem:[%s552 + $0x10] sm:$0xff]
    %v556 = vld [vmem:[%s552 + $0x18] sm:$0xff]
    %s557 = scalar_lea.vmem %s5, 2
    %v558 = vld [vmem:[%s557] sm:$0x1]
    %v560 = vlaneseq
    %v561 = vshrl.u32 %v560, 7
    %v562 = vsub.s32 0, %v561
    %v563 = vrot.slane %v558, %v562
    %565 = vmatprep.subr.mxu0 0.0
    %566 = vmatpush1.msra.mxu0 0.0
    %567 = vmatprep.subr.mxu0 0.0
    %568 = vmatpush1.msra.mxu0 0.0
    %569 = vmatprep.subr.mxu0 0.0
    %570 = vmatpush1.msra.mxu0 0.0
    %571 = vmatprep.subr.mxu0 0.0
    %572 = vmatpush1.msra.mxu0 0.0
    %573 = vmatprep.subr.mxu0 0.0
    %574 = vmatpush1.msra.mxu0 0.0
    %575 = vmatprep.subr.mxu0 0.0
    %576 = vmatpush1.msra.mxu0 0.0
    %577 = vmatprep.subr.mxu0 0.0
    %578 = vmatpush1.msra.mxu0 0.0
    %579 = vmatprep.subr.mxu0 0.0
    %580 = vmatpush1.msra.mxu0 0.0
    %581 = vmatprep.subr.mxu0 0.0
    %582 = vmatpush1.msra.mxu0 0.0
    %583 = vmatprep.subr.mxu0 0.0
    %584 = vmatpush1.msra.mxu0 0.0
    %585 = vmatprep.subr.mxu0 0.0
    %586 = vmatpush1.msra.mxu0 0.0
    %587 = vmatprep.subr.mxu0 0.0
    %588 = vmatpush1.msra.mxu0 0.0
    %589 = vmatprep.subr.mxu0 0.0
    %590 = vmatpush1.msra.mxu0 %v556
    %591 = vmatprep.subr.mxu0 0.0
    %592 = vmatpush1.msra.mxu0 %v555
    %593 = vmatprep.subr.mxu0 0.0
    %594 = vmatpush1.msra.mxu0 %v554
    %595 = vmatprep.subr.mxu0 0.0
    %596 = vmatpush1.msra.mxu0 %v553
    %597 = vmatprep.subr.mxu0 0.0
    %598 = vmatpush2.msra.mxu0 0.0
    %599 = vmatprep.subr.mxu0 0.0
    %600 = vmatpush2.msra.mxu0 0.0
    %601 = vmatprep.subr.mxu0 0.0
    %602 = vmatpush2.msra.mxu0 0.0
    %603 = vmatprep.subr.mxu0 0.0
    %604 = vmatpush2.msra.mxu0 0.0
    %605 = vmatprep.subr.mxu0 0.0
    %606 = vmatpush2.msra.mxu0 0.0
    %607 = vmatprep.subr.mxu0 0.0
    %608 = vmatpush2.msra.mxu0 0.0
    %609 = vmatprep.subr.mxu0 0.0
    %610 = vmatpush2.msra.mxu0 0.0
    %611 = vmatprep.subr.mxu0 0.0
    %612 = vmatpush2.msra.mxu0 0.0
    %613 = vmatprep.subr.mxu0 0.0
    %614 = vmatpush2.msra.mxu0 0.0
    %615 = vmatprep.subr.mxu0 0.0
    %616 = vmatpush2.msra.mxu0 0.0
    %617 = vmatprep.subr.mxu0 0.0
    %618 = vmatpush2.msra.mxu0 0.0
    %619 = vmatprep.subr.mxu0 0.0
    %620 = vmatpush2.msra.mxu0 0.0
    %621 = vmatprep.subr.mxu0 0.0
    %622 = vmatpush2.msra.mxu0 0.0
    %623 = vmatprep.subr.mxu0 0.0
    %624 = vmatpush2.msra.mxu0 0.0
    %625 = vmatprep.subr.mxu0 0.0
    %626 = vmatpush2.msra.mxu0 0.0
    %627 = vmatprep.subr.mxu0 0.0
    %628 = vmatpush2.msra.mxu0 0.0
    %629 = vmatprep.mubr.f32.mxu0 0.0
    %630 = vmatmul.mubr.f32.gmra.mxu0 %v397
    %v631 = vpop.f32.mrf.mxu0
    %v632 = vadd.f32 %v563, %v631
    %v633 = vpop.f32.mrf.mxu0
    %634 = vdwg.mxu0
    %v635 = vadd.f32 %v219, %v466
    %v636 = vxor.u32 %v635, 2147483648
    %v637 = vmul.f32 %v636, 1.442695
    %v638 = vpow.pop %v637
    %v639 = vadd.f32 %v638, 1.0
    %v640 = vrcp.pop %v639
    %v641 = vmul.f32 1.0, %v640
    %v642 = vadd.f32 %v300, %v549
    %v643 = vxor.u32 %v642, 2147483648
    %v644 = vmul.f32 %v643, 1.442695
    %v645 = vpow.pop %v644
    %v646 = vadd.f32 %v645, 1.0
    %v647 = vrcp.pop %v646
    %v648 = vmul.f32 1.0, %v647
    %v649 = vmul.f32 %v641, %v632
    %v650 = vadd.f32 %v381, %v649
    %v651 = vtanh.pop %v650
    %v652 = vsub.f32 1.0, %v648
    %v653 = vmul.f32 %v652, %v651
    %v654 = vmul.f32 %v648, %v136
    %v655 = vadd.f32 %v653, %v654
    %vm656 = vcmask 254976
    %657 = vst.msk [vmem:[#allocation15] sm:$0x3] %vm656, %v655
    %s658 = scalar_lea.vmem [#allocation7], 14
    %v659 = vld [vmem:[%s658] sm:$0x3]
    %v660 = vld [vmem:[#allocation12] sm:$0xff]
    %v661 = vld [vmem:[#allocation12 + $0x8] sm:$0xff]
    %v662 = vld [vmem:[%s8] sm:$0x1]
    %v664 = vlaneseq
    %v665 = vshrl.u32 %v664, 7
    %v666 = vsub.s32 0, %v665
    %v667 = vrot.slane %v662, %v666
    %v670 = vsel %vm148, %v659, 0
    %672 = vmatprep.subr.mxu0 0.0
    %673 = vmatpush1.msra.mxu0 0.0
    %674 = vmatprep.subr.mxu0 0.0
    %675 = vmatpush1.msra.mxu0 0.0
    %676 = vmatprep.subr.mxu0 0.0
    %677 = vmatpush1.msra.mxu0 0.0
    %678 = vmatprep.subr.mxu0 0.0
    %679 = vmatpush1.msra.mxu0 0.0
    %680 = vmatprep.subr.mxu0 0.0
    %681 = vmatpush1.msra.mxu0 0.0
    %682 = vmatprep.subr.mxu0 0.0
    %683 = vmatpush1.msra.mxu0 0.0
    %684 = vmatprep.subr.mxu0 0.0
    %685 = vmatpush1.msra.mxu0 0.0
    %686 = vmatprep.subr.mxu0 0.0
    %687 = vmatpush1.msra.mxu0 0.0
    %688 = vmatprep.subr.mxu0 0.0
    %689 = vmatpush1.msra.mxu0 0.0
    %690 = vmatprep.subr.mxu0 0.0
    %691 = vmatpush1.msra.mxu0 0.0
    %692 = vmatprep.subr.mxu0 0.0
    %693 = vmatpush1.msra.mxu0 0.0
    %694 = vmatprep.subr.mxu0 0.0
    %695 = vmatpush1.msra.mxu0 0.0
    %696 = vmatprep.subr.mxu0 0.0
    %697 = vmatpush1.msra.mxu0 0.0
    %698 = vmatprep.subr.mxu0 0.0
    %699 = vmatpush1.msra.mxu0 0.0
    %700 = vmatprep.subr.mxu0 0.0
    %701 = vmatpush1.msra.mxu0 %v661
    %702 = vmatprep.subr.mxu0 0.0
    %703 = vmatpush1.msra.mxu0 %v660
    %704 = vmatprep.subr.mxu0 0.0
    %705 = vmatpush2.msra.mxu0 0.0
    %706 = vmatprep.subr.mxu0 0.0
    %707 = vmatpush2.msra.mxu0 0.0
    %708 = vmatprep.subr.mxu0 0.0
    %709 = vmatpush2.msra.mxu0 0.0
    %710 = vmatprep.subr.mxu0 0.0
    %711 = vmatpush2.msra.mxu0 0.0
    %712 = vmatprep.subr.mxu0 0.0
    %713 = vmatpush2.msra.mxu0 0.0
    %714 = vmatprep.subr.mxu0 0.0
    %715 = vmatpush2.msra.mxu0 0.0
    %716 = vmatprep.subr.mxu0 0.0
    %717 = vmatpush2.msra.mxu0 0.0
    %718 = vmatprep.subr.mxu0 0.0
    %719 = vmatpush2.msra.mxu0 0.0
    %720 = vmatprep.subr.mxu0 0.0
    %721 = vmatpush2.msra.mxu0 0.0
    %722 = vmatprep.subr.mxu0 0.0
    %723 = vmatpush2.msra.mxu0 0.0
    %724 = vmatprep.subr.mxu0 0.0
    %725 = vmatpush2.msra.mxu0 0.0
    %726 = vmatprep.subr.mxu0 0.0
    %727 = vmatpush2.msra.mxu0 0.0
    %728 = vmatprep.subr.mxu0 0.0
    %729 = vmatpush2.msra.mxu0 0.0
    %730 = vmatprep.subr.mxu0 0.0
    %731 = vmatpush2.msra.mxu0 0.0
    %732 = vmatprep.subr.mxu0 0.0
    %733 = vmatpush2.msra.mxu0 0.0
    %734 = vmatprep.subr.mxu0 0.0
    %735 = vmatpush2.msra.mxu0 0.0
    %736 = vmatprep.mubr.f32.mxu0 0.0
    %737 = vmatmul.mubr.f32.gmra.mxu0 %v670
    %v738 = vpop.f32.mrf.mxu0
    %v739 = vadd.f32 %v667, %v738
    %v740 = vpop.f32.mrf.mxu0
    %741 = vdwg.mxu0
    %s742 = scalar_lea.vmem [#allocation12], 16
    %v743 = vld [vmem:[%s742] sm:$0xff]
    %v744 = vld [vmem:[%s742 + $0x8] sm:$0xff]
    %s745 = scalar_lea.vmem %s8, 1
    %v746 = vld [vmem:[%s745] sm:$0x1]
    %v748 = vlaneseq
    %v749 = vshrl.u32 %v748, 7
    %v750 = vsub.s32 0, %v749
    %v751 = vrot.slane %v746, %v750
    %753 = vmatprep.subr.mxu0 0.0
    %754 = vmatpush1.msra.mxu0 0.0
    %755 = vmatprep.subr.mxu0 0.0
    %756 = vmatpush1.msra.mxu0 0.0
    %757 = vmatprep.subr.mxu0 0.0
    %758 = vmatpush1.msra.mxu0 0.0
    %759 = vmatprep.subr.mxu0 0.0
    %760 = vmatpush1.msra.mxu0 0.0
    %761 = vmatprep.subr.mxu0 0.0
    %762 = vmatpush1.msra.mxu0 0.0
    %763 = vmatprep.subr.mxu0 0.0
    %764 = vmatpush1.msra.mxu0 0.0
    %765 = vmatprep.subr.mxu0 0.0
    %766 = vmatpush1.msra.mxu0 0.0
    %767 = vmatprep.subr.mxu0 0.0
    %768 = vmatpush1.msra.mxu0 0.0
    %769 = vmatprep.subr.mxu0 0.0
    %770 = vmatpush1.msra.mxu0 0.0
    %771 = vmatprep.subr.mxu0 0.0
    %772 = vmatpush1.msra.mxu0 0.0
    %773 = vmatprep.subr.mxu0 0.0
    %774 = vmatpush1.msra.mxu0 0.0
    %775 = vmatprep.subr.mxu0 0.0
    %776 = vmatpush1.msra.mxu0 0.0
    %777 = vmatprep.subr.mxu0 0.0
    %778 = vmatpush1.msra.mxu0 0.0
    %779 = vmatprep.subr.mxu0 0.0
    %780 = vmatpush1.msra.mxu0 0.0
    %781 = vmatprep.subr.mxu0 0.0
    %782 = vmatpush1.msra.mxu0 %v744
    %783 = vmatprep.subr.mxu0 0.0
    %784 = vmatpush1.msra.mxu0 %v743
    %785 = vmatprep.subr.mxu0 0.0
    %786 = vmatpush2.msra.mxu0 0.0
    %787 = vmatprep.subr.mxu0 0.0
    %788 = vmatpush2.msra.mxu0 0.0
    %789 = vmatprep.subr.mxu0 0.0
    %790 = vmatpush2.msra.mxu0 0.0
    %791 = vmatprep.subr.mxu0 0.0
    %792 = vmatpush2.msra.mxu0 0.0
    %793 = vmatprep.subr.mxu0 0.0
    %794 = vmatpush2.msra.mxu0 0.0
    %795 = vmatprep.subr.mxu0 0.0
    %796 = vmatpush2.msra.mxu0 0.0
    %797 = vmatprep.subr.mxu0 0.0
    %798 = vmatpush2.msra.mxu0 0.0
    %799 = vmatprep.subr.mxu0 0.0
    %800 = vmatpush2.msra.mxu0 0.0
    %801 = vmatprep.subr.mxu0 0.0
    %802 = vmatpush2.msra.mxu0 0.0
    %803 = vmatprep.subr.mxu0 0.0
    %804 = vmatpush2.msra.mxu0 0.0
    %805 = vmatprep.subr.mxu0 0.0
    %806 = vmatpush2.msra.mxu0 0.0
    %807 = vmatprep.subr.mxu0 0.0
    %808 = vmatpush2.msra.mxu0 0.0
    %809 = vmatprep.subr.mxu0 0.0
    %810 = vmatpush2.msra.mxu0 0.0
    %811 = vmatprep.subr.mxu0 0.0
    %812 = vmatpush2.msra.mxu0 0.0
    %813 = vmatprep.subr.mxu0 0.0
    %814 = vmatpush2.msra.mxu0 0.0
    %815 = vmatprep.subr.mxu0 0.0
    %816 = vmatpush2.msra.mxu0 0.0
    %817 = vmatprep.mubr.f32.mxu0 0.0
    %818 = vmatmul.mubr.f32.gmra.mxu0 %v670
    %v819 = vpop.f32.mrf.mxu0
    %v820 = vadd.f32 %v751, %v819
    %v821 = vpop.f32.mrf.mxu0
    %822 = vdwg.mxu0
    %s823 = scalar_lea.vmem [#allocation12], 32
    %v824 = vld [vmem:[%s823] sm:$0xff]
    %v825 = vld [vmem:[%s823 + $0x8] sm:$0xff]
    %s826 = scalar_lea.vmem %s8, 2
    %v827 = vld [vmem:[%s826] sm:$0x1]
    %v829 = vlaneseq
    %v830 = vshrl.u32 %v829, 7
    %v831 = vsub.s32 0, %v830
    %v832 = vrot.slane %v827, %v831
    %834 = vmatprep.subr.mxu0 0.0
    %835 = vmatpush1.msra.mxu0 0.0
    %836 = vmatprep.subr.mxu0 0.0
    %837 = vmatpush1.msra.mxu0 0.0
    %838 = vmatprep.subr.mxu0 0.0
    %839 = vmatpush1.msra.mxu0 0.0
    %840 = vmatprep.subr.mxu0 0.0
    %841 = vmatpush1.msra.mxu0 0.0
    %842 = vmatprep.subr.mxu0 0.0
    %843 = vmatpush1.msra.mxu0 0.0
    %844 = vmatprep.subr.mxu0 0.0
    %845 = vmatpush1.msra.mxu0 0.0
    %846 = vmatprep.subr.mxu0 0.0
    %847 = vmatpush1.msra.mxu0 0.0
    %848 = vmatprep.subr.mxu0 0.0
    %849 = vmatpush1.msra.mxu0 0.0
    %850 = vmatprep.subr.mxu0 0.0
    %851 = vmatpush1.msra.mxu0 0.0
    %852 = vmatprep.subr.mxu0 0.0
    %853 = vmatpush1.msra.mxu0 0.0
    %854 = vmatprep.subr.mxu0 0.0
    %855 = vmatpush1.msra.mxu0 0.0
    %856 = vmatprep.subr.mxu0 0.0
    %857 = vmatpush1.msra.mxu0 0.0
    %858 = vmatprep.subr.mxu0 0.0
    %859 = vmatpush1.msra.mxu0 0.0
    %860 = vmatprep.subr.mxu0 0.0
    %861 = vmatpush1.msra.mxu0 0.0
    %862 = vmatprep.subr.mxu0 0.0
    %863 = vmatpush1.msra.mxu0 %v825
    %864 = vmatprep.subr.mxu0 0.0
    %865 = vmatpush1.msra.mxu0 %v824
    %866 = vmatprep.subr.mxu0 0.0
    %867 = vmatpush2.msra.mxu0 0.0
    %868 = vmatprep.subr.mxu0 0.0
    %869 = vmatpush2.msra.mxu0 0.0
    %870 = vmatprep.subr.mxu0 0.0
    %871 = vmatpush2.msra.mxu0 0.0
    %872 = vmatprep.subr.mxu0 0.0
    %873 = vmatpush2.msra.mxu0 0.0
    %874 = vmatprep.subr.mxu0 0.0
    %875 = vmatpush2.msra.mxu0 0.0
    %876 = vmatprep.subr.mxu0 0.0
    %877 = vmatpush2.msra.mxu0 0.0
    %878 = vmatprep.subr.mxu0 0.0
    %879 = vmatpush2.msra.mxu0 0.0
    %880 = vmatprep.subr.mxu0 0.0
    %881 = vmatpush2.msra.mxu0 0.0
    %882 = vmatprep.subr.mxu0 0.0
    %883 = vmatpush2.msra.mxu0 0.0
    %884 = vmatprep.subr.mxu0 0.0
    %885 = vmatpush2.msra.mxu0 0.0
    %886 = vmatprep.subr.mxu0 0.0
    %887 = vmatpush2.msra.mxu0 0.0
    %888 = vmatprep.subr.mxu0 0.0
    %889 = vmatpush2.msra.mxu0 0.0
    %890 = vmatprep.subr.mxu0 0.0
    %891 = vmatpush2.msra.mxu0 0.0
    %892 = vmatprep.subr.mxu0 0.0
    %893 = vmatpush2.msra.mxu0 0.0
    %894 = vmatprep.subr.mxu0 0.0
    %895 = vmatpush2.msra.mxu0 0.0
    %896 = vmatprep.subr.mxu0 0.0
    %897 = vmatpush2.msra.mxu0 0.0
    %898 = vmatprep.mubr.f32.mxu0 0.0
    %899 = vmatmul.mubr.f32.gmra.mxu0 %v670
    %v900 = vpop.f32.mrf.mxu0
    %v901 = vadd.f32 %v832, %v900
    %v902 = vpop.f32.mrf.mxu0
    %903 = vdwg.mxu0
    %v904 = vld [vmem:[#allocation13] sm:$0xff]
    %v905 = vld [vmem:[#allocation13 + $0x8] sm:$0xff]
    %v906 = vld [vmem:[#allocation13 + $0x10] sm:$0xff]
    %v907 = vld [vmem:[#allocation13 + $0x18] sm:$0xff]
    %v908 = vld [vmem:[%s9] sm:$0x1]
    %v910 = vlaneseq
    %v911 = vshrl.u32 %v910, 7
    %v912 = vsub.s32 0, %v911
    %v913 = vrot.slane %v908, %v912
    %v916 = vsel %vm395, %v137, 0
    %918 = vmatprep.subr.mxu0 0.0
    %919 = vmatpush1.msra.mxu0 0.0
    %920 = vmatprep.subr.mxu0 0.0
    %921 = vmatpush1.msra.mxu0 0.0
    %922 = vmatprep.subr.mxu0 0.0
    %923 = vmatpush1.msra.mxu0 0.0
    %924 = vmatprep.subr.mxu0 0.0
    %925 = vmatpush1.msra.mxu0 0.0
    %926 = vmatprep.subr.mxu0 0.0
    %927 = vmatpush1.msra.mxu0 0.0
    %928 = vmatprep.subr.mxu0 0.0
    %929 = vmatpush1.msra.mxu0 0.0
    %930 = vmatprep.subr.mxu0 0.0
    %931 = vmatpush1.msra.mxu0 0.0
    %932 = vmatprep.subr.mxu0 0.0
    %933 = vmatpush1.msra.mxu0 0.0
    %934 = vmatprep.subr.mxu0 0.0
    %935 = vmatpush1.msra.mxu0 0.0
    %936 = vmatprep.subr.mxu0 0.0
    %937 = vmatpush1.msra.mxu0 0.0
    %938 = vmatprep.subr.mxu0 0.0
    %939 = vmatpush1.msra.mxu0 0.0
    %940 = vmatprep.subr.mxu0 0.0
    %941 = vmatpush1.msra.mxu0 0.0
    %942 = vmatprep.subr.mxu0 0.0
    %943 = vmatpush1.msra.mxu0 %v907
    %944 = vmatprep.subr.mxu0 0.0
    %945 = vmatpush1.msra.mxu0 %v906
    %946 = vmatprep.subr.mxu0 0.0
    %947 = vmatpush1.msra.mxu0 %v905
    %948 = vmatprep.subr.mxu0 0.0
    %949 = vmatpush1.msra.mxu0 %v904
    %950 = vmatprep.subr.mxu0 0.0
    %951 = vmatpush2.msra.mxu0 0.0
    %952 = vmatprep.subr.mxu0 0.0
    %953 = vmatpush2.msra.mxu0 0.0
    %954 = vmatprep.subr.mxu0 0.0
    %955 = vmatpush2.msra.mxu0 0.0
    %956 = vmatprep.subr.mxu0 0.0
    %957 = vmatpush2.msra.mxu0 0.0
    %958 = vmatprep.subr.mxu0 0.0
    %959 = vmatpush2.msra.mxu0 0.0
    %960 = vmatprep.subr.mxu0 0.0
    %961 = vmatpush2.msra.mxu0 0.0
    %962 = vmatprep.subr.mxu0 0.0
    %963 = vmatpush2.msra.mxu0 0.0
    %964 = vmatprep.subr.mxu0 0.0
    %965 = vmatpush2.msra.mxu0 0.0
    %966 = vmatprep.subr.mxu0 0.0
    %967 = vmatpush2.msra.mxu0 0.0
    %968 = vmatprep.subr.mxu0 0.0
    %969 = vmatpush2.msra.mxu0 0.0
    %970 = vmatprep.subr.mxu0 0.0
    %971 = vmatpush2.msra.mxu0 0.0
    %972 = vmatprep.subr.mxu0 0.0
    %973 = vmatpush2.msra.mxu0 0.0
    %974 = vmatprep.subr.mxu0 0.0
    %975 = vmatpush2.msra.mxu0 0.0
    %976 = vmatprep.subr.mxu0 0.0
    %977 = vmatpush2.msra.mxu0 0.0
    %978 = vmatprep.subr.mxu0 0.0
    %979 = vmatpush2.msra.mxu0 0.0
    %980 = vmatprep.subr.mxu0 0.0
    %981 = vmatpush2.msra.mxu0 0.0
    %982 = vmatprep.mubr.f32.mxu0 0.0
    %983 = vmatmul.mubr.f32.gmra.mxu0 %v916
    %v984 = vpop.f32.mrf.mxu0
    %v985 = vadd.f32 %v913, %v984
    %v986 = vpop.f32.mrf.mxu0
    %987 = vdwg.mxu0
    %s988 = scalar_lea.vmem [#allocation13], 32
    %v989 = vld [vmem:[%s988] sm:$0xff]
    %v990 = vld [vmem:[%s988 + $0x8] sm:$0xff]
    %v991 = vld [vmem:[%s988 + $0x10] sm:$0xff]
    %v992 = vld [vmem:[%s988 + $0x18] sm:$0xff]
    %s993 = scalar_lea.vmem %s9, 1
    %v994 = vld [vmem:[%s993] sm:$0x1]
    %v996 = vlaneseq
    %v997 = vshrl.u32 %v996, 7
    %v998 = vsub.s32 0, %v997
    %v999 = vrot.slane %v994, %v998
    %1001 = vmatprep.subr.mxu0 0.0
    %1002 = vmatpush1.msra.mxu0 0.0
    %1003 = vmatprep.subr.mxu0 0.0
    %1004 = vmatpush1.msra.mxu0 0.0
    %1005 = vmatprep.subr.mxu0 0.0
    %1006 = vmatpush1.msra.mxu0 0.0
    %1007 = vmatprep.subr.mxu0 0.0
    %1008 = vmatpush1.msra.mxu0 0.0
    %1009 = vmatprep.subr.mxu0 0.0
    %1010 = vmatpush1.msra.mxu0 0.0
    %1011 = vmatprep.subr.mxu0 0.0
    %1012 = vmatpush1.msra.mxu0 0.0
    %1013 = vmatprep.subr.mxu0 0.0
    %1014 = vmatpush1.msra.mxu0 0.0
    %1015 = vmatprep.subr.mxu0 0.0
    %1016 = vmatpush1.msra.mxu0 0.0
    %1017 = vmatprep.subr.mxu0 0.0
    %1018 = vmatpush1.msra.mxu0 0.0
    %1019 = vmatprep.subr.mxu0 0.0
    %1020 = vmatpush1.msra.mxu0 0.0
    %1021 = vmatprep.subr.mxu0 0.0
    %1022 = vmatpush1.msra.mxu0 0.0
    %1023 = vmatprep.subr.mxu0 0.0
    %1024 = vmatpush1.msra.mxu0 0.0
    %1025 = vmatprep.subr.mxu0 0.0
    %1026 = vmatpush1.msra.mxu0 %v992
    %1027 = vmatprep.subr.mxu0 0.0
    %1028 = vmatpush1.msra.mxu0 %v991
    %1029 = vmatprep.subr.mxu0 0.0
    %1030 = vmatpush1.msra.mxu0 %v990
    %1031 = vmatprep.subr.mxu0 0.0
    %1032 = vmatpush1.msra.mxu0 %v989
    %1033 = vmatprep.subr.mxu0 0.0
    %1034 = vmatpush2.msra.mxu0 0.0
    %1035 = vmatprep.subr.mxu0 0.0
    %1036 = vmatpush2.msra.mxu0 0.0
    %1037 = vmatprep.subr.mxu0 0.0
    %1038 = vmatpush2.msra.mxu0 0.0
    %1039 = vmatprep.subr.mxu0 0.0
    %1040 = vmatpush2.msra.mxu0 0.0
    %1041 = vmatprep.subr.mxu0 0.0
    %1042 = vmatpush2.msra.mxu0 0.0
    %1043 = vmatprep.subr.mxu0 0.0
    %1044 = vmatpush2.msra.mxu0 0.0
    %1045 = vmatprep.subr.mxu0 0.0
    %1046 = vmatpush2.msra.mxu0 0.0
    %1047 = vmatprep.subr.mxu0 0.0
    %1048 = vmatpush2.msra.mxu0 0.0
    %1049 = vmatprep.subr.mxu0 0.0
    %1050 = vmatpush2.msra.mxu0 0.0
    %1051 = vmatprep.subr.mxu0 0.0
    %1052 = vmatpush2.msra.mxu0 0.0
    %1053 = vmatprep.subr.mxu0 0.0
    %1054 = vmatpush2.msra.mxu0 0.0
    %1055 = vmatprep.subr.mxu0 0.0
    %1056 = vmatpush2.msra.mxu0 0.0
    %1057 = vmatprep.subr.mxu0 0.0
    %1058 = vmatpush2.msra.mxu0 0.0
    %1059 = vmatprep.subr.mxu0 0.0
    %1060 = vmatpush2.msra.mxu0 0.0
    %1061 = vmatprep.subr.mxu0 0.0
    %1062 = vmatpush2.msra.mxu0 0.0
    %1063 = vmatprep.subr.mxu0 0.0
    %1064 = vmatpush2.msra.mxu0 0.0
    %1065 = vmatprep.mubr.f32.mxu0 0.0
    %1066 = vmatmul.mubr.f32.gmra.mxu0 %v916
    %v1067 = vpop.f32.mrf.mxu0
    %v1068 = vadd.f32 %v999, %v1067
    %v1069 = vpop.f32.mrf.mxu0
    %1070 = vdwg.mxu0
    %s1071 = scalar_lea.vmem [#allocation13], 64
    %v1072 = vld [vmem:[%s1071] sm:$0xff]
    %v1073 = vld [vmem:[%s1071 + $0x8] sm:$0xff]
    %v1074 = vld [vmem:[%s1071 + $0x10] sm:$0xff]
    %v1075 = vld [vmem:[%s1071 + $0x18] sm:$0xff]
    %s1076 = scalar_lea.vmem %s9, 2
    %v1077 = vld [vmem:[%s1076] sm:$0x1]
    %v1079 = vlaneseq
    %v1080 = vshrl.u32 %v1079, 7
    %v1081 = vsub.s32 0, %v1080
    %v1082 = vrot.slane %v1077, %v1081
    %1084 = vmatprep.subr.mxu0 0.0
    %1085 = vmatpush1.msra.mxu0 0.0
    %1086 = vmatprep.subr.mxu0 0.0
    %1087 = vmatpush1.msra.mxu0 0.0
    %1088 = vmatprep.subr.mxu0 0.0
    %1089 = vmatpush1.msra.mxu0 0.0
    %1090 = vmatprep.subr.mxu0 0.0
    %1091 = vmatpush1.msra.mxu0 0.0
    %1092 = vmatprep.subr.mxu0 0.0
    %1093 = vmatpush1.msra.mxu0 0.0
    %1094 = vmatprep.subr.mxu0 0.0
    %1095 = vmatpush1.msra.mxu0 0.0
    %1096 = vmatprep.subr.mxu0 0.0
    %1097 = vmatpush1.msra.mxu0 0.0
    %1098 = vmatprep.subr.mxu0 0.0
    %1099 = vmatpush1.msra.mxu0 0.0
    %1100 = vmatprep.subr.mxu0 0.0
    %1101 = vmatpush1.msra.mxu0 0.0
    %1102 = vmatprep.subr.mxu0 0.0
    %1103 = vmatpush1.msra.mxu0 0.0
    %1104 = vmatprep.subr.mxu0 0.0
    %1105 = vmatpush1.msra.mxu0 0.0
    %1106 = vmatprep.subr.mxu0 0.0
    %1107 = vmatpush1.msra.mxu0 0.0
    %1108 = vmatprep.subr.mxu0 0.0
    %1109 = vmatpush1.msra.mxu0 %v1075
    %1110 = vmatprep.subr.mxu0 0.0
    %1111 = vmatpush1.msra.mxu0 %v1074
    %1112 = vmatprep.subr.mxu0 0.0
    %1113 = vmatpush1.msra.mxu0 %v1073
    %1114 = vmatprep.subr.mxu0 0.0
    %1115 = vmatpush1.msra.mxu0 %v1072
    %1116 = vmatprep.subr.mxu0 0.0
    %1117 = vmatpush2.msra.mxu0 0.0
    %1118 = vmatprep.subr.mxu0 0.0
    %1119 = vmatpush2.msra.mxu0 0.0
    %1120 = vmatprep.subr.mxu0 0.0
    %1121 = vmatpush2.msra.mxu0 0.0
    %1122 = vmatprep.subr.mxu0 0.0
    %1123 = vmatpush2.msra.mxu0 0.0
    %1124 = vmatprep.subr.mxu0 0.0
    %1125 = vmatpush2.msra.mxu0 0.0
    %1126 = vmatprep.subr.mxu0 0.0
    %1127 = vmatpush2.msra.mxu0 0.0
    %1128 = vmatprep.subr.mxu0 0.0
    %1129 = vmatpush2.msra.mxu0 0.0
    %1130 = vmatprep.subr.mxu0 0.0
    %1131 = vmatpush2.msra.mxu0 0.0
    %1132 = vmatprep.subr.mxu0 0.0
    %1133 = vmatpush2.msra.mxu0 0.0
    %1134 = vmatprep.subr.mxu0 0.0
    %1135 = vmatpush2.msra.mxu0 0.0
    %1136 = vmatprep.subr.mxu0 0.0
    %1137 = vmatpush2.msra.mxu0 0.0
    %1138 = vmatprep.subr.mxu0 0.0
    %1139 = vmatpush2.msra.mxu0 0.0
    %1140 = vmatprep.subr.mxu0 0.0
    %1141 = vmatpush2.msra.mxu0 0.0
    %1142 = vmatprep.subr.mxu0 0.0
    %1143 = vmatpush2.msra.mxu0 0.0
    %1144 = vmatprep.subr.mxu0 0.0
    %1145 = vmatpush2.msra.mxu0 0.0
    %1146 = vmatprep.subr.mxu0 0.0
    %1147 = vmatpush2.msra.mxu0 0.0
    %1148 = vmatprep.mubr.f32.mxu0 0.0
    %1149 = vmatmul.mubr.f32.gmra.mxu0 %v916
    %v1150 = vpop.f32.mrf.mxu0
    %v1151 = vadd.f32 %v1082, %v1150
    %v1152 = vpop.f32.mrf.mxu0
    %1153 = vdwg.mxu0
    %v1154 = vadd.f32 %v739, %v985
    %v1155 = vxor.u32 %v1154, 2147483648
    %v1156 = vmul.f32 %v1155, 1.442695
    %v1157 = vpow.pop %v1156
    %v1158 = vadd.f32 %v1157, 1.0
    %v1159 = vrcp.pop %v1158
    %v1160 = vmul.f32 1.0, %v1159
    %v1161 = vadd.f32 %v820, %v1068
    %v1162 = vxor.u32 %v1161, 2147483648
    %v1163 = vmul.f32 %v1162, 1.442695
    %v1164 = vpow.pop %v1163
    %v1165 = vadd.f32 %v1164, 1.0
    %v1166 = vrcp.pop %v1165
    %v1167 = vmul.f32 1.0, %v1166
    %v1168 = vmul.f32 %v1160, %v1151
    %v1169 = vadd.f32 %v901, %v1168
    %v1170 = vtanh.pop %v1169
    %v1171 = vsub.f32 1.0, %v1167
    %v1172 = vmul.f32 %v1171, %v1170
    %v1173 = vmul.f32 %v1167, %v137
    %v1174 = vadd.f32 %v1172, %v1173
    %s1175 = scalar_lea.vmem [#allocation16], 14
    %1176 = vst.msk [vmem:[%s1175] sm:$0x3] %vm656, %v1174
    %s1177 = scalar_lea.vmem [#allocation4], 2
    %v1178 = vld [vmem:[%s1177] sm:$0x3]
    %v1179 = vld [vmem:[#allocation9] sm:$0xff]
    %v1180 = vld [vmem:[#allocation9 + $0x8] sm:$0xff]
    %v1181 = vld [vmem:[%s4] sm:$0x1]
    %v1183 = vlaneseq
    %v1184 = vshrl.u32 %v1183, 7
    %v1185 = vsub.s32 0, %v1184
    %v1186 = vrot.slane %v1181, %v1185
    %v1189 = vsel %vm148, %v1178, 0
    %1191 = vmatprep.subr.mxu0 0.0
    %1192 = vmatpush1.msra.mxu0 0.0
    %1193 = vmatprep.subr.mxu0 0.0
    %1194 = vmatpush1.msra.mxu0 0.0
    %1195 = vmatprep.subr.mxu0 0.0
    %1196 = vmatpush1.msra.mxu0 0.0
    %1197 = vmatprep.subr.mxu0 0.0
    %1198 = vmatpush1.msra.mxu0 0.0
    %1199 = vmatprep.subr.mxu0 0.0
    %1200 = vmatpush1.msra.mxu0 0.0
    %1201 = vmatprep.subr.mxu0 0.0
    %1202 = vmatpush1.msra.mxu0 0.0
    %1203 = vmatprep.subr.mxu0 0.0
    %1204 = vmatpush1.msra.mxu0 0.0
    %1205 = vmatprep.subr.mxu0 0.0
    %1206 = vmatpush1.msra.mxu0 0.0
    %1207 = vmatprep.subr.mxu0 0.0
    %1208 = vmatpush1.msra.mxu0 0.0
    %1209 = vmatprep.subr.mxu0 0.0
    %1210 = vmatpush1.msra.mxu0 0.0
    %1211 = vmatprep.subr.mxu0 0.0
    %1212 = vmatpush1.msra.mxu0 0.0
    %1213 = vmatprep.subr.mxu0 0.0
    %1214 = vmatpush1.msra.mxu0 0.0
    %1215 = vmatprep.subr.mxu0 0.0
    %1216 = vmatpush1.msra.mxu0 0.0
    %1217 = vmatprep.subr.mxu0 0.0
    %1218 = vmatpush1.msra.mxu0 0.0
    %1219 = vmatprep.subr.mxu0 0.0
    %1220 = vmatpush1.msra.mxu0 %v1180
    %1221 = vmatprep.subr.mxu0 0.0
    %1222 = vmatpush1.msra.mxu0 %v1179
    %1223 = vmatprep.subr.mxu0 0.0
    %1224 = vmatpush2.msra.mxu0 0.0
    %1225 = vmatprep.subr.mxu0 0.0
    %1226 = vmatpush2.msra.mxu0 0.0
    %1227 = vmatprep.subr.mxu0 0.0
    %1228 = vmatpush2.msra.mxu0 0.0
    %1229 = vmatprep.subr.mxu0 0.0
    %1230 = vmatpush2.msra.mxu0 0.0
    %1231 = vmatprep.subr.mxu0 0.0
    %1232 = vmatpush2.msra.mxu0 0.0
    %1233 = vmatprep.subr.mxu0 0.0
    %1234 = vmatpush2.msra.mxu0 0.0
    %1235 = vmatprep.subr.mxu0 0.0
    %1236 = vmatpush2.msra.mxu0 0.0
    %1237 = vmatprep.subr.mxu0 0.0
    %1238 = vmatpush2.msra.mxu0 0.0
    %1239 = vmatprep.subr.mxu0 0.0
    %1240 = vmatpush2.msra.mxu0 0.0
    %1241 = vmatprep.subr.mxu0 0.0
    %1242 = vmatpush2.msra.mxu0 0.0
    %1243 = vmatprep.subr.mxu0 0.0
    %1244 = vmatpush2.msra.mxu0 0.0
    %1245 = vmatprep.subr.mxu0 0.0
    %1246 = vmatpush2.msra.mxu0 0.0
    %1247 = vmatprep.subr.mxu0 0.0
    %1248 = vmatpush2.msra.mxu0 0.0
    %1249 = vmatprep.subr.mxu0 0.0
    %1250 = vmatpush2.msra.mxu0 0.0
    %1251 = vmatprep.subr.mxu0 0.0
    %1252 = vmatpush2.msra.mxu0 0.0
    %1253 = vmatprep.subr.mxu0 0.0
    %1254 = vmatpush2.msra.mxu0 0.0
    %1255 = vmatprep.mubr.f32.mxu0 0.0
    %1256 = vmatmul.mubr.f32.gmra.mxu0 %v1189
    %v1257 = vpop.f32.mrf.mxu0
    %v1258 = vadd.f32 %v1186, %v1257
    %v1259 = vpop.f32.mrf.mxu0
    %1260 = vdwg.mxu0
    %v1261 = vld [vmem:[%s222] sm:$0xff]
    %v1262 = vld [vmem:[%s222 + $0x8] sm:$0xff]
    %v1263 = vld [vmem:[%s225] sm:$0x1]
    %v1265 = vlaneseq
    %v1266 = vshrl.u32 %v1265, 7
    %v1267 = vsub.s32 0, %v1266
    %v1268 = vrot.slane %v1263, %v1267
    %1270 = vmatprep.subr.mxu0 0.0
    %1271 = vmatpush1.msra.mxu0 0.0
    %1272 = vmatprep.subr.mxu0 0.0
    %1273 = vmatpush1.msra.mxu0 0.0
    %1274 = vmatprep.subr.mxu0 0.0
    %1275 = vmatpush1.msra.mxu0 0.0
    %1276 = vmatprep.subr.mxu0 0.0
    %1277 = vmatpush1.msra.mxu0 0.0
    %1278 = vmatprep.subr.mxu0 0.0
    %1279 = vmatpush1.msra.mxu0 0.0
    %1280 = vmatprep.subr.mxu0 0.0
    %1281 = vmatpush1.msra.mxu0 0.0
    %1282 = vmatprep.subr.mxu0 0.0
    %1283 = vmatpush1.msra.mxu0 0.0
    %1284 = vmatprep.subr.mxu0 0.0
    %1285 = vmatpush1.msra.mxu0 0.0
    %1286 = vmatprep.subr.mxu0 0.0
    %1287 = vmatpush1.msra.mxu0 0.0
    %1288 = vmatprep.subr.mxu0 0.0
    %1289 = vmatpush1.msra.mxu0 0.0
    %1290 = vmatprep.subr.mxu0 0.0
    %1291 = vmatpush1.msra.mxu0 0.0
    %1292 = vmatprep.subr.mxu0 0.0
    %1293 = vmatpush1.msra.mxu0 0.0
    %1294 = vmatprep.subr.mxu0 0.0
    %1295 = vmatpush1.msra.mxu0 0.0
    %1296 = vmatprep.subr.mxu0 0.0
    %1297 = vmatpush1.msra.mxu0 0.0
    %1298 = vmatprep.subr.mxu0 0.0
    %1299 = vmatpush1.msra.mxu0 %v1262
    %1300 = vmatprep.subr.mxu0 0.0
    %1301 = vmatpush1.msra.mxu0 %v1261
    %1302 = vmatprep.subr.mxu0 0.0
    %1303 = vmatpush2.msra.mxu0 0.0
    %1304 = vmatprep.subr.mxu0 0.0
    %1305 = vmatpush2.msra.mxu0 0.0
    %1306 = vmatprep.subr.mxu0 0.0
    %1307 = vmatpush2.msra.mxu0 0.0
    %1308 = vmatprep.subr.mxu0 0.0
    %1309 = vmatpush2.msra.mxu0 0.0
    %1310 = vmatprep.subr.mxu0 0.0
    %1311 = vmatpush2.msra.mxu0 0.0
    %1312 = vmatprep.subr.mxu0 0.0
    %1313 = vmatpush2.msra.mxu0 0.0
    %1314 = vmatprep.subr.mxu0 0.0
    %1315 = vmatpush2.msra.mxu0 0.0
    %1316 = vmatprep.subr.mxu0 0.0
    %1317 = vmatpush2.msra.mxu0 0.0
    %1318 = vmatprep.subr.mxu0 0.0
    %1319 = vmatpush2.msra.mxu0 0.0
    %1320 = vmatprep.subr.mxu0 0.0
    %1321 = vmatpush2.msra.mxu0 0.0
    %1322 = vmatprep.subr.mxu0 0.0
    %1323 = vmatpush2.msra.mxu0 0.0
    %1324 = vmatprep.subr.mxu0 0.0
    %1325 = vmatpush2.msra.mxu0 0.0
    %1326 = vmatprep.subr.mxu0 0.0
    %1327 = vmatpush2.msra.mxu0 0.0
    %1328 = vmatprep.subr.mxu0 0.0
    %1329 = vmatpush2.msra.mxu0 0.0
    %1330 = vmatprep.subr.mxu0 0.0
    %1331 = vmatpush2.msra.mxu0 0.0
    %1332 = vmatprep.subr.mxu0 0.0
    %1333 = vmatpush2.msra.mxu0 0.0
    %1334 = vmatprep.mubr.f32.mxu0 0.0
    %1335 = vmatmul.mubr.f32.gmra.mxu0 %v1189
    %v1336 = vpop.f32.mrf.mxu0
    %v1337 = vadd.f32 %v1268, %v1336
    %v1338 = vpop.f32.mrf.mxu0
    %1339 = vdwg.mxu0
    %v1340 = vld [vmem:[%s303] sm:$0xff]
    %v1341 = vld [vmem:[%s303 + $0x8] sm:$0xff]
    %v1342 = vld [vmem:[%s306] sm:$0x1]
    %v1344 = vlaneseq
    %v1345 = vshrl.u32 %v1344, 7
    %v1346 = vsub.s32 0, %v1345
    %v1347 = vrot.slane %v1342, %v1346
    %1349 = vmatprep.subr.mxu0 0.0
    %1350 = vmatpush1.msra.mxu0 0.0
    %1351 = vmatprep.subr.mxu0 0.0
    %1352 = vmatpush1.msra.mxu0 0.0
    %1353 = vmatprep.subr.mxu0 0.0
    %1354 = vmatpush1.msra.mxu0 0.0
    %1355 = vmatprep.subr.mxu0 0.0
    %1356 = vmatpush1.msra.mxu0 0.0
    %1357 = vmatprep.subr.mxu0 0.0
    %1358 = vmatpush1.msra.mxu0 0.0
    %1359 = vmatprep.subr.mxu0 0.0
    %1360 = vmatpush1.msra.mxu0 0.0
    %1361 = vmatprep.subr.mxu0 0.0
    %1362 = vmatpush1.msra.mxu0 0.0
    %1363 = vmatprep.subr.mxu0 0.0
    %1364 = vmatpush1.msra.mxu0 0.0
    %1365 = vmatprep.subr.mxu0 0.0
    %1366 = vmatpush1.msra.mxu0 0.0
    %1367 = vmatprep.subr.mxu0 0.0
    %1368 = vmatpush1.msra.mxu0 0.0
    %1369 = vmatprep.subr.mxu0 0.0
    %1370 = vmatpush1.msra.mxu0 0.0
    %1371 = vmatprep.subr.mxu0 0.0
    %1372 = vmatpush1.msra.mxu0 0.0
    %1373 = vmatprep.subr.mxu0 0.0
    %1374 = vmatpush1.msra.mxu0 0.0
    %1375 = vmatprep.subr.mxu0 0.0
    %1376 = vmatpush1.msra.mxu0 0.0
    %1377 = vmatprep.subr.mxu0 0.0
    %1378 = vmatpush1.msra.mxu0 %v1341
    %1379 = vmatprep.subr.mxu0 0.0
    %1380 = vmatpush1.msra.mxu0 %v1340
    %1381 = vmatprep.subr.mxu0 0.0
    %1382 = vmatpush2.msra.mxu0 0.0
    %1383 = vmatprep.subr.mxu0 0.0
    %1384 = vmatpush2.msra.mxu0 0.0
    %1385 = vmatprep.subr.mxu0 0.0
    %1386 = vmatpush2.msra.mxu0 0.0
    %1387 = vmatprep.subr.mxu0 0.0
    %1388 = vmatpush2.msra.mxu0 0.0
    %1389 = vmatprep.subr.mxu0 0.0
    %1390 = vmatpush2.msra.mxu0 0.0
    %1391 = vmatprep.subr.mxu0 0.0
    %1392 = vmatpush2.msra.mxu0 0.0
    %1393 = vmatprep.subr.mxu0 0.0
    %1394 = vmatpush2.msra.mxu0 0.0
    %1395 = vmatprep.subr.mxu0 0.0
    %1396 = vmatpush2.msra.mxu0 0.0
    %1397 = vmatprep.subr.mxu0 0.0
    %1398 = vmatpush2.msra.mxu0 0.0
    %1399 = vmatprep.subr.mxu0 0.0
    %1400 = vmatpush2.msra.mxu0 0.0
    %1401 = vmatprep.subr.mxu0 0.0
    %1402 = vmatpush2.msra.mxu0 0.0
    %1403 = vmatprep.subr.mxu0 0.0
    %1404 = vmatpush2.msra.mxu0 0.0
    %1405 = vmatprep.subr.mxu0 0.0
    %1406 = vmatpush2.msra.mxu0 0.0
    %1407 = vmatprep.subr.mxu0 0.0
    %1408 = vmatpush2.msra.mxu0 0.0
    %1409 = vmatprep.subr.mxu0 0.0
    %1410 = vmatpush2.msra.mxu0 0.0
    %1411 = vmatprep.subr.mxu0 0.0
    %1412 = vmatpush2.msra.mxu0 0.0
    %1413 = vmatprep.mubr.f32.mxu0 0.0
    %1414 = vmatmul.mubr.f32.gmra.mxu0 %v1189
    %v1415 = vpop.f32.mrf.mxu0
    %v1416 = vadd.f32 %v1347, %v1415
    %v1417 = vpop.f32.mrf.mxu0
    %1418 = vdwg.mxu0
    %v1419 = vld [vmem:[#allocation10] sm:$0xff]
    %v1420 = vld [vmem:[#allocation10 + $0x8] sm:$0xff]
    %v1421 = vld [vmem:[#allocation10 + $0x10] sm:$0xff]
    %v1422 = vld [vmem:[#allocation10 + $0x18] sm:$0xff]
    %v1423 = vld [vmem:[%s5] sm:$0x1]
    %v1425 = vlaneseq
    %v1426 = vshrl.u32 %v1425, 7
    %v1427 = vsub.s32 0, %v1426
    %v1428 = vrot.slane %v1423, %v1427
    %v1431 = vsel %vm395, %v655, 0
    %1433 = vmatprep.subr.mxu0 0.0
    %1434 = vmatpush1.msra.mxu0 0.0
    %1435 = vmatprep.subr.mxu0 0.0
    %1436 = vmatpush1.msra.mxu0 0.0
    %1437 = vmatprep.subr.mxu0 0.0
    %1438 = vmatpush1.msra.mxu0 0.0
    %1439 = vmatprep.subr.mxu0 0.0
    %1440 = vmatpush1.msra.mxu0 0.0
    %1441 = vmatprep.subr.mxu0 0.0
    %1442 = vmatpush1.msra.mxu0 0.0
    %1443 = vmatprep.subr.mxu0 0.0
    %1444 = vmatpush1.msra.mxu0 0.0
    %1445 = vmatprep.subr.mxu0 0.0
    %1446 = vmatpush1.msra.mxu0 0.0
    %1447 = vmatprep.subr.mxu0 0.0
    %1448 = vmatpush1.msra.mxu0 0.0
    %1449 = vmatprep.subr.mxu0 0.0
    %1450 = vmatpush1.msra.mxu0 0.0
    %1451 = vmatprep.subr.mxu0 0.0
    %1452 = vmatpush1.msra.mxu0 0.0
    %1453 = vmatprep.subr.mxu0 0.0
    %1454 = vmatpush1.msra.mxu0 0.0
    %1455 = vmatprep.subr.mxu0 0.0
    %1456 = vmatpush1.msra.mxu0 0.0
    %1457 = vmatprep.subr.mxu0 0.0
    %1458 = vmatpush1.msra.mxu0 %v1422
    %1459 = vmatprep.subr.mxu0 0.0
    %1460 = vmatpush1.msra.mxu0 %v1421
    %1461 = vmatprep.subr.mxu0 0.0
    %1462 = vmatpush1.msra.mxu0 %v1420
    %1463 = vmatprep.subr.mxu0 0.0
    %1464 = vmatpush1.msra.mxu0 %v1419
    %1465 = vmatprep.subr.mxu0 0.0
    %1466 = vmatpush2.msra.mxu0 0.0
    %1467 = vmatprep.subr.mxu0 0.0
    %1468 = vmatpush2.msra.mxu0 0.0
    %1469 = vmatprep.subr.mxu0 0.0
    %1470 = vmatpush2.msra.mxu0 0.0
    %1471 = vmatprep.subr.mxu0 0.0
    %1472 = vmatpush2.msra.mxu0 0.0
    %1473 = vmatprep.subr.mxu0 0.0
    %1474 = vmatpush2.msra.mxu0 0.0
    %1475 = vmatprep.subr.mxu0 0.0
    %1476 = vmatpush2.msra.mxu0 0.0
    %1477 = vmatprep.subr.mxu0 0.0
    %1478 = vmatpush2.msra.mxu0 0.0
    %1479 = vmatprep.subr.mxu0 0.0
    %1480 = vmatpush2.msra.mxu0 0.0
    %1481 = vmatprep.subr.mxu0 0.0
    %1482 = vmatpush2.msra.mxu0 0.0
    %1483 = vmatprep.subr.mxu0 0.0
    %1484 = vmatpush2.msra.mxu0 0.0
    %1485 = vmatprep.subr.mxu0 0.0
    %1486 = vmatpush2.msra.mxu0 0.0
    %1487 = vmatprep.subr.mxu0 0.0
    %1488 = vmatpush2.msra.mxu0 0.0
    %1489 = vmatprep.subr.mxu0 0.0
    %1490 = vmatpush2.msra.mxu0 0.0
    %1491 = vmatprep.subr.mxu0 0.0
    %1492 = vmatpush2.msra.mxu0 0.0
    %1493 = vmatprep.subr.mxu0 0.0
    %1494 = vmatpush2.msra.mxu0 0.0
    %1495 = vmatprep.subr.mxu0 0.0
    %1496 = vmatpush2.msra.mxu0 0.0
    %1497 = vmatprep.mubr.f32.mxu0 0.0
    %1498 = vmatmul.mubr.f32.gmra.mxu0 %v1431
    %v1499 = vpop.f32.mrf.mxu0
    %v1500 = vadd.f32 %v1428, %v1499
    %v1501 = vpop.f32.mrf.mxu0
    %1502 = vdwg.mxu0
    %v1503 = vld [vmem:[%s469] sm:$0xff]
    %v1504 = vld [vmem:[%s469 + $0x8] sm:$0xff]
    %v1505 = vld [vmem:[%s469 + $0x10] sm:$0xff]
    %v1506 = vld [vmem:[%s469 + $0x18] sm:$0xff]
    %v1507 = vld [vmem:[%s474] sm:$0x1]
    %v1509 = vlaneseq
    %v1510 = vshrl.u32 %v1509, 7
    %v1511 = vsub.s32 0, %v1510
    %v1512 = vrot.slane %v1507, %v1511
    %1514 = vmatprep.subr.mxu0 0.0
    %1515 = vmatpush1.msra.mxu0 0.0
    %1516 = vmatprep.subr.mxu0 0.0
    %1517 = vmatpush1.msra.mxu0 0.0
    %1518 = vmatprep.subr.mxu0 0.0
    %1519 = vmatpush1.msra.mxu0 0.0
    %1520 = vmatprep.subr.mxu0 0.0
    %1521 = vmatpush1.msra.mxu0 0.0
    %1522 = vmatprep.subr.mxu0 0.0
    %1523 = vmatpush1.msra.mxu0 0.0
    %1524 = vmatprep.subr.mxu0 0.0
    %1525 = vmatpush1.msra.mxu0 0.0
    %1526 = vmatprep.subr.mxu0 0.0
    %1527 = vmatpush1.msra.mxu0 0.0
    %1528 = vmatprep.subr.mxu0 0.0
    %1529 = vmatpush1.msra.mxu0 0.0
    %1530 = vmatprep.subr.mxu0 0.0
    %1531 = vmatpush1.msra.mxu0 0.0
    %1532 = vmatprep.subr.mxu0 0.0
    %1533 = vmatpush1.msra.mxu0 0.0
    %1534 = vmatprep.subr.mxu0 0.0
    %1535 = vmatpush1.msra.mxu0 0.0
    %1536 = vmatprep.subr.mxu0 0.0
    %1537 = vmatpush1.msra.mxu0 0.0
    %1538 = vmatprep.subr.mxu0 0.0
    %1539 = vmatpush1.msra.mxu0 %v1506
    %1540 = vmatprep.subr.mxu0 0.0
    %1541 = vmatpush1.msra.mxu0 %v1505
    %1542 = vmatprep.subr.mxu0 0.0
    %1543 = vmatpush1.msra.mxu0 %v1504
    %1544 = vmatprep.subr.mxu0 0.0
    %1545 = vmatpush1.msra.mxu0 %v1503
    %1546 = vmatprep.subr.mxu0 0.0
    %1547 = vmatpush2.msra.mxu0 0.0
    %1548 = vmatprep.subr.mxu0 0.0
    %1549 = vmatpush2.msra.mxu0 0.0
    %1550 = vmatprep.subr.mxu0 0.0
    %1551 = vmatpush2.msra.mxu0 0.0
    %1552 = vmatprep.subr.mxu0 0.0
    %1553 = vmatpush2.msra.mxu0 0.0
    %1554 = vmatprep.subr.mxu0 0.0
    %1555 = vmatpush2.msra.mxu0 0.0
    %1556 = vmatprep.subr.mxu0 0.0
    %1557 = vmatpush2.msra.mxu0 0.0
    %1558 = vmatprep.subr.mxu0 0.0
    %1559 = vmatpush2.msra.mxu0 0.0
    %1560 = vmatprep.subr.mxu0 0.0
    %1561 = vmatpush2.msra.mxu0 0.0
    %1562 = vmatprep.subr.mxu0 0.0
    %1563 = vmatpush2.msra.mxu0 0.0
    %1564 = vmatprep.subr.mxu0 0.0
    %1565 = vmatpush2.msra.mxu0 0.0
    %1566 = vmatprep.subr.mxu0 0.0
    %1567 = vmatpush2.msra.mxu0 0.0
    %1568 = vmatprep.subr.mxu0 0.0
    %1569 = vmatpush2.msra.mxu0 0.0
    %1570 = vmatprep.subr.mxu0 0.0
    %1571 = vmatpush2.msra.mxu0 0.0
    %1572 = vmatprep.subr.mxu0 0.0
    %1573 = vmatpush2.msra.mxu0 0.0
    %1574 = vmatprep.subr.mxu0 0.0
    %1575 = vmatpush2.msra.mxu0 0.0
    %1576 = vmatprep.subr.mxu0 0.0
    %1577 = vmatpush2.msra.mxu0 0.0
    %1578 = vmatprep.mubr.f32.mxu0 0.0
    %1579 = vmatmul.mubr.f32.gmra.mxu0 %v1431
    %v1580 = vpop.f32.mrf.mxu0
    %v1581 = vadd.f32 %v1512, %v1580
    %v1582 = vpop.f32.mrf.mxu0
    %1583 = vdwg.mxu0
    %v1584 = vld [vmem:[%s552] sm:$0xff]
    %v1585 = vld [vmem:[%s552 + $0x8] sm:$0xff]
    %v1586 = vld [vmem:[%s552 + $0x10] sm:$0xff]
    %v1587 = vld [vmem:[%s552 + $0x18] sm:$0xff]
    %v1588 = vld [vmem:[%s557] sm:$0x1]
    %v1590 = vlaneseq
    %v1591 = vshrl.u32 %v1590, 7
    %v1592 = vsub.s32 0, %v1591
    %v1593 = vrot.slane %v1588, %v1592
    %1595 = vmatprep.subr.mxu0 0.0
    %1596 = vmatpush1.msra.mxu0 0.0
    %1597 = vmatprep.subr.mxu0 0.0
    %1598 = vmatpush1.msra.mxu0 0.0
    %1599 = vmatprep.subr.mxu0 0.0
    %1600 = vmatpush1.msra.mxu0 0.0
    %1601 = vmatprep.subr.mxu0 0.0
    %1602 = vmatpush1.msra.mxu0 0.0
    %1603 = vmatprep.subr.mxu0 0.0
    %1604 = vmatpush1.msra.mxu0 0.0
    %1605 = vmatprep.subr.mxu0 0.0
    %1606 = vmatpush1.msra.mxu0 0.0
    %1607 = vmatprep.subr.mxu0 0.0
    %1608 = vmatpush1.msra.mxu0 0.0
    %1609 = vmatprep.subr.mxu0 0.0
    %1610 = vmatpush1.msra.mxu0 0.0
    %1611 = vmatprep.subr.mxu0 0.0
    %1612 = vmatpush1.msra.mxu0 0.0
    %1613 = vmatprep.subr.mxu0 0.0
    %1614 = vmatpush1.msra.mxu0 0.0
    %1615 = vmatprep.subr.mxu0 0.0
    %1616 = vmatpush1.msra.mxu0 0.0
    %1617 = vmatprep.subr.mxu0 0.0
    %1618 = vmatpush1.msra.mxu0 0.0
    %1619 = vmatprep.subr.mxu0 0.0
    %1620 = vmatpush1.msra.mxu0 %v1587
    %1621 = vmatprep.subr.mxu0 0.0
    %1622 = vmatpush1.msra.mxu0 %v1586
    %1623 = vmatprep.subr.mxu0 0.0
    %1624 = vmatpush1.msra.mxu0 %v1585
    %1625 = vmatprep.subr.mxu0 0.0
    %1626 = vmatpush1.msra.mxu0 %v1584
    %1627 = vmatprep.subr.mxu0 0.0
    %1628 = vmatpush2.msra.mxu0 0.0
    %1629 = vmatprep.subr.mxu0 0.0
    %1630 = vmatpush2.msra.mxu0 0.0
    %1631 = vmatprep.subr.mxu0 0.0
    %1632 = vmatpush2.msra.mxu0 0.0
    %1633 = vmatprep.subr.mxu0 0.0
    %1634 = vmatpush2.msra.mxu0 0.0
    %1635 = vmatprep.subr.mxu0 0.0
    %1636 = vmatpush2.msra.mxu0 0.0
    %1637 = vmatprep.subr.mxu0 0.0
    %1638 = vmatpush2.msra.mxu0 0.0
    %1639 = vmatprep.subr.mxu0 0.0
    %1640 = vmatpush2.msra.mxu0 0.0
    %1641 = vmatprep.subr.mxu0 0.0
    %1642 = vmatpush2.msra.mxu0 0.0
    %1643 = vmatprep.subr.mxu0 0.0
    %1644 = vmatpush2.msra.mxu0 0.0
    %1645 = vmatprep.subr.mxu0 0.0
    %1646 = vmatpush2.msra.mxu0 0.0
    %1647 = vmatprep.subr.mxu0 0.0
    %1648 = vmatpush2.msra.mxu0 0.0
    %1649 = vmatprep.subr.mxu0 0.0
    %1650 = vmatpush2.msra.mxu0 0.0
    %1651 = vmatprep.subr.mxu0 0.0
    %1652 = vmatpush2.msra.mxu0 0.0
    %1653 = vmatprep.subr.mxu0 0.0
    %1654 = vmatpush2.msra.mxu0 0.0
    %1655 = vmatprep.subr.mxu0 0.0
    %1656 = vmatpush2.msra.mxu0 0.0
    %1657 = vmatprep.subr.mxu0 0.0
    %1658 = vmatpush2.msra.mxu0 0.0
    %1659 = vmatprep.mubr.f32.mxu0 0.0
    %1660 = vmatmul.mubr.f32.gmra.mxu0 %v1431
    %v1661 = vpop.f32.mrf.mxu0
    %v1662 = vadd.f32 %v1593, %v1661
    %v1663 = vpop.f32.mrf.mxu0
    %1664 = vdwg.mxu0
    %v1665 = vadd.f32 %v1258, %v1500
    %v1666 = vxor.u32 %v1665, 2147483648
    %v1667 = vmul.f32 %v1666, 1.442695
    %v1668 = vpow.pop %v1667
    %v1669 = vadd.f32 %v1668, 1.0
    %v1670 = vrcp.pop %v1669
    %v1671 = vmul.f32 1.0, %v1670
    %v1672 = vadd.f32 %v1337, %v1581
    %v1673 = vxor.u32 %v1672, 2147483648
    %v1674 = vmul.f32 %v1673, 1.442695
    %v1675 = vpow.pop %v1674
    %v1676 = vadd.f32 %v1675, 1.0
    %v1677 = vrcp.pop %v1676
    %v1678 = vmul.f32 1.0, %v1677
    %v1679 = vmul.f32 %v1671, %v1662
    %v1680 = vadd.f32 %v1416, %v1679
    %v1681 = vtanh.pop %v1680
    %v1682 = vsub.f32 1.0, %v1678
    %v1683 = vmul.f32 %v1682, %v1681
    %v1684 = vmul.f32 %v1678, %v655
    %v1685 = vadd.f32 %v1683, %v1684
    %s1686 = scalar_lea.vmem [#allocation15], 2
    %1687 = vst.msk [vmem:[%s1686] sm:$0x3] %vm656, %v1685
    %s1688 = scalar_lea.vmem [#allocation7], 12
    %v1689 = vld [vmem:[%s1688] sm:$0x3]
    %v1690 = vld [vmem:[#allocation12] sm:$0xff]
    %v1691 = vld [vmem:[#allocation12 + $0x8] sm:$0xff]
    %v1692 = vld [vmem:[%s8] sm:$0x1]
    %v1694 = vlaneseq
    %v1695 = vshrl.u32 %v1694, 7
    %v1696 = vsub.s32 0, %v1695
    %v1697 = vrot.slane %v1692, %v1696
    %v1700 = vsel %vm148, %v1689, 0
    %1702 = vmatprep.subr.mxu0 0.0
    %1703 = vmatpush1.msra.mxu0 0.0
    %1704 = vmatprep.subr.mxu0 0.0
    %1705 = vmatpush1.msra.mxu0 0.0
    %1706 = vmatprep.subr.mxu0 0.0
    %1707 = vmatpush1.msra.mxu0 0.0
    %1708 = vmatprep.subr.mxu0 0.0
    %1709 = vmatpush1.msra.mxu0 0.0
    %1710 = vmatprep.subr.mxu0 0.0
    %1711 = vmatpush1.msra.mxu0 0.0
    %1712 = vmatprep.subr.mxu0 0.0
    %1713 = vmatpush1.msra.mxu0 0.0
    %1714 = vmatprep.subr.mxu0 0.0
    %1715 = vmatpush1.msra.mxu0 0.0
    %1716 = vmatprep.subr.mxu0 0.0
    %1717 = vmatpush1.msra.mxu0 0.0
    %1718 = vmatprep.subr.mxu0 0.0
    %1719 = vmatpush1.msra.mxu0 0.0
    %1720 = vmatprep.subr.mxu0 0.0
    %1721 = vmatpush1.msra.mxu0 0.0
    %1722 = vmatprep.subr.mxu0 0.0
    %1723 = vmatpush1.msra.mxu0 0.0
    %1724 = vmatprep.subr.mxu0 0.0
    %1725 = vmatpush1.msra.mxu0 0.0
    %1726 = vmatprep.subr.mxu0 0.0
    %1727 = vmatpush1.msra.mxu0 0.0
    %1728 = vmatprep.subr.mxu0 0.0
    %1729 = vmatpush1.msra.mxu0 0.0
    %1730 = vmatprep.subr.mxu0 0.0
    %1731 = vmatpush1.msra.mxu0 %v1691
    %1732 = vmatprep.subr.mxu0 0.0
    %1733 = vmatpush1.msra.mxu0 %v1690
    %1734 = vmatprep.subr.mxu0 0.0
    %1735 = vmatpush2.msra.mxu0 0.0
    %1736 = vmatprep.subr.mxu0 0.0
    %1737 = vmatpush2.msra.mxu0 0.0
    %1738 = vmatprep.subr.mxu0 0.0
    %1739 = vmatpush2.msra.mxu0 0.0
    %1740 = vmatprep.subr.mxu0 0.0
    %1741 = vmatpush2.msra.mxu0 0.0
    %1742 = vmatprep.subr.mxu0 0.0
    %1743 = vmatpush2.msra.mxu0 0.0
    %1744 = vmatprep.subr.mxu0 0.0
    %1745 = vmatpush2.msra.mxu0 0.0
    %1746 = vmatprep.subr.mxu0 0.0
    %1747 = vmatpush2.msra.mxu0 0.0
    %1748 = vmatprep.subr.mxu0 0.0
    %1749 = vmatpush2.msra.mxu0 0.0
    %1750 = vmatprep.subr.mxu0 0.0
    %1751 = vmatpush2.msra.mxu0 0.0
    %1752 = vmatprep.subr.mxu0 0.0
    %1753 = vmatpush2.msra.mxu0 0.0
    %1754 = vmatprep.subr.mxu0 0.0
    %1755 = vmatpush2.msra.mxu0 0.0
    %1756 = vmatprep.subr.mxu0 0.0
    %1757 = vmatpush2.msra.mxu0 0.0
    %1758 = vmatprep.subr.mxu0 0.0
    %1759 = vmatpush2.msra.mxu0 0.0
    %1760 = vmatprep.subr.mxu0 0.0
    %1761 = vmatpush2.msra.mxu0 0.0
    %1762 = vmatprep.subr.mxu0 0.0
    %1763 = vmatpush2.msra.mxu0 0.0
    %1764 = vmatprep.subr.mxu0 0.0
    %1765 = vmatpush2.msra.mxu0 0.0
    %1766 = vmatprep.mubr.f32.mxu0 0.0
    %1767 = vmatmul.mubr.f32.gmra.mxu0 %v1700
    %v1768 = vpop.f32.mrf.mxu0
    %v1769 = vadd.f32 %v1697, %v1768
    %v1770 = vpop.f32.mrf.mxu0
    %1771 = vdwg.mxu0
    %v1772 = vld [vmem:[%s742] sm:$0xff]
    %v1773 = vld [vmem:[%s742 + $0x8] sm:$0xff]
    %v1774 = vld [vmem:[%s745] sm:$0x1]
    %v1776 = vlaneseq
    %v1777 = vshrl.u32 %v1776, 7
    %v1778 = vsub.s32 0, %v1777
    %v1779 = vrot.slane %v1774, %v1778
    %1781 = vmatprep.subr.mxu0 0.0
    %1782 = vmatpush1.msra.mxu0 0.0
    %1783 = vmatprep.subr.mxu0 0.0
    %1784 = vmatpush1.msra.mxu0 0.0
    %1785 = vmatprep.subr.mxu0 0.0
    %1786 = vmatpush1.msra.mxu0 0.0
    %1787 = vmatprep.subr.mxu0 0.0
    %1788 = vmatpush1.msra.mxu0 0.0
    %1789 = vmatprep.subr.mxu0 0.0
    %1790 = vmatpush1.msra.mxu0 0.0
    %1791 = vmatprep.subr.mxu0 0.0
    %1792 = vmatpush1.msra.mxu0 0.0
    %1793 = vmatprep.subr.mxu0 0.0
    %1794 = vmatpush1.msra.mxu0 0.0
    %1795 = vmatprep.subr.mxu0 0.0
    %1796 = vmatpush1.msra.mxu0 0.0
    %1797 = vmatprep.subr.mxu0 0.0
    %1798 = vmatpush1.msra.mxu0 0.0
    %1799 = vmatprep.subr.mxu0 0.0
    %1800 = vmatpush1.msra.mxu0 0.0
    %1801 = vmatprep.subr.mxu0 0.0
    %1802 = vmatpush1.msra.mxu0 0.0
    %1803 = vmatprep.subr.mxu0 0.0
    %1804 = vmatpush1.msra.mxu0 0.0
    %1805 = vmatprep.subr.mxu0 0.0
    %1806 = vmatpush1.msra.mxu0 0.0
    %1807 = vmatprep.subr.mxu0 0.0
    %1808 = vmatpush1.msra.mxu0 0.0
    %1809 = vmatprep.subr.mxu0 0.0
    %1810 = vmatpush1.msra.mxu0 %v1773
    %1811 = vmatprep.subr.mxu0 0.0
    %1812 = vmatpush1.msra.mxu0 %v1772
    %1813 = vmatprep.subr.mxu0 0.0
    %1814 = vmatpush2.msra.mxu0 0.0
    %1815 = vmatprep.subr.mxu0 0.0
    %1816 = vmatpush2.msra.mxu0 0.0
    %1817 = vmatprep.subr.mxu0 0.0
    %1818 = vmatpush2.msra.mxu0 0.0
    %1819 = vmatprep.subr.mxu0 0.0
    %1820 = vmatpush2.msra.mxu0 0.0
    %1821 = vmatprep.subr.mxu0 0.0
    %1822 = vmatpush2.msra.mxu0 0.0
    %1823 = vmatprep.subr.mxu0 0.0
    %1824 = vmatpush2.msra.mxu0 0.0
    %1825 = vmatprep.subr.mxu0 0.0
    %1826 = vmatpush2.msra.mxu0 0.0
    %1827 = vmatprep.subr.mxu0 0.0
    %1828 = vmatpush2.msra.mxu0 0.0
    %1829 = vmatprep.subr.mxu0 0.0
    %1830 = vmatpush2.msra.mxu0 0.0
    %1831 = vmatprep.subr.mxu0 0.0
    %1832 = vmatpush2.msra.mxu0 0.0
    %1833 = vmatprep.subr.mxu0 0.0
    %1834 = vmatpush2.msra.mxu0 0.0
    %1835 = vmatprep.subr.mxu0 0.0
    %1836 = vmatpush2.msra.mxu0 0.0
    %1837 = vmatprep.subr.mxu0 0.0
    %1838 = vmatpush2.msra.mxu0 0.0
    %1839 = vmatprep.subr.mxu0 0.0
    %1840 = vmatpush2.msra.mxu0 0.0
    %1841 = vmatprep.subr.mxu0 0.0
    %1842 = vmatpush2.msra.mxu0 0.0
    %1843 = vmatprep.subr.mxu0 0.0
    %1844 = vmatpush2.msra.mxu0 0.0
    %1845 = vmatprep.mubr.f32.mxu0 0.0
    %1846 = vmatmul.mubr.f32.gmra.mxu0 %v1700
    %v1847 = vpop.f32.mrf.mxu0
    %v1848 = vadd.f32 %v1779, %v1847
    %v1849 = vpop.f32.mrf.mxu0
    %1850 = vdwg.mxu0
    %v1851 = vld [vmem:[%s823] sm:$0xff]
    %v1852 = vld [vmem:[%s823 + $0x8] sm:$0xff]
    %v1853 = vld [vmem:[%s826] sm:$0x1]
    %v1855 = vlaneseq
    %v1856 = vshrl.u32 %v1855, 7
    %v1857 = vsub.s32 0, %v1856
    %v1858 = vrot.slane %v1853, %v1857
    %1860 = vmatprep.subr.mxu0 0.0
    %1861 = vmatpush1.msra.mxu0 0.0
    %1862 = vmatprep.subr.mxu0 0.0
    %1863 = vmatpush1.msra.mxu0 0.0
    %1864 = vmatprep.subr.mxu0 0.0
    %1865 = vmatpush1.msra.mxu0 0.0
    %1866 = vmatprep.subr.mxu0 0.0
    %1867 = vmatpush1.msra.mxu0 0.0
    %1868 = vmatprep.subr.mxu0 0.0
    %1869 = vmatpush1.msra.mxu0 0.0
    %1870 = vmatprep.subr.mxu0 0.0
    %1871 = vmatpush1.msra.mxu0 0.0
    %1872 = vmatprep.subr.mxu0 0.0
    %1873 = vmatpush1.msra.mxu0 0.0
    %1874 = vmatprep.subr.mxu0 0.0
    %1875 = vmatpush1.msra.mxu0 0.0
    %1876 = vmatprep.subr.mxu0 0.0
    %1877 = vmatpush1.msra.mxu0 0.0
    %1878 = vmatprep.subr.mxu0 0.0
    %1879 = vmatpush1.msra.mxu0 0.0
    %1880 = vmatprep.subr.mxu0 0.0
    %1881 = vmatpush1.msra.mxu0 0.0
    %1882 = vmatprep.subr.mxu0 0.0
    %1883 = vmatpush1.msra.mxu0 0.0
    %1884 = vmatprep.subr.mxu0 0.0
    %1885 = vmatpush1.msra.mxu0 0.0
    %1886 = vmatprep.subr.mxu0 0.0
    %1887 = vmatpush1.msra.mxu0 0.0
    %1888 = vmatprep.subr.mxu0 0.0
    %1889 = vmatpush1.msra.mxu0 %v1852
    %1890 = vmatprep.subr.mxu0 0.0
    %1891 = vmatpush1.msra.mxu0 %v1851
    %1892 = vmatprep.subr.mxu0 0.0
    %1893 = vmatpush2.msra.mxu0 0.0
    %1894 = vmatprep.subr.mxu0 0.0
    %1895 = vmatpush2.msra.mxu0 0.0
    %1896 = vmatprep.subr.mxu0 0.0
    %1897 = vmatpush2.msra.mxu0 0.0
    %1898 = vmatprep.subr.mxu0 0.0
    %1899 = vmatpush2.msra.mxu0 0.0
    %1900 = vmatprep.subr.mxu0 0.0
    %1901 = vmatpush2.msra.mxu0 0.0
    %1902 = vmatprep.subr.mxu0 0.0
    %1903 = vmatpush2.msra.mxu0 0.0
    %1904 = vmatprep.subr.mxu0 0.0
    %1905 = vmatpush2.msra.mxu0 0.0
    %1906 = vmatprep.subr.mxu0 0.0
    %1907 = vmatpush2.msra.mxu0 0.0
    %1908 = vmatprep.subr.mxu0 0.0
    %1909 = vmatpush2.msra.mxu0 0.0
    %1910 = vmatprep.subr.mxu0 0.0
    %1911 = vmatpush2.msra.mxu0 0.0
    %1912 = vmatprep.subr.mxu0 0.0
    %1913 = vmatpush2.msra.mxu0 0.0
    %1914 = vmatprep.subr.mxu0 0.0
    %1915 = vmatpush2.msra.mxu0 0.0
    %1916 = vmatprep.subr.mxu0 0.0
    %1917 = vmatpush2.msra.mxu0 0.0
    %1918 = vmatprep.subr.mxu0 0.0
    %1919 = vmatpush2.msra.mxu0 0.0
    %1920 = vmatprep.subr.mxu0 0.0
    %1921 = vmatpush2.msra.mxu0 0.0
    %1922 = vmatprep.subr.mxu0 0.0
    %1923 = vmatpush2.msra.mxu0 0.0
    %1924 = vmatprep.mubr.f32.mxu0 0.0
    %1925 = vmatmul.mubr.f32.gmra.mxu0 %v1700
    %v1926 = vpop.f32.mrf.mxu0
    %v1927 = vadd.f32 %v1858, %v1926
    %v1928 = vpop.f32.mrf.mxu0
    %1929 = vdwg.mxu0
    %v1930 = vld [vmem:[#allocation13] sm:$0xff]
    %v1931 = vld [vmem:[#allocation13 + $0x8] sm:$0xff]
    %v1932 = vld [vmem:[#allocation13 + $0x10] sm:$0xff]
    %v1933 = vld [vmem:[#allocation13 + $0x18] sm:$0xff]
    %v1934 = vld [vmem:[%s9] sm:$0x1]
    %v1936 = vlaneseq
    %v1937 = vshrl.u32 %v1936, 7
    %v1938 = vsub.s32 0, %v1937
    %v1939 = vrot.slane %v1934, %v1938
    %v1942 = vsel %vm395, %v1174, 0
    %1944 = vmatprep.subr.mxu0 0.0
    %1945 = vmatpush1.msra.mxu0 0.0
    %1946 = vmatprep.subr.mxu0 0.0
    %1947 = vmatpush1.msra.mxu0 0.0
    %1948 = vmatprep.subr.mxu0 0.0
    %1949 = vmatpush1.msra.mxu0 0.0
    %1950 = vmatprep.subr.mxu0 0.0
    %1951 = vmatpush1.msra.mxu0 0.0
    %1952 = vmatprep.subr.mxu0 0.0
    %1953 = vmatpush1.msra.mxu0 0.0
    %1954 = vmatprep.subr.mxu0 0.0
    %1955 = vmatpush1.msra.mxu0 0.0
    %1956 = vmatprep.subr.mxu0 0.0
    %1957 = vmatpush1.msra.mxu0 0.0
    %1958 = vmatprep.subr.mxu0 0.0
    %1959 = vmatpush1.msra.mxu0 0.0
    %1960 = vmatprep.subr.mxu0 0.0
    %1961 = vmatpush1.msra.mxu0 0.0
    %1962 = vmatprep.subr.mxu0 0.0
    %1963 = vmatpush1.msra.mxu0 0.0
    %1964 = vmatprep.subr.mxu0 0.0
    %1965 = vmatpush1.msra.mxu0 0.0
    %1966 = vmatprep.subr.mxu0 0.0
    %1967 = vmatpush1.msra.mxu0 0.0
    %1968 = vmatprep.subr.mxu0 0.0
    %1969 = vmatpush1.msra.mxu0 %v1933
    %1970 = vmatprep.subr.mxu0 0.0
    %1971 = vmatpush1.msra.mxu0 %v1932
    %1972 = vmatprep.subr.mxu0 0.0
    %1973 = vmatpush1.msra.mxu0 %v1931
    %1974 = vmatprep.subr.mxu0 0.0
    %1975 = vmatpush1.msra.mxu0 %v1930
    %1976 = vmatprep.subr.mxu0 0.0
    %1977 = vmatpush2.msra.mxu0 0.0
    %1978 = vmatprep.subr.mxu0 0.0
    %1979 = vmatpush2.msra.mxu0 0.0
    %1980 = vmatprep.subr.mxu0 0.0
    %1981 = vmatpush2.msra.mxu0 0.0
    %1982 = vmatprep.subr.mxu0 0.0
    %1983 = vmatpush2.msra.mxu0 0.0
    %1984 = vmatprep.subr.mxu0 0.0
    %1985 = vmatpush2.msra.mxu0 0.0
    %1986 = vmatprep.subr.mxu0 0.0
    %1987 = vmatpush2.msra.mxu0 0.0
    %1988 = vmatprep.subr.mxu0 0.0
    %1989 = vmatpush2.msra.mxu0 0.0
    %1990 = vmatprep.subr.mxu0 0.0
    %1991 = vmatpush2.msra.mxu0 0.0
    %1992 = vmatprep.subr.mxu0 0.0
    %1993 = vmatpush2.msra.mxu0 0.0
    %1994 = vmatprep.subr.mxu0 0.0
    %1995 = vmatpush2.msra.mxu0 0.0
    %1996 = vmatprep.subr.mxu0 0.0
    %1997 = vmatpush2.msra.mxu0 0.0
    %1998 = vmatprep.subr.mxu0 0.0
    %1999 = vmatpush2.msra.mxu0 0.0
    %2000 = vmatprep.subr.mxu0 0.0
    %2001 = vmatpush2.msra.mxu0 0.0
    %2002 = vmatprep.subr.mxu0 0.0
    %2003 = vmatpush2.msra.mxu0 0.0
    %2004 = vmatprep.subr.mxu0 0.0
    %2005 = vmatpush2.msra.mxu0 0.0
    %2006 = vmatprep.subr.mxu0 0.0
    %2007 = vmatpush2.msra.mxu0 0.0
    %2008 = vmatprep.mubr.f32.mxu0 0.0
    %2009 = vmatmul.mubr.f32.gmra.mxu0 %v1942
    %v2010 = vpop.f32.mrf.mxu0
    %v2011 = vadd.f32 %v1939, %v2010
    %v2012 = vpop.f32.mrf.mxu0
    %2013 = vdwg.mxu0
    %v2014 = vld [vmem:[%s988] sm:$0xff]
    %v2015 = vld [vmem:[%s988 + $0x8] sm:$0xff]
    %v2016 = vld [vmem:[%s988 + $0x10] sm:$0xff]
    %v2017 = vld [vmem:[%s988 + $0x18] sm:$0xff]
    %v2018 = vld [vmem:[%s993] sm:$0x1]
    %v2020 = vlaneseq
    %v2021 = vshrl.u32 %v2020, 7
    %v2022 = vsub.s32 0, %v2021
    %v2023 = vrot.slane %v2018, %v2022
    %2025 = vmatprep.subr.mxu0 0.0
    %2026 = vmatpush1.msra.mxu0 0.0
    %2027 = vmatprep.subr.mxu0 0.0
    %2028 = vmatpush1.msra.mxu0 0.0
    %2029 = vmatprep.subr.mxu0 0.0
    %2030 = vmatpush1.msra.mxu0 0.0
    %2031 = vmatprep.subr.mxu0 0.0
    %2032 = vmatpush1.msra.mxu0 0.0
    %2033 = vmatprep.subr.mxu0 0.0
    %2034 = vmatpush1.msra.mxu0 0.0
    %2035 = vmatprep.subr.mxu0 0.0
    %2036 = vmatpush1.msra.mxu0 0.0
    %2037 = vmatprep.subr.mxu0 0.0
    %2038 = vmatpush1.msra.mxu0 0.0
    %2039 = vmatprep.subr.mxu0 0.0
    %2040 = vmatpush1.msra.mxu0 0.0
    %2041 = vmatprep.subr.mxu0 0.0
    %2042 = vmatpush1.msra.mxu0 0.0
    %2043 = vmatprep.subr.mxu0 0.0
    %2044 = vmatpush1.msra.mxu0 0.0
    %2045 = vmatprep.subr.mxu0 0.0
    %2046 = vmatpush1.msra.mxu0 0.0
    %2047 = vmatprep.subr.mxu0 0.0
    %2048 = vmatpush1.msra.mxu0 0.0
    %2049 = vmatprep.subr.mxu0 0.0
    %2050 = vmatpush1.msra.mxu0 %v2017
    %2051 = vmatprep.subr.mxu0 0.0
    %2052 = vmatpush1.msra.mxu0 %v2016
    %2053 = vmatprep.subr.mxu0 0.0
    %2054 = vmatpush1.msra.mxu0 %v2015
    %2055 = vmatprep.subr.mxu0 0.0
    %2056 = vmatpush1.msra.mxu0 %v2014
    %2057 = vmatprep.subr.mxu0 0.0
    %2058 = vmatpush2.msra.mxu0 0.0
    %2059 = vmatprep.subr.mxu0 0.0
    %2060 = vmatpush2.msra.mxu0 0.0
    %2061 = vmatprep.subr.mxu0 0.0
    %2062 = vmatpush2.msra.mxu0 0.0
    %2063 = vmatprep.subr.mxu0 0.0
    %2064 = vmatpush2.msra.mxu0 0.0
    %2065 = vmatprep.subr.mxu0 0.0
    %2066 = vmatpush2.msra.mxu0 0.0
    %2067 = vmatprep.subr.mxu0 0.0
    %2068 = vmatpush2.msra.mxu0 0.0
    %2069 = vmatprep.subr.mxu0 0.0
    %2070 = vmatpush2.msra.mxu0 0.0
    %2071 = vmatprep.subr.mxu0 0.0
    %2072 = vmatpush2.msra.mxu0 0.0
    %2073 = vmatprep.subr.mxu0 0.0
    %2074 = vmatpush2.msra.mxu0 0.0
    %2075 = vmatprep.subr.mxu0 0.0
    %2076 = vmatpush2.msra.mxu0 0.0
    %2077 = vmatprep.subr.mxu0 0.0
    %2078 = vmatpush2.msra.mxu0 0.0
    %2079 = vmatprep.subr.mxu0 0.0
    %2080 = vmatpush2.msra.mxu0 0.0
    %2081 = vmatprep.subr.mxu0 0.0
    %2082 = vmatpush2.msra.mxu0 0.0
    %2083 = vmatprep.subr.mxu0 0.0
    %2084 = vmatpush2.msra.mxu0 0.0
    %2085 = vmatprep.subr.mxu0 0.0
    %2086 = vmatpush2.msra.mxu0 0.0
    %2087 = vmatprep.subr.mxu0 0.0
    %2088 = vmatpush2.msra.mxu0 0.0
    %2089 = vmatprep.mubr.f32.mxu0 0.0
    %2090 = vmatmul.mubr.f32.gmra.mxu0 %v1942
    %v2091 = vpop.f32.mrf.mxu0
    %v2092 = vadd.f32 %v2023, %v2091
    %v2093 = vpop.f32.mrf.mxu0
    %2094 = vdwg.mxu0
    %v2095 = vld [vmem:[%s1071] sm:$0xff]
    %v2096 = vld [vmem:[%s1071 + $0x8] sm:$0xff]
    %v2097 = vld [vmem:[%s1071 + $0x10] sm:$0xff]
    %v2098 = vld [vmem:[%s1071 + $0x18] sm:$0xff]
    %v2099 = vld [vmem:[%s1076] sm:$0x1]
    %v2101 = vlaneseq
    %v2102 = vshrl.u32 %v2101, 7
    %v2103 = vsub.s32 0, %v2102
    %v2104 = vrot.slane %v2099, %v2103
    %2106 = vmatprep.subr.mxu0 0.0
    %2107 = vmatpush1.msra.mxu0 0.0
    %2108 = vmatprep.subr.mxu0 0.0
    %2109 = vmatpush1.msra.mxu0 0.0
    %2110 = vmatprep.subr.mxu0 0.0
    %2111 = vmatpush1.msra.mxu0 0.0
    %2112 = vmatprep.subr.mxu0 0.0
    %2113 = vmatpush1.msra.mxu0 0.0
    %2114 = vmatprep.subr.mxu0 0.0
    %2115 = vmatpush1.msra.mxu0 0.0
    %2116 = vmatprep.subr.mxu0 0.0
    %2117 = vmatpush1.msra.mxu0 0.0
    %2118 = vmatprep.subr.mxu0 0.0
    %2119 = vmatpush1.msra.mxu0 0.0
    %2120 = vmatprep.subr.mxu0 0.0
    %2121 = vmatpush1.msra.mxu0 0.0
    %2122 = vmatprep.subr.mxu0 0.0
    %2123 = vmatpush1.msra.mxu0 0.0
    %2124 = vmatprep.subr.mxu0 0.0
    %2125 = vmatpush1.msra.mxu0 0.0
    %2126 = vmatprep.subr.mxu0 0.0
    %2127 = vmatpush1.msra.mxu0 0.0
    %2128 = vmatprep.subr.mxu0 0.0
    %2129 = vmatpush1.msra.mxu0 0.0
    %2130 = vmatprep.subr.mxu0 0.0
    %2131 = vmatpush1.msra.mxu0 %v2098
    %2132 = vmatprep.subr.mxu0 0.0
    %2133 = vmatpush1.msra.mxu0 %v2097
    %2134 = vmatprep.subr.mxu0 0.0
    %2135 = vmatpush1.msra.mxu0 %v2096
    %2136 = vmatprep.subr.mxu0 0.0
    %2137 = vmatpush1.msra.mxu0 %v2095
    %2138 = vmatprep.subr.mxu0 0.0
    %2139 = vmatpush2.msra.mxu0 0.0
    %2140 = vmatprep.subr.mxu0 0.0
    %2141 = vmatpush2.msra.mxu0 0.0
    %2142 = vmatprep.subr.mxu0 0.0
    %2143 = vmatpush2.msra.mxu0 0.0
    %2144 = vmatprep.subr.mxu0 0.0
    %2145 = vmatpush2.msra.mxu0 0.0
    %2146 = vmatprep.subr.mxu0 0.0
    %2147 = vmatpush2.msra.mxu0 0.0
    %2148 = vmatprep.subr.mxu0 0.0
    %2149 = vmatpush2.msra.mxu0 0.0
    %2150 = vmatprep.subr.mxu0 0.0
    %2151 = vmatpush2.msra.mxu0 0.0
    %2152 = vmatprep.subr.mxu0 0.0
    %2153 = vmatpush2.msra.mxu0 0.0
    %2154 = vmatprep.subr.mxu0 0.0
    %2155 = vmatpush2.msra.mxu0 0.0
    %2156 = vmatprep.subr.mxu0 0.0
    %2157 = vmatpush2.msra.mxu0 0.0
    %2158 = vmatprep.subr.mxu0 0.0
    %2159 = vmatpush2.msra.mxu0 0.0
    %2160 = vmatprep.subr.mxu0 0.0
    %2161 = vmatpush2.msra.mxu0 0.0
    %2162 = vmatprep.subr.mxu0 0.0
    %2163 = vmatpush2.msra.mxu0 0.0
    %2164 = vmatprep.subr.mxu0 0.0
    %2165 = vmatpush2.msra.mxu0 0.0
    %2166 = vmatprep.subr.mxu0 0.0
    %2167 = vmatpush2.msra.mxu0 0.0
    %2168 = vmatprep.subr.mxu0 0.0
    %2169 = vmatpush2.msra.mxu0 0.0
    %2170 = vmatprep.mubr.f32.mxu0 0.0
    %2171 = vmatmul.mubr.f32.gmra.mxu0 %v1942
    %v2172 = vpop.f32.mrf.mxu0
    %v2173 = vadd.f32 %v2104, %v2172
    %v2174 = vpop.f32.mrf.mxu0
    %2175 = vdwg.mxu0
    %v2176 = vadd.f32 %v1769, %v2011
    %v2177 = vxor.u32 %v2176, 2147483648
    %v2178 = vmul.f32 %v2177, 1.442695
    %v2179 = vpow.pop %v2178
    %v2180 = vadd.f32 %v2179, 1.0
    %v2181 = vrcp.pop %v2180
    %v2182 = vmul.f32 1.0, %v2181
    %v2183 = vadd.f32 %v1848, %v2092
    %v2184 = vxor.u32 %v2183, 2147483648
    %v2185 = vmul.f32 %v2184, 1.442695
    %v2186 = vpow.pop %v2185
    %v2187 = vadd.f32 %v2186, 1.0
    %v2188 = vrcp.pop %v2187
    %v2189 = vmul.f32 1.0, %v2188
    %v2190 = vmul.f32 %v2182, %v2173
    %v2191 = vadd.f32 %v1927, %v2190
    %v2192 = vtanh.pop %v2191
    %v2193 = vsub.f32 1.0, %v2189
    %v2194 = vmul.f32 %v2193, %v2192
    %v2195 = vmul.f32 %v2189, %v1174
    %v2196 = vadd.f32 %v2194, %v2195
    %s2197 = scalar_lea.vmem [#allocation16], 12
    %2198 = vst.msk [vmem:[%s2197] sm:$0x3] %vm656, %v2196
    %s2199 = scalar_lea.vmem [#allocation4], 4
    %v2200 = vld [vmem:[%s2199] sm:$0x3]
    %v2201 = vld [vmem:[#allocation9] sm:$0xff]
    %v2202 = vld [vmem:[#allocation9 + $0x8] sm:$0xff]
    %v2203 = vld [vmem:[%s4] sm:$0x1]
    %v2205 = vlaneseq
    %v2206 = vshrl.u32 %v2205, 7
    %v2207 = vsub.s32 0, %v2206
    %v2208 = vrot.slane %v2203, %v2207
    %v2211 = vsel %vm148, %v2200, 0
    %2213 = vmatprep.subr.mxu0 0.0
    %2214 = vmatpush1.msra.mxu0 0.0
    %2215 = vmatprep.subr.mxu0 0.0
    %2216 = vmatpush1.msra.mxu0 0.0
    %2217 = vmatprep.subr.mxu0 0.0
    %2218 = vmatpush1.msra.mxu0 0.0
    %2219 = vmatprep.subr.mxu0 0.0
    %2220 = vmatpush1.msra.mxu0 0.0
    %2221 = vmatprep.subr.mxu0 0.0
    %2222 = vmatpush1.msra.mxu0 0.0
    %2223 = vmatprep.subr.mxu0 0.0
    %2224 = vmatpush1.msra.mxu0 0.0
    %2225 = vmatprep.subr.mxu0 0.0
    %2226 = vmatpush1.msra.mxu0 0.0
    %2227 = vmatprep.subr.mxu0 0.0
    %2228 = vmatpush1.msra.mxu0 0.0
    %2229 = vmatprep.subr.mxu0 0.0
    %2230 = vmatpush1.msra.mxu0 0.0
    %2231 = vmatprep.subr.mxu0 0.0
    %2232 = vmatpush1.msra.mxu0 0.0
    %2233 = vmatprep.subr.mxu0 0.0
    %2234 = vmatpush1.msra.mxu0 0.0
    %2235 = vmatprep.subr.mxu0 0.0
    %2236 = vmatpush1.msra.mxu0 0.0
    %2237 = vmatprep.subr.mxu0 0.0
    %2238 = vmatpush1.msra.mxu0 0.0
    %2239 = vmatprep.subr.mxu0 0.0
    %2240 = vmatpush1.msra.mxu0 0.0
    %2241 = vmatprep.subr.mxu0 0.0
    %2242 = vmatpush1.msra.mxu0 %v2202
    %2243 = vmatprep.subr.mxu0 0.0
    %2244 = vmatpush1.msra.mxu0 %v2201
    %2245 = vmatprep.subr.mxu0 0.0
    %2246 = vmatpush2.msra.mxu0 0.0
    %2247 = vmatprep.subr.mxu0 0.0
    %2248 = vmatpush2.msra.mxu0 0.0
    %2249 = vmatprep.subr.mxu0 0.0
    %2250 = vmatpush2.msra.mxu0 0.0
    %2251 = vmatprep.subr.mxu0 0.0
    %2252 = vmatpush2.msra.mxu0 0.0
    %2253 = vmatprep.subr.mxu0 0.0
    %2254 = vmatpush2.msra.mxu0 0.0
    %2255 = vmatprep.subr.mxu0 0.0
    %2256 = vmatpush2.msra.mxu0 0.0
    %2257 = vmatprep.subr.mxu0 0.0
    %2258 = vmatpush2.msra.mxu0 0.0
    %2259 = vmatprep.subr.mxu0 0.0
    %2260 = vmatpush2.msra.mxu0 0.0
    %2261 = vmatprep.subr.mxu0 0.0
    %2262 = vmatpush2.msra.mxu0 0.0
    %2263 = vmatprep.subr.mxu0 0.0
    %2264 = vmatpush2.msra.mxu0 0.0
    %2265 = vmatprep.subr.mxu0 0.0
    %2266 = vmatpush2.msra.mxu0 0.0
    %2267 = vmatprep.subr.mxu0 0.0
    %2268 = vmatpush2.msra.mxu0 0.0
    %2269 = vmatprep.subr.mxu0 0.0
    %2270 = vmatpush2.msra.mxu0 0.0
    %2271 = vmatprep.subr.mxu0 0.0
    %2272 = vmatpush2.msra.mxu0 0.0
    %2273 = vmatprep.subr.mxu0 0.0
    %2274 = vmatpush2.msra.mxu0 0.0
    %2275 = vmatprep.subr.mxu0 0.0
    %2276 = vmatpush2.msra.mxu0 0.0
    %2277 = vmatprep.mubr.f32.mxu0 0.0
    %2278 = vmatmul.mubr.f32.gmra.mxu0 %v2211
    %v2279 = vpop.f32.mrf.mxu0
    %v2280 = vadd.f32 %v2208, %v2279
    %v2281 = vpop.f32.mrf.mxu0
    %2282 = vdwg.mxu0
    %v2283 = vld [vmem:[%s222] sm:$0xff]
    %v2284 = vld [vmem:[%s222 + $0x8] sm:$0xff]
    %v2285 = vld [vmem:[%s225] sm:$0x1]
    %v2287 = vlaneseq
    %v2288 = vshrl.u32 %v2287, 7
    %v2289 = vsub.s32 0, %v2288
    %v2290 = vrot.slane %v2285, %v2289
    %2292 = vmatprep.subr.mxu0 0.0
    %2293 = vmatpush1.msra.mxu0 0.0
    %2294 = vmatprep.subr.mxu0 0.0
    %2295 = vmatpush1.msra.mxu0 0.0
    %2296 = vmatprep.subr.mxu0 0.0
    %2297 = vmatpush1.msra.mxu0 0.0
    %2298 = vmatprep.subr.mxu0 0.0
    %2299 = vmatpush1.msra.mxu0 0.0
    %2300 = vmatprep.subr.mxu0 0.0
    %2301 = vmatpush1.msra.mxu0 0.0
    %2302 = vmatprep.subr.mxu0 0.0
    %2303 = vmatpush1.msra.mxu0 0.0
    %2304 = vmatprep.subr.mxu0 0.0
    %2305 = vmatpush1.msra.mxu0 0.0
    %2306 = vmatprep.subr.mxu0 0.0
    %2307 = vmatpush1.msra.mxu0 0.0
    %2308 = vmatprep.subr.mxu0 0.0
    %2309 = vmatpush1.msra.mxu0 0.0
    %2310 = vmatprep.subr.mxu0 0.0
    %2311 = vmatpush1.msra.mxu0 0.0
    %2312 = vmatprep.subr.mxu0 0.0
    %2313 = vmatpush1.msra.mxu0 0.0
    %2314 = vmatprep.subr.mxu0 0.0
    %2315 = vmatpush1.msra.mxu0 0.0
    %2316 = vmatprep.subr.mxu0 0.0
    %2317 = vmatpush1.msra.mxu0 0.0
    %2318 = vmatprep.subr.mxu0 0.0
    %2319 = vmatpush1.msra.mxu0 0.0
    %2320 = vmatprep.subr.mxu0 0.0
    %2321 = vmatpush1.msra.mxu0 %v2284
    %2322 = vmatprep.subr.mxu0 0.0
    %2323 = vmatpush1.msra.mxu0 %v2283
    %2324 = vmatprep.subr.mxu0 0.0
    %2325 = vmatpush2.msra.mxu0 0.0
    %2326 = vmatprep.subr.mxu0 0.0
    %2327 = vmatpush2.msra.mxu0 0.0
    %2328 = vmatprep.subr.mxu0 0.0
    %2329 = vmatpush2.msra.mxu0 0.0
    %2330 = vmatprep.subr.mxu0 0.0
    %2331 = vmatpush2.msra.mxu0 0.0
    %2332 = vmatprep.subr.mxu0 0.0
    %2333 = vmatpush2.msra.mxu0 0.0
    %2334 = vmatprep.subr.mxu0 0.0
    %2335 = vmatpush2.msra.mxu0 0.0
    %2336 = vmatprep.subr.mxu0 0.0
    %2337 = vmatpush2.msra.mxu0 0.0
    %2338 = vmatprep.subr.mxu0 0.0
    %2339 = vmatpush2.msra.mxu0 0.0
    %2340 = vmatprep.subr.mxu0 0.0
    %2341 = vmatpush2.msra.mxu0 0.0
    %2342 = vmatprep.subr.mxu0 0.0
    %2343 = vmatpush2.msra.mxu0 0.0
    %2344 = vmatprep.subr.mxu0 0.0
    %2345 = vmatpush2.msra.mxu0 0.0
    %2346 = vmatprep.subr.mxu0 0.0
    %2347 = vmatpush2.msra.mxu0 0.0
    %2348 = vmatprep.subr.mxu0 0.0
    %2349 = vmatpush2.msra.mxu0 0.0
    %2350 = vmatprep.subr.mxu0 0.0
    %2351 = vmatpush2.msra.mxu0 0.0
    %2352 = vmatprep.subr.mxu0 0.0
    %2353 = vmatpush2.msra.mxu0 0.0
    %2354 = vmatprep.subr.mxu0 0.0
    %2355 = vmatpush2.msra.mxu0 0.0
    %2356 = vmatprep.mubr.f32.mxu0 0.0
    %2357 = vmatmul.mubr.f32.gmra.mxu0 %v2211
    %v2358 = vpop.f32.mrf.mxu0
    %v2359 = vadd.f32 %v2290, %v2358
    %v2360 = vpop.f32.mrf.mxu0
    %2361 = vdwg.mxu0
    %v2362 = vld [vmem:[%s303] sm:$0xff]
    %v2363 = vld [vmem:[%s303 + $0x8] sm:$0xff]
    %v2364 = vld [vmem:[%s306] sm:$0x1]
    %v2366 = vlaneseq
    %v2367 = vshrl.u32 %v2366, 7
    %v2368 = vsub.s32 0, %v2367
    %v2369 = vrot.slane %v2364, %v2368
    %2371 = vmatprep.subr.mxu0 0.0
    %2372 = vmatpush1.msra.mxu0 0.0
    %2373 = vmatprep.subr.mxu0 0.0
    %2374 = vmatpush1.msra.mxu0 0.0
    %2375 = vmatprep.subr.mxu0 0.0
    %2376 = vmatpush1.msra.mxu0 0.0
    %2377 = vmatprep.subr.mxu0 0.0
    %2378 = vmatpush1.msra.mxu0 0.0
    %2379 = vmatprep.subr.mxu0 0.0
    %2380 = vmatpush1.msra.mxu0 0.0
    %2381 = vmatprep.subr.mxu0 0.0
    %2382 = vmatpush1.msra.mxu0 0.0
    %2383 = vmatprep.subr.mxu0 0.0
    %2384 = vmatpush1.msra.mxu0 0.0
    %2385 = vmatprep.subr.mxu0 0.0
    %2386 = vmatpush1.msra.mxu0 0.0
    %2387 = vmatprep.subr.mxu0 0.0
    %2388 = vmatpush1.msra.mxu0 0.0
    %2389 = vmatprep.subr.mxu0 0.0
    %2390 = vmatpush1.msra.mxu0 0.0
    %2391 = vmatprep.subr.mxu0 0.0
    %2392 = vmatpush1.msra.mxu0 0.0
    %2393 = vmatprep.subr.mxu0 0.0
    %2394 = vmatpush1.msra.mxu0 0.0
    %2395 = vmatprep.subr.mxu0 0.0
    %2396 = vmatpush1.msra.mxu0 0.0
    %2397 = vmatprep.subr.mxu0 0.0
    %2398 = vmatpush1.msra.mxu0 0.0
    %2399 = vmatprep.subr.mxu0 0.0
    %2400 = vmatpush1.msra.mxu0 %v2363
    %2401 = vmatprep.subr.mxu0 0.0
    %2402 = vmatpush1.msra.mxu0 %v2362
    %2403 = vmatprep.subr.mxu0 0.0
    %2404 = vmatpush2.msra.mxu0 0.0
    %2405 = vmatprep.subr.mxu0 0.0
    %2406 = vmatpush2.msra.mxu0 0.0
    %2407 = vmatprep.subr.mxu0 0.0
    %2408 = vmatpush2.msra.mxu0 0.0
    %2409 = vmatprep.subr.mxu0 0.0
    %2410 = vmatpush2.msra.mxu0 0.0
    %2411 = vmatprep.subr.mxu0 0.0
    %2412 = vmatpush2.msra.mxu0 0.0
    %2413 = vmatprep.subr.mxu0 0.0
    %2414 = vmatpush2.msra.mxu0 0.0
    %2415 = vmatprep.subr.mxu0 0.0
    %2416 = vmatpush2.msra.mxu0 0.0
    %2417 = vmatprep.subr.mxu0 0.0
    %2418 = vmatpush2.msra.mxu0 0.0
    %2419 = vmatprep.subr.mxu0 0.0
    %2420 = vmatpush2.msra.mxu0 0.0
    %2421 = vmatprep.subr.mxu0 0.0
    %2422 = vmatpush2.msra.mxu0 0.0
    %2423 = vmatprep.subr.mxu0 0.0
    %2424 = vmatpush2.msra.mxu0 0.0
    %2425 = vmatprep.subr.mxu0 0.0
    %2426 = vmatpush2.msra.mxu0 0.0
    %2427 = vmatprep.subr.mxu0 0.0
    %2428 = vmatpush2.msra.mxu0 0.0
    %2429 = vmatprep.subr.mxu0 0.0
    %2430 = vmatpush2.msra.mxu0 0.0
    %2431 = vmatprep.subr.mxu0 0.0
    %2432 = vmatpush2.msra.mxu0 0.0
    %2433 = vmatprep.subr.mxu0 0.0
    %2434 = vmatpush2.msra.mxu0 0.0
    %2435 = vmatprep.mubr.f32.mxu0 0.0
    %2436 = vmatmul.mubr.f32.gmra.mxu0 %v2211
    %v2437 = vpop.f32.mrf.mxu0
    %v2438 = vadd.f32 %v2369, %v2437
    %v2439 = vpop.f32.mrf.mxu0
    %2440 = vdwg.mxu0
    %v2441 = vld [vmem:[#allocation10] sm:$0xff]
    %v2442 = vld [vmem:[#allocation10 + $0x8] sm:$0xff]
    %v2443 = vld [vmem:[#allocation10 + $0x10] sm:$0xff]
    %v2444 = vld [vmem:[#allocation10 + $0x18] sm:$0xff]
    %v2445 = vld [vmem:[%s5] sm:$0x1]
    %v2447 = vlaneseq
    %v2448 = vshrl.u32 %v2447, 7
    %v2449 = vsub.s32 0, %v2448
    %v2450 = vrot.slane %v2445, %v2449
    %v2453 = vsel %vm395, %v1685, 0
    %2455 = vmatprep.subr.mxu0 0.0
    %2456 = vmatpush1.msra.mxu0 0.0
    %2457 = vmatprep.subr.mxu0 0.0
    %2458 = vmatpush1.msra.mxu0 0.0
    %2459 = vmatprep.subr.mxu0 0.0
    %2460 = vmatpush1.msra.mxu0 0.0
    %2461 = vmatprep.subr.mxu0 0.0
    %2462 = vmatpush1.msra.mxu0 0.0
    %2463 = vmatprep.subr.mxu0 0.0
    %2464 = vmatpush1.msra.mxu0 0.0
    %2465 = vmatprep.subr.mxu0 0.0
    %2466 = vmatpush1.msra.mxu0 0.0
    %2467 = vmatprep.subr.mxu0 0.0
    %2468 = vmatpush1.msra.mxu0 0.0
    %2469 = vmatprep.subr.mxu0 0.0
    %2470 = vmatpush1.msra.mxu0 0.0
    %2471 = vmatprep.subr.mxu0 0.0
    %2472 = vmatpush1.msra.mxu0 0.0
    %2473 = vmatprep.subr.mxu0 0.0
    %2474 = vmatpush1.msra.mxu0 0.0
    %2475 = vmatprep.subr.mxu0 0.0
    %2476 = vmatpush1.msra.mxu0 0.0
    %2477 = vmatprep.subr.mxu0 0.0
    %2478 = vmatpush1.msra.mxu0 0.0
    %2479 = vmatprep.subr.mxu0 0.0
    %2480 = vmatpush1.msra.mxu0 %v2444
    %2481 = vmatprep.subr.mxu0 0.0
    %2482 = vmatpush1.msra.mxu0 %v2443
    %2483 = vmatprep.subr.mxu0 0.0
    %2484 = vmatpush1.msra.mxu0 %v2442
    %2485 = vmatprep.subr.mxu0 0.0
    %2486 = vmatpush1.msra.mxu0 %v2441
    %2487 = vmatprep.subr.mxu0 0.0
    %2488 = vmatpush2.msra.mxu0 0.0
    %2489 = vmatprep.subr.mxu0 0.0
    %2490 = vmatpush2.msra.mxu0 0.0
    %2491 = vmatprep.subr.mxu0 0.0
    %2492 = vmatpush2.msra.mxu0 0.0
    %2493 = vmatprep.subr.mxu0 0.0
    %2494 = vmatpush2.msra.mxu0 0.0
    %2495 = vmatprep.subr.mxu0 0.0
    %2496 = vmatpush2.msra.mxu0 0.0
    %2497 = vmatprep.subr.mxu0 0.0
    %2498 = vmatpush2.msra.mxu0 0.0
    %2499 = vmatprep.subr.mxu0 0.0
    %2500 = vmatpush2.msra.mxu0 0.0
    %2501 = vmatprep.subr.mxu0 0.0
    %2502 = vmatpush2.msra.mxu0 0.0
    %2503 = vmatprep.subr.mxu0 0.0
    %2504 = vmatpush2.msra.mxu0 0.0
    %2505 = vmatprep.subr.mxu0 0.0
    %2506 = vmatpush2.msra.mxu0 0.0
    %2507 = vmatprep.subr.mxu0 0.0
    %2508 = vmatpush2.msra.mxu0 0.0
    %2509 = vmatprep.subr.mxu0 0.0
    %2510 = vmatpush2.msra.mxu0 0.0
    %2511 = vmatprep.subr.mxu0 0.0
    %2512 = vmatpush2.msra.mxu0 0.0
    %2513 = vmatprep.subr.mxu0 0.0
    %2514 = vmatpush2.msra.mxu0 0.0
    %2515 = vmatprep.subr.mxu0 0.0
    %2516 = vmatpush2.msra.mxu0 0.0
    %2517 = vmatprep.subr.mxu0 0.0
    %2518 = vmatpush2.msra.mxu0 0.0
    %2519 = vmatprep.mubr.f32.mxu0 0.0
    %2520 = vmatmul.mubr.f32.gmra.mxu0 %v2453
    %v2521 = vpop.f32.mrf.mxu0
    %v2522 = vadd.f32 %v2450, %v2521
    %v2523 = vpop.f32.mrf.mxu0
    %2524 = vdwg.mxu0
    %v2525 = vld [vmem:[%s469] sm:$0xff]
    %v2526 = vld [vmem:[%s469 + $0x8] sm:$0xff]
    %v2527 = vld [vmem:[%s469 + $0x10] sm:$0xff]
    %v2528 = vld [vmem:[%s469 + $0x18] sm:$0xff]
    %v2529 = vld [vmem:[%s474] sm:$0x1]
    %v2531 = vlaneseq
    %v2532 = vshrl.u32 %v2531, 7
    %v2533 = vsub.s32 0, %v2532
    %v2534 = vrot.slane %v2529, %v2533
    %2536 = vmatprep.subr.mxu0 0.0
    %2537 = vmatpush1.msra.mxu0 0.0
    %2538 = vmatprep.subr.mxu0 0.0
    %2539 = vmatpush1.msra.mxu0 0.0
    %2540 = vmatprep.subr.mxu0 0.0
    %2541 = vmatpush1.msra.mxu0 0.0
    %2542 = vmatprep.subr.mxu0 0.0
    %2543 = vmatpush1.msra.mxu0 0.0
    %2544 = vmatprep.subr.mxu0 0.0
    %2545 = vmatpush1.msra.mxu0 0.0
    %2546 = vmatprep.subr.mxu0 0.0
    %2547 = vmatpush1.msra.mxu0 0.0
    %2548 = vmatprep.subr.mxu0 0.0
    %2549 = vmatpush1.msra.mxu0 0.0
    %2550 = vmatprep.subr.mxu0 0.0
    %2551 = vmatpush1.msra.mxu0 0.0
    %2552 = vmatprep.subr.mxu0 0.0
    %2553 = vmatpush1.msra.mxu0 0.0
    %2554 = vmatprep.subr.mxu0 0.0
    %2555 = vmatpush1.msra.mxu0 0.0
    %2556 = vmatprep.subr.mxu0 0.0
    %2557 = vmatpush1.msra.mxu0 0.0
    %2558 = vmatprep.subr.mxu0 0.0
    %2559 = vmatpush1.msra.mxu0 0.0
    %2560 = vmatprep.subr.mxu0 0.0
    %2561 = vmatpush1.msra.mxu0 %v2528
    %2562 = vmatprep.subr.mxu0 0.0
    %2563 = vmatpush1.msra.mxu0 %v2527
    %2564 = vmatprep.subr.mxu0 0.0
    %2565 = vmatpush1.msra.mxu0 %v2526
    %2566 = vmatprep.subr.mxu0 0.0
    %2567 = vmatpush1.msra.mxu0 %v2525
    %2568 = vmatprep.subr.mxu0 0.0
    %2569 = vmatpush2.msra.mxu0 0.0
    %2570 = vmatprep.subr.mxu0 0.0
    %2571 = vmatpush2.msra.mxu0 0.0
    %2572 = vmatprep.subr.mxu0 0.0
    %2573 = vmatpush2.msra.mxu0 0.0
    %2574 = vmatprep.subr.mxu0 0.0
    %2575 = vmatpush2.msra.mxu0 0.0
    %2576 = vmatprep.subr.mxu0 0.0
    %2577 = vmatpush2.msra.mxu0 0.0
    %2578 = vmatprep.subr.mxu0 0.0
    %2579 = vmatpush2.msra.mxu0 0.0
    %2580 = vmatprep.subr.mxu0 0.0
    %2581 = vmatpush2.msra.mxu0 0.0
    %2582 = vmatprep.subr.mxu0 0.0
    %2583 = vmatpush2.msra.mxu0 0.0
    %2584 = vmatprep.subr.mxu0 0.0
    %2585 = vmatpush2.msra.mxu0 0.0
    %2586 = vmatprep.subr.mxu0 0.0
    %2587 = vmatpush2.msra.mxu0 0.0
    %2588 = vmatprep.subr.mxu0 0.0
    %2589 = vmatpush2.msra.mxu0 0.0
    %2590 = vmatprep.subr.mxu0 0.0
    %2591 = vmatpush2.msra.mxu0 0.0
    %2592 = vmatprep.subr.mxu0 0.0
    %2593 = vmatpush2.msra.mxu0 0.0
    %2594 = vmatprep.subr.mxu0 0.0
    %2595 = vmatpush2.msra.mxu0 0.0
    %2596 = vmatprep.subr.mxu0 0.0
    %2597 = vmatpush2.msra.mxu0 0.0
    %2598 = vmatprep.subr.mxu0 0.0
    %2599 = vmatpush2.msra.mxu0 0.0
    %2600 = vmatprep.mubr.f32.mxu0 0.0
    %2601 = vmatmul.mubr.f32.gmra.mxu0 %v2453
    %v2602 = vpop.f32.mrf.mxu0
    %v2603 = vadd.f32 %v2534, %v2602
    %v2604 = vpop.f32.mrf.mxu0
    %2605 = vdwg.mxu0
    %v2606 = vld [vmem:[%s552] sm:$0xff]
    %v2607 = vld [vmem:[%s552 + $0x8] sm:$0xff]
    %v2608 = vld [vmem:[%s552 + $0x10] sm:$0xff]
    %v2609 = vld [vmem:[%s552 + $0x18] sm:$0xff]
    %v2610 = vld [vmem:[%s557] sm:$0x1]
    %v2612 = vlaneseq
    %v2613 = vshrl.u32 %v2612, 7
    %v2614 = vsub.s32 0, %v2613
    %v2615 = vrot.slane %v2610, %v2614
    %2617 = vmatprep.subr.mxu0 0.0
    %2618 = vmatpush1.msra.mxu0 0.0
    %2619 = vmatprep.subr.mxu0 0.0
    %2620 = vmatpush1.msra.mxu0 0.0
    %2621 = vmatprep.subr.mxu0 0.0
    %2622 = vmatpush1.msra.mxu0 0.0
    %2623 = vmatprep.subr.mxu0 0.0
    %2624 = vmatpush1.msra.mxu0 0.0
    %2625 = vmatprep.subr.mxu0 0.0
    %2626 = vmatpush1.msra.mxu0 0.0
    %2627 = vmatprep.subr.mxu0 0.0
    %2628 = vmatpush1.msra.mxu0 0.0
    %2629 = vmatprep.subr.mxu0 0.0
    %2630 = vmatpush1.msra.mxu0 0.0
    %2631 = vmatprep.subr.mxu0 0.0
    %2632 = vmatpush1.msra.mxu0 0.0
    %2633 = vmatprep.subr.mxu0 0.0
    %2634 = vmatpush1.msra.mxu0 0.0
    %2635 = vmatprep.subr.mxu0 0.0
    %2636 = vmatpush1.msra.mxu0 0.0
    %2637 = vmatprep.subr.mxu0 0.0
    %2638 = vmatpush1.msra.mxu0 0.0
    %2639 = vmatprep.subr.mxu0 0.0
    %2640 = vmatpush1.msra.mxu0 0.0
    %2641 = vmatprep.subr.mxu0 0.0
    %2642 = vmatpush1.msra.mxu0 %v2609
    %2643 = vmatprep.subr.mxu0 0.0
    %2644 = vmatpush1.msra.mxu0 %v2608
    %2645 = vmatprep.subr.mxu0 0.0
    %2646 = vmatpush1.msra.mxu0 %v2607
    %2647 = vmatprep.subr.mxu0 0.0
    %2648 = vmatpush1.msra.mxu0 %v2606
    %2649 = vmatprep.subr.mxu0 0.0
    %2650 = vmatpush2.msra.mxu0 0.0
    %2651 = vmatprep.subr.mxu0 0.0
    %2652 = vmatpush2.msra.mxu0 0.0
    %2653 = vmatprep.subr.mxu0 0.0
    %2654 = vmatpush2.msra.mxu0 0.0
    %2655 = vmatprep.subr.mxu0 0.0
    %2656 = vmatpush2.msra.mxu0 0.0
    %2657 = vmatprep.subr.mxu0 0.0
    %2658 = vmatpush2.msra.mxu0 0.0
    %2659 = vmatprep.subr.mxu0 0.0
    %2660 = vmatpush2.msra.mxu0 0.0
    %2661 = vmatprep.subr.mxu0 0.0
    %2662 = vmatpush2.msra.mxu0 0.0
    %2663 = vmatprep.subr.mxu0 0.0
    %2664 = vmatpush2.msra.mxu0 0.0
    %2665 = vmatprep.subr.mxu0 0.0
    %2666 = vmatpush2.msra.mxu0 0.0
    %2667 = vmatprep.subr.mxu0 0.0
    %2668 = vmatpush2.msra.mxu0 0.0
    %2669 = vmatprep.subr.mxu0 0.0
    %2670 = vmatpush2.msra.mxu0 0.0
    %2671 = vmatprep.subr.mxu0 0.0
    %2672 = vmatpush2.msra.mxu0 0.0
    %2673 = vmatprep.subr.mxu0 0.0
    %2674 = vmatpush2.msra.mxu0 0.0
    %2675 = vmatprep.subr.mxu0 0.0
    %2676 = vmatpush2.msra.mxu0 0.0
    %2677 = vmatprep.subr.mxu0 0.0
    %2678 = vmatpush2.msra.mxu0 0.0
    %2679 = vmatprep.subr.mxu0 0.0
    %2680 = vmatpush2.msra.mxu0 0.0
    %2681 = vmatprep.mubr.f32.mxu0 0.0
    %2682 = vmatmul.mubr.f32.gmra.mxu0 %v2453
    %v2683 = vpop.f32.mrf.mxu0
    %v2684 = vadd.f32 %v2615, %v2683
    %v2685 = vpop.f32.mrf.mxu0
    %2686 = vdwg.mxu0
    %v2687 = vadd.f32 %v2280, %v2522
    %v2688 = vxor.u32 %v2687, 2147483648
    %v2689 = vmul.f32 %v2688, 1.442695
    %v2690 = vpow.pop %v2689
    %v2691 = vadd.f32 %v2690, 1.0
    %v2692 = vrcp.pop %v2691
    %v2693 = vmul.f32 1.0, %v2692
    %v2694 = vadd.f32 %v2359, %v2603
    %v2695 = vxor.u32 %v2694, 2147483648
    %v2696 = vmul.f32 %v2695, 1.442695
    %v2697 = vpow.pop %v2696
    %v2698 = vadd.f32 %v2697, 1.0
    %v2699 = vrcp.pop %v2698
    %v2700 = vmul.f32 1.0, %v2699
    %v2701 = vmul.f32 %v2693, %v2684
    %v2702 = vadd.f32 %v2438, %v2701
    %v2703 = vtanh.pop %v2702
    %v2704 = vsub.f32 1.0, %v2700
    %v2705 = vmul.f32 %v2704, %v2703
    %v2706 = vmul.f32 %v2700, %v1685
    %v2707 = vadd.f32 %v2705, %v2706
    %s2708 = scalar_lea.vmem [#allocation15], 4
    %2709 = vst.msk [vmem:[%s2708] sm:$0x3] %vm656, %v2707
    %s2710 = scalar_lea.vmem [#allocation7], 10
    %v2711 = vld [vmem:[%s2710] sm:$0x3]
    %v2712 = vld [vmem:[#allocation12] sm:$0xff]
    %v2713 = vld [vmem:[#allocation12 + $0x8] sm:$0xff]
    %v2714 = vld [vmem:[%s8] sm:$0x1]
    %v2716 = vlaneseq
    %v2717 = vshrl.u32 %v2716, 7
    %v2718 = vsub.s32 0, %v2717
    %v2719 = vrot.slane %v2714, %v2718
    %v2722 = vsel %vm148, %v2711, 0
    %2724 = vmatprep.subr.mxu0 0.0
    %2725 = vmatpush1.msra.mxu0 0.0
    %2726 = vmatprep.subr.mxu0 0.0
    %2727 = vmatpush1.msra.mxu0 0.0
    %2728 = vmatprep.subr.mxu0 0.0
    %2729 = vmatpush1.msra.mxu0 0.0
    %2730 = vmatprep.subr.mxu0 0.0
    %2731 = vmatpush1.msra.mxu0 0.0
    %2732 = vmatprep.subr.mxu0 0.0
    %2733 = vmatpush1.msra.mxu0 0.0
    %2734 = vmatprep.subr.mxu0 0.0
    %2735 = vmatpush1.msra.mxu0 0.0
    %2736 = vmatprep.subr.mxu0 0.0
    %2737 = vmatpush1.msra.mxu0 0.0
    %2738 = vmatprep.subr.mxu0 0.0
    %2739 = vmatpush1.msra.mxu0 0.0
    %2740 = vmatprep.subr.mxu0 0.0
    %2741 = vmatpush1.msra.mxu0 0.0
    %2742 = vmatprep.subr.mxu0 0.0
    %2743 = vmatpush1.msra.mxu0 0.0
    %2744 = vmatprep.subr.mxu0 0.0
    %2745 = vmatpush1.msra.mxu0 0.0
    %2746 = vmatprep.subr.mxu0 0.0
    %2747 = vmatpush1.msra.mxu0 0.0
    %2748 = vmatprep.subr.mxu0 0.0
    %2749 = vmatpush1.msra.mxu0 0.0
    %2750 = vmatprep.subr.mxu0 0.0
    %2751 = vmatpush1.msra.mxu0 0.0
    %2752 = vmatprep.subr.mxu0 0.0
    %2753 = vmatpush1.msra.mxu0 %v2713
    %2754 = vmatprep.subr.mxu0 0.0
    %2755 = vmatpush1.msra.mxu0 %v2712
    %2756 = vmatprep.subr.mxu0 0.0
    %2757 = vmatpush2.msra.mxu0 0.0
    %2758 = vmatprep.subr.mxu0 0.0
    %2759 = vmatpush2.msra.mxu0 0.0
    %2760 = vmatprep.subr.mxu0 0.0
    %2761 = vmatpush2.msra.mxu0 0.0
    %2762 = vmatprep.subr.mxu0 0.0
    %2763 = vmatpush2.msra.mxu0 0.0
    %2764 = vmatprep.subr.mxu0 0.0
    %2765 = vmatpush2.msra.mxu0 0.0
    %2766 = vmatprep.subr.mxu0 0.0
    %2767 = vmatpush2.msra.mxu0 0.0
    %2768 = vmatprep.subr.mxu0 0.0
    %2769 = vmatpush2.msra.mxu0 0.0
    %2770 = vmatprep.subr.mxu0 0.0
    %2771 = vmatpush2.msra.mxu0 0.0
    %2772 = vmatprep.subr.mxu0 0.0
    %2773 = vmatpush2.msra.mxu0 0.0
    %2774 = vmatprep.subr.mxu0 0.0
    %2775 = vmatpush2.msra.mxu0 0.0
    %2776 = vmatprep.subr.mxu0 0.0
    %2777 = vmatpush2.msra.mxu0 0.0
    %2778 = vmatprep.subr.mxu0 0.0
    %2779 = vmatpush2.msra.mxu0 0.0
    %2780 = vmatprep.subr.mxu0 0.0
    %2781 = vmatpush2.msra.mxu0 0.0
    %2782 = vmatprep.subr.mxu0 0.0
    %2783 = vmatpush2.msra.mxu0 0.0
    %2784 = vmatprep.subr.mxu0 0.0
    %2785 = vmatpush2.msra.mxu0 0.0
    %2786 = vmatprep.subr.mxu0 0.0
    %2787 = vmatpush2.msra.mxu0 0.0
    %2788 = vmatprep.mubr.f32.mxu0 0.0
    %2789 = vmatmul.mubr.f32.gmra.mxu0 %v2722
    %v2790 = vpop.f32.mrf.mxu0
    %v2791 = vadd.f32 %v2719, %v2790
    %v2792 = vpop.f32.mrf.mxu0
    %2793 = vdwg.mxu0
    %v2794 = vld [vmem:[%s742] sm:$0xff]
    %v2795 = vld [vmem:[%s742 + $0x8] sm:$0xff]
    %v2796 = vld [vmem:[%s745] sm:$0x1]
    %v2798 = vlaneseq
    %v2799 = vshrl.u32 %v2798, 7
    %v2800 = vsub.s32 0, %v2799
    %v2801 = vrot.slane %v2796, %v2800
    %2803 = vmatprep.subr.mxu0 0.0
    %2804 = vmatpush1.msra.mxu0 0.0
    %2805 = vmatprep.subr.mxu0 0.0
    %2806 = vmatpush1.msra.mxu0 0.0
    %2807 = vmatprep.subr.mxu0 0.0
    %2808 = vmatpush1.msra.mxu0 0.0
    %2809 = vmatprep.subr.mxu0 0.0
    %2810 = vmatpush1.msra.mxu0 0.0
    %2811 = vmatprep.subr.mxu0 0.0
    %2812 = vmatpush1.msra.mxu0 0.0
    %2813 = vmatprep.subr.mxu0 0.0
    %2814 = vmatpush1.msra.mxu0 0.0
    %2815 = vmatprep.subr.mxu0 0.0
    %2816 = vmatpush1.msra.mxu0 0.0
    %2817 = vmatprep.subr.mxu0 0.0
    %2818 = vmatpush1.msra.mxu0 0.0
    %2819 = vmatprep.subr.mxu0 0.0
    %2820 = vmatpush1.msra.mxu0 0.0
    %2821 = vmatprep.subr.mxu0 0.0
    %2822 = vmatpush1.msra.mxu0 0.0
    %2823 = vmatprep.subr.mxu0 0.0
    %2824 = vmatpush1.msra.mxu0 0.0
    %2825 = vmatprep.subr.mxu0 0.0
    %2826 = vmatpush1.msra.mxu0 0.0
    %2827 = vmatprep.subr.mxu0 0.0
    %2828 = vmatpush1.msra.mxu0 0.0
    %2829 = vmatprep.subr.mxu0 0.0
    %2830 = vmatpush1.msra.mxu0 0.0
    %2831 = vmatprep.subr.mxu0 0.0
    %2832 = vmatpush1.msra.mxu0 %v2795
    %2833 = vmatprep.subr.mxu0 0.0
    %2834 = vmatpush1.msra.mxu0 %v2794
    %2835 = vmatprep.subr.mxu0 0.0
    %2836 = vmatpush2.msra.mxu0 0.0
    %2837 = vmatprep.subr.mxu0 0.0
    %2838 = vmatpush2.msra.mxu0 0.0
    %2839 = vmatprep.subr.mxu0 0.0
    %2840 = vmatpush2.msra.mxu0 0.0
    %2841 = vmatprep.subr.mxu0 0.0
    %2842 = vmatpush2.msra.mxu0 0.0
    %2843 = vmatprep.subr.mxu0 0.0
    %2844 = vmatpush2.msra.mxu0 0.0
    %2845 = vmatprep.subr.mxu0 0.0
    %2846 = vmatpush2.msra.mxu0 0.0
    %2847 = vmatprep.subr.mxu0 0.0
    %2848 = vmatpush2.msra.mxu0 0.0
    %2849 = vmatprep.subr.mxu0 0.0
    %2850 = vmatpush2.msra.mxu0 0.0
    %2851 = vmatprep.subr.mxu0 0.0
    %2852 = vmatpush2.msra.mxu0 0.0
    %2853 = vmatprep.subr.mxu0 0.0
    %2854 = vmatpush2.msra.mxu0 0.0
    %2855 = vmatprep.subr.mxu0 0.0
    %2856 = vmatpush2.msra.mxu0 0.0
    %2857 = vmatprep.subr.mxu0 0.0
    %2858 = vmatpush2.msra.mxu0 0.0
    %2859 = vmatprep.subr.mxu0 0.0
    %2860 = vmatpush2.msra.mxu0 0.0
    %2861 = vmatprep.subr.mxu0 0.0
    %2862 = vmatpush2.msra.mxu0 0.0
    %2863 = vmatprep.subr.mxu0 0.0
    %2864 = vmatpush2.msra.mxu0 0.0
    %2865 = vmatprep.subr.mxu0 0.0
    %2866 = vmatpush2.msra.mxu0 0.0
    %2867 = vmatprep.mubr.f32.mxu0 0.0
    %2868 = vmatmul.mubr.f32.gmra.mxu0 %v2722
    %v2869 = vpop.f32.mrf.mxu0
    %v2870 = vadd.f32 %v2801, %v2869
    %v2871 = vpop.f32.mrf.mxu0
    %2872 = vdwg.mxu0
    %v2873 = vld [vmem:[%s823] sm:$0xff]
    %v2874 = vld [vmem:[%s823 + $0x8] sm:$0xff]
    %v2875 = vld [vmem:[%s826] sm:$0x1]
    %v2877 = vlaneseq
    %v2878 = vshrl.u32 %v2877, 7
    %v2879 = vsub.s32 0, %v2878
    %v2880 = vrot.slane %v2875, %v2879
    %2882 = vmatprep.subr.mxu0 0.0
    %2883 = vmatpush1.msra.mxu0 0.0
    %2884 = vmatprep.subr.mxu0 0.0
    %2885 = vmatpush1.msra.mxu0 0.0
    %2886 = vmatprep.subr.mxu0 0.0
    %2887 = vmatpush1.msra.mxu0 0.0
    %2888 = vmatprep.subr.mxu0 0.0
    %2889 = vmatpush1.msra.mxu0 0.0
    %2890 = vmatprep.subr.mxu0 0.0
    %2891 = vmatpush1.msra.mxu0 0.0
    %2892 = vmatprep.subr.mxu0 0.0
    %2893 = vmatpush1.msra.mxu0 0.0
    %2894 = vmatprep.subr.mxu0 0.0
    %2895 = vmatpush1.msra.mxu0 0.0
    %2896 = vmatprep.subr.mxu0 0.0
    %2897 = vmatpush1.msra.mxu0 0.0
    %2898 = vmatprep.subr.mxu0 0.0
    %2899 = vmatpush1.msra.mxu0 0.0
    %2900 = vmatprep.subr.mxu0 0.0
    %2901 = vmatpush1.msra.mxu0 0.0
    %2902 = vmatprep.subr.mxu0 0.0
    %2903 = vmatpush1.msra.mxu0 0.0
    %2904 = vmatprep.subr.mxu0 0.0
    %2905 = vmatpush1.msra.mxu0 0.0
    %2906 = vmatprep.subr.mxu0 0.0
    %2907 = vmatpush1.msra.mxu0 0.0
    %2908 = vmatprep.subr.mxu0 0.0
    %2909 = vmatpush1.msra.mxu0 0.0
    %2910 = vmatprep.subr.mxu0 0.0
    %2911 = vmatpush1.msra.mxu0 %v2874
    %2912 = vmatprep.subr.mxu0 0.0
    %2913 = vmatpush1.msra.mxu0 %v2873
    %2914 = vmatprep.subr.mxu0 0.0
    %2915 = vmatpush2.msra.mxu0 0.0
    %2916 = vmatprep.subr.mxu0 0.0
    %2917 = vmatpush2.msra.mxu0 0.0
    %2918 = vmatprep.subr.mxu0 0.0
    %2919 = vmatpush2.msra.mxu0 0.0
    %2920 = vmatprep.subr.mxu0 0.0
    %2921 = vmatpush2.msra.mxu0 0.0
    %2922 = vmatprep.subr.mxu0 0.0
    %2923 = vmatpush2.msra.mxu0 0.0
    %2924 = vmatprep.subr.mxu0 0.0
    %2925 = vmatpush2.msra.mxu0 0.0
    %2926 = vmatprep.subr.mxu0 0.0
    %2927 = vmatpush2.msra.mxu0 0.0
    %2928 = vmatprep.subr.mxu0 0.0
    %2929 = vmatpush2.msra.mxu0 0.0
    %2930 = vmatprep.subr.mxu0 0.0
    %2931 = vmatpush2.msra.mxu0 0.0
    %2932 = vmatprep.subr.mxu0 0.0
    %2933 = vmatpush2.msra.mxu0 0.0
    %2934 = vmatprep.subr.mxu0 0.0
    %2935 = vmatpush2.msra.mxu0 0.0
    %2936 = vmatprep.subr.mxu0 0.0
    %2937 = vmatpush2.msra.mxu0 0.0
    %2938 = vmatprep.subr.mxu0 0.0
    %2939 = vmatpush2.msra.mxu0 0.0
    %2940 = vmatprep.subr.mxu0 0.0
    %2941 = vmatpush2.msra.mxu0 0.0
    %2942 = vmatprep.subr.mxu0 0.0
    %2943 = vmatpush2.msra.mxu0 0.0
    %2944 = vmatprep.subr.mxu0 0.0
    %2945 = vmatpush2.msra.mxu0 0.0
    %2946 = vmatprep.mubr.f32.mxu0 0.0
    %2947 = vmatmul.mubr.f32.gmra.mxu0 %v2722
    %v2948 = vpop.f32.mrf.mxu0
    %v2949 = vadd.f32 %v2880, %v2948
    %v2950 = vpop.f32.mrf.mxu0
    %2951 = vdwg.mxu0
    %v2952 = vld [vmem:[#allocation13] sm:$0xff]
    %v2953 = vld [vmem:[#allocation13 + $0x8] sm:$0xff]
    %v2954 = vld [vmem:[#allocation13 + $0x10] sm:$0xff]
    %v2955 = vld [vmem:[#allocation13 + $0x18] sm:$0xff]
    %v2956 = vld [vmem:[%s9] sm:$0x1]
    %v2958 = vlaneseq
    %v2959 = vshrl.u32 %v2958, 7
    %v2960 = vsub.s32 0, %v2959
    %v2961 = vrot.slane %v2956, %v2960
    %v2964 = vsel %vm395, %v2196, 0
    %2966 = vmatprep.subr.mxu0 0.0
    %2967 = vmatpush1.msra.mxu0 0.0
    %2968 = vmatprep.subr.mxu0 0.0
    %2969 = vmatpush1.msra.mxu0 0.0
    %2970 = vmatprep.subr.mxu0 0.0
    %2971 = vmatpush1.msra.mxu0 0.0
    %2972 = vmatprep.subr.mxu0 0.0
    %2973 = vmatpush1.msra.mxu0 0.0
    %2974 = vmatprep.subr.mxu0 0.0
    %2975 = vmatpush1.msra.mxu0 0.0
    %2976 = vmatprep.subr.mxu0 0.0
    %2977 = vmatpush1.msra.mxu0 0.0
    %2978 = vmatprep.subr.mxu0 0.0
    %2979 = vmatpush1.msra.mxu0 0.0
    %2980 = vmatprep.subr.mxu0 0.0
    %2981 = vmatpush1.msra.mxu0 0.0
    %2982 = vmatprep.subr.mxu0 0.0
    %2983 = vmatpush1.msra.mxu0 0.0
    %2984 = vmatprep.subr.mxu0 0.0
    %2985 = vmatpush1.msra.mxu0 0.0
    %2986 = vmatprep.subr.mxu0 0.0
    %2987 = vmatpush1.msra.mxu0 0.0
    %2988 = vmatprep.subr.mxu0 0.0
    %2989 = vmatpush1.msra.mxu0 0.0
    %2990 = vmatprep.subr.mxu0 0.0
    %2991 = vmatpush1.msra.mxu0 %v2955
    %2992 = vmatprep.subr.mxu0 0.0
    %2993 = vmatpush1.msra.mxu0 %v2954
    %2994 = vmatprep.subr.mxu0 0.0
    %2995 = vmatpush1.msra.mxu0 %v2953
    %2996 = vmatprep.subr.mxu0 0.0
    %2997 = vmatpush1.msra.mxu0 %v2952
    %2998 = vmatprep.subr.mxu0 0.0
    %2999 = vmatpush2.msra.mxu0 0.0
    %3000 = vmatprep.subr.mxu0 0.0
    %3001 = vmatpush2.msra.mxu0 0.0
    %3002 = vmatprep.subr.mxu0 0.0
    %3003 = vmatpush2.msra.mxu0 0.0
    %3004 = vmatprep.subr.mxu0 0.0
    %3005 = vmatpush2.msra.mxu0 0.0
    %3006 = vmatprep.subr.mxu0 0.0
    %3007 = vmatpush2.msra.mxu0 0.0
    %3008 = vmatprep.subr.mxu0 0.0
    %3009 = vmatpush2.msra.mxu0 0.0
    %3010 = vmatprep.subr.mxu0 0.0
    %3011 = vmatpush2.msra.mxu0 0.0
    %3012 = vmatprep.subr.mxu0 0.0
    %3013 = vmatpush2.msra.mxu0 0.0
    %3014 = vmatprep.subr.mxu0 0.0
    %3015 = vmatpush2.msra.mxu0 0.0
    %3016 = vmatprep.subr.mxu0 0.0
    %3017 = vmatpush2.msra.mxu0 0.0
    %3018 = vmatprep.subr.mxu0 0.0
    %3019 = vmatpush2.msra.mxu0 0.0
    %3020 = vmatprep.subr.mxu0 0.0
    %3021 = vmatpush2.msra.mxu0 0.0
    %3022 = vmatprep.subr.mxu0 0.0
    %3023 = vmatpush2.msra.mxu0 0.0
    %3024 = vmatprep.subr.mxu0 0.0
    %3025 = vmatpush2.msra.mxu0 0.0
    %3026 = vmatprep.subr.mxu0 0.0
    %3027 = vmatpush2.msra.mxu0 0.0
    %3028 = vmatprep.subr.mxu0 0.0
    %3029 = vmatpush2.msra.mxu0 0.0
    %3030 = vmatprep.mubr.f32.mxu0 0.0
    %3031 = vmatmul.mubr.f32.gmra.mxu0 %v2964
    %v3032 = vpop.f32.mrf.mxu0
    %v3033 = vadd.f32 %v2961, %v3032
    %v3034 = vpop.f32.mrf.mxu0
    %3035 = vdwg.mxu0
    %v3036 = vld [vmem:[%s988] sm:$0xff]
    %v3037 = vld [vmem:[%s988 + $0x8] sm:$0xff]
    %v3038 = vld [vmem:[%s988 + $0x10] sm:$0xff]
    %v3039 = vld [vmem:[%s988 + $0x18] sm:$0xff]
    %v3040 = vld [vmem:[%s993] sm:$0x1]
    %v3042 = vlaneseq
    %v3043 = vshrl.u32 %v3042, 7
    %v3044 = vsub.s32 0, %v3043
    %v3045 = vrot.slane %v3040, %v3044
    %3047 = vmatprep.subr.mxu0 0.0
    %3048 = vmatpush1.msra.mxu0 0.0
    %3049 = vmatprep.subr.mxu0 0.0
    %3050 = vmatpush1.msra.mxu0 0.0
    %3051 = vmatprep.subr.mxu0 0.0
    %3052 = vmatpush1.msra.mxu0 0.0
    %3053 = vmatprep.subr.mxu0 0.0
    %3054 = vmatpush1.msra.mxu0 0.0
    %3055 = vmatprep.subr.mxu0 0.0
    %3056 = vmatpush1.msra.mxu0 0.0
    %3057 = vmatprep.subr.mxu0 0.0
    %3058 = vmatpush1.msra.mxu0 0.0
    %3059 = vmatprep.subr.mxu0 0.0
    %3060 = vmatpush1.msra.mxu0 0.0
    %3061 = vmatprep.subr.mxu0 0.0
    %3062 = vmatpush1.msra.mxu0 0.0
    %3063 = vmatprep.subr.mxu0 0.0
    %3064 = vmatpush1.msra.mxu0 0.0
    %3065 = vmatprep.subr.mxu0 0.0
    %3066 = vmatpush1.msra.mxu0 0.0
    %3067 = vmatprep.subr.mxu0 0.0
    %3068 = vmatpush1.msra.mxu0 0.0
    %3069 = vmatprep.subr.mxu0 0.0
    %3070 = vmatpush1.msra.mxu0 0.0
    %3071 = vmatprep.subr.mxu0 0.0
    %3072 = vmatpush1.msra.mxu0 %v3039
    %3073 = vmatprep.subr.mxu0 0.0
    %3074 = vmatpush1.msra.mxu0 %v3038
    %3075 = vmatprep.subr.mxu0 0.0
    %3076 = vmatpush1.msra.mxu0 %v3037
    %3077 = vmatprep.subr.mxu0 0.0
    %3078 = vmatpush1.msra.mxu0 %v3036
    %3079 = vmatprep.subr.mxu0 0.0
    %3080 = vmatpush2.msra.mxu0 0.0
    %3081 = vmatprep.subr.mxu0 0.0
    %3082 = vmatpush2.msra.mxu0 0.0
    %3083 = vmatprep.subr.mxu0 0.0
    %3084 = vmatpush2.msra.mxu0 0.0
    %3085 = vmatprep.subr.mxu0 0.0
    %3086 = vmatpush2.msra.mxu0 0.0
    %3087 = vmatprep.subr.mxu0 0.0
    %3088 = vmatpush2.msra.mxu0 0.0
    %3089 = vmatprep.subr.mxu0 0.0
    %3090 = vmatpush2.msra.mxu0 0.0
    %3091 = vmatprep.subr.mxu0 0.0
    %3092 = vmatpush2.msra.mxu0 0.0
    %3093 = vmatprep.subr.mxu0 0.0
    %3094 = vmatpush2.msra.mxu0 0.0
    %3095 = vmatprep.subr.mxu0 0.0
    %3096 = vmatpush2.msra.mxu0 0.0
    %3097 = vmatprep.subr.mxu0 0.0
    %3098 = vmatpush2.msra.mxu0 0.0
    %3099 = vmatprep.subr.mxu0 0.0
    %3100 = vmatpush2.msra.mxu0 0.0
    %3101 = vmatprep.subr.mxu0 0.0
    %3102 = vmatpush2.msra.mxu0 0.0
    %3103 = vmatprep.subr.mxu0 0.0
    %3104 = vmatpush2.msra.mxu0 0.0
    %3105 = vmatprep.subr.mxu0 0.0
    %3106 = vmatpush2.msra.mxu0 0.0
    %3107 = vmatprep.subr.mxu0 0.0
    %3108 = vmatpush2.msra.mxu0 0.0
    %3109 = vmatprep.subr.mxu0 0.0
    %3110 = vmatpush2.msra.mxu0 0.0
    %3111 = vmatprep.mubr.f32.mxu0 0.0
    %3112 = vmatmul.mubr.f32.gmra.mxu0 %v2964
    %v3113 = vpop.f32.mrf.mxu0
    %v3114 = vadd.f32 %v3045, %v3113
    %v3115 = vpop.f32.mrf.mxu0
    %3116 = vdwg.mxu0
    %v3117 = vld [vmem:[%s1071] sm:$0xff]
    %v3118 = vld [vmem:[%s1071 + $0x8] sm:$0xff]
    %v3119 = vld [vmem:[%s1071 + $0x10] sm:$0xff]
    %v3120 = vld [vmem:[%s1071 + $0x18] sm:$0xff]
    %v3121 = vld [vmem:[%s1076] sm:$0x1]
    %v3123 = vlaneseq
    %v3124 = vshrl.u32 %v3123, 7
    %v3125 = vsub.s32 0, %v3124
    %v3126 = vrot.slane %v3121, %v3125
    %3128 = vmatprep.subr.mxu0 0.0
    %3129 = vmatpush1.msra.mxu0 0.0
    %3130 = vmatprep.subr.mxu0 0.0
    %3131 = vmatpush1.msra.mxu0 0.0
    %3132 = vmatprep.subr.mxu0 0.0
    %3133 = vmatpush1.msra.mxu0 0.0
    %3134 = vmatprep.subr.mxu0 0.0
    %3135 = vmatpush1.msra.mxu0 0.0
    %3136 = vmatprep.subr.mxu0 0.0
    %3137 = vmatpush1.msra.mxu0 0.0
    %3138 = vmatprep.subr.mxu0 0.0
    %3139 = vmatpush1.msra.mxu0 0.0
    %3140 = vmatprep.subr.mxu0 0.0
    %3141 = vmatpush1.msra.mxu0 0.0
    %3142 = vmatprep.subr.mxu0 0.0
    %3143 = vmatpush1.msra.mxu0 0.0
    %3144 = vmatprep.subr.mxu0 0.0
    %3145 = vmatpush1.msra.mxu0 0.0
    %3146 = vmatprep.subr.mxu0 0.0
    %3147 = vmatpush1.msra.mxu0 0.0
    %3148 = vmatprep.subr.mxu0 0.0
    %3149 = vmatpush1.msra.mxu0 0.0
    %3150 = vmatprep.subr.mxu0 0.0
    %3151 = vmatpush1.msra.mxu0 0.0
    %3152 = vmatprep.subr.mxu0 0.0
    %3153 = vmatpush1.msra.mxu0 %v3120
    %3154 = vmatprep.subr.mxu0 0.0
    %3155 = vmatpush1.msra.mxu0 %v3119
    %3156 = vmatprep.subr.mxu0 0.0
    %3157 = vmatpush1.msra.mxu0 %v3118
    %3158 = vmatprep.subr.mxu0 0.0
    %3159 = vmatpush1.msra.mxu0 %v3117
    %3160 = vmatprep.subr.mxu0 0.0
    %3161 = vmatpush2.msra.mxu0 0.0
    %3162 = vmatprep.subr.mxu0 0.0
    %3163 = vmatpush2.msra.mxu0 0.0
    %3164 = vmatprep.subr.mxu0 0.0
    %3165 = vmatpush2.msra.mxu0 0.0
    %3166 = vmatprep.subr.mxu0 0.0
    %3167 = vmatpush2.msra.mxu0 0.0
    %3168 = vmatprep.subr.mxu0 0.0
    %3169 = vmatpush2.msra.mxu0 0.0
    %3170 = vmatprep.subr.mxu0 0.0
    %3171 = vmatpush2.msra.mxu0 0.0
    %3172 = vmatprep.subr.mxu0 0.0
    %3173 = vmatpush2.msra.mxu0 0.0
    %3174 = vmatprep.subr.mxu0 0.0
    %3175 = vmatpush2.msra.mxu0 0.0
    %3176 = vmatprep.subr.mxu0 0.0
    %3177 = vmatpush2.msra.mxu0 0.0
    %3178 = vmatprep.subr.mxu0 0.0
    %3179 = vmatpush2.msra.mxu0 0.0
    %3180 = vmatprep.subr.mxu0 0.0
    %3181 = vmatpush2.msra.mxu0 0.0
    %3182 = vmatprep.subr.mxu0 0.0
    %3183 = vmatpush2.msra.mxu0 0.0
    %3184 = vmatprep.subr.mxu0 0.0
    %3185 = vmatpush2.msra.mxu0 0.0
    %3186 = vmatprep.subr.mxu0 0.0
    %3187 = vmatpush2.msra.mxu0 0.0
    %3188 = vmatprep.subr.mxu0 0.0
    %3189 = vmatpush2.msra.mxu0 0.0
    %3190 = vmatprep.subr.mxu0 0.0
    %3191 = vmatpush2.msra.mxu0 0.0
    %3192 = vmatprep.mubr.f32.mxu0 0.0
    %3193 = vmatmul.mubr.f32.gmra.mxu0 %v2964
    %v3194 = vpop.f32.mrf.mxu0
    %v3195 = vadd.f32 %v3126, %v3194
    %v3196 = vpop.f32.mrf.mxu0
    %3197 = vdwg.mxu0
    %v3198 = vadd.f32 %v2791, %v3033
    %v3199 = vxor.u32 %v3198, 2147483648
    %v3200 = vmul.f32 %v3199, 1.442695
    %v3201 = vpow.pop %v3200
    %v3202 = vadd.f32 %v3201, 1.0
    %v3203 = vrcp.pop %v3202
    %v3204 = vmul.f32 1.0, %v3203
    %v3205 = vadd.f32 %v2870, %v3114
    %v3206 = vxor.u32 %v3205, 2147483648
    %v3207 = vmul.f32 %v3206, 1.442695
    %v3208 = vpow.pop %v3207
    %v3209 = vadd.f32 %v3208, 1.0
    %v3210 = vrcp.pop %v3209
    %v3211 = vmul.f32 1.0, %v3210
    %v3212 = vmul.f32 %v3204, %v3195
    %v3213 = vadd.f32 %v2949, %v3212
    %v3214 = vtanh.pop %v3213
    %v3215 = vsub.f32 1.0, %v3211
    %v3216 = vmul.f32 %v3215, %v3214
    %v3217 = vmul.f32 %v3211, %v2196
    %v3218 = vadd.f32 %v3216, %v3217
    %s3219 = scalar_lea.vmem [#allocation16], 10
    %3220 = vst.msk [vmem:[%s3219] sm:$0x3] %vm656, %v3218
    %s3221 = scalar_lea.vmem [#allocation4], 6
    %v3222 = vld [vmem:[%s3221] sm:$0x3]
    %v3223 = vld [vmem:[#allocation9] sm:$0xff]
    %v3224 = vld [vmem:[#allocation9 + $0x8] sm:$0xff]
    %v3225 = vld [vmem:[%s4] sm:$0x1]
    %v3227 = vlaneseq
    %v3228 = vshrl.u32 %v3227, 7
    %v3229 = vsub.s32 0, %v3228
    %v3230 = vrot.slane %v3225, %v3229
    %v3233 = vsel %vm148, %v3222, 0
    %3235 = vmatprep.subr.mxu0 0.0
    %3236 = vmatpush1.msra.mxu0 0.0
    %3237 = vmatprep.subr.mxu0 0.0
    %3238 = vmatpush1.msra.mxu0 0.0
    %3239 = vmatprep.subr.mxu0 0.0
    %3240 = vmatpush1.msra.mxu0 0.0
    %3241 = vmatprep.subr.mxu0 0.0
    %3242 = vmatpush1.msra.mxu0 0.0
    %3243 = vmatprep.subr.mxu0 0.0
    %3244 = vmatpush1.msra.mxu0 0.0
    %3245 = vmatprep.subr.mxu0 0.0
    %3246 = vmatpush1.msra.mxu0 0.0
    %3247 = vmatprep.subr.mxu0 0.0
    %3248 = vmatpush1.msra.mxu0 0.0
    %3249 = vmatprep.subr.mxu0 0.0
    %3250 = vmatpush1.msra.mxu0 0.0
    %3251 = vmatprep.subr.mxu0 0.0
    %3252 = vmatpush1.msra.mxu0 0.0
    %3253 = vmatprep.subr.mxu0 0.0
    %3254 = vmatpush1.msra.mxu0 0.0
    %3255 = vmatprep.subr.mxu0 0.0
    %3256 = vmatpush1.msra.mxu0 0.0
    %3257 = vmatprep.subr.mxu0 0.0
    %3258 = vmatpush1.msra.mxu0 0.0
    %3259 = vmatprep.subr.mxu0 0.0
    %3260 = vmatpush1.msra.mxu0 0.0
    %3261 = vmatprep.subr.mxu0 0.0
    %3262 = vmatpush1.msra.mxu0 0.0
    %3263 = vmatprep.subr.mxu0 0.0
    %3264 = vmatpush1.msra.mxu0 %v3224
    %3265 = vmatprep.subr.mxu0 0.0
    %3266 = vmatpush1.msra.mxu0 %v3223
    %3267 = vmatprep.subr.mxu0 0.0
    %3268 = vmatpush2.msra.mxu0 0.0
    %3269 = vmatprep.subr.mxu0 0.0
    %3270 = vmatpush2.msra.mxu0 0.0
    %3271 = vmatprep.subr.mxu0 0.0
    %3272 = vmatpush2.msra.mxu0 0.0
    %3273 = vmatprep.subr.mxu0 0.0
    %3274 = vmatpush2.msra.mxu0 0.0
    %3275 = vmatprep.subr.mxu0 0.0
    %3276 = vmatpush2.msra.mxu0 0.0
    %3277 = vmatprep.subr.mxu0 0.0
    %3278 = vmatpush2.msra.mxu0 0.0
    %3279 = vmatprep.subr.mxu0 0.0
    %3280 = vmatpush2.msra.mxu0 0.0
    %3281 = vmatprep.subr.mxu0 0.0
    %3282 = vmatpush2.msra.mxu0 0.0
    %3283 = vmatprep.subr.mxu0 0.0
    %3284 = vmatpush2.msra.mxu0 0.0
    %3285 = vmatprep.subr.mxu0 0.0
    %3286 = vmatpush2.msra.mxu0 0.0
    %3287 = vmatprep.subr.mxu0 0.0
    %3288 = vmatpush2.msra.mxu0 0.0
    %3289 = vmatprep.subr.mxu0 0.0
    %3290 = vmatpush2.msra.mxu0 0.0
    %3291 = vmatprep.subr.mxu0 0.0
    %3292 = vmatpush2.msra.mxu0 0.0
    %3293 = vmatprep.subr.mxu0 0.0
    %3294 = vmatpush2.msra.mxu0 0.0
    %3295 = vmatprep.subr.mxu0 0.0
    %3296 = vmatpush2.msra.mxu0 0.0
    %3297 = vmatprep.subr.mxu0 0.0
    %3298 = vmatpush2.msra.mxu0 0.0
    %3299 = vmatprep.mubr.f32.mxu0 0.0
    %3300 = vmatmul.mubr.f32.gmra.mxu0 %v3233
    %v3301 = vpop.f32.mrf.mxu0
    %v3302 = vadd.f32 %v3230, %v3301
    %v3303 = vpop.f32.mrf.mxu0
    %3304 = vdwg.mxu0
    %v3305 = vld [vmem:[%s222] sm:$0xff]
    %v3306 = vld [vmem:[%s222 + $0x8] sm:$0xff]
    %v3307 = vld [vmem:[%s225] sm:$0x1]
    %v3309 = vlaneseq
    %v3310 = vshrl.u32 %v3309, 7
    %v3311 = vsub.s32 0, %v3310
    %v3312 = vrot.slane %v3307, %v3311
    %3314 = vmatprep.subr.mxu0 0.0
    %3315 = vmatpush1.msra.mxu0 0.0
    %3316 = vmatprep.subr.mxu0 0.0
    %3317 = vmatpush1.msra.mxu0 0.0
    %3318 = vmatprep.subr.mxu0 0.0
    %3319 = vmatpush1.msra.mxu0 0.0
    %3320 = vmatprep.subr.mxu0 0.0
    %3321 = vmatpush1.msra.mxu0 0.0
    %3322 = vmatprep.subr.mxu0 0.0
    %3323 = vmatpush1.msra.mxu0 0.0
    %3324 = vmatprep.subr.mxu0 0.0
    %3325 = vmatpush1.msra.mxu0 0.0
    %3326 = vmatprep.subr.mxu0 0.0
    %3327 = vmatpush1.msra.mxu0 0.0
    %3328 = vmatprep.subr.mxu0 0.0
    %3329 = vmatpush1.msra.mxu0 0.0
    %3330 = vmatprep.subr.mxu0 0.0
    %3331 = vmatpush1.msra.mxu0 0.0
    %3332 = vmatprep.subr.mxu0 0.0
    %3333 = vmatpush1.msra.mxu0 0.0
    %3334 = vmatprep.subr.mxu0 0.0
    %3335 = vmatpush1.msra.mxu0 0.0
    %3336 = vmatprep.subr.mxu0 0.0
    %3337 = vmatpush1.msra.mxu0 0.0
    %3338 = vmatprep.subr.mxu0 0.0
    %3339 = vmatpush1.msra.mxu0 0.0
    %3340 = vmatprep.subr.mxu0 0.0
    %3341 = vmatpush1.msra.mxu0 0.0
    %3342 = vmatprep.subr.mxu0 0.0
    %3343 = vmatpush1.msra.mxu0 %v3306
    %3344 = vmatprep.subr.mxu0 0.0
    %3345 = vmatpush1.msra.mxu0 %v3305
    %3346 = vmatprep.subr.mxu0 0.0
    %3347 = vmatpush2.msra.mxu0 0.0
    %3348 = vmatprep.subr.mxu0 0.0
    %3349 = vmatpush2.msra.mxu0 0.0
    %3350 = vmatprep.subr.mxu0 0.0
    %3351 = vmatpush2.msra.mxu0 0.0
    %3352 = vmatprep.subr.mxu0 0.0
    %3353 = vmatpush2.msra.mxu0 0.0
    %3354 = vmatprep.subr.mxu0 0.0
    %3355 = vmatpush2.msra.mxu0 0.0
    %3356 = vmatprep.subr.mxu0 0.0
    %3357 = vmatpush2.msra.mxu0 0.0
    %3358 = vmatprep.subr.mxu0 0.0
    %3359 = vmatpush2.msra.mxu0 0.0
    %3360 = vmatprep.subr.mxu0 0.0
    %3361 = vmatpush2.msra.mxu0 0.0
    %3362 = vmatprep.subr.mxu0 0.0
    %3363 = vmatpush2.msra.mxu0 0.0
    %3364 = vmatprep.subr.mxu0 0.0
    %3365 = vmatpush2.msra.mxu0 0.0
    %3366 = vmatprep.subr.mxu0 0.0
    %3367 = vmatpush2.msra.mxu0 0.0
    %3368 = vmatprep.subr.mxu0 0.0
    %3369 = vmatpush2.msra.mxu0 0.0
    %3370 = vmatprep.subr.mxu0 0.0
    %3371 = vmatpush2.msra.mxu0 0.0
    %3372 = vmatprep.subr.mxu0 0.0
    %3373 = vmatpush2.msra.mxu0 0.0
    %3374 = vmatprep.subr.mxu0 0.0
    %3375 = vmatpush2.msra.mxu0 0.0
    %3376 = vmatprep.subr.mxu0 0.0
    %3377 = vmatpush2.msra.mxu0 0.0
    %3378 = vmatprep.mubr.f32.mxu0 0.0
    %3379 = vmatmul.mubr.f32.gmra.mxu0 %v3233
    %v3380 = vpop.f32.mrf.mxu0
    %v3381 = vadd.f32 %v3312, %v3380
    %v3382 = vpop.f32.mrf.mxu0
    %3383 = vdwg.mxu0
    %v3384 = vld [vmem:[%s303] sm:$0xff]
    %v3385 = vld [vmem:[%s303 + $0x8] sm:$0xff]
    %v3386 = vld [vmem:[%s306] sm:$0x1]
    %v3388 = vlaneseq
    %v3389 = vshrl.u32 %v3388, 7
    %v3390 = vsub.s32 0, %v3389
    %v3391 = vrot.slane %v3386, %v3390
    %3393 = vmatprep.subr.mxu0 0.0
    %3394 = vmatpush1.msra.mxu0 0.0
    %3395 = vmatprep.subr.mxu0 0.0
    %3396 = vmatpush1.msra.mxu0 0.0
    %3397 = vmatprep.subr.mxu0 0.0
    %3398 = vmatpush1.msra.mxu0 0.0
    %3399 = vmatprep.subr.mxu0 0.0
    %3400 = vmatpush1.msra.mxu0 0.0
    %3401 = vmatprep.subr.mxu0 0.0
    %3402 = vmatpush1.msra.mxu0 0.0
    %3403 = vmatprep.subr.mxu0 0.0
    %3404 = vmatpush1.msra.mxu0 0.0
    %3405 = vmatprep.subr.mxu0 0.0
    %3406 = vmatpush1.msra.mxu0 0.0
    %3407 = vmatprep.subr.mxu0 0.0
    %3408 = vmatpush1.msra.mxu0 0.0
    %3409 = vmatprep.subr.mxu0 0.0
    %3410 = vmatpush1.msra.mxu0 0.0
    %3411 = vmatprep.subr.mxu0 0.0
    %3412 = vmatpush1.msra.mxu0 0.0
    %3413 = vmatprep.subr.mxu0 0.0
    %3414 = vmatpush1.msra.mxu0 0.0
    %3415 = vmatprep.subr.mxu0 0.0
    %3416 = vmatpush1.msra.mxu0 0.0
    %3417 = vmatprep.subr.mxu0 0.0
    %3418 = vmatpush1.msra.mxu0 0.0
    %3419 = vmatprep.subr.mxu0 0.0
    %3420 = vmatpush1.msra.mxu0 0.0
    %3421 = vmatprep.subr.mxu0 0.0
    %3422 = vmatpush1.msra.mxu0 %v3385
    %3423 = vmatprep.subr.mxu0 0.0
    %3424 = vmatpush1.msra.mxu0 %v3384
    %3425 = vmatprep.subr.mxu0 0.0
    %3426 = vmatpush2.msra.mxu0 0.0
    %3427 = vmatprep.subr.mxu0 0.0
    %3428 = vmatpush2.msra.mxu0 0.0
    %3429 = vmatprep.subr.mxu0 0.0
    %3430 = vmatpush2.msra.mxu0 0.0
    %3431 = vmatprep.subr.mxu0 0.0
    %3432 = vmatpush2.msra.mxu0 0.0
    %3433 = vmatprep.subr.mxu0 0.0
    %3434 = vmatpush2.msra.mxu0 0.0
    %3435 = vmatprep.subr.mxu0 0.0
    %3436 = vmatpush2.msra.mxu0 0.0
    %3437 = vmatprep.subr.mxu0 0.0
    %3438 = vmatpush2.msra.mxu0 0.0
    %3439 = vmatprep.subr.mxu0 0.0
    %3440 = vmatpush2.msra.mxu0 0.0
    %3441 = vmatprep.subr.mxu0 0.0
    %3442 = vmatpush2.msra.mxu0 0.0
    %3443 = vmatprep.subr.mxu0 0.0
    %3444 = vmatpush2.msra.mxu0 0.0
    %3445 = vmatprep.subr.mxu0 0.0
    %3446 = vmatpush2.msra.mxu0 0.0
    %3447 = vmatprep.subr.mxu0 0.0
    %3448 = vmatpush2.msra.mxu0 0.0
    %3449 = vmatprep.subr.mxu0 0.0
    %3450 = vmatpush2.msra.mxu0 0.0
    %3451 = vmatprep.subr.mxu0 0.0
    %3452 = vmatpush2.msra.mxu0 0.0
    %3453 = vmatprep.subr.mxu0 0.0
    %3454 = vmatpush2.msra.mxu0 0.0
    %3455 = vmatprep.subr.mxu0 0.0
    %3456 = vmatpush2.msra.mxu0 0.0
    %3457 = vmatprep.mubr.f32.mxu0 0.0
    %3458 = vmatmul.mubr.f32.gmra.mxu0 %v3233
    %v3459 = vpop.f32.mrf.mxu0
    %v3460 = vadd.f32 %v3391, %v3459
    %v3461 = vpop.f32.mrf.mxu0
    %3462 = vdwg.mxu0
    %v3463 = vld [vmem:[#allocation10] sm:$0xff]
    %v3464 = vld [vmem:[#allocation10 + $0x8] sm:$0xff]
    %v3465 = vld [vmem:[#allocation10 + $0x10] sm:$0xff]
    %v3466 = vld [vmem:[#allocation10 + $0x18] sm:$0xff]
    %v3467 = vld [vmem:[%s5] sm:$0x1]
    %v3469 = vlaneseq
    %v3470 = vshrl.u32 %v3469, 7
    %v3471 = vsub.s32 0, %v3470
    %v3472 = vrot.slane %v3467, %v3471
    %v3475 = vsel %vm395, %v2707, 0
    %3477 = vmatprep.subr.mxu0 0.0
    %3478 = vmatpush1.msra.mxu0 0.0
    %3479 = vmatprep.subr.mxu0 0.0
    %3480 = vmatpush1.msra.mxu0 0.0
    %3481 = vmatprep.subr.mxu0 0.0
    %3482 = vmatpush1.msra.mxu0 0.0
    %3483 = vmatprep.subr.mxu0 0.0
    %3484 = vmatpush1.msra.mxu0 0.0
    %3485 = vmatprep.subr.mxu0 0.0
    %3486 = vmatpush1.msra.mxu0 0.0
    %3487 = vmatprep.subr.mxu0 0.0
    %3488 = vmatpush1.msra.mxu0 0.0
    %3489 = vmatprep.subr.mxu0 0.0
    %3490 = vmatpush1.msra.mxu0 0.0
    %3491 = vmatprep.subr.mxu0 0.0
    %3492 = vmatpush1.msra.mxu0 0.0
    %3493 = vmatprep.subr.mxu0 0.0
    %3494 = vmatpush1.msra.mxu0 0.0
    %3495 = vmatprep.subr.mxu0 0.0
    %3496 = vmatpush1.msra.mxu0 0.0
    %3497 = vmatprep.subr.mxu0 0.0
    %3498 = vmatpush1.msra.mxu0 0.0
    %3499 = vmatprep.subr.mxu0 0.0
    %3500 = vmatpush1.msra.mxu0 0.0
    %3501 = vmatprep.subr.mxu0 0.0
    %3502 = vmatpush1.msra.mxu0 %v3466
    %3503 = vmatprep.subr.mxu0 0.0
    %3504 = vmatpush1.msra.mxu0 %v3465
    %3505 = vmatprep.subr.mxu0 0.0
    %3506 = vmatpush1.msra.mxu0 %v3464
    %3507 = vmatprep.subr.mxu0 0.0
    %3508 = vmatpush1.msra.mxu0 %v3463
    %3509 = vmatprep.subr.mxu0 0.0
    %3510 = vmatpush2.msra.mxu0 0.0
    %3511 = vmatprep.subr.mxu0 0.0
    %3512 = vmatpush2.msra.mxu0 0.0
    %3513 = vmatprep.subr.mxu0 0.0
    %3514 = vmatpush2.msra.mxu0 0.0
    %3515 = vmatprep.subr.mxu0 0.0
    %3516 = vmatpush2.msra.mxu0 0.0
    %3517 = vmatprep.subr.mxu0 0.0
    %3518 = vmatpush2.msra.mxu0 0.0
    %3519 = vmatprep.subr.mxu0 0.0
    %3520 = vmatpush2.msra.mxu0 0.0
    %3521 = vmatprep.subr.mxu0 0.0
    %3522 = vmatpush2.msra.mxu0 0.0
    %3523 = vmatprep.subr.mxu0 0.0
    %3524 = vmatpush2.msra.mxu0 0.0
    %3525 = vmatprep.subr.mxu0 0.0
    %3526 = vmatpush2.msra.mxu0 0.0
    %3527 = vmatprep.subr.mxu0 0.0
    %3528 = vmatpush2.msra.mxu0 0.0
    %3529 = vmatprep.subr.mxu0 0.0
    %3530 = vmatpush2.msra.mxu0 0.0
    %3531 = vmatprep.subr.mxu0 0.0
    %3532 = vmatpush2.msra.mxu0 0.0
    %3533 = vmatprep.subr.mxu0 0.0
    %3534 = vmatpush2.msra.mxu0 0.0
    %3535 = vmatprep.subr.mxu0 0.0
    %3536 = vmatpush2.msra.mxu0 0.0
    %3537 = vmatprep.subr.mxu0 0.0
    %3538 = vmatpush2.msra.mxu0 0.0
    %3539 = vmatprep.subr.mxu0 0.0
    %3540 = vmatpush2.msra.mxu0 0.0
    %3541 = vmatprep.mubr.f32.mxu0 0.0
    %3542 = vmatmul.mubr.f32.gmra.mxu0 %v3475
    %v3543 = vpop.f32.mrf.mxu0
    %v3544 = vadd.f32 %v3472, %v3543
    %v3545 = vpop.f32.mrf.mxu0
    %3546 = vdwg.mxu0
    %v3547 = vld [vmem:[%s469] sm:$0xff]
    %v3548 = vld [vmem:[%s469 + $0x8] sm:$0xff]
    %v3549 = vld [vmem:[%s469 + $0x10] sm:$0xff]
    %v3550 = vld [vmem:[%s469 + $0x18] sm:$0xff]
    %v3551 = vld [vmem:[%s474] sm:$0x1]
    %v3553 = vlaneseq
    %v3554 = vshrl.u32 %v3553, 7
    %v3555 = vsub.s32 0, %v3554
    %v3556 = vrot.slane %v3551, %v3555
    %3558 = vmatprep.subr.mxu0 0.0
    %3559 = vmatpush1.msra.mxu0 0.0
    %3560 = vmatprep.subr.mxu0 0.0
    %3561 = vmatpush1.msra.mxu0 0.0
    %3562 = vmatprep.subr.mxu0 0.0
    %3563 = vmatpush1.msra.mxu0 0.0
    %3564 = vmatprep.subr.mxu0 0.0
    %3565 = vmatpush1.msra.mxu0 0.0
    %3566 = vmatprep.subr.mxu0 0.0
    %3567 = vmatpush1.msra.mxu0 0.0
    %3568 = vmatprep.subr.mxu0 0.0
    %3569 = vmatpush1.msra.mxu0 0.0
    %3570 = vmatprep.subr.mxu0 0.0
    %3571 = vmatpush1.msra.mxu0 0.0
    %3572 = vmatprep.subr.mxu0 0.0
    %3573 = vmatpush1.msra.mxu0 0.0
    %3574 = vmatprep.subr.mxu0 0.0
    %3575 = vmatpush1.msra.mxu0 0.0
    %3576 = vmatprep.subr.mxu0 0.0
    %3577 = vmatpush1.msra.mxu0 0.0
    %3578 = vmatprep.subr.mxu0 0.0
    %3579 = vmatpush1.msra.mxu0 0.0
    %3580 = vmatprep.subr.mxu0 0.0
    %3581 = vmatpush1.msra.mxu0 0.0
    %3582 = vmatprep.subr.mxu0 0.0
    %3583 = vmatpush1.msra.mxu0 %v3550
    %3584 = vmatprep.subr.mxu0 0.0
    %3585 = vmatpush1.msra.mxu0 %v3549
    %3586 = vmatprep.subr.mxu0 0.0
    %3587 = vmatpush1.msra.mxu0 %v3548
    %3588 = vmatprep.subr.mxu0 0.0
    %3589 = vmatpush1.msra.mxu0 %v3547
    %3590 = vmatprep.subr.mxu0 0.0
    %3591 = vmatpush2.msra.mxu0 0.0
    %3592 = vmatprep.subr.mxu0 0.0
    %3593 = vmatpush2.msra.mxu0 0.0
    %3594 = vmatprep.subr.mxu0 0.0
    %3595 = vmatpush2.msra.mxu0 0.0
    %3596 = vmatprep.subr.mxu0 0.0
    %3597 = vmatpush2.msra.mxu0 0.0
    %3598 = vmatprep.subr.mxu0 0.0
    %3599 = vmatpush2.msra.mxu0 0.0
    %3600 = vmatprep.subr.mxu0 0.0
    %3601 = vmatpush2.msra.mxu0 0.0
    %3602 = vmatprep.subr.mxu0 0.0
    %3603 = vmatpush2.msra.mxu0 0.0
    %3604 = vmatprep.subr.mxu0 0.0
    %3605 = vmatpush2.msra.mxu0 0.0
    %3606 = vmatprep.subr.mxu0 0.0
    %3607 = vmatpush2.msra.mxu0 0.0
    %3608 = vmatprep.subr.mxu0 0.0
    %3609 = vmatpush2.msra.mxu0 0.0
    %3610 = vmatprep.subr.mxu0 0.0
    %3611 = vmatpush2.msra.mxu0 0.0
    %3612 = vmatprep.subr.mxu0 0.0
    %3613 = vmatpush2.msra.mxu0 0.0
    %3614 = vmatprep.subr.mxu0 0.0
    %3615 = vmatpush2.msra.mxu0 0.0
    %3616 = vmatprep.subr.mxu0 0.0
    %3617 = vmatpush2.msra.mxu0 0.0
    %3618 = vmatprep.subr.mxu0 0.0
    %3619 = vmatpush2.msra.mxu0 0.0
    %3620 = vmatprep.subr.mxu0 0.0
    %3621 = vmatpush2.msra.mxu0 0.0
    %3622 = vmatprep.mubr.f32.mxu0 0.0
    %3623 = vmatmul.mubr.f32.gmra.mxu0 %v3475
    %v3624 = vpop.f32.mrf.mxu0
    %v3625 = vadd.f32 %v3556, %v3624
    %v3626 = vpop.f32.mrf.mxu0
    %3627 = vdwg.mxu0
    %v3628 = vld [vmem:[%s552] sm:$0xff]
    %v3629 = vld [vmem:[%s552 + $0x8] sm:$0xff]
    %v3630 = vld [vmem:[%s552 + $0x10] sm:$0xff]
    %v3631 = vld [vmem:[%s552 + $0x18] sm:$0xff]
    %v3632 = vld [vmem:[%s557] sm:$0x1]
    %v3634 = vlaneseq
    %v3635 = vshrl.u32 %v3634, 7
    %v3636 = vsub.s32 0, %v3635
    %v3637 = vrot.slane %v3632, %v3636
    %3639 = vmatprep.subr.mxu0 0.0
    %3640 = vmatpush1.msra.mxu0 0.0
    %3641 = vmatprep.subr.mxu0 0.0
    %3642 = vmatpush1.msra.mxu0 0.0
    %3643 = vmatprep.subr.mxu0 0.0
    %3644 = vmatpush1.msra.mxu0 0.0
    %3645 = vmatprep.subr.mxu0 0.0
    %3646 = vmatpush1.msra.mxu0 0.0
    %3647 = vmatprep.subr.mxu0 0.0
    %3648 = vmatpush1.msra.mxu0 0.0
    %3649 = vmatprep.subr.mxu0 0.0
    %3650 = vmatpush1.msra.mxu0 0.0
    %3651 = vmatprep.subr.mxu0 0.0
    %3652 = vmatpush1.msra.mxu0 0.0
    %3653 = vmatprep.subr.mxu0 0.0
    %3654 = vmatpush1.msra.mxu0 0.0
    %3655 = vmatprep.subr.mxu0 0.0
    %3656 = vmatpush1.msra.mxu0 0.0
    %3657 = vmatprep.subr.mxu0 0.0
    %3658 = vmatpush1.msra.mxu0 0.0
    %3659 = vmatprep.subr.mxu0 0.0
    %3660 = vmatpush1.msra.mxu0 0.0
    %3661 = vmatprep.subr.mxu0 0.0
    %3662 = vmatpush1.msra.mxu0 0.0
    %3663 = vmatprep.subr.mxu0 0.0
    %3664 = vmatpush1.msra.mxu0 %v3631
    %3665 = vmatprep.subr.mxu0 0.0
    %3666 = vmatpush1.msra.mxu0 %v3630
    %3667 = vmatprep.subr.mxu0 0.0
    %3668 = vmatpush1.msra.mxu0 %v3629
    %3669 = vmatprep.subr.mxu0 0.0
    %3670 = vmatpush1.msra.mxu0 %v3628
    %3671 = vmatprep.subr.mxu0 0.0
    %3672 = vmatpush2.msra.mxu0 0.0
    %3673 = vmatprep.subr.mxu0 0.0
    %3674 = vmatpush2.msra.mxu0 0.0
    %3675 = vmatprep.subr.mxu0 0.0
    %3676 = vmatpush2.msra.mxu0 0.0
    %3677 = vmatprep.subr.mxu0 0.0
    %3678 = vmatpush2.msra.mxu0 0.0
    %3679 = vmatprep.subr.mxu0 0.0
    %3680 = vmatpush2.msra.mxu0 0.0
    %3681 = vmatprep.subr.mxu0 0.0
    %3682 = vmatpush2.msra.mxu0 0.0
    %3683 = vmatprep.subr.mxu0 0.0
    %3684 = vmatpush2.msra.mxu0 0.0
    %3685 = vmatprep.subr.mxu0 0.0
    %3686 = vmatpush2.msra.mxu0 0.0
    %3687 = vmatprep.subr.mxu0 0.0
    %3688 = vmatpush2.msra.mxu0 0.0
    %3689 = vmatprep.subr.mxu0 0.0
    %3690 = vmatpush2.msra.mxu0 0.0
    %3691 = vmatprep.subr.mxu0 0.0
    %3692 = vmatpush2.msra.mxu0 0.0
    %3693 = vmatprep.subr.mxu0 0.0
    %3694 = vmatpush2.msra.mxu0 0.0
    %3695 = vmatprep.subr.mxu0 0.0
    %3696 = vmatpush2.msra.mxu0 0.0
    %3697 = vmatprep.subr.mxu0 0.0
    %3698 = vmatpush2.msra.mxu0 0.0
    %3699 = vmatprep.subr.mxu0 0.0
    %3700 = vmatpush2.msra.mxu0 0.0
    %3701 = vmatprep.subr.mxu0 0.0
    %3702 = vmatpush2.msra.mxu0 0.0
    %3703 = vmatprep.mubr.f32.mxu0 0.0
    %3704 = vmatmul.mubr.f32.gmra.mxu0 %v3475
    %v3705 = vpop.f32.mrf.mxu0
    %v3706 = vadd.f32 %v3637, %v3705
    %v3707 = vpop.f32.mrf.mxu0
    %3708 = vdwg.mxu0
    %v3709 = vadd.f32 %v3302, %v3544
    %v3710 = vxor.u32 %v3709, 2147483648
    %v3711 = vmul.f32 %v3710, 1.442695
    %v3712 = vpow.pop %v3711
    %v3713 = vadd.f32 %v3712, 1.0
    %v3714 = vrcp.pop %v3713
    %v3715 = vmul.f32 1.0, %v3714
    %v3716 = vadd.f32 %v3381, %v3625
    %v3717 = vxor.u32 %v3716, 2147483648
    %v3718 = vmul.f32 %v3717, 1.442695
    %v3719 = vpow.pop %v3718
    %v3720 = vadd.f32 %v3719, 1.0
    %v3721 = vrcp.pop %v3720
    %v3722 = vmul.f32 1.0, %v3721
    %v3723 = vmul.f32 %v3715, %v3706
    %v3724 = vadd.f32 %v3460, %v3723
    %v3725 = vtanh.pop %v3724
    %v3726 = vsub.f32 1.0, %v3722
    %v3727 = vmul.f32 %v3726, %v3725
    %v3728 = vmul.f32 %v3722, %v2707
    %v3729 = vadd.f32 %v3727, %v3728
    %s3730 = scalar_lea.vmem [#allocation15], 6
    %3731 = vst.msk [vmem:[%s3730] sm:$0x3] %vm656, %v3729
    %s3732 = scalar_lea.vmem [#allocation7], 8
    %v3733 = vld [vmem:[%s3732] sm:$0x3]
    %v3734 = vld [vmem:[#allocation12] sm:$0xff]
    %v3735 = vld [vmem:[#allocation12 + $0x8] sm:$0xff]
    %v3736 = vld [vmem:[%s8] sm:$0x1]
    %v3738 = vlaneseq
    %v3739 = vshrl.u32 %v3738, 7
    %v3740 = vsub.s32 0, %v3739
    %v3741 = vrot.slane %v3736, %v3740
    %v3744 = vsel %vm148, %v3733, 0
    %3746 = vmatprep.subr.mxu0 0.0
    %3747 = vmatpush1.msra.mxu0 0.0
    %3748 = vmatprep.subr.mxu0 0.0
    %3749 = vmatpush1.msra.mxu0 0.0
    %3750 = vmatprep.subr.mxu0 0.0
    %3751 = vmatpush1.msra.mxu0 0.0
    %3752 = vmatprep.subr.mxu0 0.0
    %3753 = vmatpush1.msra.mxu0 0.0
    %3754 = vmatprep.subr.mxu0 0.0
    %3755 = vmatpush1.msra.mxu0 0.0
    %3756 = vmatprep.subr.mxu0 0.0
    %3757 = vmatpush1.msra.mxu0 0.0
    %3758 = vmatprep.subr.mxu0 0.0
    %3759 = vmatpush1.msra.mxu0 0.0
    %3760 = vmatprep.subr.mxu0 0.0
    %3761 = vmatpush1.msra.mxu0 0.0
    %3762 = vmatprep.subr.mxu0 0.0
    %3763 = vmatpush1.msra.mxu0 0.0
    %3764 = vmatprep.subr.mxu0 0.0
    %3765 = vmatpush1.msra.mxu0 0.0
    %3766 = vmatprep.subr.mxu0 0.0
    %3767 = vmatpush1.msra.mxu0 0.0
    %3768 = vmatprep.subr.mxu0 0.0
    %3769 = vmatpush1.msra.mxu0 0.0
    %3770 = vmatprep.subr.mxu0 0.0
    %3771 = vmatpush1.msra.mxu0 0.0
    %3772 = vmatprep.subr.mxu0 0.0
    %3773 = vmatpush1.msra.mxu0 0.0
    %3774 = vmatprep.subr.mxu0 0.0
    %3775 = vmatpush1.msra.mxu0 %v3735
    %3776 = vmatprep.subr.mxu0 0.0
    %3777 = vmatpush1.msra.mxu0 %v3734
    %3778 = vmatprep.subr.mxu0 0.0
    %3779 = vmatpush2.msra.mxu0 0.0
    %3780 = vmatprep.subr.mxu0 0.0
    %3781 = vmatpush2.msra.mxu0 0.0
    %3782 = vmatprep.subr.mxu0 0.0
    %3783 = vmatpush2.msra.mxu0 0.0
    %3784 = vmatprep.subr.mxu0 0.0
    %3785 = vmatpush2.msra.mxu0 0.0
    %3786 = vmatprep.subr.mxu0 0.0
    %3787 = vmatpush2.msra.mxu0 0.0
    %3788 = vmatprep.subr.mxu0 0.0
    %3789 = vmatpush2.msra.mxu0 0.0
    %3790 = vmatprep.subr.mxu0 0.0
    %3791 = vmatpush2.msra.mxu0 0.0
    %3792 = vmatprep.subr.mxu0 0.0
    %3793 = vmatpush2.msra.mxu0 0.0
    %3794 = vmatprep.subr.mxu0 0.0
    %3795 = vmatpush2.msra.mxu0 0.0
    %3796 = vmatprep.subr.mxu0 0.0
    %3797 = vmatpush2.msra.mxu0 0.0
    %3798 = vmatprep.subr.mxu0 0.0
    %3799 = vmatpush2.msra.mxu0 0.0
    %3800 = vmatprep.subr.mxu0 0.0
    %3801 = vmatpush2.msra.mxu0 0.0
    %3802 = vmatprep.subr.mxu0 0.0
    %3803 = vmatpush2.msra.mxu0 0.0
    %3804 = vmatprep.subr.mxu0 0.0
    %3805 = vmatpush2.msra.mxu0 0.0
    %3806 = vmatprep.subr.mxu0 0.0
    %3807 = vmatpush2.msra.mxu0 0.0
    %3808 = vmatprep.subr.mxu0 0.0
    %3809 = vmatpush2.msra.mxu0 0.0
    %3810 = vmatprep.mubr.f32.mxu0 0.0
    %3811 = vmatmul.mubr.f32.gmra.mxu0 %v3744
    %v3812 = vpop.f32.mrf.mxu0
    %v3813 = vadd.f32 %v3741, %v3812
    %v3814 = vpop.f32.mrf.mxu0
    %3815 = vdwg.mxu0
    %v3816 = vld [vmem:[%s742] sm:$0xff]
    %v3817 = vld [vmem:[%s742 + $0x8] sm:$0xff]
    %v3818 = vld [vmem:[%s745] sm:$0x1]
    %v3820 = vlaneseq
    %v3821 = vshrl.u32 %v3820, 7
    %v3822 = vsub.s32 0, %v3821
    %v3823 = vrot.slane %v3818, %v3822
    %3825 = vmatprep.subr.mxu0 0.0
    %3826 = vmatpush1.msra.mxu0 0.0
    %3827 = vmatprep.subr.mxu0 0.0
    %3828 = vmatpush1.msra.mxu0 0.0
    %3829 = vmatprep.subr.mxu0 0.0
    %3830 = vmatpush1.msra.mxu0 0.0
    %3831 = vmatprep.subr.mxu0 0.0
    %3832 = vmatpush1.msra.mxu0 0.0
    %3833 = vmatprep.subr.mxu0 0.0
    %3834 = vmatpush1.msra.mxu0 0.0
    %3835 = vmatprep.subr.mxu0 0.0
    %3836 = vmatpush1.msra.mxu0 0.0
    %3837 = vmatprep.subr.mxu0 0.0
    %3838 = vmatpush1.msra.mxu0 0.0
    %3839 = vmatprep.subr.mxu0 0.0
    %3840 = vmatpush1.msra.mxu0 0.0
    %3841 = vmatprep.subr.mxu0 0.0
    %3842 = vmatpush1.msra.mxu0 0.0
    %3843 = vmatprep.subr.mxu0 0.0
    %3844 = vmatpush1.msra.mxu0 0.0
    %3845 = vmatprep.subr.mxu0 0.0
    %3846 = vmatpush1.msra.mxu0 0.0
    %3847 = vmatprep.subr.mxu0 0.0
    %3848 = vmatpush1.msra.mxu0 0.0
    %3849 = vmatprep.subr.mxu0 0.0
    %3850 = vmatpush1.msra.mxu0 0.0
    %3851 = vmatprep.subr.mxu0 0.0
    %3852 = vmatpush1.msra.mxu0 0.0
    %3853 = vmatprep.subr.mxu0 0.0
    %3854 = vmatpush1.msra.mxu0 %v3817
    %3855 = vmatprep.subr.mxu0 0.0
    %3856 = vmatpush1.msra.mxu0 %v3816
    %3857 = vmatprep.subr.mxu0 0.0
    %3858 = vmatpush2.msra.mxu0 0.0
    %3859 = vmatprep.subr.mxu0 0.0
    %3860 = vmatpush2.msra.mxu0 0.0
    %3861 = vmatprep.subr.mxu0 0.0
    %3862 = vmatpush2.msra.mxu0 0.0
    %3863 = vmatprep.subr.mxu0 0.0
    %3864 = vmatpush2.msra.mxu0 0.0
    %3865 = vmatprep.subr.mxu0 0.0
    %3866 = vmatpush2.msra.mxu0 0.0
    %3867 = vmatprep.subr.mxu0 0.0
    %3868 = vmatpush2.msra.mxu0 0.0
    %3869 = vmatprep.subr.mxu0 0.0
    %3870 = vmatpush2.msra.mxu0 0.0
    %3871 = vmatprep.subr.mxu0 0.0
    %3872 = vmatpush2.msra.mxu0 0.0
    %3873 = vmatprep.subr.mxu0 0.0
    %3874 = vmatpush2.msra.mxu0 0.0
    %3875 = vmatprep.subr.mxu0 0.0
    %3876 = vmatpush2.msra.mxu0 0.0
    %3877 = vmatprep.subr.mxu0 0.0
    %3878 = vmatpush2.msra.mxu0 0.0
    %3879 = vmatprep.subr.mxu0 0.0
    %3880 = vmatpush2.msra.mxu0 0.0
    %3881 = vmatprep.subr.mxu0 0.0
    %3882 = vmatpush2.msra.mxu0 0.0
    %3883 = vmatprep.subr.mxu0 0.0
    %3884 = vmatpush2.msra.mxu0 0.0
    %3885 = vmatprep.subr.mxu0 0.0
    %3886 = vmatpush2.msra.mxu0 0.0
    %3887 = vmatprep.subr.mxu0 0.0
    %3888 = vmatpush2.msra.mxu0 0.0
    %3889 = vmatprep.mubr.f32.mxu0 0.0
    %3890 = vmatmul.mubr.f32.gmra.mxu0 %v3744
    %v3891 = vpop.f32.mrf.mxu0
    %v3892 = vadd.f32 %v3823, %v3891
    %v3893 = vpop.f32.mrf.mxu0
    %3894 = vdwg.mxu0
    %v3895 = vld [vmem:[%s823] sm:$0xff]
    %v3896 = vld [vmem:[%s823 + $0x8] sm:$0xff]
    %v3897 = vld [vmem:[%s826] sm:$0x1]
    %v3899 = vlaneseq
    %v3900 = vshrl.u32 %v3899, 7
    %v3901 = vsub.s32 0, %v3900
    %v3902 = vrot.slane %v3897, %v3901
    %3904 = vmatprep.subr.mxu0 0.0
    %3905 = vmatpush1.msra.mxu0 0.0
    %3906 = vmatprep.subr.mxu0 0.0
    %3907 = vmatpush1.msra.mxu0 0.0
    %3908 = vmatprep.subr.mxu0 0.0
    %3909 = vmatpush1.msra.mxu0 0.0
    %3910 = vmatprep.subr.mxu0 0.0
    %3911 = vmatpush1.msra.mxu0 0.0
    %3912 = vmatprep.subr.mxu0 0.0
    %3913 = vmatpush1.msra.mxu0 0.0
    %3914 = vmatprep.subr.mxu0 0.0
    %3915 = vmatpush1.msra.mxu0 0.0
    %3916 = vmatprep.subr.mxu0 0.0
    %3917 = vmatpush1.msra.mxu0 0.0
    %3918 = vmatprep.subr.mxu0 0.0
    %3919 = vmatpush1.msra.mxu0 0.0
    %3920 = vmatprep.subr.mxu0 0.0
    %3921 = vmatpush1.msra.mxu0 0.0
    %3922 = vmatprep.subr.mxu0 0.0
    %3923 = vmatpush1.msra.mxu0 0.0
    %3924 = vmatprep.subr.mxu0 0.0
    %3925 = vmatpush1.msra.mxu0 0.0
    %3926 = vmatprep.subr.mxu0 0.0
    %3927 = vmatpush1.msra.mxu0 0.0
    %3928 = vmatprep.subr.mxu0 0.0
    %3929 = vmatpush1.msra.mxu0 0.0
    %3930 = vmatprep.subr.mxu0 0.0
    %3931 = vmatpush1.msra.mxu0 0.0
    %3932 = vmatprep.subr.mxu0 0.0
    %3933 = vmatpush1.msra.mxu0 %v3896
    %3934 = vmatprep.subr.mxu0 0.0
    %3935 = vmatpush1.msra.mxu0 %v3895
    %3936 = vmatprep.subr.mxu0 0.0
    %3937 = vmatpush2.msra.mxu0 0.0
    %3938 = vmatprep.subr.mxu0 0.0
    %3939 = vmatpush2.msra.mxu0 0.0
    %3940 = vmatprep.subr.mxu0 0.0
    %3941 = vmatpush2.msra.mxu0 0.0
    %3942 = vmatprep.subr.mxu0 0.0
    %3943 = vmatpush2.msra.mxu0 0.0
    %3944 = vmatprep.subr.mxu0 0.0
    %3945 = vmatpush2.msra.mxu0 0.0
    %3946 = vmatprep.subr.mxu0 0.0
    %3947 = vmatpush2.msra.mxu0 0.0
    %3948 = vmatprep.subr.mxu0 0.0
    %3949 = vmatpush2.msra.mxu0 0.0
    %3950 = vmatprep.subr.mxu0 0.0
    %3951 = vmatpush2.msra.mxu0 0.0
    %3952 = vmatprep.subr.mxu0 0.0
    %3953 = vmatpush2.msra.mxu0 0.0
    %3954 = vmatprep.subr.mxu0 0.0
    %3955 = vmatpush2.msra.mxu0 0.0
    %3956 = vmatprep.subr.mxu0 0.0
    %3957 = vmatpush2.msra.mxu0 0.0
    %3958 = vmatprep.subr.mxu0 0.0
    %3959 = vmatpush2.msra.mxu0 0.0
    %3960 = vmatprep.subr.mxu0 0.0
    %3961 = vmatpush2.msra.mxu0 0.0
    %3962 = vmatprep.subr.mxu0 0.0
    %3963 = vmatpush2.msra.mxu0 0.0
    %3964 = vmatprep.subr.mxu0 0.0
    %3965 = vmatpush2.msra.mxu0 0.0
    %3966 = vmatprep.subr.mxu0 0.0
    %3967 = vmatpush2.msra.mxu0 0.0
    %3968 = vmatprep.mubr.f32.mxu0 0.0
    %3969 = vmatmul.mubr.f32.gmra.mxu0 %v3744
    %v3970 = vpop.f32.mrf.mxu0
    %v3971 = vadd.f32 %v3902, %v3970
    %v3972 = vpop.f32.mrf.mxu0
    %3973 = vdwg.mxu0
    %v3974 = vld [vmem:[#allocation13] sm:$0xff]
    %v3975 = vld [vmem:[#allocation13 + $0x8] sm:$0xff]
    %v3976 = vld [vmem:[#allocation13 + $0x10] sm:$0xff]
    %v3977 = vld [vmem:[#allocation13 + $0x18] sm:$0xff]
    %v3978 = vld [vmem:[%s9] sm:$0x1]
    %v3980 = vlaneseq
    %v3981 = vshrl.u32 %v3980, 7
    %v3982 = vsub.s32 0, %v3981
    %v3983 = vrot.slane %v3978, %v3982
    %v3986 = vsel %vm395, %v3218, 0
    %3988 = vmatprep.subr.mxu0 0.0
    %3989 = vmatpush1.msra.mxu0 0.0
    %3990 = vmatprep.subr.mxu0 0.0
    %3991 = vmatpush1.msra.mxu0 0.0
    %3992 = vmatprep.subr.mxu0 0.0
    %3993 = vmatpush1.msra.mxu0 0.0
    %3994 = vmatprep.subr.mxu0 0.0
    %3995 = vmatpush1.msra.mxu0 0.0
    %3996 = vmatprep.subr.mxu0 0.0
    %3997 = vmatpush1.msra.mxu0 0.0
    %3998 = vmatprep.subr.mxu0 0.0
    %3999 = vmatpush1.msra.mxu0 0.0
    %4000 = vmatprep.subr.mxu0 0.0
    %4001 = vmatpush1.msra.mxu0 0.0
    %4002 = vmatprep.subr.mxu0 0.0
    %4003 = vmatpush1.msra.mxu0 0.0
    %4004 = vmatprep.subr.mxu0 0.0
    %4005 = vmatpush1.msra.mxu0 0.0
    %4006 = vmatprep.subr.mxu0 0.0
    %4007 = vmatpush1.msra.mxu0 0.0
    %4008 = vmatprep.subr.mxu0 0.0
    %4009 = vmatpush1.msra.mxu0 0.0
    %4010 = vmatprep.subr.mxu0 0.0
    %4011 = vmatpush1.msra.mxu0 0.0
    %4012 = vmatprep.subr.mxu0 0.0
    %4013 = vmatpush1.msra.mxu0 %v3977
    %4014 = vmatprep.subr.mxu0 0.0
    %4015 = vmatpush1.msra.mxu0 %v3976
    %4016 = vmatprep.subr.mxu0 0.0
    %4017 = vmatpush1.msra.mxu0 %v3975
    %4018 = vmatprep.subr.mxu0 0.0
    %4019 = vmatpush1.msra.mxu0 %v3974
    %4020 = vmatprep.subr.mxu0 0.0
    %4021 = vmatpush2.msra.mxu0 0.0
    %4022 = vmatprep.subr.mxu0 0.0
    %4023 = vmatpush2.msra.mxu0 0.0
    %4024 = vmatprep.subr.mxu0 0.0
    %4025 = vmatpush2.msra.mxu0 0.0
    %4026 = vmatprep.subr.mxu0 0.0
    %4027 = vmatpush2.msra.mxu0 0.0
    %4028 = vmatprep.subr.mxu0 0.0
    %4029 = vmatpush2.msra.mxu0 0.0
    %4030 = vmatprep.subr.mxu0 0.0
    %4031 = vmatpush2.msra.mxu0 0.0
    %4032 = vmatprep.subr.mxu0 0.0
    %4033 = vmatpush2.msra.mxu0 0.0
    %4034 = vmatprep.subr.mxu0 0.0
    %4035 = vmatpush2.msra.mxu0 0.0
    %4036 = vmatprep.subr.mxu0 0.0
    %4037 = vmatpush2.msra.mxu0 0.0
    %4038 = vmatprep.subr.mxu0 0.0
    %4039 = vmatpush2.msra.mxu0 0.0
    %4040 = vmatprep.subr.mxu0 0.0
    %4041 = vmatpush2.msra.mxu0 0.0
    %4042 = vmatprep.subr.mxu0 0.0
    %4043 = vmatpush2.msra.mxu0 0.0
    %4044 = vmatprep.subr.mxu0 0.0
    %4045 = vmatpush2.msra.mxu0 0.0
    %4046 = vmatprep.subr.mxu0 0.0
    %4047 = vmatpush2.msra.mxu0 0.0
    %4048 = vmatprep.subr.mxu0 0.0
    %4049 = vmatpush2.msra.mxu0 0.0
    %4050 = vmatprep.subr.mxu0 0.0
    %4051 = vmatpush2.msra.mxu0 0.0
    %4052 = vmatprep.mubr.f32.mxu0 0.0
    %4053 = vmatmul.mubr.f32.gmra.mxu0 %v3986
    %v4054 = vpop.f32.mrf.mxu0
    %v4055 = vadd.f32 %v3983, %v4054
    %v4056 = vpop.f32.mrf.mxu0
    %4057 = vdwg.mxu0
    %v4058 = vld [vmem:[%s988] sm:$0xff]
    %v4059 = vld [vmem:[%s988 + $0x8] sm:$0xff]
    %v4060 = vld [vmem:[%s988 + $0x10] sm:$0xff]
    %v4061 = vld [vmem:[%s988 + $0x18] sm:$0xff]
    %v4062 = vld [vmem:[%s993] sm:$0x1]
    %v4064 = vlaneseq
    %v4065 = vshrl.u32 %v4064, 7
    %v4066 = vsub.s32 0, %v4065
    %v4067 = vrot.slane %v4062, %v4066
    %4069 = vmatprep.subr.mxu0 0.0
    %4070 = vmatpush1.msra.mxu0 0.0
    %4071 = vmatprep.subr.mxu0 0.0
    %4072 = vmatpush1.msra.mxu0 0.0
    %4073 = vmatprep.subr.mxu0 0.0
    %4074 = vmatpush1.msra.mxu0 0.0
    %4075 = vmatprep.subr.mxu0 0.0
    %4076 = vmatpush1.msra.mxu0 0.0
    %4077 = vmatprep.subr.mxu0 0.0
    %4078 = vmatpush1.msra.mxu0 0.0
    %4079 = vmatprep.subr.mxu0 0.0
    %4080 = vmatpush1.msra.mxu0 0.0
    %4081 = vmatprep.subr.mxu0 0.0
    %4082 = vmatpush1.msra.mxu0 0.0
    %4083 = vmatprep.subr.mxu0 0.0
    %4084 = vmatpush1.msra.mxu0 0.0
    %4085 = vmatprep.subr.mxu0 0.0
    %4086 = vmatpush1.msra.mxu0 0.0
    %4087 = vmatprep.subr.mxu0 0.0
    %4088 = vmatpush1.msra.mxu0 0.0
    %4089 = vmatprep.subr.mxu0 0.0
    %4090 = vmatpush1.msra.mxu0 0.0
    %4091 = vmatprep.subr.mxu0 0.0
    %4092 = vmatpush1.msra.mxu0 0.0
    %4093 = vmatprep.subr.mxu0 0.0
    %4094 = vmatpush1.msra.mxu0 %v4061
    %4095 = vmatprep.subr.mxu0 0.0
    %4096 = vmatpush1.msra.mxu0 %v4060
    %4097 = vmatprep.subr.mxu0 0.0
    %4098 = vmatpush1.msra.mxu0 %v4059
    %4099 = vmatprep.subr.mxu0 0.0
    %4100 = vmatpush1.msra.mxu0 %v4058
    %4101 = vmatprep.subr.mxu0 0.0
    %4102 = vmatpush2.msra.mxu0 0.0
    %4103 = vmatprep.subr.mxu0 0.0
    %4104 = vmatpush2.msra.mxu0 0.0
    %4105 = vmatprep.subr.mxu0 0.0
    %4106 = vmatpush2.msra.mxu0 0.0
    %4107 = vmatprep.subr.mxu0 0.0
    %4108 = vmatpush2.msra.mxu0 0.0
    %4109 = vmatprep.subr.mxu0 0.0
    %4110 = vmatpush2.msra.mxu0 0.0
    %4111 = vmatprep.subr.mxu0 0.0
    %4112 = vmatpush2.msra.mxu0 0.0
    %4113 = vmatprep.subr.mxu0 0.0
    %4114 = vmatpush2.msra.mxu0 0.0
    %4115 = vmatprep.subr.mxu0 0.0
    %4116 = vmatpush2.msra.mxu0 0.0
    %4117 = vmatprep.subr.mxu0 0.0
    %4118 = vmatpush2.msra.mxu0 0.0
    %4119 = vmatprep.subr.mxu0 0.0
    %4120 = vmatpush2.msra.mxu0 0.0
    %4121 = vmatprep.subr.mxu0 0.0
    %4122 = vmatpush2.msra.mxu0 0.0
    %4123 = vmatprep.subr.mxu0 0.0
    %4124 = vmatpush2.msra.mxu0 0.0
    %4125 = vmatprep.subr.mxu0 0.0
    %4126 = vmatpush2.msra.mxu0 0.0
    %4127 = vmatprep.subr.mxu0 0.0
    %4128 = vmatpush2.msra.mxu0 0.0
    %4129 = vmatprep.subr.mxu0 0.0
    %4130 = vmatpush2.msra.mxu0 0.0
    %4131 = vmatprep.subr.mxu0 0.0
    %4132 = vmatpush2.msra.mxu0 0.0
    %4133 = vmatprep.mubr.f32.mxu0 0.0
    %4134 = vmatmul.mubr.f32.gmra.mxu0 %v3986
    %v4135 = vpop.f32.mrf.mxu0
    %v4136 = vadd.f32 %v4067, %v4135
    %v4137 = vpop.f32.mrf.mxu0
    %4138 = vdwg.mxu0
    %v4139 = vld [vmem:[%s1071] sm:$0xff]
    %v4140 = vld [vmem:[%s1071 + $0x8] sm:$0xff]
    %v4141 = vld [vmem:[%s1071 + $0x10] sm:$0xff]
    %v4142 = vld [vmem:[%s1071 + $0x18] sm:$0xff]
    %v4143 = vld [vmem:[%s1076] sm:$0x1]
    %v4145 = vlaneseq
    %v4146 = vshrl.u32 %v4145, 7
    %v4147 = vsub.s32 0, %v4146
    %v4148 = vrot.slane %v4143, %v4147
    %4150 = vmatprep.subr.mxu0 0.0
    %4151 = vmatpush1.msra.mxu0 0.0
    %4152 = vmatprep.subr.mxu0 0.0
    %4153 = vmatpush1.msra.mxu0 0.0
    %4154 = vmatprep.subr.mxu0 0.0
    %4155 = vmatpush1.msra.mxu0 0.0
    %4156 = vmatprep.subr.mxu0 0.0
    %4157 = vmatpush1.msra.mxu0 0.0
    %4158 = vmatprep.subr.mxu0 0.0
    %4159 = vmatpush1.msra.mxu0 0.0
    %4160 = vmatprep.subr.mxu0 0.0
    %4161 = vmatpush1.msra.mxu0 0.0
    %4162 = vmatprep.subr.mxu0 0.0
    %4163 = vmatpush1.msra.mxu0 0.0
    %4164 = vmatprep.subr.mxu0 0.0
    %4165 = vmatpush1.msra.mxu0 0.0
    %4166 = vmatprep.subr.mxu0 0.0
    %4167 = vmatpush1.msra.mxu0 0.0
    %4168 = vmatprep.subr.mxu0 0.0
    %4169 = vmatpush1.msra.mxu0 0.0
    %4170 = vmatprep.subr.mxu0 0.0
    %4171 = vmatpush1.msra.mxu0 0.0
    %4172 = vmatprep.subr.mxu0 0.0
    %4173 = vmatpush1.msra.mxu0 0.0
    %4174 = vmatprep.subr.mxu0 0.0
    %4175 = vmatpush1.msra.mxu0 %v4142
    %4176 = vmatprep.subr.mxu0 0.0
    %4177 = vmatpush1.msra.mxu0 %v4141
    %4178 = vmatprep.subr.mxu0 0.0
    %4179 = vmatpush1.msra.mxu0 %v4140
    %4180 = vmatprep.subr.mxu0 0.0
    %4181 = vmatpush1.msra.mxu0 %v4139
    %4182 = vmatprep.subr.mxu0 0.0
    %4183 = vmatpush2.msra.mxu0 0.0
    %4184 = vmatprep.subr.mxu0 0.0
    %4185 = vmatpush2.msra.mxu0 0.0
    %4186 = vmatprep.subr.mxu0 0.0
    %4187 = vmatpush2.msra.mxu0 0.0
    %4188 = vmatprep.subr.mxu0 0.0
    %4189 = vmatpush2.msra.mxu0 0.0
    %4190 = vmatprep.subr.mxu0 0.0
    %4191 = vmatpush2.msra.mxu0 0.0
    %4192 = vmatprep.subr.mxu0 0.0
    %4193 = vmatpush2.msra.mxu0 0.0
    %4194 = vmatprep.subr.mxu0 0.0
    %4195 = vmatpush2.msra.mxu0 0.0
    %4196 = vmatprep.subr.mxu0 0.0
    %4197 = vmatpush2.msra.mxu0 0.0
    %4198 = vmatprep.subr.mxu0 0.0
    %4199 = vmatpush2.msra.mxu0 0.0
    %4200 = vmatprep.subr.mxu0 0.0
    %4201 = vmatpush2.msra.mxu0 0.0
    %4202 = vmatprep.subr.mxu0 0.0
    %4203 = vmatpush2.msra.mxu0 0.0
    %4204 = vmatprep.subr.mxu0 0.0
    %4205 = vmatpush2.msra.mxu0 0.0
    %4206 = vmatprep.subr.mxu0 0.0
    %4207 = vmatpush2.msra.mxu0 0.0
    %4208 = vmatprep.subr.mxu0 0.0
    %4209 = vmatpush2.msra.mxu0 0.0
    %4210 = vmatprep.subr.mxu0 0.0
    %4211 = vmatpush2.msra.mxu0 0.0
    %4212 = vmatprep.subr.mxu0 0.0
    %4213 = vmatpush2.msra.mxu0 0.0
    %4214 = vmatprep.mubr.f32.mxu0 0.0
    %4215 = vmatmul.mubr.f32.gmra.mxu0 %v3986
    %v4216 = vpop.f32.mrf.mxu0
    %v4217 = vadd.f32 %v4148, %v4216
    %v4218 = vpop.f32.mrf.mxu0
    %4219 = vdwg.mxu0
    %v4220 = vadd.f32 %v3813, %v4055
    %v4221 = vxor.u32 %v4220, 2147483648
    %v4222 = vmul.f32 %v4221, 1.442695
    %v4223 = vpow.pop %v4222
    %v4224 = vadd.f32 %v4223, 1.0
    %v4225 = vrcp.pop %v4224
    %v4226 = vmul.f32 1.0, %v4225
    %v4227 = vadd.f32 %v3892, %v4136
    %v4228 = vxor.u32 %v4227, 2147483648
    %v4229 = vmul.f32 %v4228, 1.442695
    %v4230 = vpow.pop %v4229
    %v4231 = vadd.f32 %v4230, 1.0
    %v4232 = vrcp.pop %v4231
    %v4233 = vmul.f32 1.0, %v4232
    %v4234 = vmul.f32 %v4226, %v4217
    %v4235 = vadd.f32 %v3971, %v4234
    %v4236 = vtanh.pop %v4235
    %v4237 = vsub.f32 1.0, %v4233
    %v4238 = vmul.f32 %v4237, %v4236
    %v4239 = vmul.f32 %v4233, %v3218
    %v4240 = vadd.f32 %v4238, %v4239
    %s4241 = scalar_lea.vmem [#allocation16], 8
    %4242 = vst.msk [vmem:[%s4241] sm:$0x3] %vm656, %v4240
    %s4243 = scalar_lea.vmem [#allocation4], 8
    %v4244 = vld [vmem:[%s4243] sm:$0x3]
    %v4245 = vld [vmem:[#allocation9] sm:$0xff]
    %v4246 = vld [vmem:[#allocation9 + $0x8] sm:$0xff]
    %v4247 = vld [vmem:[%s4] sm:$0x1]
    %v4249 = vlaneseq
    %v4250 = vshrl.u32 %v4249, 7
    %v4251 = vsub.s32 0, %v4250
    %v4252 = vrot.slane %v4247, %v4251
    %v4255 = vsel %vm148, %v4244, 0
    %4257 = vmatprep.subr.mxu0 0.0
    %4258 = vmatpush1.msra.mxu0 0.0
    %4259 = vmatprep.subr.mxu0 0.0
    %4260 = vmatpush1.msra.mxu0 0.0
    %4261 = vmatprep.subr.mxu0 0.0
    %4262 = vmatpush1.msra.mxu0 0.0
    %4263 = vmatprep.subr.mxu0 0.0
    %4264 = vmatpush1.msra.mxu0 0.0
    %4265 = vmatprep.subr.mxu0 0.0
    %4266 = vmatpush1.msra.mxu0 0.0
    %4267 = vmatprep.subr.mxu0 0.0
    %4268 = vmatpush1.msra.mxu0 0.0
    %4269 = vmatprep.subr.mxu0 0.0
    %4270 = vmatpush1.msra.mxu0 0.0
    %4271 = vmatprep.subr.mxu0 0.0
    %4272 = vmatpush1.msra.mxu0 0.0
    %4273 = vmatprep.subr.mxu0 0.0
    %4274 = vmatpush1.msra.mxu0 0.0
    %4275 = vmatprep.subr.mxu0 0.0
    %4276 = vmatpush1.msra.mxu0 0.0
    %4277 = vmatprep.subr.mxu0 0.0
    %4278 = vmatpush1.msra.mxu0 0.0
    %4279 = vmatprep.subr.mxu0 0.0
    %4280 = vmatpush1.msra.mxu0 0.0
    %4281 = vmatprep.subr.mxu0 0.0
    %4282 = vmatpush1.msra.mxu0 0.0
    %4283 = vmatprep.subr.mxu0 0.0
    %4284 = vmatpush1.msra.mxu0 0.0
    %4285 = vmatprep.subr.mxu0 0.0
    %4286 = vmatpush1.msra.mxu0 %v4246
    %4287 = vmatprep.subr.mxu0 0.0
    %4288 = vmatpush1.msra.mxu0 %v4245
    %4289 = vmatprep.subr.mxu0 0.0
    %4290 = vmatpush2.msra.mxu0 0.0
    %4291 = vmatprep.subr.mxu0 0.0
    %4292 = vmatpush2.msra.mxu0 0.0
    %4293 = vmatprep.subr.mxu0 0.0
    %4294 = vmatpush2.msra.mxu0 0.0
    %4295 = vmatprep.subr.mxu0 0.0
    %4296 = vmatpush2.msra.mxu0 0.0
    %4297 = vmatprep.subr.mxu0 0.0
    %4298 = vmatpush2.msra.mxu0 0.0
    %4299 = vmatprep.subr.mxu0 0.0
    %4300 = vmatpush2.msra.mxu0 0.0
    %4301 = vmatprep.subr.mxu0 0.0
    %4302 = vmatpush2.msra.mxu0 0.0
    %4303 = vmatprep.subr.mxu0 0.0
    %4304 = vmatpush2.msra.mxu0 0.0
    %4305 = vmatprep.subr.mxu0 0.0
    %4306 = vmatpush2.msra.mxu0 0.0
    %4307 = vmatprep.subr.mxu0 0.0
    %4308 = vmatpush2.msra.mxu0 0.0
    %4309 = vmatprep.subr.mxu0 0.0
    %4310 = vmatpush2.msra.mxu0 0.0
    %4311 = vmatprep.subr.mxu0 0.0
    %4312 = vmatpush2.msra.mxu0 0.0
    %4313 = vmatprep.subr.mxu0 0.0
    %4314 = vmatpush2.msra.mxu0 0.0
    %4315 = vmatprep.subr.mxu0 0.0
    %4316 = vmatpush2.msra.mxu0 0.0
    %4317 = vmatprep.subr.mxu0 0.0
    %4318 = vmatpush2.msra.mxu0 0.0
    %4319 = vmatprep.subr.mxu0 0.0
    %4320 = vmatpush2.msra.mxu0 0.0
    %4321 = vmatprep.mubr.f32.mxu0 0.0
    %4322 = vmatmul.mubr.f32.gmra.mxu0 %v4255
    %v4323 = vpop.f32.mrf.mxu0
    %v4324 = vadd.f32 %v4252, %v4323
    %v4325 = vpop.f32.mrf.mxu0
    %4326 = vdwg.mxu0
    %v4327 = vld [vmem:[%s222] sm:$0xff]
    %v4328 = vld [vmem:[%s222 + $0x8] sm:$0xff]
    %v4329 = vld [vmem:[%s225] sm:$0x1]
    %v4331 = vlaneseq
    %v4332 = vshrl.u32 %v4331, 7
    %v4333 = vsub.s32 0, %v4332
    %v4334 = vrot.slane %v4329, %v4333
    %4336 = vmatprep.subr.mxu0 0.0
    %4337 = vmatpush1.msra.mxu0 0.0
    %4338 = vmatprep.subr.mxu0 0.0
    %4339 = vmatpush1.msra.mxu0 0.0
    %4340 = vmatprep.subr.mxu0 0.0
    %4341 = vmatpush1.msra.mxu0 0.0
    %4342 = vmatprep.subr.mxu0 0.0
    %4343 = vmatpush1.msra.mxu0 0.0
    %4344 = vmatprep.subr.mxu0 0.0
    %4345 = vmatpush1.msra.mxu0 0.0
    %4346 = vmatprep.subr.mxu0 0.0
    %4347 = vmatpush1.msra.mxu0 0.0
    %4348 = vmatprep.subr.mxu0 0.0
    %4349 = vmatpush1.msra.mxu0 0.0
    %4350 = vmatprep.subr.mxu0 0.0
    %4351 = vmatpush1.msra.mxu0 0.0
    %4352 = vmatprep.subr.mxu0 0.0
    %4353 = vmatpush1.msra.mxu0 0.0
    %4354 = vmatprep.subr.mxu0 0.0
    %4355 = vmatpush1.msra.mxu0 0.0
    %4356 = vmatprep.subr.mxu0 0.0
    %4357 = vmatpush1.msra.mxu0 0.0
    %4358 = vmatprep.subr.mxu0 0.0
    %4359 = vmatpush1.msra.mxu0 0.0
    %4360 = vmatprep.subr.mxu0 0.0
    %4361 = vmatpush1.msra.mxu0 0.0
    %4362 = vmatprep.subr.mxu0 0.0
    %4363 = vmatpush1.msra.mxu0 0.0
    %4364 = vmatprep.subr.mxu0 0.0
    %4365 = vmatpush1.msra.mxu0 %v4328
    %4366 = vmatprep.subr.mxu0 0.0
    %4367 = vmatpush1.msra.mxu0 %v4327
    %4368 = vmatprep.subr.mxu0 0.0
    %4369 = vmatpush2.msra.mxu0 0.0
    %4370 = vmatprep.subr.mxu0 0.0
    %4371 = vmatpush2.msra.mxu0 0.0
    %4372 = vmatprep.subr.mxu0 0.0
    %4373 = vmatpush2.msra.mxu0 0.0
    %4374 = vmatprep.subr.mxu0 0.0
    %4375 = vmatpush2.msra.mxu0 0.0
    %4376 = vmatprep.subr.mxu0 0.0
    %4377 = vmatpush2.msra.mxu0 0.0
    %4378 = vmatprep.subr.mxu0 0.0
    %4379 = vmatpush2.msra.mxu0 0.0
    %4380 = vmatprep.subr.mxu0 0.0
    %4381 = vmatpush2.msra.mxu0 0.0
    %4382 = vmatprep.subr.mxu0 0.0
    %4383 = vmatpush2.msra.mxu0 0.0
    %4384 = vmatprep.subr.mxu0 0.0
    %4385 = vmatpush2.msra.mxu0 0.0
    %4386 = vmatprep.subr.mxu0 0.0
    %4387 = vmatpush2.msra.mxu0 0.0
    %4388 = vmatprep.subr.mxu0 0.0
    %4389 = vmatpush2.msra.mxu0 0.0
    %4390 = vmatprep.subr.mxu0 0.0
    %4391 = vmatpush2.msra.mxu0 0.0
    %4392 = vmatprep.subr.mxu0 0.0
    %4393 = vmatpush2.msra.mxu0 0.0
    %4394 = vmatprep.subr.mxu0 0.0
    %4395 = vmatpush2.msra.mxu0 0.0
    %4396 = vmatprep.subr.mxu0 0.0
    %4397 = vmatpush2.msra.mxu0 0.0
    %4398 = vmatprep.subr.mxu0 0.0
    %4399 = vmatpush2.msra.mxu0 0.0
    %4400 = vmatprep.mubr.f32.mxu0 0.0
    %4401 = vmatmul.mubr.f32.gmra.mxu0 %v4255
    %v4402 = vpop.f32.mrf.mxu0
    %v4403 = vadd.f32 %v4334, %v4402
    %v4404 = vpop.f32.mrf.mxu0
    %4405 = vdwg.mxu0
    %v4406 = vld [vmem:[%s303] sm:$0xff]
    %v4407 = vld [vmem:[%s303 + $0x8] sm:$0xff]
    %v4408 = vld [vmem:[%s306] sm:$0x1]
    %v4410 = vlaneseq
    %v4411 = vshrl.u32 %v4410, 7
    %v4412 = vsub.s32 0, %v4411
    %v4413 = vrot.slane %v4408, %v4412
    %4415 = vmatprep.subr.mxu0 0.0
    %4416 = vmatpush1.msra.mxu0 0.0
    %4417 = vmatprep.subr.mxu0 0.0
    %4418 = vmatpush1.msra.mxu0 0.0
    %4419 = vmatprep.subr.mxu0 0.0
    %4420 = vmatpush1.msra.mxu0 0.0
    %4421 = vmatprep.subr.mxu0 0.0
    %4422 = vmatpush1.msra.mxu0 0.0
    %4423 = vmatprep.subr.mxu0 0.0
    %4424 = vmatpush1.msra.mxu0 0.0
    %4425 = vmatprep.subr.mxu0 0.0
    %4426 = vmatpush1.msra.mxu0 0.0
    %4427 = vmatprep.subr.mxu0 0.0
    %4428 = vmatpush1.msra.mxu0 0.0
    %4429 = vmatprep.subr.mxu0 0.0
    %4430 = vmatpush1.msra.mxu0 0.0
    %4431 = vmatprep.subr.mxu0 0.0
    %4432 = vmatpush1.msra.mxu0 0.0
    %4433 = vmatprep.subr.mxu0 0.0
    %4434 = vmatpush1.msra.mxu0 0.0
    %4435 = vmatprep.subr.mxu0 0.0
    %4436 = vmatpush1.msra.mxu0 0.0
    %4437 = vmatprep.subr.mxu0 0.0
    %4438 = vmatpush1.msra.mxu0 0.0
    %4439 = vmatprep.subr.mxu0 0.0
    %4440 = vmatpush1.msra.mxu0 0.0
    %4441 = vmatprep.subr.mxu0 0.0
    %4442 = vmatpush1.msra.mxu0 0.0
    %4443 = vmatprep.subr.mxu0 0.0
    %4444 = vmatpush1.msra.mxu0 %v4407
    %4445 = vmatprep.subr.mxu0 0.0
    %4446 = vmatpush1.msra.mxu0 %v4406
    %4447 = vmatprep.subr.mxu0 0.0
    %4448 = vmatpush2.msra.mxu0 0.0
    %4449 = vmatprep.subr.mxu0 0.0
    %4450 = vmatpush2.msra.mxu0 0.0
    %4451 = vmatprep.subr.mxu0 0.0
    %4452 = vmatpush2.msra.mxu0 0.0
    %4453 = vmatprep.subr.mxu0 0.0
    %4454 = vmatpush2.msra.mxu0 0.0
    %4455 = vmatprep.subr.mxu0 0.0
    %4456 = vmatpush2.msra.mxu0 0.0
    %4457 = vmatprep.subr.mxu0 0.0
    %4458 = vmatpush2.msra.mxu0 0.0
    %4459 = vmatprep.subr.mxu0 0.0
    %4460 = vmatpush2.msra.mxu0 0.0
    %4461 = vmatprep.subr.mxu0 0.0
    %4462 = vmatpush2.msra.mxu0 0.0
    %4463 = vmatprep.subr.mxu0 0.0
    %4464 = vmatpush2.msra.mxu0 0.0
    %4465 = vmatprep.subr.mxu0 0.0
    %4466 = vmatpush2.msra.mxu0 0.0
    %4467 = vmatprep.subr.mxu0 0.0
    %4468 = vmatpush2.msra.mxu0 0.0
    %4469 = vmatprep.subr.mxu0 0.0
    %4470 = vmatpush2.msra.mxu0 0.0
    %4471 = vmatprep.subr.mxu0 0.0
    %4472 = vmatpush2.msra.mxu0 0.0
    %4473 = vmatprep.subr.mxu0 0.0
    %4474 = vmatpush2.msra.mxu0 0.0
    %4475 = vmatprep.subr.mxu0 0.0
    %4476 = vmatpush2.msra.mxu0 0.0
    %4477 = vmatprep.subr.mxu0 0.0
    %4478 = vmatpush2.msra.mxu0 0.0
    %4479 = vmatprep.mubr.f32.mxu0 0.0
    %4480 = vmatmul.mubr.f32.gmra.mxu0 %v4255
    %v4481 = vpop.f32.mrf.mxu0
    %v4482 = vadd.f32 %v4413, %v4481
    %v4483 = vpop.f32.mrf.mxu0
    %4484 = vdwg.mxu0
    %v4485 = vld [vmem:[#allocation10] sm:$0xff]
    %v4486 = vld [vmem:[#allocation10 + $0x8] sm:$0xff]
    %v4487 = vld [vmem:[#allocation10 + $0x10] sm:$0xff]
    %v4488 = vld [vmem:[#allocation10 + $0x18] sm:$0xff]
    %v4489 = vld [vmem:[%s5] sm:$0x1]
    %v4491 = vlaneseq
    %v4492 = vshrl.u32 %v4491, 7
    %v4493 = vsub.s32 0, %v4492
    %v4494 = vrot.slane %v4489, %v4493
    %v4497 = vsel %vm395, %v3729, 0
    %4499 = vmatprep.subr.mxu0 0.0
    %4500 = vmatpush1.msra.mxu0 0.0
    %4501 = vmatprep.subr.mxu0 0.0
    %4502 = vmatpush1.msra.mxu0 0.0
    %4503 = vmatprep.subr.mxu0 0.0
    %4504 = vmatpush1.msra.mxu0 0.0
    %4505 = vmatprep.subr.mxu0 0.0
    %4506 = vmatpush1.msra.mxu0 0.0
    %4507 = vmatprep.subr.mxu0 0.0
    %4508 = vmatpush1.msra.mxu0 0.0
    %4509 = vmatprep.subr.mxu0 0.0
    %4510 = vmatpush1.msra.mxu0 0.0
    %4511 = vmatprep.subr.mxu0 0.0
    %4512 = vmatpush1.msra.mxu0 0.0
    %4513 = vmatprep.subr.mxu0 0.0
    %4514 = vmatpush1.msra.mxu0 0.0
    %4515 = vmatprep.subr.mxu0 0.0
    %4516 = vmatpush1.msra.mxu0 0.0
    %4517 = vmatprep.subr.mxu0 0.0
    %4518 = vmatpush1.msra.mxu0 0.0
    %4519 = vmatprep.subr.mxu0 0.0
    %4520 = vmatpush1.msra.mxu0 0.0
    %4521 = vmatprep.subr.mxu0 0.0
    %4522 = vmatpush1.msra.mxu0 0.0
    %4523 = vmatprep.subr.mxu0 0.0
    %4524 = vmatpush1.msra.mxu0 %v4488
    %4525 = vmatprep.subr.mxu0 0.0
    %4526 = vmatpush1.msra.mxu0 %v4487
    %4527 = vmatprep.subr.mxu0 0.0
    %4528 = vmatpush1.msra.mxu0 %v4486
    %4529 = vmatprep.subr.mxu0 0.0
    %4530 = vmatpush1.msra.mxu0 %v4485
    %4531 = vmatprep.subr.mxu0 0.0
    %4532 = vmatpush2.msra.mxu0 0.0
    %4533 = vmatprep.subr.mxu0 0.0
    %4534 = vmatpush2.msra.mxu0 0.0
    %4535 = vmatprep.subr.mxu0 0.0
    %4536 = vmatpush2.msra.mxu0 0.0
    %4537 = vmatprep.subr.mxu0 0.0
    %4538 = vmatpush2.msra.mxu0 0.0
    %4539 = vmatprep.subr.mxu0 0.0
    %4540 = vmatpush2.msra.mxu0 0.0
    %4541 = vmatprep.subr.mxu0 0.0
    %4542 = vmatpush2.msra.mxu0 0.0
    %4543 = vmatprep.subr.mxu0 0.0
    %4544 = vmatpush2.msra.mxu0 0.0
    %4545 = vmatprep.subr.mxu0 0.0
    %4546 = vmatpush2.msra.mxu0 0.0
    %4547 = vmatprep.subr.mxu0 0.0
    %4548 = vmatpush2.msra.mxu0 0.0
    %4549 = vmatprep.subr.mxu0 0.0
    %4550 = vmatpush2.msra.mxu0 0.0
    %4551 = vmatprep.subr.mxu0 0.0
    %4552 = vmatpush2.msra.mxu0 0.0
    %4553 = vmatprep.subr.mxu0 0.0
    %4554 = vmatpush2.msra.mxu0 0.0
    %4555 = vmatprep.subr.mxu0 0.0
    %4556 = vmatpush2.msra.mxu0 0.0
    %4557 = vmatprep.subr.mxu0 0.0
    %4558 = vmatpush2.msra.mxu0 0.0
    %4559 = vmatprep.subr.mxu0 0.0
    %4560 = vmatpush2.msra.mxu0 0.0
    %4561 = vmatprep.subr.mxu0 0.0
    %4562 = vmatpush2.msra.mxu0 0.0
    %4563 = vmatprep.mubr.f32.mxu0 0.0
    %4564 = vmatmul.mubr.f32.gmra.mxu0 %v4497
    %v4565 = vpop.f32.mrf.mxu0
    %v4566 = vadd.f32 %v4494, %v4565
    %v4567 = vpop.f32.mrf.mxu0
    %4568 = vdwg.mxu0
    %v4569 = vld [vmem:[%s469] sm:$0xff]
    %v4570 = vld [vmem:[%s469 + $0x8] sm:$0xff]
    %v4571 = vld [vmem:[%s469 + $0x10] sm:$0xff]
    %v4572 = vld [vmem:[%s469 + $0x18] sm:$0xff]
    %v4573 = vld [vmem:[%s474] sm:$0x1]
    %v4575 = vlaneseq
    %v4576 = vshrl.u32 %v4575, 7
    %v4577 = vsub.s32 0, %v4576
    %v4578 = vrot.slane %v4573, %v4577
    %4580 = vmatprep.subr.mxu0 0.0
    %4581 = vmatpush1.msra.mxu0 0.0
    %4582 = vmatprep.subr.mxu0 0.0
    %4583 = vmatpush1.msra.mxu0 0.0
    %4584 = vmatprep.subr.mxu0 0.0
    %4585 = vmatpush1.msra.mxu0 0.0
    %4586 = vmatprep.subr.mxu0 0.0
    %4587 = vmatpush1.msra.mxu0 0.0
    %4588 = vmatprep.subr.mxu0 0.0
    %4589 = vmatpush1.msra.mxu0 0.0
    %4590 = vmatprep.subr.mxu0 0.0
    %4591 = vmatpush1.msra.mxu0 0.0
    %4592 = vmatprep.subr.mxu0 0.0
    %4593 = vmatpush1.msra.mxu0 0.0
    %4594 = vmatprep.subr.mxu0 0.0
    %4595 = vmatpush1.msra.mxu0 0.0
    %4596 = vmatprep.subr.mxu0 0.0
    %4597 = vmatpush1.msra.mxu0 0.0
    %4598 = vmatprep.subr.mxu0 0.0
    %4599 = vmatpush1.msra.mxu0 0.0
    %4600 = vmatprep.subr.mxu0 0.0
    %4601 = vmatpush1.msra.mxu0 0.0
    %4602 = vmatprep.subr.mxu0 0.0
    %4603 = vmatpush1.msra.mxu0 0.0
    %4604 = vmatprep.subr.mxu0 0.0
    %4605 = vmatpush1.msra.mxu0 %v4572
    %4606 = vmatprep.subr.mxu0 0.0
    %4607 = vmatpush1.msra.mxu0 %v4571
    %4608 = vmatprep.subr.mxu0 0.0
    %4609 = vmatpush1.msra.mxu0 %v4570
    %4610 = vmatprep.subr.mxu0 0.0
    %4611 = vmatpush1.msra.mxu0 %v4569
    %4612 = vmatprep.subr.mxu0 0.0
    %4613 = vmatpush2.msra.mxu0 0.0
    %4614 = vmatprep.subr.mxu0 0.0
    %4615 = vmatpush2.msra.mxu0 0.0
    %4616 = vmatprep.subr.mxu0 0.0
    %4617 = vmatpush2.msra.mxu0 0.0
    %4618 = vmatprep.subr.mxu0 0.0
    %4619 = vmatpush2.msra.mxu0 0.0
    %4620 = vmatprep.subr.mxu0 0.0
    %4621 = vmatpush2.msra.mxu0 0.0
    %4622 = vmatprep.subr.mxu0 0.0
    %4623 = vmatpush2.msra.mxu0 0.0
    %4624 = vmatprep.subr.mxu0 0.0
    %4625 = vmatpush2.msra.mxu0 0.0
    %4626 = vmatprep.subr.mxu0 0.0
    %4627 = vmatpush2.msra.mxu0 0.0
    %4628 = vmatprep.subr.mxu0 0.0
    %4629 = vmatpush2.msra.mxu0 0.0
    %4630 = vmatprep.subr.mxu0 0.0
    %4631 = vmatpush2.msra.mxu0 0.0
    %4632 = vmatprep.subr.mxu0 0.0
    %4633 = vmatpush2.msra.mxu0 0.0
    %4634 = vmatprep.subr.mxu0 0.0
    %4635 = vmatpush2.msra.mxu0 0.0
    %4636 = vmatprep.subr.mxu0 0.0
    %4637 = vmatpush2.msra.mxu0 0.0
    %4638 = vmatprep.subr.mxu0 0.0
    %4639 = vmatpush2.msra.mxu0 0.0
    %4640 = vmatprep.subr.mxu0 0.0
    %4641 = vmatpush2.msra.mxu0 0.0
    %4642 = vmatprep.subr.mxu0 0.0
    %4643 = vmatpush2.msra.mxu0 0.0
    %4644 = vmatprep.mubr.f32.mxu0 0.0
    %4645 = vmatmul.mubr.f32.gmra.mxu0 %v4497
    %v4646 = vpop.f32.mrf.mxu0
    %v4647 = vadd.f32 %v4578, %v4646
    %v4648 = vpop.f32.mrf.mxu0
    %4649 = vdwg.mxu0
    %v4650 = vld [vmem:[%s552] sm:$0xff]
    %v4651 = vld [vmem:[%s552 + $0x8] sm:$0xff]
    %v4652 = vld [vmem:[%s552 + $0x10] sm:$0xff]
    %v4653 = vld [vmem:[%s552 + $0x18] sm:$0xff]
    %v4654 = vld [vmem:[%s557] sm:$0x1]
    %v4656 = vlaneseq
    %v4657 = vshrl.u32 %v4656, 7
    %v4658 = vsub.s32 0, %v4657
    %v4659 = vrot.slane %v4654, %v4658
    %4661 = vmatprep.subr.mxu0 0.0
    %4662 = vmatpush1.msra.mxu0 0.0
    %4663 = vmatprep.subr.mxu0 0.0
    %4664 = vmatpush1.msra.mxu0 0.0
    %4665 = vmatprep.subr.mxu0 0.0
    %4666 = vmatpush1.msra.mxu0 0.0
    %4667 = vmatprep.subr.mxu0 0.0
    %4668 = vmatpush1.msra.mxu0 0.0
    %4669 = vmatprep.subr.mxu0 0.0
    %4670 = vmatpush1.msra.mxu0 0.0
    %4671 = vmatprep.subr.mxu0 0.0
    %4672 = vmatpush1.msra.mxu0 0.0
    %4673 = vmatprep.subr.mxu0 0.0
    %4674 = vmatpush1.msra.mxu0 0.0
    %4675 = vmatprep.subr.mxu0 0.0
    %4676 = vmatpush1.msra.mxu0 0.0
    %4677 = vmatprep.subr.mxu0 0.0
    %4678 = vmatpush1.msra.mxu0 0.0
    %4679 = vmatprep.subr.mxu0 0.0
    %4680 = vmatpush1.msra.mxu0 0.0
    %4681 = vmatprep.subr.mxu0 0.0
    %4682 = vmatpush1.msra.mxu0 0.0
    %4683 = vmatprep.subr.mxu0 0.0
    %4684 = vmatpush1.msra.mxu0 0.0
    %4685 = vmatprep.subr.mxu0 0.0
    %4686 = vmatpush1.msra.mxu0 %v4653
    %4687 = vmatprep.subr.mxu0 0.0
    %4688 = vmatpush1.msra.mxu0 %v4652
    %4689 = vmatprep.subr.mxu0 0.0
    %4690 = vmatpush1.msra.mxu0 %v4651
    %4691 = vmatprep.subr.mxu0 0.0
    %4692 = vmatpush1.msra.mxu0 %v4650
    %4693 = vmatprep.subr.mxu0 0.0
    %4694 = vmatpush2.msra.mxu0 0.0
    %4695 = vmatprep.subr.mxu0 0.0
    %4696 = vmatpush2.msra.mxu0 0.0
    %4697 = vmatprep.subr.mxu0 0.0
    %4698 = vmatpush2.msra.mxu0 0.0
    %4699 = vmatprep.subr.mxu0 0.0
    %4700 = vmatpush2.msra.mxu0 0.0
    %4701 = vmatprep.subr.mxu0 0.0
    %4702 = vmatpush2.msra.mxu0 0.0
    %4703 = vmatprep.subr.mxu0 0.0
    %4704 = vmatpush2.msra.mxu0 0.0
    %4705 = vmatprep.subr.mxu0 0.0
    %4706 = vmatpush2.msra.mxu0 0.0
    %4707 = vmatprep.subr.mxu0 0.0
    %4708 = vmatpush2.msra.mxu0 0.0
    %4709 = vmatprep.subr.mxu0 0.0
    %4710 = vmatpush2.msra.mxu0 0.0
    %4711 = vmatprep.subr.mxu0 0.0
    %4712 = vmatpush2.msra.mxu0 0.0
    %4713 = vmatprep.subr.mxu0 0.0
    %4714 = vmatpush2.msra.mxu0 0.0
    %4715 = vmatprep.subr.mxu0 0.0
    %4716 = vmatpush2.msra.mxu0 0.0
    %4717 = vmatprep.subr.mxu0 0.0
    %4718 = vmatpush2.msra.mxu0 0.0
    %4719 = vmatprep.subr.mxu0 0.0
    %4720 = vmatpush2.msra.mxu0 0.0
    %4721 = vmatprep.subr.mxu0 0.0
    %4722 = vmatpush2.msra.mxu0 0.0
    %4723 = vmatprep.subr.mxu0 0.0
    %4724 = vmatpush2.msra.mxu0 0.0
    %4725 = vmatprep.mubr.f32.mxu0 0.0
    %4726 = vmatmul.mubr.f32.gmra.mxu0 %v4497
    %v4727 = vpop.f32.mrf.mxu0
    %v4728 = vadd.f32 %v4659, %v4727
    %v4729 = vpop.f32.mrf.mxu0
    %4730 = vdwg.mxu0
    %v4731 = vadd.f32 %v4324, %v4566
    %v4732 = vxor.u32 %v4731, 2147483648
    %v4733 = vmul.f32 %v4732, 1.442695
    %v4734 = vpow.pop %v4733
    %v4735 = vadd.f32 %v4734, 1.0
    %v4736 = vrcp.pop %v4735
    %v4737 = vmul.f32 1.0, %v4736
    %v4738 = vadd.f32 %v4403, %v4647
    %v4739 = vxor.u32 %v4738, 2147483648
    %v4740 = vmul.f32 %v4739, 1.442695
    %v4741 = vpow.pop %v4740
    %v4742 = vadd.f32 %v4741, 1.0
    %v4743 = vrcp.pop %v4742
    %v4744 = vmul.f32 1.0, %v4743
    %v4745 = vmul.f32 %v4737, %v4728
    %v4746 = vadd.f32 %v4482, %v4745
    %v4747 = vtanh.pop %v4746
    %v4748 = vsub.f32 1.0, %v4744
    %v4749 = vmul.f32 %v4748, %v4747
    %v4750 = vmul.f32 %v4744, %v3729
    %v4751 = vadd.f32 %v4749, %v4750
    %s4752 = scalar_lea.vmem [#allocation15], 8
    %4753 = vst.msk [vmem:[%s4752] sm:$0x3] %vm656, %v4751
    %s4754 = scalar_lea.vmem [#allocation7], 6
    %v4755 = vld [vmem:[%s4754] sm:$0x3]
    %v4756 = vld [vmem:[#allocation12] sm:$0xff]
    %v4757 = vld [vmem:[#allocation12 + $0x8] sm:$0xff]
    %v4758 = vld [vmem:[%s8] sm:$0x1]
    %v4760 = vlaneseq
    %v4761 = vshrl.u32 %v4760, 7
    %v4762 = vsub.s32 0, %v4761
    %v4763 = vrot.slane %v4758, %v4762
    %v4766 = vsel %vm148, %v4755, 0
    %4768 = vmatprep.subr.mxu0 0.0
    %4769 = vmatpush1.msra.mxu0 0.0
    %4770 = vmatprep.subr.mxu0 0.0
    %4771 = vmatpush1.msra.mxu0 0.0
    %4772 = vmatprep.subr.mxu0 0.0
    %4773 = vmatpush1.msra.mxu0 0.0
    %4774 = vmatprep.subr.mxu0 0.0
    %4775 = vmatpush1.msra.mxu0 0.0
    %4776 = vmatprep.subr.mxu0 0.0
    %4777 = vmatpush1.msra.mxu0 0.0
    %4778 = vmatprep.subr.mxu0 0.0
    %4779 = vmatpush1.msra.mxu0 0.0
    %4780 = vmatprep.subr.mxu0 0.0
    %4781 = vmatpush1.msra.mxu0 0.0
    %4782 = vmatprep.subr.mxu0 0.0
    %4783 = vmatpush1.msra.mxu0 0.0
    %4784 = vmatprep.subr.mxu0 0.0
    %4785 = vmatpush1.msra.mxu0 0.0
    %4786 = vmatprep.subr.mxu0 0.0
    %4787 = vmatpush1.msra.mxu0 0.0
    %4788 = vmatprep.subr.mxu0 0.0
    %4789 = vmatpush1.msra.mxu0 0.0
    %4790 = vmatprep.subr.mxu0 0.0
    %4791 = vmatpush1.msra.mxu0 0.0
    %4792 = vmatprep.subr.mxu0 0.0
    %4793 = vmatpush1.msra.mxu0 0.0
    %4794 = vmatprep.subr.mxu0 0.0
    %4795 = vmatpush1.msra.mxu0 0.0
    %4796 = vmatprep.subr.mxu0 0.0
    %4797 = vmatpush1.msra.mxu0 %v4757
    %4798 = vmatprep.subr.mxu0 0.0
    %4799 = vmatpush1.msra.mxu0 %v4756
    %4800 = vmatprep.subr.mxu0 0.0
    %4801 = vmatpush2.msra.mxu0 0.0
    %4802 = vmatprep.subr.mxu0 0.0
    %4803 = vmatpush2.msra.mxu0 0.0
    %4804 = vmatprep.subr.mxu0 0.0
    %4805 = vmatpush2.msra.mxu0 0.0
    %4806 = vmatprep.subr.mxu0 0.0
    %4807 = vmatpush2.msra.mxu0 0.0
    %4808 = vmatprep.subr.mxu0 0.0
    %4809 = vmatpush2.msra.mxu0 0.0
    %4810 = vmatprep.subr.mxu0 0.0
    %4811 = vmatpush2.msra.mxu0 0.0
    %4812 = vmatprep.subr.mxu0 0.0
    %4813 = vmatpush2.msra.mxu0 0.0
    %4814 = vmatprep.subr.mxu0 0.0
    %4815 = vmatpush2.msra.mxu0 0.0
    %4816 = vmatprep.subr.mxu0 0.0
    %4817 = vmatpush2.msra.mxu0 0.0
    %4818 = vmatprep.subr.mxu0 0.0
    %4819 = vmatpush2.msra.mxu0 0.0
    %4820 = vmatprep.subr.mxu0 0.0
    %4821 = vmatpush2.msra.mxu0 0.0
    %4822 = vmatprep.subr.mxu0 0.0
    %4823 = vmatpush2.msra.mxu0 0.0
    %4824 = vmatprep.subr.mxu0 0.0
    %4825 = vmatpush2.msra.mxu0 0.0
    %4826 = vmatprep.subr.mxu0 0.0
    %4827 = vmatpush2.msra.mxu0 0.0
    %4828 = vmatprep.subr.mxu0 0.0
    %4829 = vmatpush2.msra.mxu0 0.0
    %4830 = vmatprep.subr.mxu0 0.0
    %4831 = vmatpush2.msra.mxu0 0.0
    %4832 = vmatprep.mubr.f32.mxu0 0.0
    %4833 = vmatmul.mubr.f32.gmra.mxu0 %v4766
    %v4834 = vpop.f32.mrf.mxu0
    %v4835 = vadd.f32 %v4763, %v4834
    %v4836 = vpop.f32.mrf.mxu0
    %4837 = vdwg.mxu0
    %v4838 = vld [vmem:[%s742] sm:$0xff]
    %v4839 = vld [vmem:[%s742 + $0x8] sm:$0xff]
    %v4840 = vld [vmem:[%s745] sm:$0x1]
    %v4842 = vlaneseq
    %v4843 = vshrl.u32 %v4842, 7
    %v4844 = vsub.s32 0, %v4843
    %v4845 = vrot.slane %v4840, %v4844
    %4847 = vmatprep.subr.mxu0 0.0
    %4848 = vmatpush1.msra.mxu0 0.0
    %4849 = vmatprep.subr.mxu0 0.0
    %4850 = vmatpush1.msra.mxu0 0.0
    %4851 = vmatprep.subr.mxu0 0.0
    %4852 = vmatpush1.msra.mxu0 0.0
    %4853 = vmatprep.subr.mxu0 0.0
    %4854 = vmatpush1.msra.mxu0 0.0
    %4855 = vmatprep.subr.mxu0 0.0
    %4856 = vmatpush1.msra.mxu0 0.0
    %4857 = vmatprep.subr.mxu0 0.0
    %4858 = vmatpush1.msra.mxu0 0.0
    %4859 = vmatprep.subr.mxu0 0.0
    %4860 = vmatpush1.msra.mxu0 0.0
    %4861 = vmatprep.subr.mxu0 0.0
    %4862 = vmatpush1.msra.mxu0 0.0
    %4863 = vmatprep.subr.mxu0 0.0
    %4864 = vmatpush1.msra.mxu0 0.0
    %4865 = vmatprep.subr.mxu0 0.0
    %4866 = vmatpush1.msra.mxu0 0.0
    %4867 = vmatprep.subr.mxu0 0.0
    %4868 = vmatpush1.msra.mxu0 0.0
    %4869 = vmatprep.subr.mxu0 0.0
    %4870 = vmatpush1.msra.mxu0 0.0
    %4871 = vmatprep.subr.mxu0 0.0
    %4872 = vmatpush1.msra.mxu0 0.0
    %4873 = vmatprep.subr.mxu0 0.0
    %4874 = vmatpush1.msra.mxu0 0.0
    %4875 = vmatprep.subr.mxu0 0.0
    %4876 = vmatpush1.msra.mxu0 %v4839
    %4877 = vmatprep.subr.mxu0 0.0
    %4878 = vmatpush1.msra.mxu0 %v4838
    %4879 = vmatprep.subr.mxu0 0.0
    %4880 = vmatpush2.msra.mxu0 0.0
    %4881 = vmatprep.subr.mxu0 0.0
    %4882 = vmatpush2.msra.mxu0 0.0
    %4883 = vmatprep.subr.mxu0 0.0
    %4884 = vmatpush2.msra.mxu0 0.0
    %4885 = vmatprep.subr.mxu0 0.0
    %4886 = vmatpush2.msra.mxu0 0.0
    %4887 = vmatprep.subr.mxu0 0.0
    %4888 = vmatpush2.msra.mxu0 0.0
    %4889 = vmatprep.subr.mxu0 0.0
    %4890 = vmatpush2.msra.mxu0 0.0
    %4891 = vmatprep.subr.mxu0 0.0
    %4892 = vmatpush2.msra.mxu0 0.0
    %4893 = vmatprep.subr.mxu0 0.0
    %4894 = vmatpush2.msra.mxu0 0.0
    %4895 = vmatprep.subr.mxu0 0.0
    %4896 = vmatpush2.msra.mxu0 0.0
    %4897 = vmatprep.subr.mxu0 0.0
    %4898 = vmatpush2.msra.mxu0 0.0
    %4899 = vmatprep.subr.mxu0 0.0
    %4900 = vmatpush2.msra.mxu0 0.0
    %4901 = vmatprep.subr.mxu0 0.0
    %4902 = vmatpush2.msra.mxu0 0.0
    %4903 = vmatprep.subr.mxu0 0.0
    %4904 = vmatpush2.msra.mxu0 0.0
    %4905 = vmatprep.subr.mxu0 0.0
    %4906 = vmatpush2.msra.mxu0 0.0
    %4907 = vmatprep.subr.mxu0 0.0
    %4908 = vmatpush2.msra.mxu0 0.0
    %4909 = vmatprep.subr.mxu0 0.0
    %4910 = vmatpush2.msra.mxu0 0.0
    %4911 = vmatprep.mubr.f32.mxu0 0.0
    %4912 = vmatmul.mubr.f32.gmra.mxu0 %v4766
    %v4913 = vpop.f32.mrf.mxu0
    %v4914 = vadd.f32 %v4845, %v4913
    %v4915 = vpop.f32.mrf.mxu0
    %4916 = vdwg.mxu0
    %v4917 = vld [vmem:[%s823] sm:$0xff]
    %v4918 = vld [vmem:[%s823 + $0x8] sm:$0xff]
    %v4919 = vld [vmem:[%s826] sm:$0x1]
    %v4921 = vlaneseq
    %v4922 = vshrl.u32 %v4921, 7
    %v4923 = vsub.s32 0, %v4922
    %v4924 = vrot.slane %v4919, %v4923
    %4926 = vmatprep.subr.mxu0 0.0
    %4927 = vmatpush1.msra.mxu0 0.0
    %4928 = vmatprep.subr.mxu0 0.0
    %4929 = vmatpush1.msra.mxu0 0.0
    %4930 = vmatprep.subr.mxu0 0.0
    %4931 = vmatpush1.msra.mxu0 0.0
    %4932 = vmatprep.subr.mxu0 0.0
    %4933 = vmatpush1.msra.mxu0 0.0
    %4934 = vmatprep.subr.mxu0 0.0
    %4935 = vmatpush1.msra.mxu0 0.0
    %4936 = vmatprep.subr.mxu0 0.0
    %4937 = vmatpush1.msra.mxu0 0.0
    %4938 = vmatprep.subr.mxu0 0.0
    %4939 = vmatpush1.msra.mxu0 0.0
    %4940 = vmatprep.subr.mxu0 0.0
    %4941 = vmatpush1.msra.mxu0 0.0
    %4942 = vmatprep.subr.mxu0 0.0
    %4943 = vmatpush1.msra.mxu0 0.0
    %4944 = vmatprep.subr.mxu0 0.0
    %4945 = vmatpush1.msra.mxu0 0.0
    %4946 = vmatprep.subr.mxu0 0.0
    %4947 = vmatpush1.msra.mxu0 0.0
    %4948 = vmatprep.subr.mxu0 0.0
    %4949 = vmatpush1.msra.mxu0 0.0
    %4950 = vmatprep.subr.mxu0 0.0
    %4951 = vmatpush1.msra.mxu0 0.0
    %4952 = vmatprep.subr.mxu0 0.0
    %4953 = vmatpush1.msra.mxu0 0.0
    %4954 = vmatprep.subr.mxu0 0.0
    %4955 = vmatpush1.msra.mxu0 %v4918
    %4956 = vmatprep.subr.mxu0 0.0
    %4957 = vmatpush1.msra.mxu0 %v4917
    %4958 = vmatprep.subr.mxu0 0.0
    %4959 = vmatpush2.msra.mxu0 0.0
    %4960 = vmatprep.subr.mxu0 0.0
    %4961 = vmatpush2.msra.mxu0 0.0
    %4962 = vmatprep.subr.mxu0 0.0
    %4963 = vmatpush2.msra.mxu0 0.0
    %4964 = vmatprep.subr.mxu0 0.0
    %4965 = vmatpush2.msra.mxu0 0.0
    %4966 = vmatprep.subr.mxu0 0.0
    %4967 = vmatpush2.msra.mxu0 0.0
    %4968 = vmatprep.subr.mxu0 0.0
    %4969 = vmatpush2.msra.mxu0 0.0
    %4970 = vmatprep.subr.mxu0 0.0
    %4971 = vmatpush2.msra.mxu0 0.0
    %4972 = vmatprep.subr.mxu0 0.0
    %4973 = vmatpush2.msra.mxu0 0.0
    %4974 = vmatprep.subr.mxu0 0.0
    %4975 = vmatpush2.msra.mxu0 0.0
    %4976 = vmatprep.subr.mxu0 0.0
    %4977 = vmatpush2.msra.mxu0 0.0
    %4978 = vmatprep.subr.mxu0 0.0
    %4979 = vmatpush2.msra.mxu0 0.0
    %4980 = vmatprep.subr.mxu0 0.0
    %4981 = vmatpush2.msra.mxu0 0.0
    %4982 = vmatprep.subr.mxu0 0.0
    %4983 = vmatpush2.msra.mxu0 0.0
    %4984 = vmatprep.subr.mxu0 0.0
    %4985 = vmatpush2.msra.mxu0 0.0
    %4986 = vmatprep.subr.mxu0 0.0
    %4987 = vmatpush2.msra.mxu0 0.0
    %4988 = vmatprep.subr.mxu0 0.0
    %4989 = vmatpush2.msra.mxu0 0.0
    %4990 = vmatprep.mubr.f32.mxu0 0.0
    %4991 = vmatmul.mubr.f32.gmra.mxu0 %v4766
    %v4992 = vpop.f32.mrf.mxu0
    %v4993 = vadd.f32 %v4924, %v4992
    %v4994 = vpop.f32.mrf.mxu0
    %4995 = vdwg.mxu0
    %v4996 = vld [vmem:[#allocation13] sm:$0xff]
    %v4997 = vld [vmem:[#allocation13 + $0x8] sm:$0xff]
    %v4998 = vld [vmem:[#allocation13 + $0x10] sm:$0xff]
    %v4999 = vld [vmem:[#allocation13 + $0x18] sm:$0xff]
    %v5000 = vld [vmem:[%s9] sm:$0x1]
    %v5002 = vlaneseq
    %v5003 = vshrl.u32 %v5002, 7
    %v5004 = vsub.s32 0, %v5003
    %v5005 = vrot.slane %v5000, %v5004
    %v5008 = vsel %vm395, %v4240, 0
    %5010 = vmatprep.subr.mxu0 0.0
    %5011 = vmatpush1.msra.mxu0 0.0
    %5012 = vmatprep.subr.mxu0 0.0
    %5013 = vmatpush1.msra.mxu0 0.0
    %5014 = vmatprep.subr.mxu0 0.0
    %5015 = vmatpush1.msra.mxu0 0.0
    %5016 = vmatprep.subr.mxu0 0.0
    %5017 = vmatpush1.msra.mxu0 0.0
    %5018 = vmatprep.subr.mxu0 0.0
    %5019 = vmatpush1.msra.mxu0 0.0
    %5020 = vmatprep.subr.mxu0 0.0
    %5021 = vmatpush1.msra.mxu0 0.0
    %5022 = vmatprep.subr.mxu0 0.0
    %5023 = vmatpush1.msra.mxu0 0.0
    %5024 = vmatprep.subr.mxu0 0.0
    %5025 = vmatpush1.msra.mxu0 0.0
    %5026 = vmatprep.subr.mxu0 0.0
    %5027 = vmatpush1.msra.mxu0 0.0
    %5028 = vmatprep.subr.mxu0 0.0
    %5029 = vmatpush1.msra.mxu0 0.0
    %5030 = vmatprep.subr.mxu0 0.0
    %5031 = vmatpush1.msra.mxu0 0.0
    %5032 = vmatprep.subr.mxu0 0.0
    %5033 = vmatpush1.msra.mxu0 0.0
    %5034 = vmatprep.subr.mxu0 0.0
    %5035 = vmatpush1.msra.mxu0 %v4999
    %5036 = vmatprep.subr.mxu0 0.0
    %5037 = vmatpush1.msra.mxu0 %v4998
    %5038 = vmatprep.subr.mxu0 0.0
    %5039 = vmatpush1.msra.mxu0 %v4997
    %5040 = vmatprep.subr.mxu0 0.0
    %5041 = vmatpush1.msra.mxu0 %v4996
    %5042 = vmatprep.subr.mxu0 0.0
    %5043 = vmatpush2.msra.mxu0 0.0
    %5044 = vmatprep.subr.mxu0 0.0
    %5045 = vmatpush2.msra.mxu0 0.0
    %5046 = vmatprep.subr.mxu0 0.0
    %5047 = vmatpush2.msra.mxu0 0.0
    %5048 = vmatprep.subr.mxu0 0.0
    %5049 = vmatpush2.msra.mxu0 0.0
    %5050 = vmatprep.subr.mxu0 0.0
    %5051 = vmatpush2.msra.mxu0 0.0
    %5052 = vmatprep.subr.mxu0 0.0
    %5053 = vmatpush2.msra.mxu0 0.0
    %5054 = vmatprep.subr.mxu0 0.0
    %5055 = vmatpush2.msra.mxu0 0.0
    %5056 = vmatprep.subr.mxu0 0.0
    %5057 = vmatpush2.msra.mxu0 0.0
    %5058 = vmatprep.subr.mxu0 0.0
    %5059 = vmatpush2.msra.mxu0 0.0
    %5060 = vmatprep.subr.mxu0 0.0
    %5061 = vmatpush2.msra.mxu0 0.0
    %5062 = vmatprep.subr.mxu0 0.0
    %5063 = vmatpush2.msra.mxu0 0.0
    %5064 = vmatprep.subr.mxu0 0.0
    %5065 = vmatpush2.msra.mxu0 0.0
    %5066 = vmatprep.subr.mxu0 0.0
    %5067 = vmatpush2.msra.mxu0 0.0
    %5068 = vmatprep.subr.mxu0 0.0
    %5069 = vmatpush2.msra.mxu0 0.0
    %5070 = vmatprep.subr.mxu0 0.0
    %5071 = vmatpush2.msra.mxu0 0.0
    %5072 = vmatprep.subr.mxu0 0.0
    %5073 = vmatpush2.msra.mxu0 0.0
    %5074 = vmatprep.mubr.f32.mxu0 0.0
    %5075 = vmatmul.mubr.f32.gmra.mxu0 %v5008
    %v5076 = vpop.f32.mrf.mxu0
    %v5077 = vadd.f32 %v5005, %v5076
    %v5078 = vpop.f32.mrf.mxu0
    %5079 = vdwg.mxu0
    %v5080 = vld [vmem:[%s988] sm:$0xff]
    %v5081 = vld [vmem:[%s988 + $0x8] sm:$0xff]
    %v5082 = vld [vmem:[%s988 + $0x10] sm:$0xff]
    %v5083 = vld [vmem:[%s988 + $0x18] sm:$0xff]
    %v5084 = vld [vmem:[%s993] sm:$0x1]
    %v5086 = vlaneseq
    %v5087 = vshrl.u32 %v5086, 7
    %v5088 = vsub.s32 0, %v5087
    %v5089 = vrot.slane %v5084, %v5088
    %5091 = vmatprep.subr.mxu0 0.0
    %5092 = vmatpush1.msra.mxu0 0.0
    %5093 = vmatprep.subr.mxu0 0.0
    %5094 = vmatpush1.msra.mxu0 0.0
    %5095 = vmatprep.subr.mxu0 0.0
    %5096 = vmatpush1.msra.mxu0 0.0
    %5097 = vmatprep.subr.mxu0 0.0
    %5098 = vmatpush1.msra.mxu0 0.0
    %5099 = vmatprep.subr.mxu0 0.0
    %5100 = vmatpush1.msra.mxu0 0.0
    %5101 = vmatprep.subr.mxu0 0.0
    %5102 = vmatpush1.msra.mxu0 0.0
    %5103 = vmatprep.subr.mxu0 0.0
    %5104 = vmatpush1.msra.mxu0 0.0
    %5105 = vmatprep.subr.mxu0 0.0
    %5106 = vmatpush1.msra.mxu0 0.0
    %5107 = vmatprep.subr.mxu0 0.0
    %5108 = vmatpush1.msra.mxu0 0.0
    %5109 = vmatprep.subr.mxu0 0.0
    %5110 = vmatpush1.msra.mxu0 0.0
    %5111 = vmatprep.subr.mxu0 0.0
    %5112 = vmatpush1.msra.mxu0 0.0
    %5113 = vmatprep.subr.mxu0 0.0
    %5114 = vmatpush1.msra.mxu0 0.0
    %5115 = vmatprep.subr.mxu0 0.0
    %5116 = vmatpush1.msra.mxu0 %v5083
    %5117 = vmatprep.subr.mxu0 0.0
    %5118 = vmatpush1.msra.mxu0 %v5082
    %5119 = vmatprep.subr.mxu0 0.0
    %5120 = vmatpush1.msra.mxu0 %v5081
    %5121 = vmatprep.subr.mxu0 0.0
    %5122 = vmatpush1.msra.mxu0 %v5080
    %5123 = vmatprep.subr.mxu0 0.0
    %5124 = vmatpush2.msra.mxu0 0.0
    %5125 = vmatprep.subr.mxu0 0.0
    %5126 = vmatpush2.msra.mxu0 0.0
    %5127 = vmatprep.subr.mxu0 0.0
    %5128 = vmatpush2.msra.mxu0 0.0
    %5129 = vmatprep.subr.mxu0 0.0
    %5130 = vmatpush2.msra.mxu0 0.0
    %5131 = vmatprep.subr.mxu0 0.0
    %5132 = vmatpush2.msra.mxu0 0.0
    %5133 = vmatprep.subr.mxu0 0.0
    %5134 = vmatpush2.msra.mxu0 0.0
    %5135 = vmatprep.subr.mxu0 0.0
    %5136 = vmatpush2.msra.mxu0 0.0
    %5137 = vmatprep.subr.mxu0 0.0
    %5138 = vmatpush2.msra.mxu0 0.0
    %5139 = vmatprep.subr.mxu0 0.0
    %5140 = vmatpush2.msra.mxu0 0.0
    %5141 = vmatprep.subr.mxu0 0.0
    %5142 = vmatpush2.msra.mxu0 0.0
    %5143 = vmatprep.subr.mxu0 0.0
    %5144 = vmatpush2.msra.mxu0 0.0
    %5145 = vmatprep.subr.mxu0 0.0
    %5146 = vmatpush2.msra.mxu0 0.0
    %5147 = vmatprep.subr.mxu0 0.0
    %5148 = vmatpush2.msra.mxu0 0.0
    %5149 = vmatprep.subr.mxu0 0.0
    %5150 = vmatpush2.msra.mxu0 0.0
    %5151 = vmatprep.subr.mxu0 0.0
    %5152 = vmatpush2.msra.mxu0 0.0
    %5153 = vmatprep.subr.mxu0 0.0
    %5154 = vmatpush2.msra.mxu0 0.0
    %5155 = vmatprep.mubr.f32.mxu0 0.0
    %5156 = vmatmul.mubr.f32.gmra.mxu0 %v5008
    %v5157 = vpop.f32.mrf.mxu0
    %v5158 = vadd.f32 %v5089, %v5157
    %v5159 = vpop.f32.mrf.mxu0
    %5160 = vdwg.mxu0
    %v5161 = vld [vmem:[%s1071] sm:$0xff]
    %v5162 = vld [vmem:[%s1071 + $0x8] sm:$0xff]
    %v5163 = vld [vmem:[%s1071 + $0x10] sm:$0xff]
    %v5164 = vld [vmem:[%s1071 + $0x18] sm:$0xff]
    %v5165 = vld [vmem:[%s1076] sm:$0x1]
    %v5167 = vlaneseq
    %v5168 = vshrl.u32 %v5167, 7
    %v5169 = vsub.s32 0, %v5168
    %v5170 = vrot.slane %v5165, %v5169
    %5172 = vmatprep.subr.mxu0 0.0
    %5173 = vmatpush1.msra.mxu0 0.0
    %5174 = vmatprep.subr.mxu0 0.0
    %5175 = vmatpush1.msra.mxu0 0.0
    %5176 = vmatprep.subr.mxu0 0.0
    %5177 = vmatpush1.msra.mxu0 0.0
    %5178 = vmatprep.subr.mxu0 0.0
    %5179 = vmatpush1.msra.mxu0 0.0
    %5180 = vmatprep.subr.mxu0 0.0
    %5181 = vmatpush1.msra.mxu0 0.0
    %5182 = vmatprep.subr.mxu0 0.0
    %5183 = vmatpush1.msra.mxu0 0.0
    %5184 = vmatprep.subr.mxu0 0.0
    %5185 = vmatpush1.msra.mxu0 0.0
    %5186 = vmatprep.subr.mxu0 0.0
    %5187 = vmatpush1.msra.mxu0 0.0
    %5188 = vmatprep.subr.mxu0 0.0
    %5189 = vmatpush1.msra.mxu0 0.0
    %5190 = vmatprep.subr.mxu0 0.0
    %5191 = vmatpush1.msra.mxu0 0.0
    %5192 = vmatprep.subr.mxu0 0.0
    %5193 = vmatpush1.msra.mxu0 0.0
    %5194 = vmatprep.subr.mxu0 0.0
    %5195 = vmatpush1.msra.mxu0 0.0
    %5196 = vmatprep.subr.mxu0 0.0
    %5197 = vmatpush1.msra.mxu0 %v5164
    %5198 = vmatprep.subr.mxu0 0.0
    %5199 = vmatpush1.msra.mxu0 %v5163
    %5200 = vmatprep.subr.mxu0 0.0
    %5201 = vmatpush1.msra.mxu0 %v5162
    %5202 = vmatprep.subr.mxu0 0.0
    %5203 = vmatpush1.msra.mxu0 %v5161
    %5204 = vmatprep.subr.mxu0 0.0
    %5205 = vmatpush2.msra.mxu0 0.0
    %5206 = vmatprep.subr.mxu0 0.0
    %5207 = vmatpush2.msra.mxu0 0.0
    %5208 = vmatprep.subr.mxu0 0.0
    %5209 = vmatpush2.msra.mxu0 0.0
    %5210 = vmatprep.subr.mxu0 0.0
    %5211 = vmatpush2.msra.mxu0 0.0
    %5212 = vmatprep.subr.mxu0 0.0
    %5213 = vmatpush2.msra.mxu0 0.0
    %5214 = vmatprep.subr.mxu0 0.0
    %5215 = vmatpush2.msra.mxu0 0.0
    %5216 = vmatprep.subr.mxu0 0.0
    %5217 = vmatpush2.msra.mxu0 0.0
    %5218 = vmatprep.subr.mxu0 0.0
    %5219 = vmatpush2.msra.mxu0 0.0
    %5220 = vmatprep.subr.mxu0 0.0
    %5221 = vmatpush2.msra.mxu0 0.0
    %5222 = vmatprep.subr.mxu0 0.0
    %5223 = vmatpush2.msra.mxu0 0.0
    %5224 = vmatprep.subr.mxu0 0.0
    %5225 = vmatpush2.msra.mxu0 0.0
    %5226 = vmatprep.subr.mxu0 0.0
    %5227 = vmatpush2.msra.mxu0 0.0
    %5228 = vmatprep.subr.mxu0 0.0
    %5229 = vmatpush2.msra.mxu0 0.0
    %5230 = vmatprep.subr.mxu0 0.0
    %5231 = vmatpush2.msra.mxu0 0.0
    %5232 = vmatprep.subr.mxu0 0.0
    %5233 = vmatpush2.msra.mxu0 0.0
    %5234 = vmatprep.subr.mxu0 0.0
    %5235 = vmatpush2.msra.mxu0 0.0
    %5236 = vmatprep.mubr.f32.mxu0 0.0
    %5237 = vmatmul.mubr.f32.gmra.mxu0 %v5008
    %v5238 = vpop.f32.mrf.mxu0
    %v5239 = vadd.f32 %v5170, %v5238
    %v5240 = vpop.f32.mrf.mxu0
    %5241 = vdwg.mxu0
    %v5242 = vadd.f32 %v4835, %v5077
    %v5243 = vxor.u32 %v5242, 2147483648
    %v5244 = vmul.f32 %v5243, 1.442695
    %v5245 = vpow.pop %v5244
    %v5246 = vadd.f32 %v5245, 1.0
    %v5247 = vrcp.pop %v5246
    %v5248 = vmul.f32 1.0, %v5247
    %v5249 = vadd.f32 %v4914, %v5158
    %v5250 = vxor.u32 %v5249, 2147483648
    %v5251 = vmul.f32 %v5250, 1.442695
    %v5252 = vpow.pop %v5251
    %v5253 = vadd.f32 %v5252, 1.0
    %v5254 = vrcp.pop %v5253
    %v5255 = vmul.f32 1.0, %v5254
    %v5256 = vmul.f32 %v5248, %v5239
    %v5257 = vadd.f32 %v4993, %v5256
    %v5258 = vtanh.pop %v5257
    %v5259 = vsub.f32 1.0, %v5255
    %v5260 = vmul.f32 %v5259, %v5258
    %v5261 = vmul.f32 %v5255, %v4240
    %v5262 = vadd.f32 %v5260, %v5261
    %s5263 = scalar_lea.vmem [#allocation16], 6
    %5264 = vst.msk [vmem:[%s5263] sm:$0x3] %vm656, %v5262
    %s5265 = scalar_lea.vmem [#allocation4], 10
    %v5266 = vld [vmem:[%s5265] sm:$0x3]
    %v5267 = vld [vmem:[#allocation9] sm:$0xff]
    %v5268 = vld [vmem:[#allocation9 + $0x8] sm:$0xff]
    %v5269 = vld [vmem:[%s4] sm:$0x1]
    %v5271 = vlaneseq
    %v5272 = vshrl.u32 %v5271, 7
    %v5273 = vsub.s32 0, %v5272
    %v5274 = vrot.slane %v5269, %v5273
    %v5277 = vsel %vm148, %v5266, 0
    %5279 = vmatprep.subr.mxu0 0.0
    %5280 = vmatpush1.msra.mxu0 0.0
    %5281 = vmatprep.subr.mxu0 0.0
    %5282 = vmatpush1.msra.mxu0 0.0
    %5283 = vmatprep.subr.mxu0 0.0
    %5284 = vmatpush1.msra.mxu0 0.0
    %5285 = vmatprep.subr.mxu0 0.0
    %5286 = vmatpush1.msra.mxu0 0.0
    %5287 = vmatprep.subr.mxu0 0.0
    %5288 = vmatpush1.msra.mxu0 0.0
    %5289 = vmatprep.subr.mxu0 0.0
    %5290 = vmatpush1.msra.mxu0 0.0
    %5291 = vmatprep.subr.mxu0 0.0
    %5292 = vmatpush1.msra.mxu0 0.0
    %5293 = vmatprep.subr.mxu0 0.0
    %5294 = vmatpush1.msra.mxu0 0.0
    %5295 = vmatprep.subr.mxu0 0.0
    %5296 = vmatpush1.msra.mxu0 0.0
    %5297 = vmatprep.subr.mxu0 0.0
    %5298 = vmatpush1.msra.mxu0 0.0
    %5299 = vmatprep.subr.mxu0 0.0
    %5300 = vmatpush1.msra.mxu0 0.0
    %5301 = vmatprep.subr.mxu0 0.0
    %5302 = vmatpush1.msra.mxu0 0.0
    %5303 = vmatprep.subr.mxu0 0.0
    %5304 = vmatpush1.msra.mxu0 0.0
    %5305 = vmatprep.subr.mxu0 0.0
    %5306 = vmatpush1.msra.mxu0 0.0
    %5307 = vmatprep.subr.mxu0 0.0
    %5308 = vmatpush1.msra.mxu0 %v5268
    %5309 = vmatprep.subr.mxu0 0.0
    %5310 = vmatpush1.msra.mxu0 %v5267
    %5311 = vmatprep.subr.mxu0 0.0
    %5312 = vmatpush2.msra.mxu0 0.0
    %5313 = vmatprep.subr.mxu0 0.0
    %5314 = vmatpush2.msra.mxu0 0.0
    %5315 = vmatprep.subr.mxu0 0.0
    %5316 = vmatpush2.msra.mxu0 0.0
    %5317 = vmatprep.subr.mxu0 0.0
    %5318 = vmatpush2.msra.mxu0 0.0
    %5319 = vmatprep.subr.mxu0 0.0
    %5320 = vmatpush2.msra.mxu0 0.0
    %5321 = vmatprep.subr.mxu0 0.0
    %5322 = vmatpush2.msra.mxu0 0.0
    %5323 = vmatprep.subr.mxu0 0.0
    %5324 = vmatpush2.msra.mxu0 0.0
    %5325 = vmatprep.subr.mxu0 0.0
    %5326 = vmatpush2.msra.mxu0 0.0
    %5327 = vmatprep.subr.mxu0 0.0
    %5328 = vmatpush2.msra.mxu0 0.0
    %5329 = vmatprep.subr.mxu0 0.0
    %5330 = vmatpush2.msra.mxu0 0.0
    %5331 = vmatprep.subr.mxu0 0.0
    %5332 = vmatpush2.msra.mxu0 0.0
    %5333 = vmatprep.subr.mxu0 0.0
    %5334 = vmatpush2.msra.mxu0 0.0
    %5335 = vmatprep.subr.mxu0 0.0
    %5336 = vmatpush2.msra.mxu0 0.0
    %5337 = vmatprep.subr.mxu0 0.0
    %5338 = vmatpush2.msra.mxu0 0.0
    %5339 = vmatprep.subr.mxu0 0.0
    %5340 = vmatpush2.msra.mxu0 0.0
    %5341 = vmatprep.subr.mxu0 0.0
    %5342 = vmatpush2.msra.mxu0 0.0
    %5343 = vmatprep.mubr.f32.mxu0 0.0
    %5344 = vmatmul.mubr.f32.gmra.mxu0 %v5277
    %v5345 = vpop.f32.mrf.mxu0
    %v5346 = vadd.f32 %v5274, %v5345
    %v5347 = vpop.f32.mrf.mxu0
    %5348 = vdwg.mxu0
    %v5349 = vld [vmem:[%s222] sm:$0xff]
    %v5350 = vld [vmem:[%s222 + $0x8] sm:$0xff]
    %v5351 = vld [vmem:[%s225] sm:$0x1]
    %v5353 = vlaneseq
    %v5354 = vshrl.u32 %v5353, 7
    %v5355 = vsub.s32 0, %v5354
    %v5356 = vrot.slane %v5351, %v5355
    %5358 = vmatprep.subr.mxu0 0.0
    %5359 = vmatpush1.msra.mxu0 0.0
    %5360 = vmatprep.subr.mxu0 0.0
    %5361 = vmatpush1.msra.mxu0 0.0
    %5362 = vmatprep.subr.mxu0 0.0
    %5363 = vmatpush1.msra.mxu0 0.0
    %5364 = vmatprep.subr.mxu0 0.0
    %5365 = vmatpush1.msra.mxu0 0.0
    %5366 = vmatprep.subr.mxu0 0.0
    %5367 = vmatpush1.msra.mxu0 0.0
    %5368 = vmatprep.subr.mxu0 0.0
    %5369 = vmatpush1.msra.mxu0 0.0
    %5370 = vmatprep.subr.mxu0 0.0
    %5371 = vmatpush1.msra.mxu0 0.0
    %5372 = vmatprep.subr.mxu0 0.0
    %5373 = vmatpush1.msra.mxu0 0.0
    %5374 = vmatprep.subr.mxu0 0.0
    %5375 = vmatpush1.msra.mxu0 0.0
    %5376 = vmatprep.subr.mxu0 0.0
    %5377 = vmatpush1.msra.mxu0 0.0
    %5378 = vmatprep.subr.mxu0 0.0
    %5379 = vmatpush1.msra.mxu0 0.0
    %5380 = vmatprep.subr.mxu0 0.0
    %5381 = vmatpush1.msra.mxu0 0.0
    %5382 = vmatprep.subr.mxu0 0.0
    %5383 = vmatpush1.msra.mxu0 0.0
    %5384 = vmatprep.subr.mxu0 0.0
    %5385 = vmatpush1.msra.mxu0 0.0
    %5386 = vmatprep.subr.mxu0 0.0
    %5387 = vmatpush1.msra.mxu0 %v5350
    %5388 = vmatprep.subr.mxu0 0.0
    %5389 = vmatpush1.msra.mxu0 %v5349
    %5390 = vmatprep.subr.mxu0 0.0
    %5391 = vmatpush2.msra.mxu0 0.0
    %5392 = vmatprep.subr.mxu0 0.0
    %5393 = vmatpush2.msra.mxu0 0.0
    %5394 = vmatprep.subr.mxu0 0.0
    %5395 = vmatpush2.msra.mxu0 0.0
    %5396 = vmatprep.subr.mxu0 0.0
    %5397 = vmatpush2.msra.mxu0 0.0
    %5398 = vmatprep.subr.mxu0 0.0
    %5399 = vmatpush2.msra.mxu0 0.0
    %5400 = vmatprep.subr.mxu0 0.0
    %5401 = vmatpush2.msra.mxu0 0.0
    %5402 = vmatprep.subr.mxu0 0.0
    %5403 = vmatpush2.msra.mxu0 0.0
    %5404 = vmatprep.subr.mxu0 0.0
    %5405 = vmatpush2.msra.mxu0 0.0
    %5406 = vmatprep.subr.mxu0 0.0
    %5407 = vmatpush2.msra.mxu0 0.0
    %5408 = vmatprep.subr.mxu0 0.0
    %5409 = vmatpush2.msra.mxu0 0.0
    %5410 = vmatprep.subr.mxu0 0.0
    %5411 = vmatpush2.msra.mxu0 0.0
    %5412 = vmatprep.subr.mxu0 0.0
    %5413 = vmatpush2.msra.mxu0 0.0
    %5414 = vmatprep.subr.mxu0 0.0
    %5415 = vmatpush2.msra.mxu0 0.0
    %5416 = vmatprep.subr.mxu0 0.0
    %5417 = vmatpush2.msra.mxu0 0.0
    %5418 = vmatprep.subr.mxu0 0.0
    %5419 = vmatpush2.msra.mxu0 0.0
    %5420 = vmatprep.subr.mxu0 0.0
    %5421 = vmatpush2.msra.mxu0 0.0
    %5422 = vmatprep.mubr.f32.mxu0 0.0
    %5423 = vmatmul.mubr.f32.gmra.mxu0 %v5277
    %v5424 = vpop.f32.mrf.mxu0
    %v5425 = vadd.f32 %v5356, %v5424
    %v5426 = vpop.f32.mrf.mxu0
    %5427 = vdwg.mxu0
    %v5428 = vld [vmem:[%s303] sm:$0xff]
    %v5429 = vld [vmem:[%s303 + $0x8] sm:$0xff]
    %v5430 = vld [vmem:[%s306] sm:$0x1]
    %v5432 = vlaneseq
    %v5433 = vshrl.u32 %v5432, 7
    %v5434 = vsub.s32 0, %v5433
    %v5435 = vrot.slane %v5430, %v5434
    %5437 = vmatprep.subr.mxu0 0.0
    %5438 = vmatpush1.msra.mxu0 0.0
    %5439 = vmatprep.subr.mxu0 0.0
    %5440 = vmatpush1.msra.mxu0 0.0
    %5441 = vmatprep.subr.mxu0 0.0
    %5442 = vmatpush1.msra.mxu0 0.0
    %5443 = vmatprep.subr.mxu0 0.0
    %5444 = vmatpush1.msra.mxu0 0.0
    %5445 = vmatprep.subr.mxu0 0.0
    %5446 = vmatpush1.msra.mxu0 0.0
    %5447 = vmatprep.subr.mxu0 0.0
    %5448 = vmatpush1.msra.mxu0 0.0
    %5449 = vmatprep.subr.mxu0 0.0
    %5450 = vmatpush1.msra.mxu0 0.0
    %5451 = vmatprep.subr.mxu0 0.0
    %5452 = vmatpush1.msra.mxu0 0.0
    %5453 = vmatprep.subr.mxu0 0.0
    %5454 = vmatpush1.msra.mxu0 0.0
    %5455 = vmatprep.subr.mxu0 0.0
    %5456 = vmatpush1.msra.mxu0 0.0
    %5457 = vmatprep.subr.mxu0 0.0
    %5458 = vmatpush1.msra.mxu0 0.0
    %5459 = vmatprep.subr.mxu0 0.0
    %5460 = vmatpush1.msra.mxu0 0.0
    %5461 = vmatprep.subr.mxu0 0.0
    %5462 = vmatpush1.msra.mxu0 0.0
    %5463 = vmatprep.subr.mxu0 0.0
    %5464 = vmatpush1.msra.mxu0 0.0
    %5465 = vmatprep.subr.mxu0 0.0
    %5466 = vmatpush1.msra.mxu0 %v5429
    %5467 = vmatprep.subr.mxu0 0.0
    %5468 = vmatpush1.msra.mxu0 %v5428
    %5469 = vmatprep.subr.mxu0 0.0
    %5470 = vmatpush2.msra.mxu0 0.0
    %5471 = vmatprep.subr.mxu0 0.0
    %5472 = vmatpush2.msra.mxu0 0.0
    %5473 = vmatprep.subr.mxu0 0.0
    %5474 = vmatpush2.msra.mxu0 0.0
    %5475 = vmatprep.subr.mxu0 0.0
    %5476 = vmatpush2.msra.mxu0 0.0
    %5477 = vmatprep.subr.mxu0 0.0
    %5478 = vmatpush2.msra.mxu0 0.0
    %5479 = vmatprep.subr.mxu0 0.0
    %5480 = vmatpush2.msra.mxu0 0.0
    %5481 = vmatprep.subr.mxu0 0.0
    %5482 = vmatpush2.msra.mxu0 0.0
    %5483 = vmatprep.subr.mxu0 0.0
    %5484 = vmatpush2.msra.mxu0 0.0
    %5485 = vmatprep.subr.mxu0 0.0
    %5486 = vmatpush2.msra.mxu0 0.0
    %5487 = vmatprep.subr.mxu0 0.0
    %5488 = vmatpush2.msra.mxu0 0.0
    %5489 = vmatprep.subr.mxu0 0.0
    %5490 = vmatpush2.msra.mxu0 0.0
    %5491 = vmatprep.subr.mxu0 0.0
    %5492 = vmatpush2.msra.mxu0 0.0
    %5493 = vmatprep.subr.mxu0 0.0
    %5494 = vmatpush2.msra.mxu0 0.0
    %5495 = vmatprep.subr.mxu0 0.0
    %5496 = vmatpush2.msra.mxu0 0.0
    %5497 = vmatprep.subr.mxu0 0.0
    %5498 = vmatpush2.msra.mxu0 0.0
    %5499 = vmatprep.subr.mxu0 0.0
    %5500 = vmatpush2.msra.mxu0 0.0
    %5501 = vmatprep.mubr.f32.mxu0 0.0
    %5502 = vmatmul.mubr.f32.gmra.mxu0 %v5277
    %v5503 = vpop.f32.mrf.mxu0
    %v5504 = vadd.f32 %v5435, %v5503
    %v5505 = vpop.f32.mrf.mxu0
    %5506 = vdwg.mxu0
    %v5507 = vld [vmem:[#allocation10] sm:$0xff]
    %v5508 = vld [vmem:[#allocation10 + $0x8] sm:$0xff]
    %v5509 = vld [vmem:[#allocation10 + $0x10] sm:$0xff]
    %v5510 = vld [vmem:[#allocation10 + $0x18] sm:$0xff]
    %v5511 = vld [vmem:[%s5] sm:$0x1]
    %v5513 = vlaneseq
    %v5514 = vshrl.u32 %v5513, 7
    %v5515 = vsub.s32 0, %v5514
    %v5516 = vrot.slane %v5511, %v5515
    %v5519 = vsel %vm395, %v4751, 0
    %5521 = vmatprep.subr.mxu0 0.0
    %5522 = vmatpush1.msra.mxu0 0.0
    %5523 = vmatprep.subr.mxu0 0.0
    %5524 = vmatpush1.msra.mxu0 0.0
    %5525 = vmatprep.subr.mxu0 0.0
    %5526 = vmatpush1.msra.mxu0 0.0
    %5527 = vmatprep.subr.mxu0 0.0
    %5528 = vmatpush1.msra.mxu0 0.0
    %5529 = vmatprep.subr.mxu0 0.0
    %5530 = vmatpush1.msra.mxu0 0.0
    %5531 = vmatprep.subr.mxu0 0.0
    %5532 = vmatpush1.msra.mxu0 0.0
    %5533 = vmatprep.subr.mxu0 0.0
    %5534 = vmatpush1.msra.mxu0 0.0
    %5535 = vmatprep.subr.mxu0 0.0
    %5536 = vmatpush1.msra.mxu0 0.0
    %5537 = vmatprep.subr.mxu0 0.0
    %5538 = vmatpush1.msra.mxu0 0.0
    %5539 = vmatprep.subr.mxu0 0.0
    %5540 = vmatpush1.msra.mxu0 0.0
    %5541 = vmatprep.subr.mxu0 0.0
    %5542 = vmatpush1.msra.mxu0 0.0
    %5543 = vmatprep.subr.mxu0 0.0
    %5544 = vmatpush1.msra.mxu0 0.0
    %5545 = vmatprep.subr.mxu0 0.0
    %5546 = vmatpush1.msra.mxu0 %v5510
    %5547 = vmatprep.subr.mxu0 0.0
    %5548 = vmatpush1.msra.mxu0 %v5509
    %5549 = vmatprep.subr.mxu0 0.0
    %5550 = vmatpush1.msra.mxu0 %v5508
    %5551 = vmatprep.subr.mxu0 0.0
    %5552 = vmatpush1.msra.mxu0 %v5507
    %5553 = vmatprep.subr.mxu0 0.0
    %5554 = vmatpush2.msra.mxu0 0.0
    %5555 = vmatprep.subr.mxu0 0.0
    %5556 = vmatpush2.msra.mxu0 0.0
    %5557 = vmatprep.subr.mxu0 0.0
    %5558 = vmatpush2.msra.mxu0 0.0
    %5559 = vmatprep.subr.mxu0 0.0
    %5560 = vmatpush2.msra.mxu0 0.0
    %5561 = vmatprep.subr.mxu0 0.0
    %5562 = vmatpush2.msra.mxu0 0.0
    %5563 = vmatprep.subr.mxu0 0.0
    %5564 = vmatpush2.msra.mxu0 0.0
    %5565 = vmatprep.subr.mxu0 0.0
    %5566 = vmatpush2.msra.mxu0 0.0
    %5567 = vmatprep.subr.mxu0 0.0
    %5568 = vmatpush2.msra.mxu0 0.0
    %5569 = vmatprep.subr.mxu0 0.0
    %5570 = vmatpush2.msra.mxu0 0.0
    %5571 = vmatprep.subr.mxu0 0.0
    %5572 = vmatpush2.msra.mxu0 0.0
    %5573 = vmatprep.subr.mxu0 0.0
    %5574 = vmatpush2.msra.mxu0 0.0
    %5575 = vmatprep.subr.mxu0 0.0
    %5576 = vmatpush2.msra.mxu0 0.0
    %5577 = vmatprep.subr.mxu0 0.0
    %5578 = vmatpush2.msra.mxu0 0.0
    %5579 = vmatprep.subr.mxu0 0.0
    %5580 = vmatpush2.msra.mxu0 0.0
    %5581 = vmatprep.subr.mxu0 0.0
    %5582 = vmatpush2.msra.mxu0 0.0
    %5583 = vmatprep.subr.mxu0 0.0
    %5584 = vmatpush2.msra.mxu0 0.0
    %5585 = vmatprep.mubr.f32.mxu0 0.0
    %5586 = vmatmul.mubr.f32.gmra.mxu0 %v5519
    %v5587 = vpop.f32.mrf.mxu0
    %v5588 = vadd.f32 %v5516, %v5587
    %v5589 = vpop.f32.mrf.mxu0
    %5590 = vdwg.mxu0
    %v5591 = vld [vmem:[%s469] sm:$0xff]
    %v5592 = vld [vmem:[%s469 + $0x8] sm:$0xff]
    %v5593 = vld [vmem:[%s469 + $0x10] sm:$0xff]
    %v5594 = vld [vmem:[%s469 + $0x18] sm:$0xff]
    %v5595 = vld [vmem:[%s474] sm:$0x1]
    %v5597 = vlaneseq
    %v5598 = vshrl.u32 %v5597, 7
    %v5599 = vsub.s32 0, %v5598
    %v5600 = vrot.slane %v5595, %v5599
    %5602 = vmatprep.subr.mxu0 0.0
    %5603 = vmatpush1.msra.mxu0 0.0
    %5604 = vmatprep.subr.mxu0 0.0
    %5605 = vmatpush1.msra.mxu0 0.0
    %5606 = vmatprep.subr.mxu0 0.0
    %5607 = vmatpush1.msra.mxu0 0.0
    %5608 = vmatprep.subr.mxu0 0.0
    %5609 = vmatpush1.msra.mxu0 0.0
    %5610 = vmatprep.subr.mxu0 0.0
    %5611 = vmatpush1.msra.mxu0 0.0
    %5612 = vmatprep.subr.mxu0 0.0
    %5613 = vmatpush1.msra.mxu0 0.0
    %5614 = vmatprep.subr.mxu0 0.0
    %5615 = vmatpush1.msra.mxu0 0.0
    %5616 = vmatprep.subr.mxu0 0.0
    %5617 = vmatpush1.msra.mxu0 0.0
    %5618 = vmatprep.subr.mxu0 0.0
    %5619 = vmatpush1.msra.mxu0 0.0
    %5620 = vmatprep.subr.mxu0 0.0
    %5621 = vmatpush1.msra.mxu0 0.0
    %5622 = vmatprep.subr.mxu0 0.0
    %5623 = vmatpush1.msra.mxu0 0.0
    %5624 = vmatprep.subr.mxu0 0.0
    %5625 = vmatpush1.msra.mxu0 0.0
    %5626 = vmatprep.subr.mxu0 0.0
    %5627 = vmatpush1.msra.mxu0 %v5594
    %5628 = vmatprep.subr.mxu0 0.0
    %5629 = vmatpush1.msra.mxu0 %v5593
    %5630 = vmatprep.subr.mxu0 0.0
    %5631 = vmatpush1.msra.mxu0 %v5592
    %5632 = vmatprep.subr.mxu0 0.0
    %5633 = vmatpush1.msra.mxu0 %v5591
    %5634 = vmatprep.subr.mxu0 0.0
    %5635 = vmatpush2.msra.mxu0 0.0
    %5636 = vmatprep.subr.mxu0 0.0
    %5637 = vmatpush2.msra.mxu0 0.0
    %5638 = vmatprep.subr.mxu0 0.0
    %5639 = vmatpush2.msra.mxu0 0.0
    %5640 = vmatprep.subr.mxu0 0.0
    %5641 = vmatpush2.msra.mxu0 0.0
    %5642 = vmatprep.subr.mxu0 0.0
    %5643 = vmatpush2.msra.mxu0 0.0
    %5644 = vmatprep.subr.mxu0 0.0
    %5645 = vmatpush2.msra.mxu0 0.0
    %5646 = vmatprep.subr.mxu0 0.0
    %5647 = vmatpush2.msra.mxu0 0.0
    %5648 = vmatprep.subr.mxu0 0.0
    %5649 = vmatpush2.msra.mxu0 0.0
    %5650 = vmatprep.subr.mxu0 0.0
    %5651 = vmatpush2.msra.mxu0 0.0
    %5652 = vmatprep.subr.mxu0 0.0
    %5653 = vmatpush2.msra.mxu0 0.0
    %5654 = vmatprep.subr.mxu0 0.0
    %5655 = vmatpush2.msra.mxu0 0.0
    %5656 = vmatprep.subr.mxu0 0.0
    %5657 = vmatpush2.msra.mxu0 0.0
    %5658 = vmatprep.subr.mxu0 0.0
    %5659 = vmatpush2.msra.mxu0 0.0
    %5660 = vmatprep.subr.mxu0 0.0
    %5661 = vmatpush2.msra.mxu0 0.0
    %5662 = vmatprep.subr.mxu0 0.0
    %5663 = vmatpush2.msra.mxu0 0.0
    %5664 = vmatprep.subr.mxu0 0.0
    %5665 = vmatpush2.msra.mxu0 0.0
    %5666 = vmatprep.mubr.f32.mxu0 0.0
    %5667 = vmatmul.mubr.f32.gmra.mxu0 %v5519
    %v5668 = vpop.f32.mrf.mxu0
    %v5669 = vadd.f32 %v5600, %v5668
    %v5670 = vpop.f32.mrf.mxu0
    %5671 = vdwg.mxu0
    %v5672 = vld [vmem:[%s552] sm:$0xff]
    %v5673 = vld [vmem:[%s552 + $0x8] sm:$0xff]
    %v5674 = vld [vmem:[%s552 + $0x10] sm:$0xff]
    %v5675 = vld [vmem:[%s552 + $0x18] sm:$0xff]
    %v5676 = vld [vmem:[%s557] sm:$0x1]
    %v5678 = vlaneseq
    %v5679 = vshrl.u32 %v5678, 7
    %v5680 = vsub.s32 0, %v5679
    %v5681 = vrot.slane %v5676, %v5680
    %5683 = vmatprep.subr.mxu0 0.0
    %5684 = vmatpush1.msra.mxu0 0.0
    %5685 = vmatprep.subr.mxu0 0.0
    %5686 = vmatpush1.msra.mxu0 0.0
    %5687 = vmatprep.subr.mxu0 0.0
    %5688 = vmatpush1.msra.mxu0 0.0
    %5689 = vmatprep.subr.mxu0 0.0
    %5690 = vmatpush1.msra.mxu0 0.0
    %5691 = vmatprep.subr.mxu0 0.0
    %5692 = vmatpush1.msra.mxu0 0.0
    %5693 = vmatprep.subr.mxu0 0.0
    %5694 = vmatpush1.msra.mxu0 0.0
    %5695 = vmatprep.subr.mxu0 0.0
    %5696 = vmatpush1.msra.mxu0 0.0
    %5697 = vmatprep.subr.mxu0 0.0
    %5698 = vmatpush1.msra.mxu0 0.0
    %5699 = vmatprep.subr.mxu0 0.0
    %5700 = vmatpush1.msra.mxu0 0.0
    %5701 = vmatprep.subr.mxu0 0.0
    %5702 = vmatpush1.msra.mxu0 0.0
    %5703 = vmatprep.subr.mxu0 0.0
    %5704 = vmatpush1.msra.mxu0 0.0
    %5705 = vmatprep.subr.mxu0 0.0
    %5706 = vmatpush1.msra.mxu0 0.0
    %5707 = vmatprep.subr.mxu0 0.0
    %5708 = vmatpush1.msra.mxu0 %v5675
    %5709 = vmatprep.subr.mxu0 0.0
    %5710 = vmatpush1.msra.mxu0 %v5674
    %5711 = vmatprep.subr.mxu0 0.0
    %5712 = vmatpush1.msra.mxu0 %v5673
    %5713 = vmatprep.subr.mxu0 0.0
    %5714 = vmatpush1.msra.mxu0 %v5672
    %5715 = vmatprep.subr.mxu0 0.0
    %5716 = vmatpush2.msra.mxu0 0.0
    %5717 = vmatprep.subr.mxu0 0.0
    %5718 = vmatpush2.msra.mxu0 0.0
    %5719 = vmatprep.subr.mxu0 0.0
    %5720 = vmatpush2.msra.mxu0 0.0
    %5721 = vmatprep.subr.mxu0 0.0
    %5722 = vmatpush2.msra.mxu0 0.0
    %5723 = vmatprep.subr.mxu0 0.0
    %5724 = vmatpush2.msra.mxu0 0.0
    %5725 = vmatprep.subr.mxu0 0.0
    %5726 = vmatpush2.msra.mxu0 0.0
    %5727 = vmatprep.subr.mxu0 0.0
    %5728 = vmatpush2.msra.mxu0 0.0
    %5729 = vmatprep.subr.mxu0 0.0
    %5730 = vmatpush2.msra.mxu0 0.0
    %5731 = vmatprep.subr.mxu0 0.0
    %5732 = vmatpush2.msra.mxu0 0.0
    %5733 = vmatprep.subr.mxu0 0.0
    %5734 = vmatpush2.msra.mxu0 0.0
    %5735 = vmatprep.subr.mxu0 0.0
    %5736 = vmatpush2.msra.mxu0 0.0
    %5737 = vmatprep.subr.mxu0 0.0
    %5738 = vmatpush2.msra.mxu0 0.0
    %5739 = vmatprep.subr.mxu0 0.0
    %5740 = vmatpush2.msra.mxu0 0.0
    %5741 = vmatprep.subr.mxu0 0.0
    %5742 = vmatpush2.msra.mxu0 0.0
    %5743 = vmatprep.subr.mxu0 0.0
    %5744 = vmatpush2.msra.mxu0 0.0
    %5745 = vmatprep.subr.mxu0 0.0
    %5746 = vmatpush2.msra.mxu0 0.0
    %5747 = vmatprep.mubr.f32.mxu0 0.0
    %5748 = vmatmul.mubr.f32.gmra.mxu0 %v5519
    %v5749 = vpop.f32.mrf.mxu0
    %v5750 = vadd.f32 %v5681, %v5749
    %v5751 = vpop.f32.mrf.mxu0
    %5752 = vdwg.mxu0
    %v5753 = vadd.f32 %v5346, %v5588
    %v5754 = vxor.u32 %v5753, 2147483648
    %v5755 = vmul.f32 %v5754, 1.442695
    %v5756 = vpow.pop %v5755
    %v5757 = vadd.f32 %v5756, 1.0
    %v5758 = vrcp.pop %v5757
    %v5759 = vmul.f32 1.0, %v5758
    %v5760 = vadd.f32 %v5425, %v5669
    %v5761 = vxor.u32 %v5760, 2147483648
    %v5762 = vmul.f32 %v5761, 1.442695
    %v5763 = vpow.pop %v5762
    %v5764 = vadd.f32 %v5763, 1.0
    %v5765 = vrcp.pop %v5764
    %v5766 = vmul.f32 1.0, %v5765
    %v5767 = vmul.f32 %v5759, %v5750
    %v5768 = vadd.f32 %v5504, %v5767
    %v5769 = vtanh.pop %v5768
    %v5770 = vsub.f32 1.0, %v5766
    %v5771 = vmul.f32 %v5770, %v5769
    %v5772 = vmul.f32 %v5766, %v4751
    %v5773 = vadd.f32 %v5771, %v5772
    %s5774 = scalar_lea.vmem [#allocation15], 10
    %5775 = vst.msk [vmem:[%s5774] sm:$0x3] %vm656, %v5773
    %s5776 = scalar_lea.vmem [#allocation7], 4
    %v5777 = vld [vmem:[%s5776] sm:$0x3]
    %v5778 = vld [vmem:[#allocation12] sm:$0xff]
    %v5779 = vld [vmem:[#allocation12 + $0x8] sm:$0xff]
    %v5780 = vld [vmem:[%s8] sm:$0x1]
    %v5782 = vlaneseq
    %v5783 = vshrl.u32 %v5782, 7
    %v5784 = vsub.s32 0, %v5783
    %v5785 = vrot.slane %v5780, %v5784
    %v5788 = vsel %vm148, %v5777, 0
    %5790 = vmatprep.subr.mxu0 0.0
    %5791 = vmatpush1.msra.mxu0 0.0
    %5792 = vmatprep.subr.mxu0 0.0
    %5793 = vmatpush1.msra.mxu0 0.0
    %5794 = vmatprep.subr.mxu0 0.0
    %5795 = vmatpush1.msra.mxu0 0.0
    %5796 = vmatprep.subr.mxu0 0.0
    %5797 = vmatpush1.msra.mxu0 0.0
    %5798 = vmatprep.subr.mxu0 0.0
    %5799 = vmatpush1.msra.mxu0 0.0
    %5800 = vmatprep.subr.mxu0 0.0
    %5801 = vmatpush1.msra.mxu0 0.0
    %5802 = vmatprep.subr.mxu0 0.0
    %5803 = vmatpush1.msra.mxu0 0.0
    %5804 = vmatprep.subr.mxu0 0.0
    %5805 = vmatpush1.msra.mxu0 0.0
    %5806 = vmatprep.subr.mxu0 0.0
    %5807 = vmatpush1.msra.mxu0 0.0
    %5808 = vmatprep.subr.mxu0 0.0
    %5809 = vmatpush1.msra.mxu0 0.0
    %5810 = vmatprep.subr.mxu0 0.0
    %5811 = vmatpush1.msra.mxu0 0.0
    %5812 = vmatprep.subr.mxu0 0.0
    %5813 = vmatpush1.msra.mxu0 0.0
    %5814 = vmatprep.subr.mxu0 0.0
    %5815 = vmatpush1.msra.mxu0 0.0
    %5816 = vmatprep.subr.mxu0 0.0
    %5817 = vmatpush1.msra.mxu0 0.0
    %5818 = vmatprep.subr.mxu0 0.0
    %5819 = vmatpush1.msra.mxu0 %v5779
    %5820 = vmatprep.subr.mxu0 0.0
    %5821 = vmatpush1.msra.mxu0 %v5778
    %5822 = vmatprep.subr.mxu0 0.0
    %5823 = vmatpush2.msra.mxu0 0.0
    %5824 = vmatprep.subr.mxu0 0.0
    %5825 = vmatpush2.msra.mxu0 0.0
    %5826 = vmatprep.subr.mxu0 0.0
    %5827 = vmatpush2.msra.mxu0 0.0
    %5828 = vmatprep.subr.mxu0 0.0
    %5829 = vmatpush2.msra.mxu0 0.0
    %5830 = vmatprep.subr.mxu0 0.0
    %5831 = vmatpush2.msra.mxu0 0.0
    %5832 = vmatprep.subr.mxu0 0.0
    %5833 = vmatpush2.msra.mxu0 0.0
    %5834 = vmatprep.subr.mxu0 0.0
    %5835 = vmatpush2.msra.mxu0 0.0
    %5836 = vmatprep.subr.mxu0 0.0
    %5837 = vmatpush2.msra.mxu0 0.0
    %5838 = vmatprep.subr.mxu0 0.0
    %5839 = vmatpush2.msra.mxu0 0.0
    %5840 = vmatprep.subr.mxu0 0.0
    %5841 = vmatpush2.msra.mxu0 0.0
    %5842 = vmatprep.subr.mxu0 0.0
    %5843 = vmatpush2.msra.mxu0 0.0
    %5844 = vmatprep.subr.mxu0 0.0
    %5845 = vmatpush2.msra.mxu0 0.0
    %5846 = vmatprep.subr.mxu0 0.0
    %5847 = vmatpush2.msra.mxu0 0.0
    %5848 = vmatprep.subr.mxu0 0.0
    %5849 = vmatpush2.msra.mxu0 0.0
    %5850 = vmatprep.subr.mxu0 0.0
    %5851 = vmatpush2.msra.mxu0 0.0
    %5852 = vmatprep.subr.mxu0 0.0
    %5853 = vmatpush2.msra.mxu0 0.0
    %5854 = vmatprep.mubr.f32.mxu0 0.0
    %5855 = vmatmul.mubr.f32.gmra.mxu0 %v5788
    %v5856 = vpop.f32.mrf.mxu0
    %v5857 = vadd.f32 %v5785, %v5856
    %v5858 = vpop.f32.mrf.mxu0
    %5859 = vdwg.mxu0
    %v5860 = vld [vmem:[%s742] sm:$0xff]
    %v5861 = vld [vmem:[%s742 + $0x8] sm:$0xff]
    %v5862 = vld [vmem:[%s745] sm:$0x1]
    %v5864 = vlaneseq
    %v5865 = vshrl.u32 %v5864, 7
    %v5866 = vsub.s32 0, %v5865
    %v5867 = vrot.slane %v5862, %v5866
    %5869 = vmatprep.subr.mxu0 0.0
    %5870 = vmatpush1.msra.mxu0 0.0
    %5871 = vmatprep.subr.mxu0 0.0
    %5872 = vmatpush1.msra.mxu0 0.0
    %5873 = vmatprep.subr.mxu0 0.0
    %5874 = vmatpush1.msra.mxu0 0.0
    %5875 = vmatprep.subr.mxu0 0.0
    %5876 = vmatpush1.msra.mxu0 0.0
    %5877 = vmatprep.subr.mxu0 0.0
    %5878 = vmatpush1.msra.mxu0 0.0
    %5879 = vmatprep.subr.mxu0 0.0
    %5880 = vmatpush1.msra.mxu0 0.0
    %5881 = vmatprep.subr.mxu0 0.0
    %5882 = vmatpush1.msra.mxu0 0.0
    %5883 = vmatprep.subr.mxu0 0.0
    %5884 = vmatpush1.msra.mxu0 0.0
    %5885 = vmatprep.subr.mxu0 0.0
    %5886 = vmatpush1.msra.mxu0 0.0
    %5887 = vmatprep.subr.mxu0 0.0
    %5888 = vmatpush1.msra.mxu0 0.0
    %5889 = vmatprep.subr.mxu0 0.0
    %5890 = vmatpush1.msra.mxu0 0.0
    %5891 = vmatprep.subr.mxu0 0.0
    %5892 = vmatpush1.msra.mxu0 0.0
    %5893 = vmatprep.subr.mxu0 0.0
    %5894 = vmatpush1.msra.mxu0 0.0
    %5895 = vmatprep.subr.mxu0 0.0
    %5896 = vmatpush1.msra.mxu0 0.0
    %5897 = vmatprep.subr.mxu0 0.0
    %5898 = vmatpush1.msra.mxu0 %v5861
    %5899 = vmatprep.subr.mxu0 0.0
    %5900 = vmatpush1.msra.mxu0 %v5860
    %5901 = vmatprep.subr.mxu0 0.0
    %5902 = vmatpush2.msra.mxu0 0.0
    %5903 = vmatprep.subr.mxu0 0.0
    %5904 = vmatpush2.msra.mxu0 0.0
    %5905 = vmatprep.subr.mxu0 0.0
    %5906 = vmatpush2.msra.mxu0 0.0
    %5907 = vmatprep.subr.mxu0 0.0
    %5908 = vmatpush2.msra.mxu0 0.0
    %5909 = vmatprep.subr.mxu0 0.0
    %5910 = vmatpush2.msra.mxu0 0.0
    %5911 = vmatprep.subr.mxu0 0.0
    %5912 = vmatpush2.msra.mxu0 0.0
    %5913 = vmatprep.subr.mxu0 0.0
    %5914 = vmatpush2.msra.mxu0 0.0
    %5915 = vmatprep.subr.mxu0 0.0
    %5916 = vmatpush2.msra.mxu0 0.0
    %5917 = vmatprep.subr.mxu0 0.0
    %5918 = vmatpush2.msra.mxu0 0.0
    %5919 = vmatprep.subr.mxu0 0.0
    %5920 = vmatpush2.msra.mxu0 0.0
    %5921 = vmatprep.subr.mxu0 0.0
    %5922 = vmatpush2.msra.mxu0 0.0
    %5923 = vmatprep.subr.mxu0 0.0
    %5924 = vmatpush2.msra.mxu0 0.0
    %5925 = vmatprep.subr.mxu0 0.0
    %5926 = vmatpush2.msra.mxu0 0.0
    %5927 = vmatprep.subr.mxu0 0.0
    %5928 = vmatpush2.msra.mxu0 0.0
    %5929 = vmatprep.subr.mxu0 0.0
    %5930 = vmatpush2.msra.mxu0 0.0
    %5931 = vmatprep.subr.mxu0 0.0
    %5932 = vmatpush2.msra.mxu0 0.0
    %5933 = vmatprep.mubr.f32.mxu0 0.0
    %5934 = vmatmul.mubr.f32.gmra.mxu0 %v5788
    %v5935 = vpop.f32.mrf.mxu0
    %v5936 = vadd.f32 %v5867, %v5935
    %v5937 = vpop.f32.mrf.mxu0
    %5938 = vdwg.mxu0
    %v5939 = vld [vmem:[%s823] sm:$0xff]
    %v5940 = vld [vmem:[%s823 + $0x8] sm:$0xff]
    %v5941 = vld [vmem:[%s826] sm:$0x1]
    %v5943 = vlaneseq
    %v5944 = vshrl.u32 %v5943, 7
    %v5945 = vsub.s32 0, %v5944
    %v5946 = vrot.slane %v5941, %v5945
    %5948 = vmatprep.subr.mxu0 0.0
    %5949 = vmatpush1.msra.mxu0 0.0
    %5950 = vmatprep.subr.mxu0 0.0
    %5951 = vmatpush1.msra.mxu0 0.0
    %5952 = vmatprep.subr.mxu0 0.0
    %5953 = vmatpush1.msra.mxu0 0.0
    %5954 = vmatprep.subr.mxu0 0.0
    %5955 = vmatpush1.msra.mxu0 0.0
    %5956 = vmatprep.subr.mxu0 0.0
    %5957 = vmatpush1.msra.mxu0 0.0
    %5958 = vmatprep.subr.mxu0 0.0
    %5959 = vmatpush1.msra.mxu0 0.0
    %5960 = vmatprep.subr.mxu0 0.0
    %5961 = vmatpush1.msra.mxu0 0.0
    %5962 = vmatprep.subr.mxu0 0.0
    %5963 = vmatpush1.msra.mxu0 0.0
    %5964 = vmatprep.subr.mxu0 0.0
    %5965 = vmatpush1.msra.mxu0 0.0
    %5966 = vmatprep.subr.mxu0 0.0
    %5967 = vmatpush1.msra.mxu0 0.0
    %5968 = vmatprep.subr.mxu0 0.0
    %5969 = vmatpush1.msra.mxu0 0.0
    %5970 = vmatprep.subr.mxu0 0.0
    %5971 = vmatpush1.msra.mxu0 0.0
    %5972 = vmatprep.subr.mxu0 0.0
    %5973 = vmatpush1.msra.mxu0 0.0
    %5974 = vmatprep.subr.mxu0 0.0
    %5975 = vmatpush1.msra.mxu0 0.0
    %5976 = vmatprep.subr.mxu0 0.0
    %5977 = vmatpush1.msra.mxu0 %v5940
    %5978 = vmatprep.subr.mxu0 0.0
    %5979 = vmatpush1.msra.mxu0 %v5939
    %5980 = vmatprep.subr.mxu0 0.0
    %5981 = vmatpush2.msra.mxu0 0.0
    %5982 = vmatprep.subr.mxu0 0.0
    %5983 = vmatpush2.msra.mxu0 0.0
    %5984 = vmatprep.subr.mxu0 0.0
    %5985 = vmatpush2.msra.mxu0 0.0
    %5986 = vmatprep.subr.mxu0 0.0
    %5987 = vmatpush2.msra.mxu0 0.0
    %5988 = vmatprep.subr.mxu0 0.0
    %5989 = vmatpush2.msra.mxu0 0.0
    %5990 = vmatprep.subr.mxu0 0.0
    %5991 = vmatpush2.msra.mxu0 0.0
    %5992 = vmatprep.subr.mxu0 0.0
    %5993 = vmatpush2.msra.mxu0 0.0
    %5994 = vmatprep.subr.mxu0 0.0
    %5995 = vmatpush2.msra.mxu0 0.0
    %5996 = vmatprep.subr.mxu0 0.0
    %5997 = vmatpush2.msra.mxu0 0.0
    %5998 = vmatprep.subr.mxu0 0.0
    %5999 = vmatpush2.msra.mxu0 0.0
    %6000 = vmatprep.subr.mxu0 0.0
    %6001 = vmatpush2.msra.mxu0 0.0
    %6002 = vmatprep.subr.mxu0 0.0
    %6003 = vmatpush2.msra.mxu0 0.0
    %6004 = vmatprep.subr.mxu0 0.0
    %6005 = vmatpush2.msra.mxu0 0.0
    %6006 = vmatprep.subr.mxu0 0.0
    %6007 = vmatpush2.msra.mxu0 0.0
    %6008 = vmatprep.subr.mxu0 0.0
    %6009 = vmatpush2.msra.mxu0 0.0
    %6010 = vmatprep.subr.mxu0 0.0
    %6011 = vmatpush2.msra.mxu0 0.0
    %6012 = vmatprep.mubr.f32.mxu0 0.0
    %6013 = vmatmul.mubr.f32.gmra.mxu0 %v5788
    %v6014 = vpop.f32.mrf.mxu0
    %v6015 = vadd.f32 %v5946, %v6014
    %v6016 = vpop.f32.mrf.mxu0
    %6017 = vdwg.mxu0
    %v6018 = vld [vmem:[#allocation13] sm:$0xff]
    %v6019 = vld [vmem:[#allocation13 + $0x8] sm:$0xff]
    %v6020 = vld [vmem:[#allocation13 + $0x10] sm:$0xff]
    %v6021 = vld [vmem:[#allocation13 + $0x18] sm:$0xff]
    %v6022 = vld [vmem:[%s9] sm:$0x1]
    %v6024 = vlaneseq
    %v6025 = vshrl.u32 %v6024, 7
    %v6026 = vsub.s32 0, %v6025
    %v6027 = vrot.slane %v6022, %v6026
    %v6030 = vsel %vm395, %v5262, 0
    %6032 = vmatprep.subr.mxu0 0.0
    %6033 = vmatpush1.msra.mxu0 0.0
    %6034 = vmatprep.subr.mxu0 0.0
    %6035 = vmatpush1.msra.mxu0 0.0
    %6036 = vmatprep.subr.mxu0 0.0
    %6037 = vmatpush1.msra.mxu0 0.0
    %6038 = vmatprep.subr.mxu0 0.0
    %6039 = vmatpush1.msra.mxu0 0.0
    %6040 = vmatprep.subr.mxu0 0.0
    %6041 = vmatpush1.msra.mxu0 0.0
    %6042 = vmatprep.subr.mxu0 0.0
    %6043 = vmatpush1.msra.mxu0 0.0
    %6044 = vmatprep.subr.mxu0 0.0
    %6045 = vmatpush1.msra.mxu0 0.0
    %6046 = vmatprep.subr.mxu0 0.0
    %6047 = vmatpush1.msra.mxu0 0.0
    %6048 = vmatprep.subr.mxu0 0.0
    %6049 = vmatpush1.msra.mxu0 0.0
    %6050 = vmatprep.subr.mxu0 0.0
    %6051 = vmatpush1.msra.mxu0 0.0
    %6052 = vmatprep.subr.mxu0 0.0
    %6053 = vmatpush1.msra.mxu0 0.0
    %6054 = vmatprep.subr.mxu0 0.0
    %6055 = vmatpush1.msra.mxu0 0.0
    %6056 = vmatprep.subr.mxu0 0.0
    %6057 = vmatpush1.msra.mxu0 %v6021
    %6058 = vmatprep.subr.mxu0 0.0
    %6059 = vmatpush1.msra.mxu0 %v6020
    %6060 = vmatprep.subr.mxu0 0.0
    %6061 = vmatpush1.msra.mxu0 %v6019
    %6062 = vmatprep.subr.mxu0 0.0
    %6063 = vmatpush1.msra.mxu0 %v6018
    %6064 = vmatprep.subr.mxu0 0.0
    %6065 = vmatpush2.msra.mxu0 0.0
    %6066 = vmatprep.subr.mxu0 0.0
    %6067 = vmatpush2.msra.mxu0 0.0
    %6068 = vmatprep.subr.mxu0 0.0
    %6069 = vmatpush2.msra.mxu0 0.0
    %6070 = vmatprep.subr.mxu0 0.0
    %6071 = vmatpush2.msra.mxu0 0.0
    %6072 = vmatprep.subr.mxu0 0.0
    %6073 = vmatpush2.msra.mxu0 0.0
    %6074 = vmatprep.subr.mxu0 0.0
    %6075 = vmatpush2.msra.mxu0 0.0
    %6076 = vmatprep.subr.mxu0 0.0
    %6077 = vmatpush2.msra.mxu0 0.0
    %6078 = vmatprep.subr.mxu0 0.0
    %6079 = vmatpush2.msra.mxu0 0.0
    %6080 = vmatprep.subr.mxu0 0.0
    %6081 = vmatpush2.msra.mxu0 0.0
    %6082 = vmatprep.subr.mxu0 0.0
    %6083 = vmatpush2.msra.mxu0 0.0
    %6084 = vmatprep.subr.mxu0 0.0
    %6085 = vmatpush2.msra.mxu0 0.0
    %6086 = vmatprep.subr.mxu0 0.0
    %6087 = vmatpush2.msra.mxu0 0.0
    %6088 = vmatprep.subr.mxu0 0.0
    %6089 = vmatpush2.msra.mxu0 0.0
    %6090 = vmatprep.subr.mxu0 0.0
    %6091 = vmatpush2.msra.mxu0 0.0
    %6092 = vmatprep.subr.mxu0 0.0
    %6093 = vmatpush2.msra.mxu0 0.0
    %6094 = vmatprep.subr.mxu0 0.0
    %6095 = vmatpush2.msra.mxu0 0.0
    %6096 = vmatprep.mubr.f32.mxu0 0.0
    %6097 = vmatmul.mubr.f32.gmra.mxu0 %v6030
    %v6098 = vpop.f32.mrf.mxu0
    %v6099 = vadd.f32 %v6027, %v6098
    %v6100 = vpop.f32.mrf.mxu0
    %6101 = vdwg.mxu0
    %v6102 = vld [vmem:[%s988] sm:$0xff]
    %v6103 = vld [vmem:[%s988 + $0x8] sm:$0xff]
    %v6104 = vld [vmem:[%s988 + $0x10] sm:$0xff]
    %v6105 = vld [vmem:[%s988 + $0x18] sm:$0xff]
    %v6106 = vld [vmem:[%s993] sm:$0x1]
    %v6108 = vlaneseq
    %v6109 = vshrl.u32 %v6108, 7
    %v6110 = vsub.s32 0, %v6109
    %v6111 = vrot.slane %v6106, %v6110
    %6113 = vmatprep.subr.mxu0 0.0
    %6114 = vmatpush1.msra.mxu0 0.0
    %6115 = vmatprep.subr.mxu0 0.0
    %6116 = vmatpush1.msra.mxu0 0.0
    %6117 = vmatprep.subr.mxu0 0.0
    %6118 = vmatpush1.msra.mxu0 0.0
    %6119 = vmatprep.subr.mxu0 0.0
    %6120 = vmatpush1.msra.mxu0 0.0
    %6121 = vmatprep.subr.mxu0 0.0
    %6122 = vmatpush1.msra.mxu0 0.0
    %6123 = vmatprep.subr.mxu0 0.0
    %6124 = vmatpush1.msra.mxu0 0.0
    %6125 = vmatprep.subr.mxu0 0.0
    %6126 = vmatpush1.msra.mxu0 0.0
    %6127 = vmatprep.subr.mxu0 0.0
    %6128 = vmatpush1.msra.mxu0 0.0
    %6129 = vmatprep.subr.mxu0 0.0
    %6130 = vmatpush1.msra.mxu0 0.0
    %6131 = vmatprep.subr.mxu0 0.0
    %6132 = vmatpush1.msra.mxu0 0.0
    %6133 = vmatprep.subr.mxu0 0.0
    %6134 = vmatpush1.msra.mxu0 0.0
    %6135 = vmatprep.subr.mxu0 0.0
    %6136 = vmatpush1.msra.mxu0 0.0
    %6137 = vmatprep.subr.mxu0 0.0
    %6138 = vmatpush1.msra.mxu0 %v6105
    %6139 = vmatprep.subr.mxu0 0.0
    %6140 = vmatpush1.msra.mxu0 %v6104
    %6141 = vmatprep.subr.mxu0 0.0
    %6142 = vmatpush1.msra.mxu0 %v6103
    %6143 = vmatprep.subr.mxu0 0.0
    %6144 = vmatpush1.msra.mxu0 %v6102
    %6145 = vmatprep.subr.mxu0 0.0
    %6146 = vmatpush2.msra.mxu0 0.0
    %6147 = vmatprep.subr.mxu0 0.0
    %6148 = vmatpush2.msra.mxu0 0.0
    %6149 = vmatprep.subr.mxu0 0.0
    %6150 = vmatpush2.msra.mxu0 0.0
    %6151 = vmatprep.subr.mxu0 0.0
    %6152 = vmatpush2.msra.mxu0 0.0
    %6153 = vmatprep.subr.mxu0 0.0
    %6154 = vmatpush2.msra.mxu0 0.0
    %6155 = vmatprep.subr.mxu0 0.0
    %6156 = vmatpush2.msra.mxu0 0.0
    %6157 = vmatprep.subr.mxu0 0.0
    %6158 = vmatpush2.msra.mxu0 0.0
    %6159 = vmatprep.subr.mxu0 0.0
    %6160 = vmatpush2.msra.mxu0 0.0
    %6161 = vmatprep.subr.mxu0 0.0
    %6162 = vmatpush2.msra.mxu0 0.0
    %6163 = vmatprep.subr.mxu0 0.0
    %6164 = vmatpush2.msra.mxu0 0.0
    %6165 = vmatprep.subr.mxu0 0.0
    %6166 = vmatpush2.msra.mxu0 0.0
    %6167 = vmatprep.subr.mxu0 0.0
    %6168 = vmatpush2.msra.mxu0 0.0
    %6169 = vmatprep.subr.mxu0 0.0
    %6170 = vmatpush2.msra.mxu0 0.0
    %6171 = vmatprep.subr.mxu0 0.0
    %6172 = vmatpush2.msra.mxu0 0.0
    %6173 = vmatprep.subr.mxu0 0.0
    %6174 = vmatpush2.msra.mxu0 0.0
    %6175 = vmatprep.subr.mxu0 0.0
    %6176 = vmatpush2.msra.mxu0 0.0
    %6177 = vmatprep.mubr.f32.mxu0 0.0
    %6178 = vmatmul.mubr.f32.gmra.mxu0 %v6030
    %v6179 = vpop.f32.mrf.mxu0
    %v6180 = vadd.f32 %v6111, %v6179
    %v6181 = vpop.f32.mrf.mxu0
    %6182 = vdwg.mxu0
    %v6183 = vld [vmem:[%s1071] sm:$0xff]
    %v6184 = vld [vmem:[%s1071 + $0x8] sm:$0xff]
    %v6185 = vld [vmem:[%s1071 + $0x10] sm:$0xff]
    %v6186 = vld [vmem:[%s1071 + $0x18] sm:$0xff]
    %v6187 = vld [vmem:[%s1076] sm:$0x1]
    %v6189 = vlaneseq
    %v6190 = vshrl.u32 %v6189, 7
    %v6191 = vsub.s32 0, %v6190
    %v6192 = vrot.slane %v6187, %v6191
    %6194 = vmatprep.subr.mxu0 0.0
    %6195 = vmatpush1.msra.mxu0 0.0
    %6196 = vmatprep.subr.mxu0 0.0
    %6197 = vmatpush1.msra.mxu0 0.0
    %6198 = vmatprep.subr.mxu0 0.0
    %6199 = vmatpush1.msra.mxu0 0.0
    %6200 = vmatprep.subr.mxu0 0.0
    %6201 = vmatpush1.msra.mxu0 0.0
    %6202 = vmatprep.subr.mxu0 0.0
    %6203 = vmatpush1.msra.mxu0 0.0
    %6204 = vmatprep.subr.mxu0 0.0
    %6205 = vmatpush1.msra.mxu0 0.0
    %6206 = vmatprep.subr.mxu0 0.0
    %6207 = vmatpush1.msra.mxu0 0.0
    %6208 = vmatprep.subr.mxu0 0.0
    %6209 = vmatpush1.msra.mxu0 0.0
    %6210 = vmatprep.subr.mxu0 0.0
    %6211 = vmatpush1.msra.mxu0 0.0
    %6212 = vmatprep.subr.mxu0 0.0
    %6213 = vmatpush1.msra.mxu0 0.0
    %6214 = vmatprep.subr.mxu0 0.0
    %6215 = vmatpush1.msra.mxu0 0.0
    %6216 = vmatprep.subr.mxu0 0.0
    %6217 = vmatpush1.msra.mxu0 0.0
    %6218 = vmatprep.subr.mxu0 0.0
    %6219 = vmatpush1.msra.mxu0 %v6186
    %6220 = vmatprep.subr.mxu0 0.0
    %6221 = vmatpush1.msra.mxu0 %v6185
    %6222 = vmatprep.subr.mxu0 0.0
    %6223 = vmatpush1.msra.mxu0 %v6184
    %6224 = vmatprep.subr.mxu0 0.0
    %6225 = vmatpush1.msra.mxu0 %v6183
    %6226 = vmatprep.subr.mxu0 0.0
    %6227 = vmatpush2.msra.mxu0 0.0
    %6228 = vmatprep.subr.mxu0 0.0
    %6229 = vmatpush2.msra.mxu0 0.0
    %6230 = vmatprep.subr.mxu0 0.0
    %6231 = vmatpush2.msra.mxu0 0.0
    %6232 = vmatprep.subr.mxu0 0.0
    %6233 = vmatpush2.msra.mxu0 0.0
    %6234 = vmatprep.subr.mxu0 0.0
    %6235 = vmatpush2.msra.mxu0 0.0
    %6236 = vmatprep.subr.mxu0 0.0
    %6237 = vmatpush2.msra.mxu0 0.0
    %6238 = vmatprep.subr.mxu0 0.0
    %6239 = vmatpush2.msra.mxu0 0.0
    %6240 = vmatprep.subr.mxu0 0.0
    %6241 = vmatpush2.msra.mxu0 0.0
    %6242 = vmatprep.subr.mxu0 0.0
    %6243 = vmatpush2.msra.mxu0 0.0
    %6244 = vmatprep.subr.mxu0 0.0
    %6245 = vmatpush2.msra.mxu0 0.0
    %6246 = vmatprep.subr.mxu0 0.0
    %6247 = vmatpush2.msra.mxu0 0.0
    %6248 = vmatprep.subr.mxu0 0.0
    %6249 = vmatpush2.msra.mxu0 0.0
    %6250 = vmatprep.subr.mxu0 0.0
    %6251 = vmatpush2.msra.mxu0 0.0
    %6252 = vmatprep.subr.mxu0 0.0
    %6253 = vmatpush2.msra.mxu0 0.0
    %6254 = vmatprep.subr.mxu0 0.0
    %6255 = vmatpush2.msra.mxu0 0.0
    %6256 = vmatprep.subr.mxu0 0.0
    %6257 = vmatpush2.msra.mxu0 0.0
    %6258 = vmatprep.mubr.f32.mxu0 0.0
    %6259 = vmatmul.mubr.f32.gmra.mxu0 %v6030
    %v6260 = vpop.f32.mrf.mxu0
    %v6261 = vadd.f32 %v6192, %v6260
    %v6262 = vpop.f32.mrf.mxu0
    %6263 = vdwg.mxu0
    %v6264 = vadd.f32 %v5857, %v6099
    %v6265 = vxor.u32 %v6264, 2147483648
    %v6266 = vmul.f32 %v6265, 1.442695
    %v6267 = vpow.pop %v6266
    %v6268 = vadd.f32 %v6267, 1.0
    %v6269 = vrcp.pop %v6268
    %v6270 = vmul.f32 1.0, %v6269
    %v6271 = vadd.f32 %v5936, %v6180
    %v6272 = vxor.u32 %v6271, 2147483648
    %v6273 = vmul.f32 %v6272, 1.442695
    %v6274 = vpow.pop %v6273
    %v6275 = vadd.f32 %v6274, 1.0
    %v6276 = vrcp.pop %v6275
    %v6277 = vmul.f32 1.0, %v6276
    %v6278 = vmul.f32 %v6270, %v6261
    %v6279 = vadd.f32 %v6015, %v6278
    %v6280 = vtanh.pop %v6279
    %v6281 = vsub.f32 1.0, %v6277
    %v6282 = vmul.f32 %v6281, %v6280
    %v6283 = vmul.f32 %v6277, %v5262
    %v6284 = vadd.f32 %v6282, %v6283
    %s6285 = scalar_lea.vmem [#allocation16], 4
    %6286 = vst.msk [vmem:[%s6285] sm:$0x3] %vm656, %v6284
    %s6287 = scalar_lea.vmem [#allocation4], 12
    %v6288 = vld [vmem:[%s6287] sm:$0x3]
    %v6289 = vld [vmem:[#allocation9] sm:$0xff]
    %v6290 = vld [vmem:[#allocation9 + $0x8] sm:$0xff]
    %v6291 = vld [vmem:[%s4] sm:$0x1]
    %v6293 = vlaneseq
    %v6294 = vshrl.u32 %v6293, 7
    %v6295 = vsub.s32 0, %v6294
    %v6296 = vrot.slane %v6291, %v6295
    %v6299 = vsel %vm148, %v6288, 0
    %6301 = vmatprep.subr.mxu0 0.0
    %6302 = vmatpush1.msra.mxu0 0.0
    %6303 = vmatprep.subr.mxu0 0.0
    %6304 = vmatpush1.msra.mxu0 0.0
    %6305 = vmatprep.subr.mxu0 0.0
    %6306 = vmatpush1.msra.mxu0 0.0
    %6307 = vmatprep.subr.mxu0 0.0
    %6308 = vmatpush1.msra.mxu0 0.0
    %6309 = vmatprep.subr.mxu0 0.0
    %6310 = vmatpush1.msra.mxu0 0.0
    %6311 = vmatprep.subr.mxu0 0.0
    %6312 = vmatpush1.msra.mxu0 0.0
    %6313 = vmatprep.subr.mxu0 0.0
    %6314 = vmatpush1.msra.mxu0 0.0
    %6315 = vmatprep.subr.mxu0 0.0
    %6316 = vmatpush1.msra.mxu0 0.0
    %6317 = vmatprep.subr.mxu0 0.0
    %6318 = vmatpush1.msra.mxu0 0.0
    %6319 = vmatprep.subr.mxu0 0.0
    %6320 = vmatpush1.msra.mxu0 0.0
    %6321 = vmatprep.subr.mxu0 0.0
    %6322 = vmatpush1.msra.mxu0 0.0
    %6323 = vmatprep.subr.mxu0 0.0
    %6324 = vmatpush1.msra.mxu0 0.0
    %6325 = vmatprep.subr.mxu0 0.0
    %6326 = vmatpush1.msra.mxu0 0.0
    %6327 = vmatprep.subr.mxu0 0.0
    %6328 = vmatpush1.msra.mxu0 0.0
    %6329 = vmatprep.subr.mxu0 0.0
    %6330 = vmatpush1.msra.mxu0 %v6290
    %6331 = vmatprep.subr.mxu0 0.0
    %6332 = vmatpush1.msra.mxu0 %v6289
    %6333 = vmatprep.subr.mxu0 0.0
    %6334 = vmatpush2.msra.mxu0 0.0
    %6335 = vmatprep.subr.mxu0 0.0
    %6336 = vmatpush2.msra.mxu0 0.0
    %6337 = vmatprep.subr.mxu0 0.0
    %6338 = vmatpush2.msra.mxu0 0.0
    %6339 = vmatprep.subr.mxu0 0.0
    %6340 = vmatpush2.msra.mxu0 0.0
    %6341 = vmatprep.subr.mxu0 0.0
    %6342 = vmatpush2.msra.mxu0 0.0
    %6343 = vmatprep.subr.mxu0 0.0
    %6344 = vmatpush2.msra.mxu0 0.0
    %6345 = vmatprep.subr.mxu0 0.0
    %6346 = vmatpush2.msra.mxu0 0.0
    %6347 = vmatprep.subr.mxu0 0.0
    %6348 = vmatpush2.msra.mxu0 0.0
    %6349 = vmatprep.subr.mxu0 0.0
    %6350 = vmatpush2.msra.mxu0 0.0
    %6351 = vmatprep.subr.mxu0 0.0
    %6352 = vmatpush2.msra.mxu0 0.0
    %6353 = vmatprep.subr.mxu0 0.0
    %6354 = vmatpush2.msra.mxu0 0.0
    %6355 = vmatprep.subr.mxu0 0.0
    %6356 = vmatpush2.msra.mxu0 0.0
    %6357 = vmatprep.subr.mxu0 0.0
    %6358 = vmatpush2.msra.mxu0 0.0
    %6359 = vmatprep.subr.mxu0 0.0
    %6360 = vmatpush2.msra.mxu0 0.0
    %6361 = vmatprep.subr.mxu0 0.0
    %6362 = vmatpush2.msra.mxu0 0.0
    %6363 = vmatprep.subr.mxu0 0.0
    %6364 = vmatpush2.msra.mxu0 0.0
    %6365 = vmatprep.mubr.f32.mxu0 0.0
    %6366 = vmatmul.mubr.f32.gmra.mxu0 %v6299
    %v6367 = vpop.f32.mrf.mxu0
    %v6368 = vadd.f32 %v6296, %v6367
    %v6369 = vpop.f32.mrf.mxu0
    %6370 = vdwg.mxu0
    %v6371 = vld [vmem:[%s222] sm:$0xff]
    %v6372 = vld [vmem:[%s222 + $0x8] sm:$0xff]
    %v6373 = vld [vmem:[%s225] sm:$0x1]
    %v6375 = vlaneseq
    %v6376 = vshrl.u32 %v6375, 7
    %v6377 = vsub.s32 0, %v6376
    %v6378 = vrot.slane %v6373, %v6377
    %6380 = vmatprep.subr.mxu0 0.0
    %6381 = vmatpush1.msra.mxu0 0.0
    %6382 = vmatprep.subr.mxu0 0.0
    %6383 = vmatpush1.msra.mxu0 0.0
    %6384 = vmatprep.subr.mxu0 0.0
    %6385 = vmatpush1.msra.mxu0 0.0
    %6386 = vmatprep.subr.mxu0 0.0
    %6387 = vmatpush1.msra.mxu0 0.0
    %6388 = vmatprep.subr.mxu0 0.0
    %6389 = vmatpush1.msra.mxu0 0.0
    %6390 = vmatprep.subr.mxu0 0.0
    %6391 = vmatpush1.msra.mxu0 0.0
    %6392 = vmatprep.subr.mxu0 0.0
    %6393 = vmatpush1.msra.mxu0 0.0
    %6394 = vmatprep.subr.mxu0 0.0
    %6395 = vmatpush1.msra.mxu0 0.0
    %6396 = vmatprep.subr.mxu0 0.0
    %6397 = vmatpush1.msra.mxu0 0.0
    %6398 = vmatprep.subr.mxu0 0.0
    %6399 = vmatpush1.msra.mxu0 0.0
    %6400 = vmatprep.subr.mxu0 0.0
    %6401 = vmatpush1.msra.mxu0 0.0
    %6402 = vmatprep.subr.mxu0 0.0
    %6403 = vmatpush1.msra.mxu0 0.0
    %6404 = vmatprep.subr.mxu0 0.0
    %6405 = vmatpush1.msra.mxu0 0.0
    %6406 = vmatprep.subr.mxu0 0.0
    %6407 = vmatpush1.msra.mxu0 0.0
    %6408 = vmatprep.subr.mxu0 0.0
    %6409 = vmatpush1.msra.mxu0 %v6372
    %6410 = vmatprep.subr.mxu0 0.0
    %6411 = vmatpush1.msra.mxu0 %v6371
    %6412 = vmatprep.subr.mxu0 0.0
    %6413 = vmatpush2.msra.mxu0 0.0
    %6414 = vmatprep.subr.mxu0 0.0
    %6415 = vmatpush2.msra.mxu0 0.0
    %6416 = vmatprep.subr.mxu0 0.0
    %6417 = vmatpush2.msra.mxu0 0.0
    %6418 = vmatprep.subr.mxu0 0.0
    %6419 = vmatpush2.msra.mxu0 0.0
    %6420 = vmatprep.subr.mxu0 0.0
    %6421 = vmatpush2.msra.mxu0 0.0
    %6422 = vmatprep.subr.mxu0 0.0
    %6423 = vmatpush2.msra.mxu0 0.0
    %6424 = vmatprep.subr.mxu0 0.0
    %6425 = vmatpush2.msra.mxu0 0.0
    %6426 = vmatprep.subr.mxu0 0.0
    %6427 = vmatpush2.msra.mxu0 0.0
    %6428 = vmatprep.subr.mxu0 0.0
    %6429 = vmatpush2.msra.mxu0 0.0
    %6430 = vmatprep.subr.mxu0 0.0
    %6431 = vmatpush2.msra.mxu0 0.0
    %6432 = vmatprep.subr.mxu0 0.0
    %6433 = vmatpush2.msra.mxu0 0.0
    %6434 = vmatprep.subr.mxu0 0.0
    %6435 = vmatpush2.msra.mxu0 0.0
    %6436 = vmatprep.subr.mxu0 0.0
    %6437 = vmatpush2.msra.mxu0 0.0
    %6438 = vmatprep.subr.mxu0 0.0
    %6439 = vmatpush2.msra.mxu0 0.0
    %6440 = vmatprep.subr.mxu0 0.0
    %6441 = vmatpush2.msra.mxu0 0.0
    %6442 = vmatprep.subr.mxu0 0.0
    %6443 = vmatpush2.msra.mxu0 0.0
    %6444 = vmatprep.mubr.f32.mxu0 0.0
    %6445 = vmatmul.mubr.f32.gmra.mxu0 %v6299
    %v6446 = vpop.f32.mrf.mxu0
    %v6447 = vadd.f32 %v6378, %v6446
    %v6448 = vpop.f32.mrf.mxu0
    %6449 = vdwg.mxu0
    %v6450 = vld [vmem:[%s303] sm:$0xff]
    %v6451 = vld [vmem:[%s303 + $0x8] sm:$0xff]
    %v6452 = vld [vmem:[%s306] sm:$0x1]
    %v6454 = vlaneseq
    %v6455 = vshrl.u32 %v6454, 7
    %v6456 = vsub.s32 0, %v6455
    %v6457 = vrot.slane %v6452, %v6456
    %6459 = vmatprep.subr.mxu0 0.0
    %6460 = vmatpush1.msra.mxu0 0.0
    %6461 = vmatprep.subr.mxu0 0.0
    %6462 = vmatpush1.msra.mxu0 0.0
    %6463 = vmatprep.subr.mxu0 0.0
    %6464 = vmatpush1.msra.mxu0 0.0
    %6465 = vmatprep.subr.mxu0 0.0
    %6466 = vmatpush1.msra.mxu0 0.0
    %6467 = vmatprep.subr.mxu0 0.0
    %6468 = vmatpush1.msra.mxu0 0.0
    %6469 = vmatprep.subr.mxu0 0.0
    %6470 = vmatpush1.msra.mxu0 0.0
    %6471 = vmatprep.subr.mxu0 0.0
    %6472 = vmatpush1.msra.mxu0 0.0
    %6473 = vmatprep.subr.mxu0 0.0
    %6474 = vmatpush1.msra.mxu0 0.0
    %6475 = vmatprep.subr.mxu0 0.0
    %6476 = vmatpush1.msra.mxu0 0.0
    %6477 = vmatprep.subr.mxu0 0.0
    %6478 = vmatpush1.msra.mxu0 0.0
    %6479 = vmatprep.subr.mxu0 0.0
    %6480 = vmatpush1.msra.mxu0 0.0
    %6481 = vmatprep.subr.mxu0 0.0
    %6482 = vmatpush1.msra.mxu0 0.0
    %6483 = vmatprep.subr.mxu0 0.0
    %6484 = vmatpush1.msra.mxu0 0.0
    %6485 = vmatprep.subr.mxu0 0.0
    %6486 = vmatpush1.msra.mxu0 0.0
    %6487 = vmatprep.subr.mxu0 0.0
    %6488 = vmatpush1.msra.mxu0 %v6451
    %6489 = vmatprep.subr.mxu0 0.0
    %6490 = vmatpush1.msra.mxu0 %v6450
    %6491 = vmatprep.subr.mxu0 0.0
    %6492 = vmatpush2.msra.mxu0 0.0
    %6493 = vmatprep.subr.mxu0 0.0
    %6494 = vmatpush2.msra.mxu0 0.0
    %6495 = vmatprep.subr.mxu0 0.0
    %6496 = vmatpush2.msra.mxu0 0.0
    %6497 = vmatprep.subr.mxu0 0.0
    %6498 = vmatpush2.msra.mxu0 0.0
    %6499 = vmatprep.subr.mxu0 0.0
    %6500 = vmatpush2.msra.mxu0 0.0
    %6501 = vmatprep.subr.mxu0 0.0
    %6502 = vmatpush2.msra.mxu0 0.0
    %6503 = vmatprep.subr.mxu0 0.0
    %6504 = vmatpush2.msra.mxu0 0.0
    %6505 = vmatprep.subr.mxu0 0.0
    %6506 = vmatpush2.msra.mxu0 0.0
    %6507 = vmatprep.subr.mxu0 0.0
    %6508 = vmatpush2.msra.mxu0 0.0
    %6509 = vmatprep.subr.mxu0 0.0
    %6510 = vmatpush2.msra.mxu0 0.0
    %6511 = vmatprep.subr.mxu0 0.0
    %6512 = vmatpush2.msra.mxu0 0.0
    %6513 = vmatprep.subr.mxu0 0.0
    %6514 = vmatpush2.msra.mxu0 0.0
    %6515 = vmatprep.subr.mxu0 0.0
    %6516 = vmatpush2.msra.mxu0 0.0
    %6517 = vmatprep.subr.mxu0 0.0
    %6518 = vmatpush2.msra.mxu0 0.0
    %6519 = vmatprep.subr.mxu0 0.0
    %6520 = vmatpush2.msra.mxu0 0.0
    %6521 = vmatprep.subr.mxu0 0.0
    %6522 = vmatpush2.msra.mxu0 0.0
    %6523 = vmatprep.mubr.f32.mxu0 0.0
    %6524 = vmatmul.mubr.f32.gmra.mxu0 %v6299
    %v6525 = vpop.f32.mrf.mxu0
    %v6526 = vadd.f32 %v6457, %v6525
    %v6527 = vpop.f32.mrf.mxu0
    %6528 = vdwg.mxu0
    %v6529 = vld [vmem:[#allocation10] sm:$0xff]
    %v6530 = vld [vmem:[#allocation10 + $0x8] sm:$0xff]
    %v6531 = vld [vmem:[#allocation10 + $0x10] sm:$0xff]
    %v6532 = vld [vmem:[#allocation10 + $0x18] sm:$0xff]
    %v6533 = vld [vmem:[%s5] sm:$0x1]
    %v6535 = vlaneseq
    %v6536 = vshrl.u32 %v6535, 7
    %v6537 = vsub.s32 0, %v6536
    %v6538 = vrot.slane %v6533, %v6537
    %v6541 = vsel %vm395, %v5773, 0
    %6543 = vmatprep.subr.mxu0 0.0
    %6544 = vmatpush1.msra.mxu0 0.0
    %6545 = vmatprep.subr.mxu0 0.0
    %6546 = vmatpush1.msra.mxu0 0.0
    %6547 = vmatprep.subr.mxu0 0.0
    %6548 = vmatpush1.msra.mxu0 0.0
    %6549 = vmatprep.subr.mxu0 0.0
    %6550 = vmatpush1.msra.mxu0 0.0
    %6551 = vmatprep.subr.mxu0 0.0
    %6552 = vmatpush1.msra.mxu0 0.0
    %6553 = vmatprep.subr.mxu0 0.0
    %6554 = vmatpush1.msra.mxu0 0.0
    %6555 = vmatprep.subr.mxu0 0.0
    %6556 = vmatpush1.msra.mxu0 0.0
    %6557 = vmatprep.subr.mxu0 0.0
    %6558 = vmatpush1.msra.mxu0 0.0
    %6559 = vmatprep.subr.mxu0 0.0
    %6560 = vmatpush1.msra.mxu0 0.0
    %6561 = vmatprep.subr.mxu0 0.0
    %6562 = vmatpush1.msra.mxu0 0.0
    %6563 = vmatprep.subr.mxu0 0.0
    %6564 = vmatpush1.msra.mxu0 0.0
    %6565 = vmatprep.subr.mxu0 0.0
    %6566 = vmatpush1.msra.mxu0 0.0
    %6567 = vmatprep.subr.mxu0 0.0
    %6568 = vmatpush1.msra.mxu0 %v6532
    %6569 = vmatprep.subr.mxu0 0.0
    %6570 = vmatpush1.msra.mxu0 %v6531
    %6571 = vmatprep.subr.mxu0 0.0
    %6572 = vmatpush1.msra.mxu0 %v6530
    %6573 = vmatprep.subr.mxu0 0.0
    %6574 = vmatpush1.msra.mxu0 %v6529
    %6575 = vmatprep.subr.mxu0 0.0
    %6576 = vmatpush2.msra.mxu0 0.0
    %6577 = vmatprep.subr.mxu0 0.0
    %6578 = vmatpush2.msra.mxu0 0.0
    %6579 = vmatprep.subr.mxu0 0.0
    %6580 = vmatpush2.msra.mxu0 0.0
    %6581 = vmatprep.subr.mxu0 0.0
    %6582 = vmatpush2.msra.mxu0 0.0
    %6583 = vmatprep.subr.mxu0 0.0
    %6584 = vmatpush2.msra.mxu0 0.0
    %6585 = vmatprep.subr.mxu0 0.0
    %6586 = vmatpush2.msra.mxu0 0.0
    %6587 = vmatprep.subr.mxu0 0.0
    %6588 = vmatpush2.msra.mxu0 0.0
    %6589 = vmatprep.subr.mxu0 0.0
    %6590 = vmatpush2.msra.mxu0 0.0
    %6591 = vmatprep.subr.mxu0 0.0
    %6592 = vmatpush2.msra.mxu0 0.0
    %6593 = vmatprep.subr.mxu0 0.0
    %6594 = vmatpush2.msra.mxu0 0.0
    %6595 = vmatprep.subr.mxu0 0.0
    %6596 = vmatpush2.msra.mxu0 0.0
    %6597 = vmatprep.subr.mxu0 0.0
    %6598 = vmatpush2.msra.mxu0 0.0
    %6599 = vmatprep.subr.mxu0 0.0
    %6600 = vmatpush2.msra.mxu0 0.0
    %6601 = vmatprep.subr.mxu0 0.0
    %6602 = vmatpush2.msra.mxu0 0.0
    %6603 = vmatprep.subr.mxu0 0.0
    %6604 = vmatpush2.msra.mxu0 0.0
    %6605 = vmatprep.subr.mxu0 0.0
    %6606 = vmatpush2.msra.mxu0 0.0
    %6607 = vmatprep.mubr.f32.mxu0 0.0
    %6608 = vmatmul.mubr.f32.gmra.mxu0 %v6541
    %v6609 = vpop.f32.mrf.mxu0
    %v6610 = vadd.f32 %v6538, %v6609
    %v6611 = vpop.f32.mrf.mxu0
    %6612 = vdwg.mxu0
    %v6613 = vld [vmem:[%s469] sm:$0xff]
    %v6614 = vld [vmem:[%s469 + $0x8] sm:$0xff]
    %v6615 = vld [vmem:[%s469 + $0x10] sm:$0xff]
    %v6616 = vld [vmem:[%s469 + $0x18] sm:$0xff]
    %v6617 = vld [vmem:[%s474] sm:$0x1]
    %v6619 = vlaneseq
    %v6620 = vshrl.u32 %v6619, 7
    %v6621 = vsub.s32 0, %v6620
    %v6622 = vrot.slane %v6617, %v6621
    %6624 = vmatprep.subr.mxu0 0.0
    %6625 = vmatpush1.msra.mxu0 0.0
    %6626 = vmatprep.subr.mxu0 0.0
    %6627 = vmatpush1.msra.mxu0 0.0
    %6628 = vmatprep.subr.mxu0 0.0
    %6629 = vmatpush1.msra.mxu0 0.0
    %6630 = vmatprep.subr.mxu0 0.0
    %6631 = vmatpush1.msra.mxu0 0.0
    %6632 = vmatprep.subr.mxu0 0.0
    %6633 = vmatpush1.msra.mxu0 0.0
    %6634 = vmatprep.subr.mxu0 0.0
    %6635 = vmatpush1.msra.mxu0 0.0
    %6636 = vmatprep.subr.mxu0 0.0
    %6637 = vmatpush1.msra.mxu0 0.0
    %6638 = vmatprep.subr.mxu0 0.0
    %6639 = vmatpush1.msra.mxu0 0.0
    %6640 = vmatprep.subr.mxu0 0.0
    %6641 = vmatpush1.msra.mxu0 0.0
    %6642 = vmatprep.subr.mxu0 0.0
    %6643 = vmatpush1.msra.mxu0 0.0
    %6644 = vmatprep.subr.mxu0 0.0
    %6645 = vmatpush1.msra.mxu0 0.0
    %6646 = vmatprep.subr.mxu0 0.0
    %6647 = vmatpush1.msra.mxu0 0.0
    %6648 = vmatprep.subr.mxu0 0.0
    %6649 = vmatpush1.msra.mxu0 %v6616
    %6650 = vmatprep.subr.mxu0 0.0
    %6651 = vmatpush1.msra.mxu0 %v6615
    %6652 = vmatprep.subr.mxu0 0.0
    %6653 = vmatpush1.msra.mxu0 %v6614
    %6654 = vmatprep.subr.mxu0 0.0
    %6655 = vmatpush1.msra.mxu0 %v6613
    %6656 = vmatprep.subr.mxu0 0.0
    %6657 = vmatpush2.msra.mxu0 0.0
    %6658 = vmatprep.subr.mxu0 0.0
    %6659 = vmatpush2.msra.mxu0 0.0
    %6660 = vmatprep.subr.mxu0 0.0
    %6661 = vmatpush2.msra.mxu0 0.0
    %6662 = vmatprep.subr.mxu0 0.0
    %6663 = vmatpush2.msra.mxu0 0.0
    %6664 = vmatprep.subr.mxu0 0.0
    %6665 = vmatpush2.msra.mxu0 0.0
    %6666 = vmatprep.subr.mxu0 0.0
    %6667 = vmatpush2.msra.mxu0 0.0
    %6668 = vmatprep.subr.mxu0 0.0
    %6669 = vmatpush2.msra.mxu0 0.0
    %6670 = vmatprep.subr.mxu0 0.0
    %6671 = vmatpush2.msra.mxu0 0.0
    %6672 = vmatprep.subr.mxu0 0.0
    %6673 = vmatpush2.msra.mxu0 0.0
    %6674 = vmatprep.subr.mxu0 0.0
    %6675 = vmatpush2.msra.mxu0 0.0
    %6676 = vmatprep.subr.mxu0 0.0
    %6677 = vmatpush2.msra.mxu0 0.0
    %6678 = vmatprep.subr.mxu0 0.0
    %6679 = vmatpush2.msra.mxu0 0.0
    %6680 = vmatprep.subr.mxu0 0.0
    %6681 = vmatpush2.msra.mxu0 0.0
    %6682 = vmatprep.subr.mxu0 0.0
    %6683 = vmatpush2.msra.mxu0 0.0
    %6684 = vmatprep.subr.mxu0 0.0
    %6685 = vmatpush2.msra.mxu0 0.0
    %6686 = vmatprep.subr.mxu0 0.0
    %6687 = vmatpush2.msra.mxu0 0.0
    %6688 = vmatprep.mubr.f32.mxu0 0.0
    %6689 = vmatmul.mubr.f32.gmra.mxu0 %v6541
    %v6690 = vpop.f32.mrf.mxu0
    %v6691 = vadd.f32 %v6622, %v6690
    %v6692 = vpop.f32.mrf.mxu0
    %6693 = vdwg.mxu0
    %v6694 = vld [vmem:[%s552] sm:$0xff]
    %v6695 = vld [vmem:[%s552 + $0x8] sm:$0xff]
    %v6696 = vld [vmem:[%s552 + $0x10] sm:$0xff]
    %v6697 = vld [vmem:[%s552 + $0x18] sm:$0xff]
    %v6698 = vld [vmem:[%s557] sm:$0x1]
    %v6700 = vlaneseq
    %v6701 = vshrl.u32 %v6700, 7
    %v6702 = vsub.s32 0, %v6701
    %v6703 = vrot.slane %v6698, %v6702
    %6705 = vmatprep.subr.mxu0 0.0
    %6706 = vmatpush1.msra.mxu0 0.0
    %6707 = vmatprep.subr.mxu0 0.0
    %6708 = vmatpush1.msra.mxu0 0.0
    %6709 = vmatprep.subr.mxu0 0.0
    %6710 = vmatpush1.msra.mxu0 0.0
    %6711 = vmatprep.subr.mxu0 0.0
    %6712 = vmatpush1.msra.mxu0 0.0
    %6713 = vmatprep.subr.mxu0 0.0
    %6714 = vmatpush1.msra.mxu0 0.0
    %6715 = vmatprep.subr.mxu0 0.0
    %6716 = vmatpush1.msra.mxu0 0.0
    %6717 = vmatprep.subr.mxu0 0.0
    %6718 = vmatpush1.msra.mxu0 0.0
    %6719 = vmatprep.subr.mxu0 0.0
    %6720 = vmatpush1.msra.mxu0 0.0
    %6721 = vmatprep.subr.mxu0 0.0
    %6722 = vmatpush1.msra.mxu0 0.0
    %6723 = vmatprep.subr.mxu0 0.0
    %6724 = vmatpush1.msra.mxu0 0.0
    %6725 = vmatprep.subr.mxu0 0.0
    %6726 = vmatpush1.msra.mxu0 0.0
    %6727 = vmatprep.subr.mxu0 0.0
    %6728 = vmatpush1.msra.mxu0 0.0
    %6729 = vmatprep.subr.mxu0 0.0
    %6730 = vmatpush1.msra.mxu0 %v6697
    %6731 = vmatprep.subr.mxu0 0.0
    %6732 = vmatpush1.msra.mxu0 %v6696
    %6733 = vmatprep.subr.mxu0 0.0
    %6734 = vmatpush1.msra.mxu0 %v6695
    %6735 = vmatprep.subr.mxu0 0.0
    %6736 = vmatpush1.msra.mxu0 %v6694
    %6737 = vmatprep.subr.mxu0 0.0
    %6738 = vmatpush2.msra.mxu0 0.0
    %6739 = vmatprep.subr.mxu0 0.0
    %6740 = vmatpush2.msra.mxu0 0.0
    %6741 = vmatprep.subr.mxu0 0.0
    %6742 = vmatpush2.msra.mxu0 0.0
    %6743 = vmatprep.subr.mxu0 0.0
    %6744 = vmatpush2.msra.mxu0 0.0
    %6745 = vmatprep.subr.mxu0 0.0
    %6746 = vmatpush2.msra.mxu0 0.0
    %6747 = vmatprep.subr.mxu0 0.0
    %6748 = vmatpush2.msra.mxu0 0.0
    %6749 = vmatprep.subr.mxu0 0.0
    %6750 = vmatpush2.msra.mxu0 0.0
    %6751 = vmatprep.subr.mxu0 0.0
    %6752 = vmatpush2.msra.mxu0 0.0
    %6753 = vmatprep.subr.mxu0 0.0
    %6754 = vmatpush2.msra.mxu0 0.0
    %6755 = vmatprep.subr.mxu0 0.0
    %6756 = vmatpush2.msra.mxu0 0.0
    %6757 = vmatprep.subr.mxu0 0.0
    %6758 = vmatpush2.msra.mxu0 0.0
    %6759 = vmatprep.subr.mxu0 0.0
    %6760 = vmatpush2.msra.mxu0 0.0
    %6761 = vmatprep.subr.mxu0 0.0
    %6762 = vmatpush2.msra.mxu0 0.0
    %6763 = vmatprep.subr.mxu0 0.0
    %6764 = vmatpush2.msra.mxu0 0.0
    %6765 = vmatprep.subr.mxu0 0.0
    %6766 = vmatpush2.msra.mxu0 0.0
    %6767 = vmatprep.subr.mxu0 0.0
    %6768 = vmatpush2.msra.mxu0 0.0
    %6769 = vmatprep.mubr.f32.mxu0 0.0
    %6770 = vmatmul.mubr.f32.gmra.mxu0 %v6541
    %v6771 = vpop.f32.mrf.mxu0
    %v6772 = vadd.f32 %v6703, %v6771
    %v6773 = vpop.f32.mrf.mxu0
    %6774 = vdwg.mxu0
    %v6775 = vadd.f32 %v6368, %v6610
    %v6776 = vxor.u32 %v6775, 2147483648
    %v6777 = vmul.f32 %v6776, 1.442695
    %v6778 = vpow.pop %v6777
    %v6779 = vadd.f32 %v6778, 1.0
    %v6780 = vrcp.pop %v6779
    %v6781 = vmul.f32 1.0, %v6780
    %v6782 = vadd.f32 %v6447, %v6691
    %v6783 = vxor.u32 %v6782, 2147483648
    %v6784 = vmul.f32 %v6783, 1.442695
    %v6785 = vpow.pop %v6784
    %v6786 = vadd.f32 %v6785, 1.0
    %v6787 = vrcp.pop %v6786
    %v6788 = vmul.f32 1.0, %v6787
    %v6789 = vmul.f32 %v6781, %v6772
    %v6790 = vadd.f32 %v6526, %v6789
    %v6791 = vtanh.pop %v6790
    %v6792 = vsub.f32 1.0, %v6788
    %v6793 = vmul.f32 %v6792, %v6791
    %v6794 = vmul.f32 %v6788, %v5773
    %v6795 = vadd.f32 %v6793, %v6794
    %s6796 = scalar_lea.vmem [#allocation15], 12
    %6797 = vst.msk [vmem:[%s6796] sm:$0x3] %vm656, %v6795
    %s6798 = scalar_lea.vmem [#allocation7], 2
    %v6799 = vld [vmem:[%s6798] sm:$0x3]
    %v6800 = vld [vmem:[#allocation12] sm:$0xff]
    %v6801 = vld [vmem:[#allocation12 + $0x8] sm:$0xff]
    %v6802 = vld [vmem:[%s8] sm:$0x1]
    %v6804 = vlaneseq
    %v6805 = vshrl.u32 %v6804, 7
    %v6806 = vsub.s32 0, %v6805
    %v6807 = vrot.slane %v6802, %v6806
    %v6810 = vsel %vm148, %v6799, 0
    %6812 = vmatprep.subr.mxu0 0.0
    %6813 = vmatpush1.msra.mxu0 0.0
    %6814 = vmatprep.subr.mxu0 0.0
    %6815 = vmatpush1.msra.mxu0 0.0
    %6816 = vmatprep.subr.mxu0 0.0
    %6817 = vmatpush1.msra.mxu0 0.0
    %6818 = vmatprep.subr.mxu0 0.0
    %6819 = vmatpush1.msra.mxu0 0.0
    %6820 = vmatprep.subr.mxu0 0.0
    %6821 = vmatpush1.msra.mxu0 0.0
    %6822 = vmatprep.subr.mxu0 0.0
    %6823 = vmatpush1.msra.mxu0 0.0
    %6824 = vmatprep.subr.mxu0 0.0
    %6825 = vmatpush1.msra.mxu0 0.0
    %6826 = vmatprep.subr.mxu0 0.0
    %6827 = vmatpush1.msra.mxu0 0.0
    %6828 = vmatprep.subr.mxu0 0.0
    %6829 = vmatpush1.msra.mxu0 0.0
    %6830 = vmatprep.subr.mxu0 0.0
    %6831 = vmatpush1.msra.mxu0 0.0
    %6832 = vmatprep.subr.mxu0 0.0
    %6833 = vmatpush1.msra.mxu0 0.0
    %6834 = vmatprep.subr.mxu0 0.0
    %6835 = vmatpush1.msra.mxu0 0.0
    %6836 = vmatprep.subr.mxu0 0.0
    %6837 = vmatpush1.msra.mxu0 0.0
    %6838 = vmatprep.subr.mxu0 0.0
    %6839 = vmatpush1.msra.mxu0 0.0
    %6840 = vmatprep.subr.mxu0 0.0
    %6841 = vmatpush1.msra.mxu0 %v6801
    %6842 = vmatprep.subr.mxu0 0.0
    %6843 = vmatpush1.msra.mxu0 %v6800
    %6844 = vmatprep.subr.mxu0 0.0
    %6845 = vmatpush2.msra.mxu0 0.0
    %6846 = vmatprep.subr.mxu0 0.0
    %6847 = vmatpush2.msra.mxu0 0.0
    %6848 = vmatprep.subr.mxu0 0.0
    %6849 = vmatpush2.msra.mxu0 0.0
    %6850 = vmatprep.subr.mxu0 0.0
    %6851 = vmatpush2.msra.mxu0 0.0
    %6852 = vmatprep.subr.mxu0 0.0
    %6853 = vmatpush2.msra.mxu0 0.0
    %6854 = vmatprep.subr.mxu0 0.0
    %6855 = vmatpush2.msra.mxu0 0.0
    %6856 = vmatprep.subr.mxu0 0.0
    %6857 = vmatpush2.msra.mxu0 0.0
    %6858 = vmatprep.subr.mxu0 0.0
    %6859 = vmatpush2.msra.mxu0 0.0
    %6860 = vmatprep.subr.mxu0 0.0
    %6861 = vmatpush2.msra.mxu0 0.0
    %6862 = vmatprep.subr.mxu0 0.0
    %6863 = vmatpush2.msra.mxu0 0.0
    %6864 = vmatprep.subr.mxu0 0.0
    %6865 = vmatpush2.msra.mxu0 0.0
    %6866 = vmatprep.subr.mxu0 0.0
    %6867 = vmatpush2.msra.mxu0 0.0
    %6868 = vmatprep.subr.mxu0 0.0
    %6869 = vmatpush2.msra.mxu0 0.0
    %6870 = vmatprep.subr.mxu0 0.0
    %6871 = vmatpush2.msra.mxu0 0.0
    %6872 = vmatprep.subr.mxu0 0.0
    %6873 = vmatpush2.msra.mxu0 0.0
    %6874 = vmatprep.subr.mxu0 0.0
    %6875 = vmatpush2.msra.mxu0 0.0
    %6876 = vmatprep.mubr.f32.mxu0 0.0
    %6877 = vmatmul.mubr.f32.gmra.mxu0 %v6810
    %v6878 = vpop.f32.mrf.mxu0
    %v6879 = vadd.f32 %v6807, %v6878
    %v6880 = vpop.f32.mrf.mxu0
    %6881 = vdwg.mxu0
    %v6882 = vld [vmem:[%s742] sm:$0xff]
    %v6883 = vld [vmem:[%s742 + $0x8] sm:$0xff]
    %v6884 = vld [vmem:[%s745] sm:$0x1]
    %v6886 = vlaneseq
    %v6887 = vshrl.u32 %v6886, 7
    %v6888 = vsub.s32 0, %v6887
    %v6889 = vrot.slane %v6884, %v6888
    %6891 = vmatprep.subr.mxu0 0.0
    %6892 = vmatpush1.msra.mxu0 0.0
    %6893 = vmatprep.subr.mxu0 0.0
    %6894 = vmatpush1.msra.mxu0 0.0
    %6895 = vmatprep.subr.mxu0 0.0
    %6896 = vmatpush1.msra.mxu0 0.0
    %6897 = vmatprep.subr.mxu0 0.0
    %6898 = vmatpush1.msra.mxu0 0.0
    %6899 = vmatprep.subr.mxu0 0.0
    %6900 = vmatpush1.msra.mxu0 0.0
    %6901 = vmatprep.subr.mxu0 0.0
    %6902 = vmatpush1.msra.mxu0 0.0
    %6903 = vmatprep.subr.mxu0 0.0
    %6904 = vmatpush1.msra.mxu0 0.0
    %6905 = vmatprep.subr.mxu0 0.0
    %6906 = vmatpush1.msra.mxu0 0.0
    %6907 = vmatprep.subr.mxu0 0.0
    %6908 = vmatpush1.msra.mxu0 0.0
    %6909 = vmatprep.subr.mxu0 0.0
    %6910 = vmatpush1.msra.mxu0 0.0
    %6911 = vmatprep.subr.mxu0 0.0
    %6912 = vmatpush1.msra.mxu0 0.0
    %6913 = vmatprep.subr.mxu0 0.0
    %6914 = vmatpush1.msra.mxu0 0.0
    %6915 = vmatprep.subr.mxu0 0.0
    %6916 = vmatpush1.msra.mxu0 0.0
    %6917 = vmatprep.subr.mxu0 0.0
    %6918 = vmatpush1.msra.mxu0 0.0
    %6919 = vmatprep.subr.mxu0 0.0
    %6920 = vmatpush1.msra.mxu0 %v6883
    %6921 = vmatprep.subr.mxu0 0.0
    %6922 = vmatpush1.msra.mxu0 %v6882
    %6923 = vmatprep.subr.mxu0 0.0
    %6924 = vmatpush2.msra.mxu0 0.0
    %6925 = vmatprep.subr.mxu0 0.0
    %6926 = vmatpush2.msra.mxu0 0.0
    %6927 = vmatprep.subr.mxu0 0.0
    %6928 = vmatpush2.msra.mxu0 0.0
    %6929 = vmatprep.subr.mxu0 0.0
    %6930 = vmatpush2.msra.mxu0 0.0
    %6931 = vmatprep.subr.mxu0 0.0
    %6932 = vmatpush2.msra.mxu0 0.0
    %6933 = vmatprep.subr.mxu0 0.0
    %6934 = vmatpush2.msra.mxu0 0.0
    %6935 = vmatprep.subr.mxu0 0.0
    %6936 = vmatpush2.msra.mxu0 0.0
    %6937 = vmatprep.subr.mxu0 0.0
    %6938 = vmatpush2.msra.mxu0 0.0
    %6939 = vmatprep.subr.mxu0 0.0
    %6940 = vmatpush2.msra.mxu0 0.0
    %6941 = vmatprep.subr.mxu0 0.0
    %6942 = vmatpush2.msra.mxu0 0.0
    %6943 = vmatprep.subr.mxu0 0.0
    %6944 = vmatpush2.msra.mxu0 0.0
    %6945 = vmatprep.subr.mxu0 0.0
    %6946 = vmatpush2.msra.mxu0 0.0
    %6947 = vmatprep.subr.mxu0 0.0
    %6948 = vmatpush2.msra.mxu0 0.0
    %6949 = vmatprep.subr.mxu0 0.0
    %6950 = vmatpush2.msra.mxu0 0.0
    %6951 = vmatprep.subr.mxu0 0.0
    %6952 = vmatpush2.msra.mxu0 0.0
    %6953 = vmatprep.subr.mxu0 0.0
    %6954 = vmatpush2.msra.mxu0 0.0
    %6955 = vmatprep.mubr.f32.mxu0 0.0
    %6956 = vmatmul.mubr.f32.gmra.mxu0 %v6810
    %v6957 = vpop.f32.mrf.mxu0
    %v6958 = vadd.f32 %v6889, %v6957
    %v6959 = vpop.f32.mrf.mxu0
    %6960 = vdwg.mxu0
    %v6961 = vld [vmem:[%s823] sm:$0xff]
    %v6962 = vld [vmem:[%s823 + $0x8] sm:$0xff]
    %v6963 = vld [vmem:[%s826] sm:$0x1]
    %v6965 = vlaneseq
    %v6966 = vshrl.u32 %v6965, 7
    %v6967 = vsub.s32 0, %v6966
    %v6968 = vrot.slane %v6963, %v6967
    %6970 = vmatprep.subr.mxu0 0.0
    %6971 = vmatpush1.msra.mxu0 0.0
    %6972 = vmatprep.subr.mxu0 0.0
    %6973 = vmatpush1.msra.mxu0 0.0
    %6974 = vmatprep.subr.mxu0 0.0
    %6975 = vmatpush1.msra.mxu0 0.0
    %6976 = vmatprep.subr.mxu0 0.0
    %6977 = vmatpush1.msra.mxu0 0.0
    %6978 = vmatprep.subr.mxu0 0.0
    %6979 = vmatpush1.msra.mxu0 0.0
    %6980 = vmatprep.subr.mxu0 0.0
    %6981 = vmatpush1.msra.mxu0 0.0
    %6982 = vmatprep.subr.mxu0 0.0
    %6983 = vmatpush1.msra.mxu0 0.0
    %6984 = vmatprep.subr.mxu0 0.0
    %6985 = vmatpush1.msra.mxu0 0.0
    %6986 = vmatprep.subr.mxu0 0.0
    %6987 = vmatpush1.msra.mxu0 0.0
    %6988 = vmatprep.subr.mxu0 0.0
    %6989 = vmatpush1.msra.mxu0 0.0
    %6990 = vmatprep.subr.mxu0 0.0
    %6991 = vmatpush1.msra.mxu0 0.0
    %6992 = vmatprep.subr.mxu0 0.0
    %6993 = vmatpush1.msra.mxu0 0.0
    %6994 = vmatprep.subr.mxu0 0.0
    %6995 = vmatpush1.msra.mxu0 0.0
    %6996 = vmatprep.subr.mxu0 0.0
    %6997 = vmatpush1.msra.mxu0 0.0
    %6998 = vmatprep.subr.mxu0 0.0
    %6999 = vmatpush1.msra.mxu0 %v6962
    %7000 = vmatprep.subr.mxu0 0.0
    %7001 = vmatpush1.msra.mxu0 %v6961
    %7002 = vmatprep.subr.mxu0 0.0
    %7003 = vmatpush2.msra.mxu0 0.0
    %7004 = vmatprep.subr.mxu0 0.0
    %7005 = vmatpush2.msra.mxu0 0.0
    %7006 = vmatprep.subr.mxu0 0.0
    %7007 = vmatpush2.msra.mxu0 0.0
    %7008 = vmatprep.subr.mxu0 0.0
    %7009 = vmatpush2.msra.mxu0 0.0
    %7010 = vmatprep.subr.mxu0 0.0
    %7011 = vmatpush2.msra.mxu0 0.0
    %7012 = vmatprep.subr.mxu0 0.0
    %7013 = vmatpush2.msra.mxu0 0.0
    %7014 = vmatprep.subr.mxu0 0.0
    %7015 = vmatpush2.msra.mxu0 0.0
    %7016 = vmatprep.subr.mxu0 0.0
    %7017 = vmatpush2.msra.mxu0 0.0
    %7018 = vmatprep.subr.mxu0 0.0
    %7019 = vmatpush2.msra.mxu0 0.0
    %7020 = vmatprep.subr.mxu0 0.0
    %7021 = vmatpush2.msra.mxu0 0.0
    %7022 = vmatprep.subr.mxu0 0.0
    %7023 = vmatpush2.msra.mxu0 0.0
    %7024 = vmatprep.subr.mxu0 0.0
    %7025 = vmatpush2.msra.mxu0 0.0
    %7026 = vmatprep.subr.mxu0 0.0
    %7027 = vmatpush2.msra.mxu0 0.0
    %7028 = vmatprep.subr.mxu0 0.0
    %7029 = vmatpush2.msra.mxu0 0.0
    %7030 = vmatprep.subr.mxu0 0.0
    %7031 = vmatpush2.msra.mxu0 0.0
    %7032 = vmatprep.subr.mxu0 0.0
    %7033 = vmatpush2.msra.mxu0 0.0
    %7034 = vmatprep.mubr.f32.mxu0 0.0
    %7035 = vmatmul.mubr.f32.gmra.mxu0 %v6810
    %v7036 = vpop.f32.mrf.mxu0
    %v7037 = vadd.f32 %v6968, %v7036
    %v7038 = vpop.f32.mrf.mxu0
    %7039 = vdwg.mxu0
    %v7040 = vld [vmem:[#allocation13] sm:$0xff]
    %v7041 = vld [vmem:[#allocation13 + $0x8] sm:$0xff]
    %v7042 = vld [vmem:[#allocation13 + $0x10] sm:$0xff]
    %v7043 = vld [vmem:[#allocation13 + $0x18] sm:$0xff]
    %v7044 = vld [vmem:[%s9] sm:$0x1]
    %v7046 = vlaneseq
    %v7047 = vshrl.u32 %v7046, 7
    %v7048 = vsub.s32 0, %v7047
    %v7049 = vrot.slane %v7044, %v7048
    %v7052 = vsel %vm395, %v6284, 0
    %7054 = vmatprep.subr.mxu0 0.0
    %7055 = vmatpush1.msra.mxu0 0.0
    %7056 = vmatprep.subr.mxu0 0.0
    %7057 = vmatpush1.msra.mxu0 0.0
    %7058 = vmatprep.subr.mxu0 0.0
    %7059 = vmatpush1.msra.mxu0 0.0
    %7060 = vmatprep.subr.mxu0 0.0
    %7061 = vmatpush1.msra.mxu0 0.0
    %7062 = vmatprep.subr.mxu0 0.0
    %7063 = vmatpush1.msra.mxu0 0.0
    %7064 = vmatprep.subr.mxu0 0.0
    %7065 = vmatpush1.msra.mxu0 0.0
    %7066 = vmatprep.subr.mxu0 0.0
    %7067 = vmatpush1.msra.mxu0 0.0
    %7068 = vmatprep.subr.mxu0 0.0
    %7069 = vmatpush1.msra.mxu0 0.0
    %7070 = vmatprep.subr.mxu0 0.0
    %7071 = vmatpush1.msra.mxu0 0.0
    %7072 = vmatprep.subr.mxu0 0.0
    %7073 = vmatpush1.msra.mxu0 0.0
    %7074 = vmatprep.subr.mxu0 0.0
    %7075 = vmatpush1.msra.mxu0 0.0
    %7076 = vmatprep.subr.mxu0 0.0
    %7077 = vmatpush1.msra.mxu0 0.0
    %7078 = vmatprep.subr.mxu0 0.0
    %7079 = vmatpush1.msra.mxu0 %v7043
    %7080 = vmatprep.subr.mxu0 0.0
    %7081 = vmatpush1.msra.mxu0 %v7042
    %7082 = vmatprep.subr.mxu0 0.0
    %7083 = vmatpush1.msra.mxu0 %v7041
    %7084 = vmatprep.subr.mxu0 0.0
    %7085 = vmatpush1.msra.mxu0 %v7040
    %7086 = vmatprep.subr.mxu0 0.0
    %7087 = vmatpush2.msra.mxu0 0.0
    %7088 = vmatprep.subr.mxu0 0.0
    %7089 = vmatpush2.msra.mxu0 0.0
    %7090 = vmatprep.subr.mxu0 0.0
    %7091 = vmatpush2.msra.mxu0 0.0
    %7092 = vmatprep.subr.mxu0 0.0
    %7093 = vmatpush2.msra.mxu0 0.0
    %7094 = vmatprep.subr.mxu0 0.0
    %7095 = vmatpush2.msra.mxu0 0.0
    %7096 = vmatprep.subr.mxu0 0.0
    %7097 = vmatpush2.msra.mxu0 0.0
    %7098 = vmatprep.subr.mxu0 0.0
    %7099 = vmatpush2.msra.mxu0 0.0
    %7100 = vmatprep.subr.mxu0 0.0
    %7101 = vmatpush2.msra.mxu0 0.0
    %7102 = vmatprep.subr.mxu0 0.0
    %7103 = vmatpush2.msra.mxu0 0.0
    %7104 = vmatprep.subr.mxu0 0.0
    %7105 = vmatpush2.msra.mxu0 0.0
    %7106 = vmatprep.subr.mxu0 0.0
    %7107 = vmatpush2.msra.mxu0 0.0
    %7108 = vmatprep.subr.mxu0 0.0
    %7109 = vmatpush2.msra.mxu0 0.0
    %7110 = vmatprep.subr.mxu0 0.0
    %7111 = vmatpush2.msra.mxu0 0.0
    %7112 = vmatprep.subr.mxu0 0.0
    %7113 = vmatpush2.msra.mxu0 0.0
    %7114 = vmatprep.subr.mxu0 0.0
    %7115 = vmatpush2.msra.mxu0 0.0
    %7116 = vmatprep.subr.mxu0 0.0
    %7117 = vmatpush2.msra.mxu0 0.0
    %7118 = vmatprep.mubr.f32.mxu0 0.0
    %7119 = vmatmul.mubr.f32.gmra.mxu0 %v7052
    %v7120 = vpop.f32.mrf.mxu0
    %v7121 = vadd.f32 %v7049, %v7120
    %v7122 = vpop.f32.mrf.mxu0
    %7123 = vdwg.mxu0
    %v7124 = vld [vmem:[%s988] sm:$0xff]
    %v7125 = vld [vmem:[%s988 + $0x8] sm:$0xff]
    %v7126 = vld [vmem:[%s988 + $0x10] sm:$0xff]
    %v7127 = vld [vmem:[%s988 + $0x18] sm:$0xff]
    %v7128 = vld [vmem:[%s993] sm:$0x1]
    %v7130 = vlaneseq
    %v7131 = vshrl.u32 %v7130, 7
    %v7132 = vsub.s32 0, %v7131
    %v7133 = vrot.slane %v7128, %v7132
    %7135 = vmatprep.subr.mxu0 0.0
    %7136 = vmatpush1.msra.mxu0 0.0
    %7137 = vmatprep.subr.mxu0 0.0
    %7138 = vmatpush1.msra.mxu0 0.0
    %7139 = vmatprep.subr.mxu0 0.0
    %7140 = vmatpush1.msra.mxu0 0.0
    %7141 = vmatprep.subr.mxu0 0.0
    %7142 = vmatpush1.msra.mxu0 0.0
    %7143 = vmatprep.subr.mxu0 0.0
    %7144 = vmatpush1.msra.mxu0 0.0
    %7145 = vmatprep.subr.mxu0 0.0
    %7146 = vmatpush1.msra.mxu0 0.0
    %7147 = vmatprep.subr.mxu0 0.0
    %7148 = vmatpush1.msra.mxu0 0.0
    %7149 = vmatprep.subr.mxu0 0.0
    %7150 = vmatpush1.msra.mxu0 0.0
    %7151 = vmatprep.subr.mxu0 0.0
    %7152 = vmatpush1.msra.mxu0 0.0
    %7153 = vmatprep.subr.mxu0 0.0
    %7154 = vmatpush1.msra.mxu0 0.0
    %7155 = vmatprep.subr.mxu0 0.0
    %7156 = vmatpush1.msra.mxu0 0.0
    %7157 = vmatprep.subr.mxu0 0.0
    %7158 = vmatpush1.msra.mxu0 0.0
    %7159 = vmatprep.subr.mxu0 0.0
    %7160 = vmatpush1.msra.mxu0 %v7127
    %7161 = vmatprep.subr.mxu0 0.0
    %7162 = vmatpush1.msra.mxu0 %v7126
    %7163 = vmatprep.subr.mxu0 0.0
    %7164 = vmatpush1.msra.mxu0 %v7125
    %7165 = vmatprep.subr.mxu0 0.0
    %7166 = vmatpush1.msra.mxu0 %v7124
    %7167 = vmatprep.subr.mxu0 0.0
    %7168 = vmatpush2.msra.mxu0 0.0
    %7169 = vmatprep.subr.mxu0 0.0
    %7170 = vmatpush2.msra.mxu0 0.0
    %7171 = vmatprep.subr.mxu0 0.0
    %7172 = vmatpush2.msra.mxu0 0.0
    %7173 = vmatprep.subr.mxu0 0.0
    %7174 = vmatpush2.msra.mxu0 0.0
    %7175 = vmatprep.subr.mxu0 0.0
    %7176 = vmatpush2.msra.mxu0 0.0
    %7177 = vmatprep.subr.mxu0 0.0
    %7178 = vmatpush2.msra.mxu0 0.0
    %7179 = vmatprep.subr.mxu0 0.0
    %7180 = vmatpush2.msra.mxu0 0.0
    %7181 = vmatprep.subr.mxu0 0.0
    %7182 = vmatpush2.msra.mxu0 0.0
    %7183 = vmatprep.subr.mxu0 0.0
    %7184 = vmatpush2.msra.mxu0 0.0
    %7185 = vmatprep.subr.mxu0 0.0
    %7186 = vmatpush2.msra.mxu0 0.0
    %7187 = vmatprep.subr.mxu0 0.0
    %7188 = vmatpush2.msra.mxu0 0.0
    %7189 = vmatprep.subr.mxu0 0.0
    %7190 = vmatpush2.msra.mxu0 0.0
    %7191 = vmatprep.subr.mxu0 0.0
    %7192 = vmatpush2.msra.mxu0 0.0
    %7193 = vmatprep.subr.mxu0 0.0
    %7194 = vmatpush2.msra.mxu0 0.0
    %7195 = vmatprep.subr.mxu0 0.0
    %7196 = vmatpush2.msra.mxu0 0.0
    %7197 = vmatprep.subr.mxu0 0.0
    %7198 = vmatpush2.msra.mxu0 0.0
    %7199 = vmatprep.mubr.f32.mxu0 0.0
    %7200 = vmatmul.mubr.f32.gmra.mxu0 %v7052
    %v7201 = vpop.f32.mrf.mxu0
    %v7202 = vadd.f32 %v7133, %v7201
    %v7203 = vpop.f32.mrf.mxu0
    %7204 = vdwg.mxu0
    %v7205 = vld [vmem:[%s1071] sm:$0xff]
    %v7206 = vld [vmem:[%s1071 + $0x8] sm:$0xff]
    %v7207 = vld [vmem:[%s1071 + $0x10] sm:$0xff]
    %v7208 = vld [vmem:[%s1071 + $0x18] sm:$0xff]
    %v7209 = vld [vmem:[%s1076] sm:$0x1]
    %v7211 = vlaneseq
    %v7212 = vshrl.u32 %v7211, 7
    %v7213 = vsub.s32 0, %v7212
    %v7214 = vrot.slane %v7209, %v7213
    %7216 = vmatprep.subr.mxu0 0.0
    %7217 = vmatpush1.msra.mxu0 0.0
    %7218 = vmatprep.subr.mxu0 0.0
    %7219 = vmatpush1.msra.mxu0 0.0
    %7220 = vmatprep.subr.mxu0 0.0
    %7221 = vmatpush1.msra.mxu0 0.0
    %7222 = vmatprep.subr.mxu0 0.0
    %7223 = vmatpush1.msra.mxu0 0.0
    %7224 = vmatprep.subr.mxu0 0.0
    %7225 = vmatpush1.msra.mxu0 0.0
    %7226 = vmatprep.subr.mxu0 0.0
    %7227 = vmatpush1.msra.mxu0 0.0
    %7228 = vmatprep.subr.mxu0 0.0
    %7229 = vmatpush1.msra.mxu0 0.0
    %7230 = vmatprep.subr.mxu0 0.0
    %7231 = vmatpush1.msra.mxu0 0.0
    %7232 = vmatprep.subr.mxu0 0.0
    %7233 = vmatpush1.msra.mxu0 0.0
    %7234 = vmatprep.subr.mxu0 0.0
    %7235 = vmatpush1.msra.mxu0 0.0
    %7236 = vmatprep.subr.mxu0 0.0
    %7237 = vmatpush1.msra.mxu0 0.0
    %7238 = vmatprep.subr.mxu0 0.0
    %7239 = vmatpush1.msra.mxu0 0.0
    %7240 = vmatprep.subr.mxu0 0.0
    %7241 = vmatpush1.msra.mxu0 %v7208
    %7242 = vmatprep.subr.mxu0 0.0
    %7243 = vmatpush1.msra.mxu0 %v7207
    %7244 = vmatprep.subr.mxu0 0.0
    %7245 = vmatpush1.msra.mxu0 %v7206
    %7246 = vmatprep.subr.mxu0 0.0
    %7247 = vmatpush1.msra.mxu0 %v7205
    %7248 = vmatprep.subr.mxu0 0.0
    %7249 = vmatpush2.msra.mxu0 0.0
    %7250 = vmatprep.subr.mxu0 0.0
    %7251 = vmatpush2.msra.mxu0 0.0
    %7252 = vmatprep.subr.mxu0 0.0
    %7253 = vmatpush2.msra.mxu0 0.0
    %7254 = vmatprep.subr.mxu0 0.0
    %7255 = vmatpush2.msra.mxu0 0.0
    %7256 = vmatprep.subr.mxu0 0.0
    %7257 = vmatpush2.msra.mxu0 0.0
    %7258 = vmatprep.subr.mxu0 0.0
    %7259 = vmatpush2.msra.mxu0 0.0
    %7260 = vmatprep.subr.mxu0 0.0
    %7261 = vmatpush2.msra.mxu0 0.0
    %7262 = vmatprep.subr.mxu0 0.0
    %7263 = vmatpush2.msra.mxu0 0.0
    %7264 = vmatprep.subr.mxu0 0.0
    %7265 = vmatpush2.msra.mxu0 0.0
    %7266 = vmatprep.subr.mxu0 0.0
    %7267 = vmatpush2.msra.mxu0 0.0
    %7268 = vmatprep.subr.mxu0 0.0
    %7269 = vmatpush2.msra.mxu0 0.0
    %7270 = vmatprep.subr.mxu0 0.0
    %7271 = vmatpush2.msra.mxu0 0.0
    %7272 = vmatprep.subr.mxu0 0.0
    %7273 = vmatpush2.msra.mxu0 0.0
    %7274 = vmatprep.subr.mxu0 0.0
    %7275 = vmatpush2.msra.mxu0 0.0
    %7276 = vmatprep.subr.mxu0 0.0
    %7277 = vmatpush2.msra.mxu0 0.0
    %7278 = vmatprep.subr.mxu0 0.0
    %7279 = vmatpush2.msra.mxu0 0.0
    %7280 = vmatprep.mubr.f32.mxu0 0.0
    %7281 = vmatmul.mubr.f32.gmra.mxu0 %v7052
    %v7282 = vpop.f32.mrf.mxu0
    %v7283 = vadd.f32 %v7214, %v7282
    %v7284 = vpop.f32.mrf.mxu0
    %7285 = vdwg.mxu0
    %v7286 = vadd.f32 %v6879, %v7121
    %v7287 = vxor.u32 %v7286, 2147483648
    %v7288 = vmul.f32 %v7287, 1.442695
    %v7289 = vpow.pop %v7288
    %v7290 = vadd.f32 %v7289, 1.0
    %v7291 = vrcp.pop %v7290
    %v7292 = vmul.f32 1.0, %v7291
    %v7293 = vadd.f32 %v6958, %v7202
    %v7294 = vxor.u32 %v7293, 2147483648
    %v7295 = vmul.f32 %v7294, 1.442695
    %v7296 = vpow.pop %v7295
    %v7297 = vadd.f32 %v7296, 1.0
    %v7298 = vrcp.pop %v7297
    %v7299 = vmul.f32 1.0, %v7298
    %v7300 = vmul.f32 %v7292, %v7283
    %v7301 = vadd.f32 %v7037, %v7300
    %v7302 = vtanh.pop %v7301
    %v7303 = vsub.f32 1.0, %v7299
    %v7304 = vmul.f32 %v7303, %v7302
    %v7305 = vmul.f32 %v7299, %v6284
    %v7306 = vadd.f32 %v7304, %v7305
    %s7307 = scalar_lea.vmem [#allocation16], 2
    %7308 = vst.msk [vmem:[%s7307] sm:$0x3] %vm656, %v7306
    %s7309 = scalar_lea.vmem [#allocation4], 14
    %v7310 = vld [vmem:[%s7309] sm:$0x3]
    %v7311 = vld [vmem:[#allocation9] sm:$0xff]
    %v7312 = vld [vmem:[#allocation9 + $0x8] sm:$0xff]
    %v7313 = vld [vmem:[%s4] sm:$0x1]
    %v7315 = vlaneseq
    %v7316 = vshrl.u32 %v7315, 7
    %v7317 = vsub.s32 0, %v7316
    %v7318 = vrot.slane %v7313, %v7317
    %v7321 = vsel %vm148, %v7310, 0
    %7323 = vmatprep.subr.mxu0 0.0
    %7324 = vmatpush1.msra.mxu0 0.0
    %7325 = vmatprep.subr.mxu0 0.0
    %7326 = vmatpush1.msra.mxu0 0.0
    %7327 = vmatprep.subr.mxu0 0.0
    %7328 = vmatpush1.msra.mxu0 0.0
    %7329 = vmatprep.subr.mxu0 0.0
    %7330 = vmatpush1.msra.mxu0 0.0
    %7331 = vmatprep.subr.mxu0 0.0
    %7332 = vmatpush1.msra.mxu0 0.0
    %7333 = vmatprep.subr.mxu0 0.0
    %7334 = vmatpush1.msra.mxu0 0.0
    %7335 = vmatprep.subr.mxu0 0.0
    %7336 = vmatpush1.msra.mxu0 0.0
    %7337 = vmatprep.subr.mxu0 0.0
    %7338 = vmatpush1.msra.mxu0 0.0
    %7339 = vmatprep.subr.mxu0 0.0
    %7340 = vmatpush1.msra.mxu0 0.0
    %7341 = vmatprep.subr.mxu0 0.0
    %7342 = vmatpush1.msra.mxu0 0.0
    %7343 = vmatprep.subr.mxu0 0.0
    %7344 = vmatpush1.msra.mxu0 0.0
    %7345 = vmatprep.subr.mxu0 0.0
    %7346 = vmatpush1.msra.mxu0 0.0
    %7347 = vmatprep.subr.mxu0 0.0
    %7348 = vmatpush1.msra.mxu0 0.0
    %7349 = vmatprep.subr.mxu0 0.0
    %7350 = vmatpush1.msra.mxu0 0.0
    %7351 = vmatprep.subr.mxu0 0.0
    %7352 = vmatpush1.msra.mxu0 %v7312
    %7353 = vmatprep.subr.mxu0 0.0
    %7354 = vmatpush1.msra.mxu0 %v7311
    %7355 = vmatprep.subr.mxu0 0.0
    %7356 = vmatpush2.msra.mxu0 0.0
    %7357 = vmatprep.subr.mxu0 0.0
    %7358 = vmatpush2.msra.mxu0 0.0
    %7359 = vmatprep.subr.mxu0 0.0
    %7360 = vmatpush2.msra.mxu0 0.0
    %7361 = vmatprep.subr.mxu0 0.0
    %7362 = vmatpush2.msra.mxu0 0.0
    %7363 = vmatprep.subr.mxu0 0.0
    %7364 = vmatpush2.msra.mxu0 0.0
    %7365 = vmatprep.subr.mxu0 0.0
    %7366 = vmatpush2.msra.mxu0 0.0
    %7367 = vmatprep.subr.mxu0 0.0
    %7368 = vmatpush2.msra.mxu0 0.0
    %7369 = vmatprep.subr.mxu0 0.0
    %7370 = vmatpush2.msra.mxu0 0.0
    %7371 = vmatprep.subr.mxu0 0.0
    %7372 = vmatpush2.msra.mxu0 0.0
    %7373 = vmatprep.subr.mxu0 0.0
    %7374 = vmatpush2.msra.mxu0 0.0
    %7375 = vmatprep.subr.mxu0 0.0
    %7376 = vmatpush2.msra.mxu0 0.0
    %7377 = vmatprep.subr.mxu0 0.0
    %7378 = vmatpush2.msra.mxu0 0.0
    %7379 = vmatprep.subr.mxu0 0.0
    %7380 = vmatpush2.msra.mxu0 0.0
    %7381 = vmatprep.subr.mxu0 0.0
    %7382 = vmatpush2.msra.mxu0 0.0
    %7383 = vmatprep.subr.mxu0 0.0
    %7384 = vmatpush2.msra.mxu0 0.0
    %7385 = vmatprep.subr.mxu0 0.0
    %7386 = vmatpush2.msra.mxu0 0.0
    %7387 = vmatprep.mubr.f32.mxu0 0.0
    %7388 = vmatmul.mubr.f32.gmra.mxu0 %v7321
    %v7389 = vpop.f32.mrf.mxu0
    %v7390 = vadd.f32 %v7318, %v7389
    %v7391 = vpop.f32.mrf.mxu0
    %7392 = vdwg.mxu0
    %v7393 = vld [vmem:[%s222] sm:$0xff]
    %v7394 = vld [vmem:[%s222 + $0x8] sm:$0xff]
    %v7395 = vld [vmem:[%s225] sm:$0x1]
    %v7397 = vlaneseq
    %v7398 = vshrl.u32 %v7397, 7
    %v7399 = vsub.s32 0, %v7398
    %v7400 = vrot.slane %v7395, %v7399
    %7402 = vmatprep.subr.mxu0 0.0
    %7403 = vmatpush1.msra.mxu0 0.0
    %7404 = vmatprep.subr.mxu0 0.0
    %7405 = vmatpush1.msra.mxu0 0.0
    %7406 = vmatprep.subr.mxu0 0.0
    %7407 = vmatpush1.msra.mxu0 0.0
    %7408 = vmatprep.subr.mxu0 0.0
    %7409 = vmatpush1.msra.mxu0 0.0
    %7410 = vmatprep.subr.mxu0 0.0
    %7411 = vmatpush1.msra.mxu0 0.0
    %7412 = vmatprep.subr.mxu0 0.0
    %7413 = vmatpush1.msra.mxu0 0.0
    %7414 = vmatprep.subr.mxu0 0.0
    %7415 = vmatpush1.msra.mxu0 0.0
    %7416 = vmatprep.subr.mxu0 0.0
    %7417 = vmatpush1.msra.mxu0 0.0
    %7418 = vmatprep.subr.mxu0 0.0
    %7419 = vmatpush1.msra.mxu0 0.0
    %7420 = vmatprep.subr.mxu0 0.0
    %7421 = vmatpush1.msra.mxu0 0.0
    %7422 = vmatprep.subr.mxu0 0.0
    %7423 = vmatpush1.msra.mxu0 0.0
    %7424 = vmatprep.subr.mxu0 0.0
    %7425 = vmatpush1.msra.mxu0 0.0
    %7426 = vmatprep.subr.mxu0 0.0
    %7427 = vmatpush1.msra.mxu0 0.0
    %7428 = vmatprep.subr.mxu0 0.0
    %7429 = vmatpush1.msra.mxu0 0.0
    %7430 = vmatprep.subr.mxu0 0.0
    %7431 = vmatpush1.msra.mxu0 %v7394
    %7432 = vmatprep.subr.mxu0 0.0
    %7433 = vmatpush1.msra.mxu0 %v7393
    %7434 = vmatprep.subr.mxu0 0.0
    %7435 = vmatpush2.msra.mxu0 0.0
    %7436 = vmatprep.subr.mxu0 0.0
    %7437 = vmatpush2.msra.mxu0 0.0
    %7438 = vmatprep.subr.mxu0 0.0
    %7439 = vmatpush2.msra.mxu0 0.0
    %7440 = vmatprep.subr.mxu0 0.0
    %7441 = vmatpush2.msra.mxu0 0.0
    %7442 = vmatprep.subr.mxu0 0.0
    %7443 = vmatpush2.msra.mxu0 0.0
    %7444 = vmatprep.subr.mxu0 0.0
    %7445 = vmatpush2.msra.mxu0 0.0
    %7446 = vmatprep.subr.mxu0 0.0
    %7447 = vmatpush2.msra.mxu0 0.0
    %7448 = vmatprep.subr.mxu0 0.0
    %7449 = vmatpush2.msra.mxu0 0.0
    %7450 = vmatprep.subr.mxu0 0.0
    %7451 = vmatpush2.msra.mxu0 0.0
    %7452 = vmatprep.subr.mxu0 0.0
    %7453 = vmatpush2.msra.mxu0 0.0
    %7454 = vmatprep.subr.mxu0 0.0
    %7455 = vmatpush2.msra.mxu0 0.0
    %7456 = vmatprep.subr.mxu0 0.0
    %7457 = vmatpush2.msra.mxu0 0.0
    %7458 = vmatprep.subr.mxu0 0.0
    %7459 = vmatpush2.msra.mxu0 0.0
    %7460 = vmatprep.subr.mxu0 0.0
    %7461 = vmatpush2.msra.mxu0 0.0
    %7462 = vmatprep.subr.mxu0 0.0
    %7463 = vmatpush2.msra.mxu0 0.0
    %7464 = vmatprep.subr.mxu0 0.0
    %7465 = vmatpush2.msra.mxu0 0.0
    %7466 = vmatprep.mubr.f32.mxu0 0.0
    %7467 = vmatmul.mubr.f32.gmra.mxu0 %v7321
    %v7468 = vpop.f32.mrf.mxu0
    %v7469 = vadd.f32 %v7400, %v7468
    %v7470 = vpop.f32.mrf.mxu0
    %7471 = vdwg.mxu0
    %v7472 = vld [vmem:[%s303] sm:$0xff]
    %v7473 = vld [vmem:[%s303 + $0x8] sm:$0xff]
    %v7474 = vld [vmem:[%s306] sm:$0x1]
    %v7476 = vlaneseq
    %v7477 = vshrl.u32 %v7476, 7
    %v7478 = vsub.s32 0, %v7477
    %v7479 = vrot.slane %v7474, %v7478
    %7481 = vmatprep.subr.mxu0 0.0
    %7482 = vmatpush1.msra.mxu0 0.0
    %7483 = vmatprep.subr.mxu0 0.0
    %7484 = vmatpush1.msra.mxu0 0.0
    %7485 = vmatprep.subr.mxu0 0.0
    %7486 = vmatpush1.msra.mxu0 0.0
    %7487 = vmatprep.subr.mxu0 0.0
    %7488 = vmatpush1.msra.mxu0 0.0
    %7489 = vmatprep.subr.mxu0 0.0
    %7490 = vmatpush1.msra.mxu0 0.0
    %7491 = vmatprep.subr.mxu0 0.0
    %7492 = vmatpush1.msra.mxu0 0.0
    %7493 = vmatprep.subr.mxu0 0.0
    %7494 = vmatpush1.msra.mxu0 0.0
    %7495 = vmatprep.subr.mxu0 0.0
    %7496 = vmatpush1.msra.mxu0 0.0
    %7497 = vmatprep.subr.mxu0 0.0
    %7498 = vmatpush1.msra.mxu0 0.0
    %7499 = vmatprep.subr.mxu0 0.0
    %7500 = vmatpush1.msra.mxu0 0.0
    %7501 = vmatprep.subr.mxu0 0.0
    %7502 = vmatpush1.msra.mxu0 0.0
    %7503 = vmatprep.subr.mxu0 0.0
    %7504 = vmatpush1.msra.mxu0 0.0
    %7505 = vmatprep.subr.mxu0 0.0
    %7506 = vmatpush1.msra.mxu0 0.0
    %7507 = vmatprep.subr.mxu0 0.0
    %7508 = vmatpush1.msra.mxu0 0.0
    %7509 = vmatprep.subr.mxu0 0.0
    %7510 = vmatpush1.msra.mxu0 %v7473
    %7511 = vmatprep.subr.mxu0 0.0
    %7512 = vmatpush1.msra.mxu0 %v7472
    %7513 = vmatprep.subr.mxu0 0.0
    %7514 = vmatpush2.msra.mxu0 0.0
    %7515 = vmatprep.subr.mxu0 0.0
    %7516 = vmatpush2.msra.mxu0 0.0
    %7517 = vmatprep.subr.mxu0 0.0
    %7518 = vmatpush2.msra.mxu0 0.0
    %7519 = vmatprep.subr.mxu0 0.0
    %7520 = vmatpush2.msra.mxu0 0.0
    %7521 = vmatprep.subr.mxu0 0.0
    %7522 = vmatpush2.msra.mxu0 0.0
    %7523 = vmatprep.subr.mxu0 0.0
    %7524 = vmatpush2.msra.mxu0 0.0
    %7525 = vmatprep.subr.mxu0 0.0
    %7526 = vmatpush2.msra.mxu0 0.0
    %7527 = vmatprep.subr.mxu0 0.0
    %7528 = vmatpush2.msra.mxu0 0.0
    %7529 = vmatprep.subr.mxu0 0.0
    %7530 = vmatpush2.msra.mxu0 0.0
    %7531 = vmatprep.subr.mxu0 0.0
    %7532 = vmatpush2.msra.mxu0 0.0
    %7533 = vmatprep.subr.mxu0 0.0
    %7534 = vmatpush2.msra.mxu0 0.0
    %7535 = vmatprep.subr.mxu0 0.0
    %7536 = vmatpush2.msra.mxu0 0.0
    %7537 = vmatprep.subr.mxu0 0.0
    %7538 = vmatpush2.msra.mxu0 0.0
    %7539 = vmatprep.subr.mxu0 0.0
    %7540 = vmatpush2.msra.mxu0 0.0
    %7541 = vmatprep.subr.mxu0 0.0
    %7542 = vmatpush2.msra.mxu0 0.0
    %7543 = vmatprep.subr.mxu0 0.0
    %7544 = vmatpush2.msra.mxu0 0.0
    %7545 = vmatprep.mubr.f32.mxu0 0.0
    %7546 = vmatmul.mubr.f32.gmra.mxu0 %v7321
    %v7547 = vpop.f32.mrf.mxu0
    %v7548 = vadd.f32 %v7479, %v7547
    %v7549 = vpop.f32.mrf.mxu0
    %7550 = vdwg.mxu0
    %v7551 = vld [vmem:[#allocation10] sm:$0xff]
    %v7552 = vld [vmem:[#allocation10 + $0x8] sm:$0xff]
    %v7553 = vld [vmem:[#allocation10 + $0x10] sm:$0xff]
    %v7554 = vld [vmem:[#allocation10 + $0x18] sm:$0xff]
    %v7555 = vld [vmem:[%s5] sm:$0x1]
    %v7557 = vlaneseq
    %v7558 = vshrl.u32 %v7557, 7
    %v7559 = vsub.s32 0, %v7558
    %v7560 = vrot.slane %v7555, %v7559
    %v7563 = vsel %vm395, %v6795, 0
    %7565 = vmatprep.subr.mxu0 0.0
    %7566 = vmatpush1.msra.mxu0 0.0
    %7567 = vmatprep.subr.mxu0 0.0
    %7568 = vmatpush1.msra.mxu0 0.0
    %7569 = vmatprep.subr.mxu0 0.0
    %7570 = vmatpush1.msra.mxu0 0.0
    %7571 = vmatprep.subr.mxu0 0.0
    %7572 = vmatpush1.msra.mxu0 0.0
    %7573 = vmatprep.subr.mxu0 0.0
    %7574 = vmatpush1.msra.mxu0 0.0
    %7575 = vmatprep.subr.mxu0 0.0
    %7576 = vmatpush1.msra.mxu0 0.0
    %7577 = vmatprep.subr.mxu0 0.0
    %7578 = vmatpush1.msra.mxu0 0.0
    %7579 = vmatprep.subr.mxu0 0.0
    %7580 = vmatpush1.msra.mxu0 0.0
    %7581 = vmatprep.subr.mxu0 0.0
    %7582 = vmatpush1.msra.mxu0 0.0
    %7583 = vmatprep.subr.mxu0 0.0
    %7584 = vmatpush1.msra.mxu0 0.0
    %7585 = vmatprep.subr.mxu0 0.0
    %7586 = vmatpush1.msra.mxu0 0.0
    %7587 = vmatprep.subr.mxu0 0.0
    %7588 = vmatpush1.msra.mxu0 0.0
    %7589 = vmatprep.subr.mxu0 0.0
    %7590 = vmatpush1.msra.mxu0 %v7554
    %7591 = vmatprep.subr.mxu0 0.0
    %7592 = vmatpush1.msra.mxu0 %v7553
    %7593 = vmatprep.subr.mxu0 0.0
    %7594 = vmatpush1.msra.mxu0 %v7552
    %7595 = vmatprep.subr.mxu0 0.0
    %7596 = vmatpush1.msra.mxu0 %v7551
    %7597 = vmatprep.subr.mxu0 0.0
    %7598 = vmatpush2.msra.mxu0 0.0
    %7599 = vmatprep.subr.mxu0 0.0
    %7600 = vmatpush2.msra.mxu0 0.0
    %7601 = vmatprep.subr.mxu0 0.0
    %7602 = vmatpush2.msra.mxu0 0.0
    %7603 = vmatprep.subr.mxu0 0.0
    %7604 = vmatpush2.msra.mxu0 0.0
    %7605 = vmatprep.subr.mxu0 0.0
    %7606 = vmatpush2.msra.mxu0 0.0
    %7607 = vmatprep.subr.mxu0 0.0
    %7608 = vmatpush2.msra.mxu0 0.0
    %7609 = vmatprep.subr.mxu0 0.0
    %7610 = vmatpush2.msra.mxu0 0.0
    %7611 = vmatprep.subr.mxu0 0.0
    %7612 = vmatpush2.msra.mxu0 0.0
    %7613 = vmatprep.subr.mxu0 0.0
    %7614 = vmatpush2.msra.mxu0 0.0
    %7615 = vmatprep.subr.mxu0 0.0
    %7616 = vmatpush2.msra.mxu0 0.0
    %7617 = vmatprep.subr.mxu0 0.0
    %7618 = vmatpush2.msra.mxu0 0.0
    %7619 = vmatprep.subr.mxu0 0.0
    %7620 = vmatpush2.msra.mxu0 0.0
    %7621 = vmatprep.subr.mxu0 0.0
    %7622 = vmatpush2.msra.mxu0 0.0
    %7623 = vmatprep.subr.mxu0 0.0
    %7624 = vmatpush2.msra.mxu0 0.0
    %7625 = vmatprep.subr.mxu0 0.0
    %7626 = vmatpush2.msra.mxu0 0.0
    %7627 = vmatprep.subr.mxu0 0.0
    %7628 = vmatpush2.msra.mxu0 0.0
    %7629 = vmatprep.mubr.f32.mxu0 0.0
    %7630 = vmatmul.mubr.f32.gmra.mxu0 %v7563
    %v7631 = vpop.f32.mrf.mxu0
    %v7632 = vadd.f32 %v7560, %v7631
    %v7633 = vpop.f32.mrf.mxu0
    %7634 = vdwg.mxu0
    %v7635 = vld [vmem:[%s469] sm:$0xff]
    %v7636 = vld [vmem:[%s469 + $0x8] sm:$0xff]
    %v7637 = vld [vmem:[%s469 + $0x10] sm:$0xff]
    %v7638 = vld [vmem:[%s469 + $0x18] sm:$0xff]
    %v7639 = vld [vmem:[%s474] sm:$0x1]
    %v7641 = vlaneseq
    %v7642 = vshrl.u32 %v7641, 7
    %v7643 = vsub.s32 0, %v7642
    %v7644 = vrot.slane %v7639, %v7643
    %7646 = vmatprep.subr.mxu0 0.0
    %7647 = vmatpush1.msra.mxu0 0.0
    %7648 = vmatprep.subr.mxu0 0.0
    %7649 = vmatpush1.msra.mxu0 0.0
    %7650 = vmatprep.subr.mxu0 0.0
    %7651 = vmatpush1.msra.mxu0 0.0
    %7652 = vmatprep.subr.mxu0 0.0
    %7653 = vmatpush1.msra.mxu0 0.0
    %7654 = vmatprep.subr.mxu0 0.0
    %7655 = vmatpush1.msra.mxu0 0.0
    %7656 = vmatprep.subr.mxu0 0.0
    %7657 = vmatpush1.msra.mxu0 0.0
    %7658 = vmatprep.subr.mxu0 0.0
    %7659 = vmatpush1.msra.mxu0 0.0
    %7660 = vmatprep.subr.mxu0 0.0
    %7661 = vmatpush1.msra.mxu0 0.0
    %7662 = vmatprep.subr.mxu0 0.0
    %7663 = vmatpush1.msra.mxu0 0.0
    %7664 = vmatprep.subr.mxu0 0.0
    %7665 = vmatpush1.msra.mxu0 0.0
    %7666 = vmatprep.subr.mxu0 0.0
    %7667 = vmatpush1.msra.mxu0 0.0
    %7668 = vmatprep.subr.mxu0 0.0
    %7669 = vmatpush1.msra.mxu0 0.0
    %7670 = vmatprep.subr.mxu0 0.0
    %7671 = vmatpush1.msra.mxu0 %v7638
    %7672 = vmatprep.subr.mxu0 0.0
    %7673 = vmatpush1.msra.mxu0 %v7637
    %7674 = vmatprep.subr.mxu0 0.0
    %7675 = vmatpush1.msra.mxu0 %v7636
    %7676 = vmatprep.subr.mxu0 0.0
    %7677 = vmatpush1.msra.mxu0 %v7635
    %7678 = vmatprep.subr.mxu0 0.0
    %7679 = vmatpush2.msra.mxu0 0.0
    %7680 = vmatprep.subr.mxu0 0.0
    %7681 = vmatpush2.msra.mxu0 0.0
    %7682 = vmatprep.subr.mxu0 0.0
    %7683 = vmatpush2.msra.mxu0 0.0
    %7684 = vmatprep.subr.mxu0 0.0
    %7685 = vmatpush2.msra.mxu0 0.0
    %7686 = vmatprep.subr.mxu0 0.0
    %7687 = vmatpush2.msra.mxu0 0.0
    %7688 = vmatprep.subr.mxu0 0.0
    %7689 = vmatpush2.msra.mxu0 0.0
    %7690 = vmatprep.subr.mxu0 0.0
    %7691 = vmatpush2.msra.mxu0 0.0
    %7692 = vmatprep.subr.mxu0 0.0
    %7693 = vmatpush2.msra.mxu0 0.0
    %7694 = vmatprep.subr.mxu0 0.0
    %7695 = vmatpush2.msra.mxu0 0.0
    %7696 = vmatprep.subr.mxu0 0.0
    %7697 = vmatpush2.msra.mxu0 0.0
    %7698 = vmatprep.subr.mxu0 0.0
    %7699 = vmatpush2.msra.mxu0 0.0
    %7700 = vmatprep.subr.mxu0 0.0
    %7701 = vmatpush2.msra.mxu0 0.0
    %7702 = vmatprep.subr.mxu0 0.0
    %7703 = vmatpush2.msra.mxu0 0.0
    %7704 = vmatprep.subr.mxu0 0.0
    %7705 = vmatpush2.msra.mxu0 0.0
    %7706 = vmatprep.subr.mxu0 0.0
    %7707 = vmatpush2.msra.mxu0 0.0
    %7708 = vmatprep.subr.mxu0 0.0
    %7709 = vmatpush2.msra.mxu0 0.0
    %7710 = vmatprep.mubr.f32.mxu0 0.0
    %7711 = vmatmul.mubr.f32.gmra.mxu0 %v7563
    %v7712 = vpop.f32.mrf.mxu0
    %v7713 = vadd.f32 %v7644, %v7712
    %v7714 = vpop.f32.mrf.mxu0
    %7715 = vdwg.mxu0
    %v7716 = vld [vmem:[%s552] sm:$0xff]
    %v7717 = vld [vmem:[%s552 + $0x8] sm:$0xff]
    %v7718 = vld [vmem:[%s552 + $0x10] sm:$0xff]
    %v7719 = vld [vmem:[%s552 + $0x18] sm:$0xff]
    %v7720 = vld [vmem:[%s557] sm:$0x1]
    %v7722 = vlaneseq
    %v7723 = vshrl.u32 %v7722, 7
    %v7724 = vsub.s32 0, %v7723
    %v7725 = vrot.slane %v7720, %v7724
    %7727 = vmatprep.subr.mxu0 0.0
    %7728 = vmatpush1.msra.mxu0 0.0
    %7729 = vmatprep.subr.mxu0 0.0
    %7730 = vmatpush1.msra.mxu0 0.0
    %7731 = vmatprep.subr.mxu0 0.0
    %7732 = vmatpush1.msra.mxu0 0.0
    %7733 = vmatprep.subr.mxu0 0.0
    %7734 = vmatpush1.msra.mxu0 0.0
    %7735 = vmatprep.subr.mxu0 0.0
    %7736 = vmatpush1.msra.mxu0 0.0
    %7737 = vmatprep.subr.mxu0 0.0
    %7738 = vmatpush1.msra.mxu0 0.0
    %7739 = vmatprep.subr.mxu0 0.0
    %7740 = vmatpush1.msra.mxu0 0.0
    %7741 = vmatprep.subr.mxu0 0.0
    %7742 = vmatpush1.msra.mxu0 0.0
    %7743 = vmatprep.subr.mxu0 0.0
    %7744 = vmatpush1.msra.mxu0 0.0
    %7745 = vmatprep.subr.mxu0 0.0
    %7746 = vmatpush1.msra.mxu0 0.0
    %7747 = vmatprep.subr.mxu0 0.0
    %7748 = vmatpush1.msra.mxu0 0.0
    %7749 = vmatprep.subr.mxu0 0.0
    %7750 = vmatpush1.msra.mxu0 0.0
    %7751 = vmatprep.subr.mxu0 0.0
    %7752 = vmatpush1.msra.mxu0 %v7719
    %7753 = vmatprep.subr.mxu0 0.0
    %7754 = vmatpush1.msra.mxu0 %v7718
    %7755 = vmatprep.subr.mxu0 0.0
    %7756 = vmatpush1.msra.mxu0 %v7717
    %7757 = vmatprep.subr.mxu0 0.0
    %7758 = vmatpush1.msra.mxu0 %v7716
    %7759 = vmatprep.subr.mxu0 0.0
    %7760 = vmatpush2.msra.mxu0 0.0
    %7761 = vmatprep.subr.mxu0 0.0
    %7762 = vmatpush2.msra.mxu0 0.0
    %7763 = vmatprep.subr.mxu0 0.0
    %7764 = vmatpush2.msra.mxu0 0.0
    %7765 = vmatprep.subr.mxu0 0.0
    %7766 = vmatpush2.msra.mxu0 0.0
    %7767 = vmatprep.subr.mxu0 0.0
    %7768 = vmatpush2.msra.mxu0 0.0
    %7769 = vmatprep.subr.mxu0 0.0
    %7770 = vmatpush2.msra.mxu0 0.0
    %7771 = vmatprep.subr.mxu0 0.0
    %7772 = vmatpush2.msra.mxu0 0.0
    %7773 = vmatprep.subr.mxu0 0.0
    %7774 = vmatpush2.msra.mxu0 0.0
    %7775 = vmatprep.subr.mxu0 0.0
    %7776 = vmatpush2.msra.mxu0 0.0
    %7777 = vmatprep.subr.mxu0 0.0
    %7778 = vmatpush2.msra.mxu0 0.0
    %7779 = vmatprep.subr.mxu0 0.0
    %7780 = vmatpush2.msra.mxu0 0.0
    %7781 = vmatprep.subr.mxu0 0.0
    %7782 = vmatpush2.msra.mxu0 0.0
    %7783 = vmatprep.subr.mxu0 0.0
    %7784 = vmatpush2.msra.mxu0 0.0
    %7785 = vmatprep.subr.mxu0 0.0
    %7786 = vmatpush2.msra.mxu0 0.0
    %7787 = vmatprep.subr.mxu0 0.0
    %7788 = vmatpush2.msra.mxu0 0.0
    %7789 = vmatprep.subr.mxu0 0.0
    %7790 = vmatpush2.msra.mxu0 0.0
    %7791 = vmatprep.mubr.f32.mxu0 0.0
    %7792 = vmatmul.mubr.f32.gmra.mxu0 %v7563
    %v7793 = vpop.f32.mrf.mxu0
    %v7794 = vadd.f32 %v7725, %v7793
    %v7795 = vpop.f32.mrf.mxu0
    %7796 = vdwg.mxu0
    %v7797 = vadd.f32 %v7390, %v7632
    %v7798 = vxor.u32 %v7797, 2147483648
    %v7799 = vmul.f32 %v7798, 1.442695
    %v7800 = vpow.pop %v7799
    %v7801 = vadd.f32 %v7800, 1.0
    %v7802 = vrcp.pop %v7801
    %v7803 = vmul.f32 1.0, %v7802
    %v7804 = vadd.f32 %v7469, %v7713
    %v7805 = vxor.u32 %v7804, 2147483648
    %v7806 = vmul.f32 %v7805, 1.442695
    %v7807 = vpow.pop %v7806
    %v7808 = vadd.f32 %v7807, 1.0
    %v7809 = vrcp.pop %v7808
    %v7810 = vmul.f32 1.0, %v7809
    %v7811 = vmul.f32 %v7803, %v7794
    %v7812 = vadd.f32 %v7548, %v7811
    %v7813 = vtanh.pop %v7812
    %v7814 = vsub.f32 1.0, %v7810
    %v7815 = vmul.f32 %v7814, %v7813
    %v7816 = vmul.f32 %v7810, %v6795
    %v7817 = vadd.f32 %v7815, %v7816
    %s7818 = scalar_lea.vmem [#allocation15], 14
    %7819 = vst.msk [vmem:[%s7818] sm:$0x3] %vm656, %v7817
    %v7820 = vld [vmem:[#allocation7] sm:$0x3]
    %v7821 = vld [vmem:[#allocation12] sm:$0xff]
    %v7822 = vld [vmem:[#allocation12 + $0x8] sm:$0xff]
    %v7823 = vld [vmem:[%s8] sm:$0x1]
    %v7825 = vlaneseq
    %v7826 = vshrl.u32 %v7825, 7
    %v7827 = vsub.s32 0, %v7826
    %v7828 = vrot.slane %v7823, %v7827
    %v7831 = vsel %vm148, %v7820, 0
    %7833 = vmatprep.subr.mxu0 0.0
    %7834 = vmatpush1.msra.mxu0 0.0
    %7835 = vmatprep.subr.mxu0 0.0
    %7836 = vmatpush1.msra.mxu0 0.0
    %7837 = vmatprep.subr.mxu0 0.0
    %7838 = vmatpush1.msra.mxu0 0.0
    %7839 = vmatprep.subr.mxu0 0.0
    %7840 = vmatpush1.msra.mxu0 0.0
    %7841 = vmatprep.subr.mxu0 0.0
    %7842 = vmatpush1.msra.mxu0 0.0
    %7843 = vmatprep.subr.mxu0 0.0
    %7844 = vmatpush1.msra.mxu0 0.0
    %7845 = vmatprep.subr.mxu0 0.0
    %7846 = vmatpush1.msra.mxu0 0.0
    %7847 = vmatprep.subr.mxu0 0.0
    %7848 = vmatpush1.msra.mxu0 0.0
    %7849 = vmatprep.subr.mxu0 0.0
    %7850 = vmatpush1.msra.mxu0 0.0
    %7851 = vmatprep.subr.mxu0 0.0
    %7852 = vmatpush1.msra.mxu0 0.0
    %7853 = vmatprep.subr.mxu0 0.0
    %7854 = vmatpush1.msra.mxu0 0.0
    %7855 = vmatprep.subr.mxu0 0.0
    %7856 = vmatpush1.msra.mxu0 0.0
    %7857 = vmatprep.subr.mxu0 0.0
    %7858 = vmatpush1.msra.mxu0 0.0
    %7859 = vmatprep.subr.mxu0 0.0
    %7860 = vmatpush1.msra.mxu0 0.0
    %7861 = vmatprep.subr.mxu0 0.0
    %7862 = vmatpush1.msra.mxu0 %v7822
    %7863 = vmatprep.subr.mxu0 0.0
    %7864 = vmatpush1.msra.mxu0 %v7821
    %7865 = vmatprep.subr.mxu0 0.0
    %7866 = vmatpush2.msra.mxu0 0.0
    %7867 = vmatprep.subr.mxu0 0.0
    %7868 = vmatpush2.msra.mxu0 0.0
    %7869 = vmatprep.subr.mxu0 0.0
    %7870 = vmatpush2.msra.mxu0 0.0
    %7871 = vmatprep.subr.mxu0 0.0
    %7872 = vmatpush2.msra.mxu0 0.0
    %7873 = vmatprep.subr.mxu0 0.0
    %7874 = vmatpush2.msra.mxu0 0.0
    %7875 = vmatprep.subr.mxu0 0.0
    %7876 = vmatpush2.msra.mxu0 0.0
    %7877 = vmatprep.subr.mxu0 0.0
    %7878 = vmatpush2.msra.mxu0 0.0
    %7879 = vmatprep.subr.mxu0 0.0
    %7880 = vmatpush2.msra.mxu0 0.0
    %7881 = vmatprep.subr.mxu0 0.0
    %7882 = vmatpush2.msra.mxu0 0.0
    %7883 = vmatprep.subr.mxu0 0.0
    %7884 = vmatpush2.msra.mxu0 0.0
    %7885 = vmatprep.subr.mxu0 0.0
    %7886 = vmatpush2.msra.mxu0 0.0
    %7887 = vmatprep.subr.mxu0 0.0
    %7888 = vmatpush2.msra.mxu0 0.0
    %7889 = vmatprep.subr.mxu0 0.0
    %7890 = vmatpush2.msra.mxu0 0.0
    %7891 = vmatprep.subr.mxu0 0.0
    %7892 = vmatpush2.msra.mxu0 0.0
    %7893 = vmatprep.subr.mxu0 0.0
    %7894 = vmatpush2.msra.mxu0 0.0
    %7895 = vmatprep.subr.mxu0 0.0
    %7896 = vmatpush2.msra.mxu0 0.0
    %7897 = vmatprep.mubr.f32.mxu0 0.0
    %7898 = vmatmul.mubr.f32.gmra.mxu0 %v7831
    %v7899 = vpop.f32.mrf.mxu0
    %v7900 = vadd.f32 %v7828, %v7899
    %v7901 = vpop.f32.mrf.mxu0
    %7902 = vdwg.mxu0
    %v7903 = vld [vmem:[%s742] sm:$0xff]
    %v7904 = vld [vmem:[%s742 + $0x8] sm:$0xff]
    %v7905 = vld [vmem:[%s745] sm:$0x1]
    %v7907 = vlaneseq
    %v7908 = vshrl.u32 %v7907, 7
    %v7909 = vsub.s32 0, %v7908
    %v7910 = vrot.slane %v7905, %v7909
    %7912 = vmatprep.subr.mxu0 0.0
    %7913 = vmatpush1.msra.mxu0 0.0
    %7914 = vmatprep.subr.mxu0 0.0
    %7915 = vmatpush1.msra.mxu0 0.0
    %7916 = vmatprep.subr.mxu0 0.0
    %7917 = vmatpush1.msra.mxu0 0.0
    %7918 = vmatprep.subr.mxu0 0.0
    %7919 = vmatpush1.msra.mxu0 0.0
    %7920 = vmatprep.subr.mxu0 0.0
    %7921 = vmatpush1.msra.mxu0 0.0
    %7922 = vmatprep.subr.mxu0 0.0
    %7923 = vmatpush1.msra.mxu0 0.0
    %7924 = vmatprep.subr.mxu0 0.0
    %7925 = vmatpush1.msra.mxu0 0.0
    %7926 = vmatprep.subr.mxu0 0.0
    %7927 = vmatpush1.msra.mxu0 0.0
    %7928 = vmatprep.subr.mxu0 0.0
    %7929 = vmatpush1.msra.mxu0 0.0
    %7930 = vmatprep.subr.mxu0 0.0
    %7931 = vmatpush1.msra.mxu0 0.0
    %7932 = vmatprep.subr.mxu0 0.0
    %7933 = vmatpush1.msra.mxu0 0.0
    %7934 = vmatprep.subr.mxu0 0.0
    %7935 = vmatpush1.msra.mxu0 0.0
    %7936 = vmatprep.subr.mxu0 0.0
    %7937 = vmatpush1.msra.mxu0 0.0
    %7938 = vmatprep.subr.mxu0 0.0
    %7939 = vmatpush1.msra.mxu0 0.0
    %7940 = vmatprep.subr.mxu0 0.0
    %7941 = vmatpush1.msra.mxu0 %v7904
    %7942 = vmatprep.subr.mxu0 0.0
    %7943 = vmatpush1.msra.mxu0 %v7903
    %7944 = vmatprep.subr.mxu0 0.0
    %7945 = vmatpush2.msra.mxu0 0.0
    %7946 = vmatprep.subr.mxu0 0.0
    %7947 = vmatpush2.msra.mxu0 0.0
    %7948 = vmatprep.subr.mxu0 0.0
    %7949 = vmatpush2.msra.mxu0 0.0
    %7950 = vmatprep.subr.mxu0 0.0
    %7951 = vmatpush2.msra.mxu0 0.0
    %7952 = vmatprep.subr.mxu0 0.0
    %7953 = vmatpush2.msra.mxu0 0.0
    %7954 = vmatprep.subr.mxu0 0.0
    %7955 = vmatpush2.msra.mxu0 0.0
    %7956 = vmatprep.subr.mxu0 0.0
    %7957 = vmatpush2.msra.mxu0 0.0
    %7958 = vmatprep.subr.mxu0 0.0
    %7959 = vmatpush2.msra.mxu0 0.0
    %7960 = vmatprep.subr.mxu0 0.0
    %7961 = vmatpush2.msra.mxu0 0.0
    %7962 = vmatprep.subr.mxu0 0.0
    %7963 = vmatpush2.msra.mxu0 0.0
    %7964 = vmatprep.subr.mxu0 0.0
    %7965 = vmatpush2.msra.mxu0 0.0
    %7966 = vmatprep.subr.mxu0 0.0
    %7967 = vmatpush2.msra.mxu0 0.0
    %7968 = vmatprep.subr.mxu0 0.0
    %7969 = vmatpush2.msra.mxu0 0.0
    %7970 = vmatprep.subr.mxu0 0.0
    %7971 = vmatpush2.msra.mxu0 0.0
    %7972 = vmatprep.subr.mxu0 0.0
    %7973 = vmatpush2.msra.mxu0 0.0
    %7974 = vmatprep.subr.mxu0 0.0
    %7975 = vmatpush2.msra.mxu0 0.0
    %7976 = vmatprep.mubr.f32.mxu0 0.0
    %7977 = vmatmul.mubr.f32.gmra.mxu0 %v7831
    %v7978 = vpop.f32.mrf.mxu0
    %v7979 = vadd.f32 %v7910, %v7978
    %v7980 = vpop.f32.mrf.mxu0
    %7981 = vdwg.mxu0
    %v7982 = vld [vmem:[%s823] sm:$0xff]
    %v7983 = vld [vmem:[%s823 + $0x8] sm:$0xff]
    %v7984 = vld [vmem:[%s826] sm:$0x1]
    %v7986 = vlaneseq
    %v7987 = vshrl.u32 %v7986, 7
    %v7988 = vsub.s32 0, %v7987
    %v7989 = vrot.slane %v7984, %v7988
    %7991 = vmatprep.subr.mxu0 0.0
    %7992 = vmatpush1.msra.mxu0 0.0
    %7993 = vmatprep.subr.mxu0 0.0
    %7994 = vmatpush1.msra.mxu0 0.0
    %7995 = vmatprep.subr.mxu0 0.0
    %7996 = vmatpush1.msra.mxu0 0.0
    %7997 = vmatprep.subr.mxu0 0.0
    %7998 = vmatpush1.msra.mxu0 0.0
    %7999 = vmatprep.subr.mxu0 0.0
    %8000 = vmatpush1.msra.mxu0 0.0
    %8001 = vmatprep.subr.mxu0 0.0
    %8002 = vmatpush1.msra.mxu0 0.0
    %8003 = vmatprep.subr.mxu0 0.0
    %8004 = vmatpush1.msra.mxu0 0.0
    %8005 = vmatprep.subr.mxu0 0.0
    %8006 = vmatpush1.msra.mxu0 0.0
    %8007 = vmatprep.subr.mxu0 0.0
    %8008 = vmatpush1.msra.mxu0 0.0
    %8009 = vmatprep.subr.mxu0 0.0
    %8010 = vmatpush1.msra.mxu0 0.0
    %8011 = vmatprep.subr.mxu0 0.0
    %8012 = vmatpush1.msra.mxu0 0.0
    %8013 = vmatprep.subr.mxu0 0.0
    %8014 = vmatpush1.msra.mxu0 0.0
    %8015 = vmatprep.subr.mxu0 0.0
    %8016 = vmatpush1.msra.mxu0 0.0
    %8017 = vmatprep.subr.mxu0 0.0
    %8018 = vmatpush1.msra.mxu0 0.0
    %8019 = vmatprep.subr.mxu0 0.0
    %8020 = vmatpush1.msra.mxu0 %v7983
    %8021 = vmatprep.subr.mxu0 0.0
    %8022 = vmatpush1.msra.mxu0 %v7982
    %8023 = vmatprep.subr.mxu0 0.0
    %8024 = vmatpush2.msra.mxu0 0.0
    %8025 = vmatprep.subr.mxu0 0.0
    %8026 = vmatpush2.msra.mxu0 0.0
    %8027 = vmatprep.subr.mxu0 0.0
    %8028 = vmatpush2.msra.mxu0 0.0
    %8029 = vmatprep.subr.mxu0 0.0
    %8030 = vmatpush2.msra.mxu0 0.0
    %8031 = vmatprep.subr.mxu0 0.0
    %8032 = vmatpush2.msra.mxu0 0.0
    %8033 = vmatprep.subr.mxu0 0.0
    %8034 = vmatpush2.msra.mxu0 0.0
    %8035 = vmatprep.subr.mxu0 0.0
    %8036 = vmatpush2.msra.mxu0 0.0
    %8037 = vmatprep.subr.mxu0 0.0
    %8038 = vmatpush2.msra.mxu0 0.0
    %8039 = vmatprep.subr.mxu0 0.0
    %8040 = vmatpush2.msra.mxu0 0.0
    %8041 = vmatprep.subr.mxu0 0.0
    %8042 = vmatpush2.msra.mxu0 0.0
    %8043 = vmatprep.subr.mxu0 0.0
    %8044 = vmatpush2.msra.mxu0 0.0
    %8045 = vmatprep.subr.mxu0 0.0
    %8046 = vmatpush2.msra.mxu0 0.0
    %8047 = vmatprep.subr.mxu0 0.0
    %8048 = vmatpush2.msra.mxu0 0.0
    %8049 = vmatprep.subr.mxu0 0.0
    %8050 = vmatpush2.msra.mxu0 0.0
    %8051 = vmatprep.subr.mxu0 0.0
    %8052 = vmatpush2.msra.mxu0 0.0
    %8053 = vmatprep.subr.mxu0 0.0
    %8054 = vmatpush2.msra.mxu0 0.0
    %8055 = vmatprep.mubr.f32.mxu0 0.0
    %8056 = vmatmul.mubr.f32.gmra.mxu0 %v7831
    %v8057 = vpop.f32.mrf.mxu0
    %v8058 = vadd.f32 %v7989, %v8057
    %v8059 = vpop.f32.mrf.mxu0
    %8060 = vdwg.mxu0
    %v8061 = vld [vmem:[#allocation13] sm:$0xff]
    %v8062 = vld [vmem:[#allocation13 + $0x8] sm:$0xff]
    %v8063 = vld [vmem:[#allocation13 + $0x10] sm:$0xff]
    %v8064 = vld [vmem:[#allocation13 + $0x18] sm:$0xff]
    %v8065 = vld [vmem:[%s9] sm:$0x1]
    %v8067 = vlaneseq
    %v8068 = vshrl.u32 %v8067, 7
    %v8069 = vsub.s32 0, %v8068
    %v8070 = vrot.slane %v8065, %v8069
    %v8073 = vsel %vm395, %v7306, 0
    %8075 = vmatprep.subr.mxu0 0.0
    %8076 = vmatpush1.msra.mxu0 0.0
    %8077 = vmatprep.subr.mxu0 0.0
    %8078 = vmatpush1.msra.mxu0 0.0
    %8079 = vmatprep.subr.mxu0 0.0
    %8080 = vmatpush1.msra.mxu0 0.0
    %8081 = vmatprep.subr.mxu0 0.0
    %8082 = vmatpush1.msra.mxu0 0.0
    %8083 = vmatprep.subr.mxu0 0.0
    %8084 = vmatpush1.msra.mxu0 0.0
    %8085 = vmatprep.subr.mxu0 0.0
    %8086 = vmatpush1.msra.mxu0 0.0
    %8087 = vmatprep.subr.mxu0 0.0
    %8088 = vmatpush1.msra.mxu0 0.0
    %8089 = vmatprep.subr.mxu0 0.0
    %8090 = vmatpush1.msra.mxu0 0.0
    %8091 = vmatprep.subr.mxu0 0.0
    %8092 = vmatpush1.msra.mxu0 0.0
    %8093 = vmatprep.subr.mxu0 0.0
    %8094 = vmatpush1.msra.mxu0 0.0
    %8095 = vmatprep.subr.mxu0 0.0
    %8096 = vmatpush1.msra.mxu0 0.0
    %8097 = vmatprep.subr.mxu0 0.0
    %8098 = vmatpush1.msra.mxu0 0.0
    %8099 = vmatprep.subr.mxu0 0.0
    %8100 = vmatpush1.msra.mxu0 %v8064
    %8101 = vmatprep.subr.mxu0 0.0
    %8102 = vmatpush1.msra.mxu0 %v8063
    %8103 = vmatprep.subr.mxu0 0.0
    %8104 = vmatpush1.msra.mxu0 %v8062
    %8105 = vmatprep.subr.mxu0 0.0
    %8106 = vmatpush1.msra.mxu0 %v8061
    %8107 = vmatprep.subr.mxu0 0.0
    %8108 = vmatpush2.msra.mxu0 0.0
    %8109 = vmatprep.subr.mxu0 0.0
    %8110 = vmatpush2.msra.mxu0 0.0
    %8111 = vmatprep.subr.mxu0 0.0
    %8112 = vmatpush2.msra.mxu0 0.0
    %8113 = vmatprep.subr.mxu0 0.0
    %8114 = vmatpush2.msra.mxu0 0.0
    %8115 = vmatprep.subr.mxu0 0.0
    %8116 = vmatpush2.msra.mxu0 0.0
    %8117 = vmatprep.subr.mxu0 0.0
    %8118 = vmatpush2.msra.mxu0 0.0
    %8119 = vmatprep.subr.mxu0 0.0
    %8120 = vmatpush2.msra.mxu0 0.0
    %8121 = vmatprep.subr.mxu0 0.0
    %8122 = vmatpush2.msra.mxu0 0.0
    %8123 = vmatprep.subr.mxu0 0.0
    %8124 = vmatpush2.msra.mxu0 0.0
    %8125 = vmatprep.subr.mxu0 0.0
    %8126 = vmatpush2.msra.mxu0 0.0
    %8127 = vmatprep.subr.mxu0 0.0
    %8128 = vmatpush2.msra.mxu0 0.0
    %8129 = vmatprep.subr.mxu0 0.0
    %8130 = vmatpush2.msra.mxu0 0.0
    %8131 = vmatprep.subr.mxu0 0.0
    %8132 = vmatpush2.msra.mxu0 0.0
    %8133 = vmatprep.subr.mxu0 0.0
    %8134 = vmatpush2.msra.mxu0 0.0
    %8135 = vmatprep.subr.mxu0 0.0
    %8136 = vmatpush2.msra.mxu0 0.0
    %8137 = vmatprep.subr.mxu0 0.0
    %8138 = vmatpush2.msra.mxu0 0.0
    %8139 = vmatprep.mubr.f32.mxu0 0.0
    %8140 = vmatmul.mubr.f32.gmra.mxu0 %v8073
    %v8141 = vpop.f32.mrf.mxu0
    %v8142 = vadd.f32 %v8070, %v8141
    %v8143 = vpop.f32.mrf.mxu0
    %8144 = vdwg.mxu0
    %v8145 = vld [vmem:[%s988] sm:$0xff]
    %v8146 = vld [vmem:[%s988 + $0x8] sm:$0xff]
    %v8147 = vld [vmem:[%s988 + $0x10] sm:$0xff]
    %v8148 = vld [vmem:[%s988 + $0x18] sm:$0xff]
    %v8149 = vld [vmem:[%s993] sm:$0x1]
    %v8151 = vlaneseq
    %v8152 = vshrl.u32 %v8151, 7
    %v8153 = vsub.s32 0, %v8152
    %v8154 = vrot.slane %v8149, %v8153
    %8156 = vmatprep.subr.mxu0 0.0
    %8157 = vmatpush1.msra.mxu0 0.0
    %8158 = vmatprep.subr.mxu0 0.0
    %8159 = vmatpush1.msra.mxu0 0.0
    %8160 = vmatprep.subr.mxu0 0.0
    %8161 = vmatpush1.msra.mxu0 0.0
    %8162 = vmatprep.subr.mxu0 0.0
    %8163 = vmatpush1.msra.mxu0 0.0
    %8164 = vmatprep.subr.mxu0 0.0
    %8165 = vmatpush1.msra.mxu0 0.0
    %8166 = vmatprep.subr.mxu0 0.0
    %8167 = vmatpush1.msra.mxu0 0.0
    %8168 = vmatprep.subr.mxu0 0.0
    %8169 = vmatpush1.msra.mxu0 0.0
    %8170 = vmatprep.subr.mxu0 0.0
    %8171 = vmatpush1.msra.mxu0 0.0
    %8172 = vmatprep.subr.mxu0 0.0
    %8173 = vmatpush1.msra.mxu0 0.0
    %8174 = vmatprep.subr.mxu0 0.0
    %8175 = vmatpush1.msra.mxu0 0.0
    %8176 = vmatprep.subr.mxu0 0.0
    %8177 = vmatpush1.msra.mxu0 0.0
    %8178 = vmatprep.subr.mxu0 0.0
    %8179 = vmatpush1.msra.mxu0 0.0
    %8180 = vmatprep.subr.mxu0 0.0
    %8181 = vmatpush1.msra.mxu0 %v8148
    %8182 = vmatprep.subr.mxu0 0.0
    %8183 = vmatpush1.msra.mxu0 %v8147
    %8184 = vmatprep.subr.mxu0 0.0
    %8185 = vmatpush1.msra.mxu0 %v8146
    %8186 = vmatprep.subr.mxu0 0.0
    %8187 = vmatpush1.msra.mxu0 %v8145
    %8188 = vmatprep.subr.mxu0 0.0
    %8189 = vmatpush2.msra.mxu0 0.0
    %8190 = vmatprep.subr.mxu0 0.0
    %8191 = vmatpush2.msra.mxu0 0.0
    %8192 = vmatprep.subr.mxu0 0.0
    %8193 = vmatpush2.msra.mxu0 0.0
    %8194 = vmatprep.subr.mxu0 0.0
    %8195 = vmatpush2.msra.mxu0 0.0
    %8196 = vmatprep.subr.mxu0 0.0
    %8197 = vmatpush2.msra.mxu0 0.0
    %8198 = vmatprep.subr.mxu0 0.0
    %8199 = vmatpush2.msra.mxu0 0.0
    %8200 = vmatprep.subr.mxu0 0.0
    %8201 = vmatpush2.msra.mxu0 0.0
    %8202 = vmatprep.subr.mxu0 0.0
    %8203 = vmatpush2.msra.mxu0 0.0
    %8204 = vmatprep.subr.mxu0 0.0
    %8205 = vmatpush2.msra.mxu0 0.0
    %8206 = vmatprep.subr.mxu0 0.0
    %8207 = vmatpush2.msra.mxu0 0.0
    %8208 = vmatprep.subr.mxu0 0.0
    %8209 = vmatpush2.msra.mxu0 0.0
    %8210 = vmatprep.subr.mxu0 0.0
    %8211 = vmatpush2.msra.mxu0 0.0
    %8212 = vmatprep.subr.mxu0 0.0
    %8213 = vmatpush2.msra.mxu0 0.0
    %8214 = vmatprep.subr.mxu0 0.0
    %8215 = vmatpush2.msra.mxu0 0.0
    %8216 = vmatprep.subr.mxu0 0.0
    %8217 = vmatpush2.msra.mxu0 0.0
    %8218 = vmatprep.subr.mxu0 0.0
    %8219 = vmatpush2.msra.mxu0 0.0
    %8220 = vmatprep.mubr.f32.mxu0 0.0
    %8221 = vmatmul.mubr.f32.gmra.mxu0 %v8073
    %v8222 = vpop.f32.mrf.mxu0
    %v8223 = vadd.f32 %v8154, %v8222
    %v8224 = vpop.f32.mrf.mxu0
    %8225 = vdwg.mxu0
    %v8226 = vld [vmem:[%s1071] sm:$0xff]
    %v8227 = vld [vmem:[%s1071 + $0x8] sm:$0xff]
    %v8228 = vld [vmem:[%s1071 + $0x10] sm:$0xff]
    %v8229 = vld [vmem:[%s1071 + $0x18] sm:$0xff]
    %v8230 = vld [vmem:[%s1076] sm:$0x1]
    %v8232 = vlaneseq
    %v8233 = vshrl.u32 %v8232, 7
    %v8234 = vsub.s32 0, %v8233
    %v8235 = vrot.slane %v8230, %v8234
    %8237 = vmatprep.subr.mxu0 0.0
    %8238 = vmatpush1.msra.mxu0 0.0
    %8239 = vmatprep.subr.mxu0 0.0
    %8240 = vmatpush1.msra.mxu0 0.0
    %8241 = vmatprep.subr.mxu0 0.0
    %8242 = vmatpush1.msra.mxu0 0.0
    %8243 = vmatprep.subr.mxu0 0.0
    %8244 = vmatpush1.msra.mxu0 0.0
    %8245 = vmatprep.subr.mxu0 0.0
    %8246 = vmatpush1.msra.mxu0 0.0
    %8247 = vmatprep.subr.mxu0 0.0
    %8248 = vmatpush1.msra.mxu0 0.0
    %8249 = vmatprep.subr.mxu0 0.0
    %8250 = vmatpush1.msra.mxu0 0.0
    %8251 = vmatprep.subr.mxu0 0.0
    %8252 = vmatpush1.msra.mxu0 0.0
    %8253 = vmatprep.subr.mxu0 0.0
    %8254 = vmatpush1.msra.mxu0 0.0
    %8255 = vmatprep.subr.mxu0 0.0
    %8256 = vmatpush1.msra.mxu0 0.0
    %8257 = vmatprep.subr.mxu0 0.0
    %8258 = vmatpush1.msra.mxu0 0.0
    %8259 = vmatprep.subr.mxu0 0.0
    %8260 = vmatpush1.msra.mxu0 0.0
    %8261 = vmatprep.subr.mxu0 0.0
    %8262 = vmatpush1.msra.mxu0 %v8229
    %8263 = vmatprep.subr.mxu0 0.0
    %8264 = vmatpush1.msra.mxu0 %v8228
    %8265 = vmatprep.subr.mxu0 0.0
    %8266 = vmatpush1.msra.mxu0 %v8227
    %8267 = vmatprep.subr.mxu0 0.0
    %8268 = vmatpush1.msra.mxu0 %v8226
    %8269 = vmatprep.subr.mxu0 0.0
    %8270 = vmatpush2.msra.mxu0 0.0
    %8271 = vmatprep.subr.mxu0 0.0
    %8272 = vmatpush2.msra.mxu0 0.0
    %8273 = vmatprep.subr.mxu0 0.0
    %8274 = vmatpush2.msra.mxu0 0.0
    %8275 = vmatprep.subr.mxu0 0.0
    %8276 = vmatpush2.msra.mxu0 0.0
    %8277 = vmatprep.subr.mxu0 0.0
    %8278 = vmatpush2.msra.mxu0 0.0
    %8279 = vmatprep.subr.mxu0 0.0
    %8280 = vmatpush2.msra.mxu0 0.0
    %8281 = vmatprep.subr.mxu0 0.0
    %8282 = vmatpush2.msra.mxu0 0.0
    %8283 = vmatprep.subr.mxu0 0.0
    %8284 = vmatpush2.msra.mxu0 0.0
    %8285 = vmatprep.subr.mxu0 0.0
    %8286 = vmatpush2.msra.mxu0 0.0
    %8287 = vmatprep.subr.mxu0 0.0
    %8288 = vmatpush2.msra.mxu0 0.0
    %8289 = vmatprep.subr.mxu0 0.0
    %8290 = vmatpush2.msra.mxu0 0.0
    %8291 = vmatprep.subr.mxu0 0.0
    %8292 = vmatpush2.msra.mxu0 0.0
    %8293 = vmatprep.subr.mxu0 0.0
    %8294 = vmatpush2.msra.mxu0 0.0
    %8295 = vmatprep.subr.mxu0 0.0
    %8296 = vmatpush2.msra.mxu0 0.0
    %8297 = vmatprep.subr.mxu0 0.0
    %8298 = vmatpush2.msra.mxu0 0.0
    %8299 = vmatprep.subr.mxu0 0.0
    %8300 = vmatpush2.msra.mxu0 0.0
    %8301 = vmatprep.mubr.f32.mxu0 0.0
    %8302 = vmatmul.mubr.f32.gmra.mxu0 %v8073
    %v8303 = vpop.f32.mrf.mxu0
    %v8304 = vadd.f32 %v8235, %v8303
    %v8305 = vpop.f32.mrf.mxu0
    %8306 = vdwg.mxu0
    %v8307 = vadd.f32 %v7900, %v8142
    %v8308 = vxor.u32 %v8307, 2147483648
    %v8309 = vmul.f32 %v8308, 1.442695
    %v8310 = vpow.pop %v8309
    %v8311 = vadd.f32 %v8310, 1.0
    %v8312 = vrcp.pop %v8311
    %v8313 = vmul.f32 1.0, %v8312
    %v8314 = vadd.f32 %v7979, %v8223
    %v8315 = vxor.u32 %v8314, 2147483648
    %v8316 = vmul.f32 %v8315, 1.442695
    %v8317 = vpow.pop %v8316
    %v8318 = vadd.f32 %v8317, 1.0
    %v8319 = vrcp.pop %v8318
    %v8320 = vmul.f32 1.0, %v8319
    %v8321 = vmul.f32 %v8313, %v8304
    %v8322 = vadd.f32 %v8058, %v8321
    %v8323 = vtanh.pop %v8322
    %v8324 = vsub.f32 1.0, %v8320
    %v8325 = vmul.f32 %v8324, %v8323
    %v8326 = vmul.f32 %v8320, %v7306
    %v8327 = vadd.f32 %v8325, %v8326
    %8328 = vst.msk [vmem:[#allocation16] sm:$0x3] %vm656, %v8327
    %8329 = vst.msk [vmem:[#allocation2] sm:$0x3] %vm656, %v7817
    %8330 = vst.msk [vmem:[#allocation3] sm:$0x3] %vm656, %v8327
    // Predicated region
    $region70: #{tpu_custom_call.1} parent=1 // pred_check
      _
    $region71: #{tpu_custom_call.1} parent=1 // pred_check_branch
      %8332 = sbr.rel (0) target = $region73
    $region72: #{tpu_custom_call.1} parent=1 // pred_region
      %s8334 = ssub.s32 256, 256
      %8335 = vsyncadd [#allocation6], %s8334
      %s8336 = sshll.u32 [#allocation15], 4
      %s8337 = int_to_ptr.vmem [resolvable:$true] %s8336
      %8342 = dma.vmem_to_hbm [thread:$0]  %s8337, 256, %s10, [#allocation6], 32, 32, 2
    $region73: #{tpu_custom_call.1} parent=1 // pred_fallthru
      _
    // Predicated region
    $region74: #{tpu_custom_call.1} parent=1 // pred_check
      _
    $region75: #{tpu_custom_call.1} parent=1 // pred_check_branch
      %8344 = sbr.rel (0) target = $region77
    $region76: #{tpu_custom_call.1} parent=1 // pred_region
      %s8345 = ssub.s32 0, 0
      %s8346 = smul.u32 8, %s8345
      %s8348 = ssub.s32 256, 256
      %8349 = vsyncadd [#allocation17], %s8348
      %s8350 = smul.addr %s8346, 32
      %s8351 = scalar_lea.hbm %s11, %s8350
      %s8352 = sshll.u32 [#allocation16], 4
      %s8353 = int_to_ptr.vmem [resolvable:$true] %s8352
      %8358 = dma.vmem_to_hbm [thread:$0]  %s8353, 256, %s8351, [#allocation17], 32, 32, 2
    $region77: #{tpu_custom_call.1} parent=1 // pred_fallthru
      _
    // Predicated region
    $region78: #{tpu_custom_call.1} parent=1 // pred_check
      _
    $region79: #{tpu_custom_call.1} parent=1 // pred_check_branch
      %8360 = sbr.rel (0) target = $region81
    $region80: #{tpu_custom_call.1} parent=1 // pred_region
      %8361 = dma.done [#allocation6], 256
    $region81: #{tpu_custom_call.1} parent=1 // pred_fallthru
      _
    // Predicated region
    $region82: #{tpu_custom_call.1} parent=1 // pred_check
      _
    $region83: #{tpu_custom_call.1} parent=1 // pred_check_branch
      %8363 = sbr.rel (0) target = $region85
    $region84: #{tpu_custom_call.1} parent=1 // pred_region
      %8364 = dma.done [#allocation17], 256
    $region85: #{tpu_custom_call.1} parent=1 // pred_fallthru
      _
    %8365 = vsyncpa [#allocation5], 1
    %8366 = vsyncpa [#allocation8], 1
    %8367 = vsyncpa [#allocation11], 1
    %8368 = vsyncpa [#allocation14], 1
    %8369 = vsyncpa [#allocation6], 1
    %8370 = vsyncpa [#allocation17], 1

</llo_original>
